<compile_context>
chip_gen: v7x
topology: tpu7x:2x2x1
jax: 0.10.0
libtpu: 0.0.40
codegen_flags: <defaults>
</compile_context>

<pallas_src>
import functools

import jax
import jax.numpy as jnp
from jax.experimental import pallas as pl
from jax.experimental.pallas import tpu as pltpu


def _round_up(x, m):
    return ((x + m - 1) // m) * m


def conv_out_spatial(h, w):
    h = (h - 8) // 4 + 1; w = (w - 8) // 4 + 1   # conv1 8x8/4
    h = (h - 4) // 2 + 1; w = (w - 4) // 2 + 1   # conv2 4x4/2
    h = (h - 3) // 1 + 1; w = (w - 3) // 1 + 1   # conv3 3x3/1
    return h, w


# ----------------------------------------------------------------------------
# Fused kernel: conv1 -> conv2 -> conv3 -> FC1 -> FC2, all in VMEM.
# ----------------------------------------------------------------------------
def _dqn_fused_kernel(x_ref, w1_ref, b1_ref, w2_ref, b2_ref, w3_ref, b3_ref,
                      f1w_ref, f1b_ref, f2w_ref, f2b_ref, o_ref, *, dims):
    NB, Ho1, Wo1, Ho2, Wo2, Ho3, Wo3, Cs = dims
    f32 = jnp.float32

    # ---- conv1: 8x8/4 conv == 2x2/1 conv over the space-to-depth(4) input.
    # 4 shifted unit-stride GEMMs accumulated in f32 (weights VMEM-resident).
    acc1 = None
    for di in range(2):
        for dj in range(2):
            patch = x_ref[:, pl.ds(di, Ho1), pl.ds(dj, Wo1), :]    # (NB,Ho1,Wo1,Cs)
            patch = patch.reshape(NB * Ho1 * Wo1, Cs)
            d = jnp.dot(patch, w1_ref[di * 2 + dj],
                        preferred_element_type=f32)
            acc1 = d if acc1 is None else acc1 + d
    h1 = jnp.maximum(acc1 + b1_ref[...], 0.0).astype(jnp.bfloat16)
    h1 = h1.reshape(NB, Ho1 * Wo1, 128)
    # Per-pixel channel vectors of the conv1 output (stay in VMEM).
    h1_vec = [h1[:, p, :] for p in range(Ho1 * Wo1)]

    # ---- conv2: 4x4/2.  Per output pixel: gather its 16 input pixels by
    # lane-aligned concat and run one (NB, 2048) x (2048, 256) GEMM.
    w2 = w2_ref[...]
    b2 = b2_ref[...]
    h2_vec = []
    for oy in range(Ho2):
        for ox in range(Wo2):
            patch = jnp.concatenate(
                [h1_vec[(2 * oy + i) * Wo1 + (2 * ox + j)]
                 for i in range(4) for j in range(4)], axis=-1)
            acc = jnp.dot(patch, w2, preferred_element_type=f32) + b2
            h2_vec.append(jnp.maximum(acc, 0.0).astype(jnp.bfloat16))

    # ---- conv3: 3x3/1.  Per output pixel: one (NB, 2304) x (2304, 128) GEMM.
    w3 = w3_ref[...]
    b3 = b3_ref[...]
    h3_vec = []
    for oy in range(Ho3):
        for ox in range(Wo3):
            patch = jnp.concatenate(
                [h2_vec[(oy + dy) * Wo2 + (ox + dx)]
                 for dy in range(3) for dx in range(3)], axis=-1)
            acc = jnp.dot(patch, w3, preferred_element_type=f32) + b3
            h3_vec.append(jnp.maximum(acc, 0.0).astype(jnp.bfloat16))

    # ---- FC head (channel-last flatten; f1w columns pre-permuted to match).
    flat = h3_vec[0] if len(h3_vec) == 1 else jnp.concatenate(h3_vec, axis=-1)
    hid = jnp.dot(flat, f1w_ref[...], preferred_element_type=f32) + f1b_ref[...]
    hid = jnp.maximum(hid, 0.0).astype(jnp.bfloat16)   # bf16 hidden: halves spills
    q = jnp.dot(hid, f2w_ref[...], preferred_element_type=f32) + f2b_ref[...]
    o_ref[...] = q.astype(o_ref.dtype)


# ----------------------------------------------------------------------------
# Parameters (PyTorch layouts) and one-time conversion to kernel layouts.
# ----------------------------------------------------------------------------
def init_params(key, input_shape, n_actions):
    """Parameters in PyTorch layout (Conv: OIHW, Linear: (out, in))."""
    C, H, W = input_shape
    ho, wo = conv_out_spatial(H, W)
    conv_out_size = 128 * ho * wo
    ks = jax.random.split(key, 10)
    s = 0.03
    return {
        "c1w": jax.random.normal(ks[0], (128, C, 8, 8), jnp.float32) * s,
        "c1b": jax.random.normal(ks[1], (128,), jnp.float32) * s,
        "c2w": jax.random.normal(ks[2], (256, 128, 4, 4), jnp.float32) * s,
        "c2b": jax.random.normal(ks[3], (256,), jnp.float32) * s,
        "c3w": jax.random.normal(ks[4], (128, 256, 3, 3), jnp.float32) * s,
        "c3b": jax.random.normal(ks[5], (128,), jnp.float32) * s,
        "f1w": jax.random.normal(ks[6], (512, conv_out_size), jnp.float32) * s,
        "f1b": jax.random.normal(ks[7], (512,), jnp.float32) * s,
        "f2w": jax.random.normal(ks[8], (n_actions, 512), jnp.float32) * s,
        "f2b": jax.random.normal(ks[9], (n_actions,), jnp.float32) * s,
    }


def prepare_params(p, input_shape):
    """One-time conversion to kernel-friendly bf16 matrices (done once)."""
    C, H, W = input_shape
    ho3, wo3 = conv_out_spatial(H, W)

    def conv_w(w):  # OIHW -> (kh*kw*cin, cout), row order (kh, kw, cin)
        cout, cin, kh, kw = w.shape
        return (jnp.transpose(w, (2, 3, 1, 0))
                .reshape(kh * kw * cin, cout).astype(jnp.bfloat16))

    # conv1 weights regrouped for the space-to-depth(4) formulation:
    # block[di*2+dj][(py*4+px)*C + c, cout] = W[cout, c, 4*di+py, 4*dj+px]
    w1 = p["c1w"]
    cout1 = w1.shape[0]
    w1t = jnp.transpose(w1, (2, 3, 1, 0))            # (8, 8, C, 128)
    w1t = w1t.reshape(2, 4, 2, 4, C, cout1)          # (di, py, dj, px, c, cout)
    w1t = jnp.transpose(w1t, (0, 2, 1, 3, 4, 5))     # (di, dj, py, px, c, cout)
    c1w = w1t.reshape(4, 16 * C, cout1).astype(jnp.bfloat16)

    # FC1 columns: torch flatten order (c, h, w) -> kernel flatten order (h, w, c).
    f1w = p["f1w"]
    f1w = (f1w.reshape(-1, 128, ho3, wo3).transpose(0, 2, 3, 1)
              .reshape(f1w.shape[0], -1))

    n_actions = p["f2w"].shape[0]
    ap = _round_up(max(n_actions, 128), 128)
    f2w = jnp.zeros((512, ap), jnp.bfloat16).at[:, :n_actions].set(
        p["f2w"].T.astype(jnp.bfloat16))
    f2b = jnp.zeros((1, ap), jnp.float32).at[0, :n_actions].set(
        p["f2b"].astype(jnp.float32))

    return {
        "c1w": c1w, "c1b": p["c1b"].reshape(1, -1).astype(jnp.float32),
        "c2w": conv_w(p["c2w"]), "c2b": p["c2b"].reshape(1, -1).astype(jnp.float32),
        "c3w": conv_w(p["c3w"]), "c3b": p["c3b"].reshape(1, -1).astype(jnp.float32),
        "f1w": jnp.asarray(f1w.T, jnp.bfloat16),
        "f1b": p["f1b"].reshape(1, -1).astype(jnp.float32),
        "f2w": f2w, "f2b": f2b,
    }


# ----------------------------------------------------------------------------
# Full CNN_Model forward: one pallas_call.
# ----------------------------------------------------------------------------
def cnn_model_forward(prepared, x_nchw, *, n_actions):
    B, C, H, W = x_nchw.shape
    assert H % 4 == 0 and W % 4 == 0 and H >= 8 and W >= 8
    Ho1, Wo1 = (H - 8) // 4 + 1, (W - 8) // 4 + 1
    Ho2, Wo2 = (Ho1 - 4) // 2 + 1, (Wo1 - 4) // 2 + 1
    Ho3, Wo3 = Ho2 - 2, Wo2 - 2
    Hs, Ws, Cs = H // 4, W // 4, 16 * C

    # One fused XLA pass over the (tiny) raw input only:
    # NCHW -> NHWC -> space-to-depth(4) -> bf16.
    x = jnp.transpose(x_nchw, (0, 2, 3, 1))
    x = (x.reshape(B, Hs, 4, Ws, 4, C).transpose(0, 1, 3, 2, 4, 5)
           .reshape(B, Hs, Ws, Cs).astype(jnp.bfloat16))

    # Batch tile: >= 8 rows; for batches > 8, keep >= 2 grid steps so the
    # "parallel" axis can shard across v7x's two TensorCores.
    NB = 8 if B <= 8 else min(32, _round_up((B + 1) // 2, 8))
    Bp = _round_up(B, NB)
    if Bp != B:
        x = jnp.pad(x, ((0, Bp - B), (0, 0), (0, 0), (0, 0)))

    ap = prepared["f2w"].shape[1]
    F = Ho3 * Wo3 * 128
    dims = (NB, Ho1, Wo1, Ho2, Wo2, Ho3, Wo3, Cs)

    weight_bytes = sum(int(prepared[k].size) * prepared[k].dtype.itemsize
                       for k in ("c1w", "c2w", "c3w", "f1w", "f2w"))
    flops = 2 * Bp * (Ho1 * Wo1 * (8 * 8 * C) * 128
                      + Ho2 * Wo2 * 2048 * 256
                      + Ho3 * Wo3 * 2304 * 128
                      + F * 512 + 512 * ap)
    cost = pl.CostEstimate(
        flops=flops, transcendentals=0,
        bytes_accessed=2 * Bp * Hs * Ws * Cs + weight_bytes + 4 * Bp * ap)

    out = pl.pallas_call(
        functools.partial(_dqn_fused_kernel, dims=dims),
        out_shape=jax.ShapeDtypeStruct((Bp, ap), jnp.float32),
        grid_spec=pltpu.PrefetchScalarGridSpec(
            num_scalar_prefetch=0,
            grid=(Bp // NB,),
            in_specs=[
                pl.BlockSpec((NB, Hs, Ws, Cs), lambda i: (i, 0, 0, 0)),
                pl.BlockSpec((4, Cs, 128), lambda i: (0, 0, 0)),   # c1w (resident)
                pl.BlockSpec((1, 128), lambda i: (0, 0)),          # c1b
                pl.BlockSpec((2048, 256), lambda i: (0, 0)),       # c2w (resident)
                pl.BlockSpec((1, 256), lambda i: (0, 0)),          # c2b
                pl.BlockSpec((2304, 128), lambda i: (0, 0)),       # c3w (resident)
                pl.BlockSpec((1, 128), lambda i: (0, 0)),          # c3b
                pl.BlockSpec((F, 512), lambda i: (0, 0)),          # f1w (resident)
                pl.BlockSpec((1, 512), lambda i: (0, 0)),          # f1b
                pl.BlockSpec((512, ap), lambda i: (0, 0)),         # f2w (resident)
                pl.BlockSpec((1, ap), lambda i: (0, 0)),           # f2b
            ],
            out_specs=pl.BlockSpec((NB, ap), lambda i: (i, 0)),
        ),
        compiler_params=pltpu.CompilerParams(
            dimension_semantics=("parallel",),
            # Re-derived for v7x's 64 MiB VMEM: ~2 MiB weights (x2 buffers)
            # + <2 MiB activations per tile, far under this limit.
            vmem_limit_bytes=32 * 1024 * 1024,
        ),
        cost_estimate=cost,
    )(x, prepared["c1w"], prepared["c1b"], prepared["c2w"], prepared["c2b"],
      prepared["c3w"], prepared["c3b"], prepared["f1w"], prepared["f1b"],
      prepared["f2w"], prepared["f2b"])

    # Only the final tiny output is sliced back to logical shape.
    return out[:B, :n_actions]


# ----------------------------------------------------------------------------
# Pure-JAX f32 reference (torch-layout params) for correctness check only.
# ----------------------------------------------------------------------------
def _ref_forward(params, x):
    def conv(x, w, b, s):
        y = jax.lax.conv_general_dilated(
            x, w, window_strides=(s, s), padding="VALID",
            dimension_numbers=("NCHW", "OIHW", "NCHW"),
            precision=jax.lax.Precision.HIGHEST)
        return jax.nn.relu(y + b[None, :, None, None])

    h = conv(x, params["c1w"], params["c1b"], 4)
    h = conv(h, params["c2w"], params["c2b"], 2)
    h = conv(h, params["c3w"], params["c3b"], 1)
    flat = h.reshape(x.shape[0], -1)
    h = jax.nn.relu(flat @ params["f1w"].T + params["f1b"])
    return h @ params["f2w"].T + params["f2b"]


if __name__ == "__main__":
    key = jax.random.PRNGKey(0)
    k_param, k_x = jax.random.split(key)

    # Smallest input the conv stack (8/4, 4/2, 3/1) supports: 36x36 -> 1x1 out.
    input_shape = (4, 36, 36)
    n_actions = 6
    x = jax.random.normal(k_x, (2, *input_shape), jnp.float32)

    params = init_params(k_param, input_shape, n_actions)
    prepared = prepare_params(params, input_shape)

    forward = jax.jit(functools.partial(cnn_model_forward, n_actions=n_actions))
    out = jax.block_until_ready(forward(prepared, x))

    assert out.shape == (2, n_actions), out.shape
    ref = _ref_forward(params, x)
    max_err = float(jnp.max(jnp.abs(out - ref)))
    # bf16 matmul operands (f32 accumulation) vs. f32 HIGHEST reference.
    assert jnp.allclose(out, ref, rtol=2e-2, atol=2e-2), max_err

    print("KERNEL_OK")
</pallas_src>

<mosaic_0001>
module attributes {stable_mosaic.version = 11 : i64} {
  func.func @_dqn_fused_kernel(%arg0: i32, %arg1: memref<8x9x9x64xbf16, #tpu.memory_space<vmem>>, %arg2: memref<4x64x128xbf16, #tpu.memory_space<vmem>>, %arg3: memref<1x128xf32, #tpu.memory_space<vmem>>, %arg4: memref<2048x256xbf16, #tpu.memory_space<vmem>>, %arg5: memref<1x256xf32, #tpu.memory_space<vmem>>, %arg6: memref<2304x128xbf16, #tpu.memory_space<vmem>>, %arg7: memref<1x128xf32, #tpu.memory_space<vmem>>, %arg8: memref<128x512xbf16, #tpu.memory_space<vmem>>, %arg9: memref<1x512xf32, #tpu.memory_space<vmem>>, %arg10: memref<512x128xbf16, #tpu.memory_space<vmem>>, %arg11: memref<1x128xf32, #tpu.memory_space<vmem>>, %arg12: memref<8x128xf32, #tpu.memory_space<vmem>>) attributes {dimension_semantics = [#tpu.dimension_semantics<parallel>], iteration_bounds = array<i64: 1>, scalar_prefetch = 0 : i64, scratch_operands = 0 : i64, tpu.core_type = #tpu.core_type<tc>, window_params = [{transform_indices = @transform_0, window_bounds = array<i64: 8, 9, 9, 64>}, {pipeline_mode = #tpu.pipeline_mode<synchronous>, transform_indices = @transform_1, window_bounds = array<i64: 4, 64, 128>}, {pipeline_mode = #tpu.pipeline_mode<synchronous>, transform_indices = @transform_2, window_bounds = array<i64: 1, 128>}, {pipeline_mode = #tpu.pipeline_mode<synchronous>, transform_indices = @transform_3, window_bounds = array<i64: 2048, 256>}, {pipeline_mode = #tpu.pipeline_mode<synchronous>, transform_indices = @transform_4, window_bounds = array<i64: 1, 256>}, {pipeline_mode = #tpu.pipeline_mode<synchronous>, transform_indices = @transform_5, window_bounds = array<i64: 2304, 128>}, {pipeline_mode = #tpu.pipeline_mode<synchronous>, transform_indices = @transform_6, window_bounds = array<i64: 1, 128>}, {pipeline_mode = #tpu.pipeline_mode<synchronous>, transform_indices = @transform_7, window_bounds = array<i64: 128, 512>}, {pipeline_mode = #tpu.pipeline_mode<synchronous>, transform_indices = @transform_8, window_bounds = array<i64: 1, 512>}, {pipeline_mode = #tpu.pipeline_mode<synchronous>, transform_indices = @transform_9, window_bounds = array<i64: 512, 128>}, {pipeline_mode = #tpu.pipeline_mode<synchronous>, transform_indices = @transform_10, window_bounds = array<i64: 1, 128>}, {transform_indices = @transform_11, window_bounds = array<i64: 8, 128>}]} {
    %c0 = arith.constant 0 : index
    %c0_0 = arith.constant 0 : index
    %c0_1 = arith.constant 0 : index
    %c0_2 = arith.constant 0 : index
    %0 = vector.load %arg1[%c0, %c0_0, %c0_1, %c0_2] : memref<8x9x9x64xbf16, #tpu.memory_space<vmem>>, vector<8x8x8x64xbf16>
    %1 = vector.shape_cast %0 : vector<8x8x8x64xbf16> to vector<512x64xbf16>
    %c0_3 = arith.constant 0 : index
    %c0_4 = arith.constant 0 : index
    %c0_5 = arith.constant 0 : index
    %2 = vector.load %arg2[%c0_3, %c0_4, %c0_5] : memref<4x64x128xbf16, #tpu.memory_space<vmem>>, vector<1x64x128xbf16>
    %3 = vector.shape_cast %2 : vector<1x64x128xbf16> to vector<64x128xbf16>
    %cst = arith.constant dense<0.000000e+00> : vector<512x128xf32>
    %4 = tpu.matmul %1, %3, %cst {dimension_numbers = #tpu.dot_dimension_numbers<[1], [0], [0], [1], [0, 0, 1, 1], [], []>} : vector<512x64xbf16>, vector<64x128xbf16>, vector<512x128xf32> -> vector<512x128xf32>
    %c0_6 = arith.constant 0 : index
    %c0_7 = arith.constant 0 : index
    %c1 = arith.constant 1 : index
    %c0_8 = arith.constant 0 : index
    %5 = vector.load %arg1[%c0_6, %c0_7, %c1, %c0_8] : memref<8x9x9x64xbf16, #tpu.memory_space<vmem>>, vector<8x8x8x64xbf16>
    %6 = vector.shape_cast %5 : vector<8x8x8x64xbf16> to vector<512x64xbf16>
    %c1_9 = arith.constant 1 : index
    %c0_10 = arith.constant 0 : index
    %c0_11 = arith.constant 0 : index
    %7 = vector.load %arg2[%c1_9, %c0_10, %c0_11] : memref<4x64x128xbf16, #tpu.memory_space<vmem>>, vector<1x64x128xbf16>
    %8 = vector.shape_cast %7 : vector<1x64x128xbf16> to vector<64x128xbf16>
    %cst_12 = arith.constant dense<0.000000e+00> : vector<512x128xf32>
    %9 = tpu.matmul %6, %8, %cst_12 {dimension_numbers = #tpu.dot_dimension_numbers<[1], [0], [0], [1], [0, 0, 1, 1], [], []>} : vector<512x64xbf16>, vector<64x128xbf16>, vector<512x128xf32> -> vector<512x128xf32>
    %10 = arith.addf %4, %9 : vector<512x128xf32>
    %c0_13 = arith.constant 0 : index
    %c1_14 = arith.constant 1 : index
    %c0_15 = arith.constant 0 : index
    %c0_16 = arith.constant 0 : index
    %11 = vector.load %arg1[%c0_13, %c1_14, %c0_15, %c0_16] : memref<8x9x9x64xbf16, #tpu.memory_space<vmem>>, vector<8x8x8x64xbf16>
    %12 = vector.shape_cast %11 : vector<8x8x8x64xbf16> to vector<512x64xbf16>
    %c2 = arith.constant 2 : index
    %c0_17 = arith.constant 0 : index
    %c0_18 = arith.constant 0 : index
    %13 = vector.load %arg2[%c2, %c0_17, %c0_18] : memref<4x64x128xbf16, #tpu.memory_space<vmem>>, vector<1x64x128xbf16>
    %14 = vector.shape_cast %13 : vector<1x64x128xbf16> to vector<64x128xbf16>
    %cst_19 = arith.constant dense<0.000000e+00> : vector<512x128xf32>
    %15 = tpu.matmul %12, %14, %cst_19 {dimension_numbers = #tpu.dot_dimension_numbers<[1], [0], [0], [1], [0, 0, 1, 1], [], []>} : vector<512x64xbf16>, vector<64x128xbf16>, vector<512x128xf32> -> vector<512x128xf32>
    %16 = arith.addf %10, %15 : vector<512x128xf32>
    %c0_20 = arith.constant 0 : index
    %c1_21 = arith.constant 1 : index
    %c1_22 = arith.constant 1 : index
    %c0_23 = arith.constant 0 : index
    %17 = vector.load %arg1[%c0_20, %c1_21, %c1_22, %c0_23] : memref<8x9x9x64xbf16, #tpu.memory_space<vmem>>, vector<8x8x8x64xbf16>
    %18 = vector.shape_cast %17 : vector<8x8x8x64xbf16> to vector<512x64xbf16>
    %c3 = arith.constant 3 : index
    %c0_24 = arith.constant 0 : index
    %c0_25 = arith.constant 0 : index
    %19 = vector.load %arg2[%c3, %c0_24, %c0_25] : memref<4x64x128xbf16, #tpu.memory_space<vmem>>, vector<1x64x128xbf16>
    %20 = vector.shape_cast %19 : vector<1x64x128xbf16> to vector<64x128xbf16>
    %cst_26 = arith.constant dense<0.000000e+00> : vector<512x128xf32>
    %21 = tpu.matmul %18, %20, %cst_26 {dimension_numbers = #tpu.dot_dimension_numbers<[1], [0], [0], [1], [0, 0, 1, 1], [], []>} : vector<512x64xbf16>, vector<64x128xbf16>, vector<512x128xf32> -> vector<512x128xf32>
    %22 = arith.addf %16, %21 : vector<512x128xf32>
    %c0_27 = arith.constant 0 : index
    %c0_28 = arith.constant 0 : index
    %23 = vector.load %arg3[%c0_27, %c0_28] : memref<1x128xf32, #tpu.memory_space<vmem>>, vector<1x128xf32>
    %24 = vector.broadcast %23 : vector<1x128xf32> to vector<512x128xf32>
    %25 = arith.addf %22, %24 : vector<512x128xf32>
    %cst_29 = arith.constant 0.000000e+00 : f32
    %26 = vector.broadcast %cst_29 : f32 to vector<512x128xf32>
    %27 = arith.maximumf %25, %26 : vector<512x128xf32>
    %28 = arith.truncf %27 : vector<512x128xf32> to vector<512x128xbf16>
    %29 = vector.shape_cast %28 : vector<512x128xbf16> to vector<8x64x128xbf16>
    %30 = vector.extract_strided_slice %29 {offsets = [0, 0, 0], sizes = [8, 1, 128], strides = [1, 1, 1]} : vector<8x64x128xbf16> to vector<8x1x128xbf16>
    %31 = vector.shape_cast %30 : vector<8x1x128xbf16> to vector<8x128xbf16>
    %32 = vector.extract_strided_slice %29 {offsets = [0, 1, 0], sizes = [8, 1, 128], strides = [1, 1, 1]} : vector<8x64x128xbf16> to vector<8x1x128xbf16>
    %33 = vector.shape_cast %32 : vector<8x1x128xbf16> to vector<8x128xbf16>
    %34 = vector.extract_strided_slice %29 {offsets = [0, 2, 0], sizes = [8, 1, 128], strides = [1, 1, 1]} : vector<8x64x128xbf16> to vector<8x1x128xbf16>
    %35 = vector.shape_cast %34 : vector<8x1x128xbf16> to vector<8x128xbf16>
    %36 = vector.extract_strided_slice %29 {offsets = [0, 3, 0], sizes = [8, 1, 128], strides = [1, 1, 1]} : vector<8x64x128xbf16> to vector<8x1x128xbf16>
    %37 = vector.shape_cast %36 : vector<8x1x128xbf16> to vector<8x128xbf16>
    %38 = vector.extract_strided_slice %29 {offsets = [0, 4, 0], sizes = [8, 1, 128], strides = [1, 1, 1]} : vector<8x64x128xbf16> to vector<8x1x128xbf16>
    %39 = vector.shape_cast %38 : vector<8x1x128xbf16> to vector<8x128xbf16>
    %40 = vector.extract_strided_slice %29 {offsets = [0, 5, 0], sizes = [8, 1, 128], strides = [1, 1, 1]} : vector<8x64x128xbf16> to vector<8x1x128xbf16>
    %41 = vector.shape_cast %40 : vector<8x1x128xbf16> to vector<8x128xbf16>
    %42 = vector.extract_strided_slice %29 {offsets = [0, 6, 0], sizes = [8, 1, 128], strides = [1, 1, 1]} : vector<8x64x128xbf16> to vector<8x1x128xbf16>
    %43 = vector.shape_cast %42 : vector<8x1x128xbf16> to vector<8x128xbf16>
    %44 = vector.extract_strided_slice %29 {offsets = [0, 7, 0], sizes = [8, 1, 128], strides = [1, 1, 1]} : vector<8x64x128xbf16> to vector<8x1x128xbf16>
    %45 = vector.shape_cast %44 : vector<8x1x128xbf16> to vector<8x128xbf16>
    %46 = vector.extract_strided_slice %29 {offsets = [0, 8, 0], sizes = [8, 1, 128], strides = [1, 1, 1]} : vector<8x64x128xbf16> to vector<8x1x128xbf16>
    %47 = vector.shape_cast %46 : vector<8x1x128xbf16> to vector<8x128xbf16>
    %48 = vector.extract_strided_slice %29 {offsets = [0, 9, 0], sizes = [8, 1, 128], strides = [1, 1, 1]} : vector<8x64x128xbf16> to vector<8x1x128xbf16>
    %49 = vector.shape_cast %48 : vector<8x1x128xbf16> to vector<8x128xbf16>
    %50 = vector.extract_strided_slice %29 {offsets = [0, 10, 0], sizes = [8, 1, 128], strides = [1, 1, 1]} : vector<8x64x128xbf16> to vector<8x1x128xbf16>
    %51 = vector.shape_cast %50 : vector<8x1x128xbf16> to vector<8x128xbf16>
    %52 = vector.extract_strided_slice %29 {offsets = [0, 11, 0], sizes = [8, 1, 128], strides = [1, 1, 1]} : vector<8x64x128xbf16> to vector<8x1x128xbf16>
    %53 = vector.shape_cast %52 : vector<8x1x128xbf16> to vector<8x128xbf16>
    %54 = vector.extract_strided_slice %29 {offsets = [0, 12, 0], sizes = [8, 1, 128], strides = [1, 1, 1]} : vector<8x64x128xbf16> to vector<8x1x128xbf16>
    %55 = vector.shape_cast %54 : vector<8x1x128xbf16> to vector<8x128xbf16>
    %56 = vector.extract_strided_slice %29 {offsets = [0, 13, 0], sizes = [8, 1, 128], strides = [1, 1, 1]} : vector<8x64x128xbf16> to vector<8x1x128xbf16>
    %57 = vector.shape_cast %56 : vector<8x1x128xbf16> to vector<8x128xbf16>
    %58 = vector.extract_strided_slice %29 {offsets = [0, 14, 0], sizes = [8, 1, 128], strides = [1, 1, 1]} : vector<8x64x128xbf16> to vector<8x1x128xbf16>
    %59 = vector.shape_cast %58 : vector<8x1x128xbf16> to vector<8x128xbf16>
    %60 = vector.extract_strided_slice %29 {offsets = [0, 15, 0], sizes = [8, 1, 128], strides = [1, 1, 1]} : vector<8x64x128xbf16> to vector<8x1x128xbf16>
    %61 = vector.shape_cast %60 : vector<8x1x128xbf16> to vector<8x128xbf16>
    %62 = vector.extract_strided_slice %29 {offsets = [0, 16, 0], sizes = [8, 1, 128], strides = [1, 1, 1]} : vector<8x64x128xbf16> to vector<8x1x128xbf16>
    %63 = vector.shape_cast %62 : vector<8x1x128xbf16> to vector<8x128xbf16>
    %64 = vector.extract_strided_slice %29 {offsets = [0, 17, 0], sizes = [8, 1, 128], strides = [1, 1, 1]} : vector<8x64x128xbf16> to vector<8x1x128xbf16>
    %65 = vector.shape_cast %64 : vector<8x1x128xbf16> to vector<8x128xbf16>
    %66 = vector.extract_strided_slice %29 {offsets = [0, 18, 0], sizes = [8, 1, 128], strides = [1, 1, 1]} : vector<8x64x128xbf16> to vector<8x1x128xbf16>
    %67 = vector.shape_cast %66 : vector<8x1x128xbf16> to vector<8x128xbf16>
    %68 = vector.extract_strided_slice %29 {offsets = [0, 19, 0], sizes = [8, 1, 128], strides = [1, 1, 1]} : vector<8x64x128xbf16> to vector<8x1x128xbf16>
    %69 = vector.shape_cast %68 : vector<8x1x128xbf16> to vector<8x128xbf16>
    %70 = vector.extract_strided_slice %29 {offsets = [0, 20, 0], sizes = [8, 1, 128], strides = [1, 1, 1]} : vector<8x64x128xbf16> to vector<8x1x128xbf16>
    %71 = vector.shape_cast %70 : vector<8x1x128xbf16> to vector<8x128xbf16>
    %72 = vector.extract_strided_slice %29 {offsets = [0, 21, 0], sizes = [8, 1, 128], strides = [1, 1, 1]} : vector<8x64x128xbf16> to vector<8x1x128xbf16>
    %73 = vector.shape_cast %72 : vector<8x1x128xbf16> to vector<8x128xbf16>
    %74 = vector.extract_strided_slice %29 {offsets = [0, 22, 0], sizes = [8, 1, 128], strides = [1, 1, 1]} : vector<8x64x128xbf16> to vector<8x1x128xbf16>
    %75 = vector.shape_cast %74 : vector<8x1x128xbf16> to vector<8x128xbf16>
    %76 = vector.extract_strided_slice %29 {offsets = [0, 23, 0], sizes = [8, 1, 128], strides = [1, 1, 1]} : vector<8x64x128xbf16> to vector<8x1x128xbf16>
    %77 = vector.shape_cast %76 : vector<8x1x128xbf16> to vector<8x128xbf16>
    %78 = vector.extract_strided_slice %29 {offsets = [0, 24, 0], sizes = [8, 1, 128], strides = [1, 1, 1]} : vector<8x64x128xbf16> to vector<8x1x128xbf16>
    %79 = vector.shape_cast %78 : vector<8x1x128xbf16> to vector<8x128xbf16>
    %80 = vector.extract_strided_slice %29 {offsets = [0, 25, 0], sizes = [8, 1, 128], strides = [1, 1, 1]} : vector<8x64x128xbf16> to vector<8x1x128xbf16>
    %81 = vector.shape_cast %80 : vector<8x1x128xbf16> to vector<8x128xbf16>
    %82 = vector.extract_strided_slice %29 {offsets = [0, 26, 0], sizes = [8, 1, 128], strides = [1, 1, 1]} : vector<8x64x128xbf16> to vector<8x1x128xbf16>
    %83 = vector.shape_cast %82 : vector<8x1x128xbf16> to vector<8x128xbf16>
    %84 = vector.extract_strided_slice %29 {offsets = [0, 27, 0], sizes = [8, 1, 128], strides = [1, 1, 1]} : vector<8x64x128xbf16> to vector<8x1x128xbf16>
    %85 = vector.shape_cast %84 : vector<8x1x128xbf16> to vector<8x128xbf16>
    %86 = vector.extract_strided_slice %29 {offsets = [0, 28, 0], sizes = [8, 1, 128], strides = [1, 1, 1]} : vector<8x64x128xbf16> to vector<8x1x128xbf16>
    %87 = vector.shape_cast %86 : vector<8x1x128xbf16> to vector<8x128xbf16>
    %88 = vector.extract_strided_slice %29 {offsets = [0, 29, 0], sizes = [8, 1, 128], strides = [1, 1, 1]} : vector<8x64x128xbf16> to vector<8x1x128xbf16>
    %89 = vector.shape_cast %88 : vector<8x1x128xbf16> to vector<8x128xbf16>
    %90 = vector.extract_strided_slice %29 {offsets = [0, 30, 0], sizes = [8, 1, 128], strides = [1, 1, 1]} : vector<8x64x128xbf16> to vector<8x1x128xbf16>
    %91 = vector.shape_cast %90 : vector<8x1x128xbf16> to vector<8x128xbf16>
    %92 = vector.extract_strided_slice %29 {offsets = [0, 31, 0], sizes = [8, 1, 128], strides = [1, 1, 1]} : vector<8x64x128xbf16> to vector<8x1x128xbf16>
    %93 = vector.shape_cast %92 : vector<8x1x128xbf16> to vector<8x128xbf16>
    %94 = vector.extract_strided_slice %29 {offsets = [0, 32, 0], sizes = [8, 1, 128], strides = [1, 1, 1]} : vector<8x64x128xbf16> to vector<8x1x128xbf16>
    %95 = vector.shape_cast %94 : vector<8x1x128xbf16> to vector<8x128xbf16>
    %96 = vector.extract_strided_slice %29 {offsets = [0, 33, 0], sizes = [8, 1, 128], strides = [1, 1, 1]} : vector<8x64x128xbf16> to vector<8x1x128xbf16>
    %97 = vector.shape_cast %96 : vector<8x1x128xbf16> to vector<8x128xbf16>
    %98 = vector.extract_strided_slice %29 {offsets = [0, 34, 0], sizes = [8, 1, 128], strides = [1, 1, 1]} : vector<8x64x128xbf16> to vector<8x1x128xbf16>
    %99 = vector.shape_cast %98 : vector<8x1x128xbf16> to vector<8x128xbf16>
    %100 = vector.extract_strided_slice %29 {offsets = [0, 35, 0], sizes = [8, 1, 128], strides = [1, 1, 1]} : vector<8x64x128xbf16> to vector<8x1x128xbf16>
    %101 = vector.shape_cast %100 : vector<8x1x128xbf16> to vector<8x128xbf16>
    %102 = vector.extract_strided_slice %29 {offsets = [0, 36, 0], sizes = [8, 1, 128], strides = [1, 1, 1]} : vector<8x64x128xbf16> to vector<8x1x128xbf16>
    %103 = vector.shape_cast %102 : vector<8x1x128xbf16> to vector<8x128xbf16>
    %104 = vector.extract_strided_slice %29 {offsets = [0, 37, 0], sizes = [8, 1, 128], strides = [1, 1, 1]} : vector<8x64x128xbf16> to vector<8x1x128xbf16>
    %105 = vector.shape_cast %104 : vector<8x1x128xbf16> to vector<8x128xbf16>
    %106 = vector.extract_strided_slice %29 {offsets = [0, 38, 0], sizes = [8, 1, 128], strides = [1, 1, 1]} : vector<8x64x128xbf16> to vector<8x1x128xbf16>
    %107 = vector.shape_cast %106 : vector<8x1x128xbf16> to vector<8x128xbf16>
    %108 = vector.extract_strided_slice %29 {offsets = [0, 39, 0], sizes = [8, 1, 128], strides = [1, 1, 1]} : vector<8x64x128xbf16> to vector<8x1x128xbf16>
    %109 = vector.shape_cast %108 : vector<8x1x128xbf16> to vector<8x128xbf16>
    %110 = vector.extract_strided_slice %29 {offsets = [0, 40, 0], sizes = [8, 1, 128], strides = [1, 1, 1]} : vector<8x64x128xbf16> to vector<8x1x128xbf16>
    %111 = vector.shape_cast %110 : vector<8x1x128xbf16> to vector<8x128xbf16>
    %112 = vector.extract_strided_slice %29 {offsets = [0, 41, 0], sizes = [8, 1, 128], strides = [1, 1, 1]} : vector<8x64x128xbf16> to vector<8x1x128xbf16>
    %113 = vector.shape_cast %112 : vector<8x1x128xbf16> to vector<8x128xbf16>
    %114 = vector.extract_strided_slice %29 {offsets = [0, 42, 0], sizes = [8, 1, 128], strides = [1, 1, 1]} : vector<8x64x128xbf16> to vector<8x1x128xbf16>
    %115 = vector.shape_cast %114 : vector<8x1x128xbf16> to vector<8x128xbf16>
    %116 = vector.extract_strided_slice %29 {offsets = [0, 43, 0], sizes = [8, 1, 128], strides = [1, 1, 1]} : vector<8x64x128xbf16> to vector<8x1x128xbf16>
    %117 = vector.shape_cast %116 : vector<8x1x128xbf16> to vector<8x128xbf16>
    %118 = vector.extract_strided_slice %29 {offsets = [0, 44, 0], sizes = [8, 1, 128], strides = [1, 1, 1]} : vector<8x64x128xbf16> to vector<8x1x128xbf16>
    %119 = vector.shape_cast %118 : vector<8x1x128xbf16> to vector<8x128xbf16>
    %120 = vector.extract_strided_slice %29 {offsets = [0, 45, 0], sizes = [8, 1, 128], strides = [1, 1, 1]} : vector<8x64x128xbf16> to vector<8x1x128xbf16>
    %121 = vector.shape_cast %120 : vector<8x1x128xbf16> to vector<8x128xbf16>
    %122 = vector.extract_strided_slice %29 {offsets = [0, 46, 0], sizes = [8, 1, 128], strides = [1, 1, 1]} : vector<8x64x128xbf16> to vector<8x1x128xbf16>
    %123 = vector.shape_cast %122 : vector<8x1x128xbf16> to vector<8x128xbf16>
    %124 = vector.extract_strided_slice %29 {offsets = [0, 47, 0], sizes = [8, 1, 128], strides = [1, 1, 1]} : vector<8x64x128xbf16> to vector<8x1x128xbf16>
    %125 = vector.shape_cast %124 : vector<8x1x128xbf16> to vector<8x128xbf16>
    %126 = vector.extract_strided_slice %29 {offsets = [0, 48, 0], sizes = [8, 1, 128], strides = [1, 1, 1]} : vector<8x64x128xbf16> to vector<8x1x128xbf16>
    %127 = vector.shape_cast %126 : vector<8x1x128xbf16> to vector<8x128xbf16>
    %128 = vector.extract_strided_slice %29 {offsets = [0, 49, 0], sizes = [8, 1, 128], strides = [1, 1, 1]} : vector<8x64x128xbf16> to vector<8x1x128xbf16>
    %129 = vector.shape_cast %128 : vector<8x1x128xbf16> to vector<8x128xbf16>
    %130 = vector.extract_strided_slice %29 {offsets = [0, 50, 0], sizes = [8, 1, 128], strides = [1, 1, 1]} : vector<8x64x128xbf16> to vector<8x1x128xbf16>
    %131 = vector.shape_cast %130 : vector<8x1x128xbf16> to vector<8x128xbf16>
    %132 = vector.extract_strided_slice %29 {offsets = [0, 51, 0], sizes = [8, 1, 128], strides = [1, 1, 1]} : vector<8x64x128xbf16> to vector<8x1x128xbf16>
    %133 = vector.shape_cast %132 : vector<8x1x128xbf16> to vector<8x128xbf16>
    %134 = vector.extract_strided_slice %29 {offsets = [0, 52, 0], sizes = [8, 1, 128], strides = [1, 1, 1]} : vector<8x64x128xbf16> to vector<8x1x128xbf16>
    %135 = vector.shape_cast %134 : vector<8x1x128xbf16> to vector<8x128xbf16>
    %136 = vector.extract_strided_slice %29 {offsets = [0, 53, 0], sizes = [8, 1, 128], strides = [1, 1, 1]} : vector<8x64x128xbf16> to vector<8x1x128xbf16>
    %137 = vector.shape_cast %136 : vector<8x1x128xbf16> to vector<8x128xbf16>
    %138 = vector.extract_strided_slice %29 {offsets = [0, 54, 0], sizes = [8, 1, 128], strides = [1, 1, 1]} : vector<8x64x128xbf16> to vector<8x1x128xbf16>
    %139 = vector.shape_cast %138 : vector<8x1x128xbf16> to vector<8x128xbf16>
    %140 = vector.extract_strided_slice %29 {offsets = [0, 55, 0], sizes = [8, 1, 128], strides = [1, 1, 1]} : vector<8x64x128xbf16> to vector<8x1x128xbf16>
    %141 = vector.shape_cast %140 : vector<8x1x128xbf16> to vector<8x128xbf16>
    %142 = vector.extract_strided_slice %29 {offsets = [0, 56, 0], sizes = [8, 1, 128], strides = [1, 1, 1]} : vector<8x64x128xbf16> to vector<8x1x128xbf16>
    %143 = vector.shape_cast %142 : vector<8x1x128xbf16> to vector<8x128xbf16>
    %144 = vector.extract_strided_slice %29 {offsets = [0, 57, 0], sizes = [8, 1, 128], strides = [1, 1, 1]} : vector<8x64x128xbf16> to vector<8x1x128xbf16>
    %145 = vector.shape_cast %144 : vector<8x1x128xbf16> to vector<8x128xbf16>
    %146 = vector.extract_strided_slice %29 {offsets = [0, 58, 0], sizes = [8, 1, 128], strides = [1, 1, 1]} : vector<8x64x128xbf16> to vector<8x1x128xbf16>
    %147 = vector.shape_cast %146 : vector<8x1x128xbf16> to vector<8x128xbf16>
    %148 = vector.extract_strided_slice %29 {offsets = [0, 59, 0], sizes = [8, 1, 128], strides = [1, 1, 1]} : vector<8x64x128xbf16> to vector<8x1x128xbf16>
    %149 = vector.shape_cast %148 : vector<8x1x128xbf16> to vector<8x128xbf16>
    %150 = vector.extract_strided_slice %29 {offsets = [0, 60, 0], sizes = [8, 1, 128], strides = [1, 1, 1]} : vector<8x64x128xbf16> to vector<8x1x128xbf16>
    %151 = vector.shape_cast %150 : vector<8x1x128xbf16> to vector<8x128xbf16>
    %152 = vector.extract_strided_slice %29 {offsets = [0, 61, 0], sizes = [8, 1, 128], strides = [1, 1, 1]} : vector<8x64x128xbf16> to vector<8x1x128xbf16>
    %153 = vector.shape_cast %152 : vector<8x1x128xbf16> to vector<8x128xbf16>
    %154 = vector.extract_strided_slice %29 {offsets = [0, 62, 0], sizes = [8, 1, 128], strides = [1, 1, 1]} : vector<8x64x128xbf16> to vector<8x1x128xbf16>
    %155 = vector.shape_cast %154 : vector<8x1x128xbf16> to vector<8x128xbf16>
    %156 = vector.extract_strided_slice %29 {offsets = [0, 63, 0], sizes = [8, 1, 128], strides = [1, 1, 1]} : vector<8x64x128xbf16> to vector<8x1x128xbf16>
    %157 = vector.shape_cast %156 : vector<8x1x128xbf16> to vector<8x128xbf16>
    %c0_30 = arith.constant 0 : index
    %c0_31 = arith.constant 0 : index
    %158 = vector.load %arg4[%c0_30, %c0_31] : memref<2048x256xbf16, #tpu.memory_space<vmem>>, vector<2048x256xbf16>
    %c0_32 = arith.constant 0 : index
    %c0_33 = arith.constant 0 : index
    %159 = vector.load %arg5[%c0_32, %c0_33] : memref<1x256xf32, #tpu.memory_space<vmem>>, vector<1x256xf32>
    %160 = tpu.concatenate %31, %33, %35, %37, %47, %49, %51, %53, %63, %65, %67, %69, %79, %81, %83, %85 in 1 : vector<8x128xbf16>, vector<8x128xbf16>, vector<8x128xbf16>, vector<8x128xbf16>, vector<8x128xbf16>, vector<8x128xbf16>, vector<8x128xbf16>, vector<8x128xbf16>, vector<8x128xbf16>, vector<8x128xbf16>, vector<8x128xbf16>, vector<8x128xbf16>, vector<8x128xbf16>, vector<8x128xbf16>, vector<8x128xbf16>, vector<8x128xbf16> -> vector<8x2048xbf16>
    %cst_34 = arith.constant dense<0.000000e+00> : vector<8x256xf32>
    %161 = tpu.matmul %160, %158, %cst_34 {dimension_numbers = #tpu.dot_dimension_numbers<[1], [0], [0], [1], [0, 0, 1, 1], [], []>} : vector<8x2048xbf16>, vector<2048x256xbf16>, vector<8x256xf32> -> vector<8x256xf32>
    %162 = vector.broadcast %159 : vector<1x256xf32> to vector<8x256xf32>
    %163 = arith.addf %161, %162 : vector<8x256xf32>
    %cst_35 = arith.constant 0.000000e+00 : f32
    %164 = vector.broadcast %cst_35 : f32 to vector<8x256xf32>
    %165 = arith.maximumf %163, %164 : vector<8x256xf32>
    %166 = arith.truncf %165 : vector<8x256xf32> to vector<8x256xbf16>
    %167 = tpu.concatenate %35, %37, %39, %41, %51, %53, %55, %57, %67, %69, %71, %73, %83, %85, %87, %89 in 1 : vector<8x128xbf16>, vector<8x128xbf16>, vector<8x128xbf16>, vector<8x128xbf16>, vector<8x128xbf16>, vector<8x128xbf16>, vector<8x128xbf16>, vector<8x128xbf16>, vector<8x128xbf16>, vector<8x128xbf16>, vector<8x128xbf16>, vector<8x128xbf16>, vector<8x128xbf16>, vector<8x128xbf16>, vector<8x128xbf16>, vector<8x128xbf16> -> vector<8x2048xbf16>
    %cst_36 = arith.constant dense<0.000000e+00> : vector<8x256xf32>
    %168 = tpu.matmul %167, %158, %cst_36 {dimension_numbers = #tpu.dot_dimension_numbers<[1], [0], [0], [1], [0, 0, 1, 1], [], []>} : vector<8x2048xbf16>, vector<2048x256xbf16>, vector<8x256xf32> -> vector<8x256xf32>
    %169 = vector.broadcast %159 : vector<1x256xf32> to vector<8x256xf32>
    %170 = arith.addf %168, %169 : vector<8x256xf32>
    %cst_37 = arith.constant 0.000000e+00 : f32
    %171 = vector.broadcast %cst_37 : f32 to vector<8x256xf32>
    %172 = arith.maximumf %170, %171 : vector<8x256xf32>
    %173 = arith.truncf %172 : vector<8x256xf32> to vector<8x256xbf16>
    %174 = tpu.concatenate %39, %41, %43, %45, %55, %57, %59, %61, %71, %73, %75, %77, %87, %89, %91, %93 in 1 : vector<8x128xbf16>, vector<8x128xbf16>, vector<8x128xbf16>, vector<8x128xbf16>, vector<8x128xbf16>, vector<8x128xbf16>, vector<8x128xbf16>, vector<8x128xbf16>, vector<8x128xbf16>, vector<8x128xbf16>, vector<8x128xbf16>, vector<8x128xbf16>, vector<8x128xbf16>, vector<8x128xbf16>, vector<8x128xbf16>, vector<8x128xbf16> -> vector<8x2048xbf16>
    %cst_38 = arith.constant dense<0.000000e+00> : vector<8x256xf32>
    %175 = tpu.matmul %174, %158, %cst_38 {dimension_numbers = #tpu.dot_dimension_numbers<[1], [0], [0], [1], [0, 0, 1, 1], [], []>} : vector<8x2048xbf16>, vector<2048x256xbf16>, vector<8x256xf32> -> vector<8x256xf32>
    %176 = vector.broadcast %159 : vector<1x256xf32> to vector<8x256xf32>
    %177 = arith.addf %175, %176 : vector<8x256xf32>
    %cst_39 = arith.constant 0.000000e+00 : f32
    %178 = vector.broadcast %cst_39 : f32 to vector<8x256xf32>
    %179 = arith.maximumf %177, %178 : vector<8x256xf32>
    %180 = arith.truncf %179 : vector<8x256xf32> to vector<8x256xbf16>
    %181 = tpu.concatenate %63, %65, %67, %69, %79, %81, %83, %85, %95, %97, %99, %101, %111, %113, %115, %117 in 1 : vector<8x128xbf16>, vector<8x128xbf16>, vector<8x128xbf16>, vector<8x128xbf16>, vector<8x128xbf16>, vector<8x128xbf16>, vector<8x128xbf16>, vector<8x128xbf16>, vector<8x128xbf16>, vector<8x128xbf16>, vector<8x128xbf16>, vector<8x128xbf16>, vector<8x128xbf16>, vector<8x128xbf16>, vector<8x128xbf16>, vector<8x128xbf16> -> vector<8x2048xbf16>
    %cst_40 = arith.constant dense<0.000000e+00> : vector<8x256xf32>
    %182 = tpu.matmul %181, %158, %cst_40 {dimension_numbers = #tpu.dot_dimension_numbers<[1], [0], [0], [1], [0, 0, 1, 1], [], []>} : vector<8x2048xbf16>, vector<2048x256xbf16>, vector<8x256xf32> -> vector<8x256xf32>
    %183 = vector.broadcast %159 : vector<1x256xf32> to vector<8x256xf32>
    %184 = arith.addf %182, %183 : vector<8x256xf32>
    %cst_41 = arith.constant 0.000000e+00 : f32
    %185 = vector.broadcast %cst_41 : f32 to vector<8x256xf32>
    %186 = arith.maximumf %184, %185 : vector<8x256xf32>
    %187 = arith.truncf %186 : vector<8x256xf32> to vector<8x256xbf16>
    %188 = tpu.concatenate %67, %69, %71, %73, %83, %85, %87, %89, %99, %101, %103, %105, %115, %117, %119, %121 in 1 : vector<8x128xbf16>, vector<8x128xbf16>, vector<8x128xbf16>, vector<8x128xbf16>, vector<8x128xbf16>, vector<8x128xbf16>, vector<8x128xbf16>, vector<8x128xbf16>, vector<8x128xbf16>, vector<8x128xbf16>, vector<8x128xbf16>, vector<8x128xbf16>, vector<8x128xbf16>, vector<8x128xbf16>, vector<8x128xbf16>, vector<8x128xbf16> -> vector<8x2048xbf16>
    %cst_42 = arith.constant dense<0.000000e+00> : vector<8x256xf32>
    %189 = tpu.matmul %188, %158, %cst_42 {dimension_numbers = #tpu.dot_dimension_numbers<[1], [0], [0], [1], [0, 0, 1, 1], [], []>} : vector<8x2048xbf16>, vector<2048x256xbf16>, vector<8x256xf32> -> vector<8x256xf32>
    %190 = vector.broadcast %159 : vector<1x256xf32> to vector<8x256xf32>
    %191 = arith.addf %189, %190 : vector<8x256xf32>
    %cst_43 = arith.constant 0.000000e+00 : f32
    %192 = vector.broadcast %cst_43 : f32 to vector<8x256xf32>
    %193 = arith.maximumf %191, %192 : vector<8x256xf32>
    %194 = arith.truncf %193 : vector<8x256xf32> to vector<8x256xbf16>
    %195 = tpu.concatenate %71, %73, %75, %77, %87, %89, %91, %93, %103, %105, %107, %109, %119, %121, %123, %125 in 1 : vector<8x128xbf16>, vector<8x128xbf16>, vector<8x128xbf16>, vector<8x128xbf16>, vector<8x128xbf16>, vector<8x128xbf16>, vector<8x128xbf16>, vector<8x128xbf16>, vector<8x128xbf16>, vector<8x128xbf16>, vector<8x128xbf16>, vector<8x128xbf16>, vector<8x128xbf16>, vector<8x128xbf16>, vector<8x128xbf16>, vector<8x128xbf16> -> vector<8x2048xbf16>
    %cst_44 = arith.constant dense<0.000000e+00> : vector<8x256xf32>
    %196 = tpu.matmul %195, %158, %cst_44 {dimension_numbers = #tpu.dot_dimension_numbers<[1], [0], [0], [1], [0, 0, 1, 1], [], []>} : vector<8x2048xbf16>, vector<2048x256xbf16>, vector<8x256xf32> -> vector<8x256xf32>
    %197 = vector.broadcast %159 : vector<1x256xf32> to vector<8x256xf32>
    %198 = arith.addf %196, %197 : vector<8x256xf32>
    %cst_45 = arith.constant 0.000000e+00 : f32
    %199 = vector.broadcast %cst_45 : f32 to vector<8x256xf32>
    %200 = arith.maximumf %198, %199 : vector<8x256xf32>
    %201 = arith.truncf %200 : vector<8x256xf32> to vector<8x256xbf16>
    %202 = tpu.concatenate %95, %97, %99, %101, %111, %113, %115, %117, %127, %129, %131, %133, %143, %145, %147, %149 in 1 : vector<8x128xbf16>, vector<8x128xbf16>, vector<8x128xbf16>, vector<8x128xbf16>, vector<8x128xbf16>, vector<8x128xbf16>, vector<8x128xbf16>, vector<8x128xbf16>, vector<8x128xbf16>, vector<8x128xbf16>, vector<8x128xbf16>, vector<8x128xbf16>, vector<8x128xbf16>, vector<8x128xbf16>, vector<8x128xbf16>, vector<8x128xbf16> -> vector<8x2048xbf16>
    %cst_46 = arith.constant dense<0.000000e+00> : vector<8x256xf32>
    %203 = tpu.matmul %202, %158, %cst_46 {dimension_numbers = #tpu.dot_dimension_numbers<[1], [0], [0], [1], [0, 0, 1, 1], [], []>} : vector<8x2048xbf16>, vector<2048x256xbf16>, vector<8x256xf32> -> vector<8x256xf32>
    %204 = vector.broadcast %159 : vector<1x256xf32> to vector<8x256xf32>
    %205 = arith.addf %203, %204 : vector<8x256xf32>
    %cst_47 = arith.constant 0.000000e+00 : f32
    %206 = vector.broadcast %cst_47 : f32 to vector<8x256xf32>
    %207 = arith.maximumf %205, %206 : vector<8x256xf32>
    %208 = arith.truncf %207 : vector<8x256xf32> to vector<8x256xbf16>
    %209 = tpu.concatenate %99, %101, %103, %105, %115, %117, %119, %121, %131, %133, %135, %137, %147, %149, %151, %153 in 1 : vector<8x128xbf16>, vector<8x128xbf16>, vector<8x128xbf16>, vector<8x128xbf16>, vector<8x128xbf16>, vector<8x128xbf16>, vector<8x128xbf16>, vector<8x128xbf16>, vector<8x128xbf16>, vector<8x128xbf16>, vector<8x128xbf16>, vector<8x128xbf16>, vector<8x128xbf16>, vector<8x128xbf16>, vector<8x128xbf16>, vector<8x128xbf16> -> vector<8x2048xbf16>
    %cst_48 = arith.constant dense<0.000000e+00> : vector<8x256xf32>
    %210 = tpu.matmul %209, %158, %cst_48 {dimension_numbers = #tpu.dot_dimension_numbers<[1], [0], [0], [1], [0, 0, 1, 1], [], []>} : vector<8x2048xbf16>, vector<2048x256xbf16>, vector<8x256xf32> -> vector<8x256xf32>
    %211 = vector.broadcast %159 : vector<1x256xf32> to vector<8x256xf32>
    %212 = arith.addf %210, %211 : vector<8x256xf32>
    %cst_49 = arith.constant 0.000000e+00 : f32
    %213 = vector.broadcast %cst_49 : f32 to vector<8x256xf32>
    %214 = arith.maximumf %212, %213 : vector<8x256xf32>
    %215 = arith.truncf %214 : vector<8x256xf32> to vector<8x256xbf16>
    %216 = tpu.concatenate %103, %105, %107, %109, %119, %121, %123, %125, %135, %137, %139, %141, %151, %153, %155, %157 in 1 : vector<8x128xbf16>, vector<8x128xbf16>, vector<8x128xbf16>, vector<8x128xbf16>, vector<8x128xbf16>, vector<8x128xbf16>, vector<8x128xbf16>, vector<8x128xbf16>, vector<8x128xbf16>, vector<8x128xbf16>, vector<8x128xbf16>, vector<8x128xbf16>, vector<8x128xbf16>, vector<8x128xbf16>, vector<8x128xbf16>, vector<8x128xbf16> -> vector<8x2048xbf16>
    %cst_50 = arith.constant dense<0.000000e+00> : vector<8x256xf32>
    %217 = tpu.matmul %216, %158, %cst_50 {dimension_numbers = #tpu.dot_dimension_numbers<[1], [0], [0], [1], [0, 0, 1, 1], [], []>} : vector<8x2048xbf16>, vector<2048x256xbf16>, vector<8x256xf32> -> vector<8x256xf32>
    %218 = vector.broadcast %159 : vector<1x256xf32> to vector<8x256xf32>
    %219 = arith.addf %217, %218 : vector<8x256xf32>
    %cst_51 = arith.constant 0.000000e+00 : f32
    %220 = vector.broadcast %cst_51 : f32 to vector<8x256xf32>
    %221 = arith.maximumf %219, %220 : vector<8x256xf32>
    %222 = arith.truncf %221 : vector<8x256xf32> to vector<8x256xbf16>
    %c0_52 = arith.constant 0 : index
    %c0_53 = arith.constant 0 : index
    %223 = vector.load %arg6[%c0_52, %c0_53] : memref<2304x128xbf16, #tpu.memory_space<vmem>>, vector<2304x128xbf16>
    %c0_54 = arith.constant 0 : index
    %c0_55 = arith.constant 0 : index
    %224 = vector.load %arg7[%c0_54, %c0_55] : memref<1x128xf32, #tpu.memory_space<vmem>>, vector<1x128xf32>
    %225 = tpu.concatenate %166, %173, %180, %187, %194, %201, %208, %215, %222 in 1 : vector<8x256xbf16>, vector<8x256xbf16>, vector<8x256xbf16>, vector<8x256xbf16>, vector<8x256xbf16>, vector<8x256xbf16>, vector<8x256xbf16>, vector<8x256xbf16>, vector<8x256xbf16> -> vector<8x2304xbf16>
    %cst_56 = arith.constant dense<0.000000e+00> : vector<8x128xf32>
    %226 = tpu.matmul %225, %223, %cst_56 {dimension_numbers = #tpu.dot_dimension_numbers<[1], [0], [0], [1], [0, 0, 1, 1], [], []>} : vector<8x2304xbf16>, vector<2304x128xbf16>, vector<8x128xf32> -> vector<8x128xf32>
    %227 = vector.broadcast %224 : vector<1x128xf32> to vector<8x128xf32>
    %228 = arith.addf %226, %227 : vector<8x128xf32>
    %cst_57 = arith.constant 0.000000e+00 : f32
    %229 = vector.broadcast %cst_57 : f32 to vector<8x128xf32>
    %230 = arith.maximumf %228, %229 : vector<8x128xf32>
    %231 = arith.truncf %230 : vector<8x128xf32> to vector<8x128xbf16>
    %c0_58 = arith.constant 0 : index
    %c0_59 = arith.constant 0 : index
    %232 = vector.load %arg8[%c0_58, %c0_59] : memref<128x512xbf16, #tpu.memory_space<vmem>>, vector<128x512xbf16>
    %cst_60 = arith.constant dense<0.000000e+00> : vector<8x512xf32>
    %233 = tpu.matmul %231, %232, %cst_60 {dimension_numbers = #tpu.dot_dimension_numbers<[1], [0], [0], [1], [0, 0, 1, 1], [], []>} : vector<8x128xbf16>, vector<128x512xbf16>, vector<8x512xf32> -> vector<8x512xf32>
    %c0_61 = arith.constant 0 : index
    %c0_62 = arith.constant 0 : index
    %234 = vector.load %arg9[%c0_61, %c0_62] : memref<1x512xf32, #tpu.memory_space<vmem>>, vector<1x512xf32>
    %235 = vector.broadcast %234 : vector<1x512xf32> to vector<8x512xf32>
    %236 = arith.addf %233, %235 : vector<8x512xf32>
    %cst_63 = arith.constant 0.000000e+00 : f32
    %237 = vector.broadcast %cst_63 : f32 to vector<8x512xf32>
    %238 = arith.maximumf %236, %237 : vector<8x512xf32>
    %239 = arith.truncf %238 : vector<8x512xf32> to vector<8x512xbf16>
    %c0_64 = arith.constant 0 : index
    %c0_65 = arith.constant 0 : index
    %240 = vector.load %arg10[%c0_64, %c0_65] : memref<512x128xbf16, #tpu.memory_space<vmem>>, vector<512x128xbf16>
    %cst_66 = arith.constant dense<0.000000e+00> : vector<8x128xf32>
    %241 = tpu.matmul %239, %240, %cst_66 {dimension_numbers = #tpu.dot_dimension_numbers<[1], [0], [0], [1], [0, 0, 1, 1], [], []>} : vector<8x512xbf16>, vector<512x128xbf16>, vector<8x128xf32> -> vector<8x128xf32>
    %c0_67 = arith.constant 0 : index
    %c0_68 = arith.constant 0 : index
    %242 = vector.load %arg11[%c0_67, %c0_68] : memref<1x128xf32, #tpu.memory_space<vmem>>, vector<1x128xf32>
    %243 = vector.broadcast %242 : vector<1x128xf32> to vector<8x128xf32>
    %244 = arith.addf %241, %243 : vector<8x128xf32>
    %c0_69 = arith.constant 0 : index
    %c0_70 = arith.constant 0 : index
    %245 = vector.load %arg12[%c0_69, %c0_70] : memref<8x128xf32, #tpu.memory_space<vmem>>, vector<8x128xf32>
    tpu.vector_store %arg12[%c0_69, %c0_70], %244 {strides = array<i32>} : memref<8x128xf32, #tpu.memory_space<vmem>>, vector<8x128xf32>,
    return
  }
  func.func @transform_0(%arg0: i32) -> (i32, i32, i32, i32) {
    %c0_i32 = arith.constant 0 : i32
    %c0_i32_0 = arith.constant 0 : i32
    %c0_i32_1 = arith.constant 0 : i32
    %c0_i32_2 = arith.constant 0 : i32
    return %arg0, %c0_i32, %c0_i32_0, %c0_i32_1 : i32, i32, i32, i32
  }
  func.func @transform_1(%arg0: i32) -> (i32, i32, i32) {
    %c0_i32 = arith.constant 0 : i32
    %c0_i32_0 = arith.constant 0 : i32
    %c0_i32_1 = arith.constant 0 : i32
    %c0_i32_2 = arith.constant 0 : i32
    return %c0_i32, %c0_i32_0, %c0_i32_1 : i32, i32, i32
  }
  func.func @transform_2(%arg0: i32) -> (i32, i32) {
    %c0_i32 = arith.constant 0 : i32
    %c0_i32_0 = arith.constant 0 : i32
    %c0_i32_1 = arith.constant 0 : i32
    return %c0_i32, %c0_i32_0 : i32, i32
  }
  func.func @transform_3(%arg0: i32) -> (i32, i32) {
    %c0_i32 = arith.constant 0 : i32
    %c0_i32_0 = arith.constant 0 : i32
    %c0_i32_1 = arith.constant 0 : i32
    return %c0_i32, %c0_i32_0 : i32, i32
  }
  func.func @transform_4(%arg0: i32) -> (i32, i32) {
    %c0_i32 = arith.constant 0 : i32
    %c0_i32_0 = arith.constant 0 : i32
    %c0_i32_1 = arith.constant 0 : i32
    return %c0_i32, %c0_i32_0 : i32, i32
  }
  func.func @transform_5(%arg0: i32) -> (i32, i32) {
    %c0_i32 = arith.constant 0 : i32
    %c0_i32_0 = arith.constant 0 : i32
    %c0_i32_1 = arith.constant 0 : i32
    return %c0_i32, %c0_i32_0 : i32, i32
  }
  func.func @transform_6(%arg0: i32) -> (i32, i32) {
    %c0_i32 = arith.constant 0 : i32
    %c0_i32_0 = arith.constant 0 : i32
    %c0_i32_1 = arith.constant 0 : i32
    return %c0_i32, %c0_i32_0 : i32, i32
  }
  func.func @transform_7(%arg0: i32) -> (i32, i32) {
    %c0_i32 = arith.constant 0 : i32
    %c0_i32_0 = arith.constant 0 : i32
    %c0_i32_1 = arith.constant 0 : i32
    return %c0_i32, %c0_i32_0 : i32, i32
  }
  func.func @transform_8(%arg0: i32) -> (i32, i32) {
    %c0_i32 = arith.constant 0 : i32
    %c0_i32_0 = arith.constant 0 : i32
    %c0_i32_1 = arith.constant 0 : i32
    return %c0_i32, %c0_i32_0 : i32, i32
  }
  func.func @transform_9(%arg0: i32) -> (i32, i32) {
    %c0_i32 = arith.constant 0 : i32
    %c0_i32_0 = arith.constant 0 : i32
    %c0_i32_1 = arith.constant 0 : i32
    return %c0_i32, %c0_i32_0 : i32, i32
  }
  func.func @transform_10(%arg0: i32) -> (i32, i32) {
    %c0_i32 = arith.constant 0 : i32
    %c0_i32_0 = arith.constant 0 : i32
    %c0_i32_1 = arith.constant 0 : i32
    return %c0_i32, %c0_i32_0 : i32, i32
  }
  func.func @transform_11(%arg0: i32) -> (i32, i32) {
    %c0_i32 = arith.constant 0 : i32
    %c0_i32_0 = arith.constant 0 : i32
    return %arg0, %c0_i32 : i32, i32
  }
}

</mosaic_0001>

<llo_original>
// kernel: cnn_model_forward.1
$region0: #{cnn_model_forward.1}
  #allocation0 [shape = 'u32[]', space=smem, size = 0x4, offset = 0x4, fixed_abs, tag = 'smem constant byte address 0x4 - core index']
  #allocation1 [shape = 'u32[144,128]{1,0:T(1,128)}', space=vmem, size = 0x12000, scoped, tag = 'internal scratch']
  %s0 = inlined_call_operand.vmem [shape: bf16[8,9,9,64], index: 0, kind: input, shape index: {}]
  %s1 = inlined_call_operand.vmem [shape: bf16[4,64,128], index: 1, kind: input, shape index: {}]
  %s2 = inlined_call_operand.vmem [shape: f32[1,128], index: 2, kind: input, shape index: {}]
  %s3 = inlined_call_operand.vmem [shape: bf16[2048,256], index: 3, kind: input, shape index: {}]
  %s4 = inlined_call_operand.vmem [shape: f32[1,256], index: 4, kind: input, shape index: {}]
  %s5 = inlined_call_operand.vmem [shape: bf16[2304,128], index: 5, kind: input, shape index: {}]
  %s6 = inlined_call_operand.vmem [shape: f32[1,128], index: 6, kind: input, shape index: {}]
  %s7 = inlined_call_operand.vmem [shape: bf16[128,512], index: 7, kind: input, shape index: {}]
  %s8 = inlined_call_operand.vmem [shape: f32[1,512], index: 8, kind: input, shape index: {}]
  %s9 = inlined_call_operand.vmem [shape: bf16[512,128], index: 9, kind: input, shape index: {}]
  %s10 = inlined_call_operand.vmem [shape: f32[1,128], index: 10, kind: input, shape index: {}]
  %s11 = inlined_call_operand.vmem [shape: f32[8,128], index: 11, kind: output, shape index: {}]
  %s12 = sld [smem:[#allocation0]]
  $region54: #{cnn_model_forward.1} parent=0
    _
  %s14 = ssub.s32 1, %s12
  %s15 = scalar_select 0, %s14, %s12
  // Predicated region
  $region2: #{cnn_model_forward.1} parent=0 // pred_check
    _
  $region3: #{cnn_model_forward.1} parent=0 // pred_check_branch
    %17 = sbr.rel (0) target = $region5
  $region4: #{cnn_model_forward.1} parent=0 // pred_region
    _
  $region5: #{cnn_model_forward.1} parent=0 // pred_fallthru
    _
  // Predicated region
  $region6: #{cnn_model_forward.1} parent=0 // pred_check
    _
  $region7: #{cnn_model_forward.1} parent=0 // pred_check_branch
    %19 = sbr.rel (0) target = $region9
  $region8: #{cnn_model_forward.1} parent=0 // pred_region
    _
  $region9: #{cnn_model_forward.1} parent=0 // pred_fallthru
    _
  // Predicated region
  $region10: #{cnn_model_forward.1} parent=0 // pred_check
    _
  $region11: #{cnn_model_forward.1} parent=0 // pred_check_branch
    %21 = sbr.rel (0) target = $region13
  $region12: #{cnn_model_forward.1} parent=0 // pred_region
    _
  $region13: #{cnn_model_forward.1} parent=0 // pred_fallthru
    _
  // Predicated region
  $region14: #{cnn_model_forward.1} parent=0 // pred_check
    _
  $region15: #{cnn_model_forward.1} parent=0 // pred_check_branch
    %23 = sbr.rel (0) target = $region17
  $region16: #{cnn_model_forward.1} parent=0 // pred_region
    _
  $region17: #{cnn_model_forward.1} parent=0 // pred_fallthru
    _
  // Predicated region
  $region18: #{cnn_model_forward.1} parent=0 // pred_check
    _
  $region19: #{cnn_model_forward.1} parent=0 // pred_check_branch
    %25 = sbr.rel (0) target = $region21
  $region20: #{cnn_model_forward.1} parent=0 // pred_region
    _
  $region21: #{cnn_model_forward.1} parent=0 // pred_fallthru
    _
  // Predicated region
  $region22: #{cnn_model_forward.1} parent=0 // pred_check
    _
  $region23: #{cnn_model_forward.1} parent=0 // pred_check_branch
    %27 = sbr.rel (0) target = $region25
  $region24: #{cnn_model_forward.1} parent=0 // pred_region
    _
  $region25: #{cnn_model_forward.1} parent=0 // pred_fallthru
    _
  // Predicated region
  $region26: #{cnn_model_forward.1} parent=0 // pred_check
    _
  $region27: #{cnn_model_forward.1} parent=0 // pred_check_branch
    %29 = sbr.rel (0) target = $region29
  $region28: #{cnn_model_forward.1} parent=0 // pred_region
    _
  $region29: #{cnn_model_forward.1} parent=0 // pred_fallthru
    _
  // Predicated region
  $region30: #{cnn_model_forward.1} parent=0 // pred_check
    _
  $region31: #{cnn_model_forward.1} parent=0 // pred_check_branch
    %31 = sbr.rel (0) target = $region33
  $region32: #{cnn_model_forward.1} parent=0 // pred_region
    _
  $region33: #{cnn_model_forward.1} parent=0 // pred_fallthru
    _
  // Predicated region
  $region34: #{cnn_model_forward.1} parent=0 // pred_check
    _
  $region35: #{cnn_model_forward.1} parent=0 // pred_check_branch
    %33 = sbr.rel (0) target = $region37
  $region36: #{cnn_model_forward.1} parent=0 // pred_region
    _
  $region37: #{cnn_model_forward.1} parent=0 // pred_fallthru
    _
  // Predicated region
  $region38: #{cnn_model_forward.1} parent=0 // pred_check
    _
  $region39: #{cnn_model_forward.1} parent=0 // pred_check_branch
    %35 = sbr.rel (0) target = $region41
  $region40: #{cnn_model_forward.1} parent=0 // pred_region
    _
  $region41: #{cnn_model_forward.1} parent=0 // pred_fallthru
    _
  // Predicated region
  $region42: #{cnn_model_forward.1} parent=0 // pred_check
    _
  $region43: #{cnn_model_forward.1} parent=0 // pred_check_branch
    %37 = sbr.rel (0) target = $region45
  $region44: #{cnn_model_forward.1} parent=0 // pred_region
    _
  $region45: #{cnn_model_forward.1} parent=0 // pred_fallthru
    _
  %v39 = vld [vmem:[%s0] sm:$0xf]
  %v40 = vld [vmem:[%s0 + $0x8] sm:$0xf]
  %v41 = vld [vmem:[%s0 + $0x10] sm:$0xf]
  %v42 = vld [vmem:[%s0 + $0x18] sm:$0xf]
  %v43 = vld [vmem:[%s0 + $0x20] sm:$0xf]
  %v44 = vld [vmem:[%s0 + $0x28] sm:$0xf]
  %v45 = vld [vmem:[%s0 + $0x30] sm:$0xf]
  %v46 = vld [vmem:[%s0 + $0x38] sm:$0xf]
  %v47 = vld [vmem:[%s0 + $0x48] sm:$0xf]
  %v48 = vld [vmem:[%s0 + $0x50] sm:$0xf]
  %v49 = vld [vmem:[%s0 + $0x58] sm:$0xf]
  %v50 = vld [vmem:[%s0 + $0x60] sm:$0xf]
  %v51 = vld [vmem:[%s0 + $0x68] sm:$0xf]
  %v52 = vld [vmem:[%s0 + $0x70] sm:$0xf]
  %v53 = vld [vmem:[%s0 + $0x78] sm:$0xf]
  %v54 = vld [vmem:[%s0 + $0x80] sm:$0xf]
  %v55 = vld [vmem:[%s0 + $0x90] sm:$0xf]
  %v56 = vld [vmem:[%s0 + $0x98] sm:$0xf]
  %v57 = vld [vmem:[%s0 + $0xa0] sm:$0xf]
  %v58 = vld [vmem:[%s0 + $0xa8] sm:$0xf]
  %v59 = vld [vmem:[%s0 + $0xb0] sm:$0xf]
  %v60 = vld [vmem:[%s0 + $0xb8] sm:$0xf]
  %v61 = vld [vmem:[%s0 + $0xc0] sm:$0xf]
  %v62 = vld [vmem:[%s0 + $0xc8] sm:$0xf]
  %v63 = vld [vmem:[%s0 + $0xd8] sm:$0xf]
  %v64 = vld [vmem:[%s0 + $0xe0] sm:$0xf]
  %v65 = vld [vmem:[%s0 + $0xe8] sm:$0xf]
  %v66 = vld [vmem:[%s0 + $0xf0] sm:$0xf]
  %v67 = vld [vmem:[%s0 + $0xf8] sm:$0xf]
  %v68 = vld [vmem:[%s0 + $0x100] sm:$0xf]
  %v69 = vld [vmem:[%s0 + $0x108] sm:$0xf]
  %v70 = vld [vmem:[%s0 + $0x110] sm:$0xf]
  %v71 = vld [vmem:[%s0 + $0x120] sm:$0xf]
  %v72 = vld [vmem:[%s0 + $0x128] sm:$0xf]
  %v73 = vld [vmem:[%s0 + $0x130] sm:$0xf]
  %v74 = vld [vmem:[%s0 + $0x138] sm:$0xf]
  %v75 = vld [vmem:[%s0 + $0x140] sm:$0xf]
  %v76 = vld [vmem:[%s0 + $0x148] sm:$0xf]
  %v77 = vld [vmem:[%s0 + $0x150] sm:$0xf]
  %v78 = vld [vmem:[%s0 + $0x158] sm:$0xf]
  %v79 = vld [vmem:[%s0 + $0x168] sm:$0xf]
  %v80 = vld [vmem:[%s0 + $0x170] sm:$0xf]
  %v81 = vld [vmem:[%s0 + $0x178] sm:$0xf]
  %v82 = vld [vmem:[%s0 + $0x180] sm:$0xf]
  %v83 = vld [vmem:[%s0 + $0x188] sm:$0xf]
  %v84 = vld [vmem:[%s0 + $0x190] sm:$0xf]
  %v85 = vld [vmem:[%s0 + $0x198] sm:$0xf]
  %v86 = vld [vmem:[%s0 + $0x1a0] sm:$0xf]
  %v87 = vld [vmem:[%s0 + $0x1b0] sm:$0xf]
  %v88 = vld [vmem:[%s0 + $0x1b8] sm:$0xf]
  %v89 = vld [vmem:[%s0 + $0x1c0] sm:$0xf]
  %v90 = vld [vmem:[%s0 + $0x1c8] sm:$0xf]
  %v91 = vld [vmem:[%s0 + $0x1d0] sm:$0xf]
  %v92 = vld [vmem:[%s0 + $0x1d8] sm:$0xf]
  %v93 = vld [vmem:[%s0 + $0x1e0] sm:$0xf]
  %v94 = vld [vmem:[%s0 + $0x1e8] sm:$0xf]
  %v95 = vld [vmem:[%s0 + $0x1f8] sm:$0xf]
  %v96 = vld [vmem:[%s0 + $0x200] sm:$0xf]
  %v97 = vld [vmem:[%s0 + $0x208] sm:$0xf]
  %v98 = vld [vmem:[%s0 + $0x210] sm:$0xf]
  %v99 = vld [vmem:[%s0 + $0x218] sm:$0xf]
  %v100 = vld [vmem:[%s0 + $0x220] sm:$0xf]
  %v101 = vld [vmem:[%s0 + $0x228] sm:$0xf]
  %v102 = vld [vmem:[%s0 + $0x230] sm:$0xf]
  %v103 = vld [vmem:[%s1] sm:$0xf]
  %v104 = vld [vmem:[%s1 + $0x4] sm:$0xf]
  %v105 = vld [vmem:[%s1 + $0x8] sm:$0xf]
  %v106 = vld [vmem:[%s1 + $0xc] sm:$0xf]
  %v107 = vld [vmem:[%s1 + $0x10] sm:$0xf]
  %v108 = vld [vmem:[%s1 + $0x14] sm:$0xf]
  %v109 = vld [vmem:[%s1 + $0x18] sm:$0xf]
  %v110 = vld [vmem:[%s1 + $0x1c] sm:$0xf]
  %v111 = vld [vmem:[%s0 + $0x4] sm:$0x1]
  %v112 = vld [vmem:[%s0 + $0xc] sm:$0x1]
  %v113 = vld [vmem:[%s0 + $0x14] sm:$0x1]
  %v114 = vld [vmem:[%s0 + $0x1c] sm:$0x1]
  %v115 = vld [vmem:[%s0 + $0x24] sm:$0x1]
  %v116 = vld [vmem:[%s0 + $0x2c] sm:$0x1]
  %v117 = vld [vmem:[%s0 + $0x34] sm:$0x1]
  %v118 = vld [vmem:[%s0 + $0x3c] sm:$0x1]
  %v119 = vld [vmem:[%s0 + $0x4c] sm:$0x1]
  %v120 = vld [vmem:[%s0 + $0x54] sm:$0x1]
  %v121 = vld [vmem:[%s0 + $0x5c] sm:$0x1]
  %v122 = vld [vmem:[%s0 + $0x64] sm:$0x1]
  %v123 = vld [vmem:[%s0 + $0x6c] sm:$0x1]
  %v124 = vld [vmem:[%s0 + $0x74] sm:$0x1]
  %v125 = vld [vmem:[%s0 + $0x7c] sm:$0x1]
  %v126 = vld [vmem:[%s0 + $0x84] sm:$0x1]
  %v127 = vld [vmem:[%s0 + $0x94] sm:$0x1]
  %v128 = vld [vmem:[%s0 + $0x9c] sm:$0x1]
  %v129 = vld [vmem:[%s0 + $0xa4] sm:$0x1]
  %v130 = vld [vmem:[%s0 + $0xac] sm:$0x1]
  %v131 = vld [vmem:[%s0 + $0xb4] sm:$0x1]
  %v132 = vld [vmem:[%s0 + $0xbc] sm:$0x1]
  %v133 = vld [vmem:[%s0 + $0xc4] sm:$0x1]
  %v134 = vld [vmem:[%s0 + $0xcc] sm:$0x1]
  %v135 = vld [vmem:[%s0 + $0xdc] sm:$0x1]
  %v136 = vld [vmem:[%s0 + $0xe4] sm:$0x1]
  %v137 = vld [vmem:[%s0 + $0xec] sm:$0x1]
  %v138 = vld [vmem:[%s0 + $0xf4] sm:$0x1]
  %v139 = vld [vmem:[%s0 + $0xfc] sm:$0x1]
  %v140 = vld [vmem:[%s0 + $0x104] sm:$0x1]
  %v141 = vld [vmem:[%s0 + $0x10c] sm:$0x1]
  %v142 = vld [vmem:[%s0 + $0x114] sm:$0x1]
  %v143 = vld [vmem:[%s0 + $0x124] sm:$0x1]
  %v144 = vld [vmem:[%s0 + $0x12c] sm:$0x1]
  %v145 = vld [vmem:[%s0 + $0x134] sm:$0x1]
  %v146 = vld [vmem:[%s0 + $0x13c] sm:$0x1]
  %v147 = vld [vmem:[%s0 + $0x144] sm:$0x1]
  %v148 = vld [vmem:[%s0 + $0x14c] sm:$0x1]
  %v149 = vld [vmem:[%s0 + $0x154] sm:$0x1]
  %v150 = vld [vmem:[%s0 + $0x15c] sm:$0x1]
  %v151 = vld [vmem:[%s0 + $0x16c] sm:$0x1]
  %v152 = vld [vmem:[%s0 + $0x174] sm:$0x1]
  %v153 = vld [vmem:[%s0 + $0x17c] sm:$0x1]
  %v154 = vld [vmem:[%s0 + $0x184] sm:$0x1]
  %v155 = vld [vmem:[%s0 + $0x18c] sm:$0x1]
  %v156 = vld [vmem:[%s0 + $0x194] sm:$0x1]
  %v157 = vld [vmem:[%s0 + $0x19c] sm:$0x1]
  %v158 = vld [vmem:[%s0 + $0x1a4] sm:$0x1]
  %v159 = vld [vmem:[%s0 + $0x1b4] sm:$0x1]
  %v160 = vld [vmem:[%s0 + $0x1bc] sm:$0x1]
  %v161 = vld [vmem:[%s0 + $0x1c4] sm:$0x1]
  %v162 = vld [vmem:[%s0 + $0x1cc] sm:$0x1]
  %v163 = vld [vmem:[%s0 + $0x1d4] sm:$0x1]
  %v164 = vld [vmem:[%s0 + $0x1dc] sm:$0x1]
  %v165 = vld [vmem:[%s0 + $0x1e4] sm:$0x1]
  %v166 = vld [vmem:[%s0 + $0x1ec] sm:$0x1]
  %v167 = vld [vmem:[%s0 + $0x1fc] sm:$0x1]
  %v168 = vld [vmem:[%s0 + $0x204] sm:$0x1]
  %v169 = vld [vmem:[%s0 + $0x20c] sm:$0x1]
  %v170 = vld [vmem:[%s0 + $0x214] sm:$0x1]
  %v171 = vld [vmem:[%s0 + $0x21c] sm:$0x1]
  %v172 = vld [vmem:[%s0 + $0x224] sm:$0x1]
  %v173 = vld [vmem:[%s0 + $0x22c] sm:$0x1]
  %v174 = vld [vmem:[%s0 + $0x234] sm:$0x1]
  %vm175 = vsmask.f32 3328
  %vm176 = vsmask.f32 7440
  %vm177 = vmor %vm175, %vm176
  %v179 = vshrl.u32 %v39, 16
  %v181 = vrot.slane %v179, 4
  %v182 = vshll.u32 %v39, 16
  %v184 = vrot.slane %v182, 5
  %v185 = vor.u32 %v181, %v184
  %v186 = vrot.slane %v185, 4
  %v188 = vshll.u32 %v111, 16
  %v190 = vrot.slane %v188, 5
  %v191 = vsel %vm177, %v186, %v190
  %v193 = vshrl.u32 %v40, 16
  %v195 = vrot.slane %v193, 4
  %v196 = vshll.u32 %v40, 16
  %v198 = vrot.slane %v196, 5
  %v199 = vor.u32 %v195, %v198
  %v200 = vrot.slane %v199, 4
  %v202 = vshll.u32 %v112, 16
  %v204 = vrot.slane %v202, 5
  %v205 = vsel %vm177, %v200, %v204
  %v207 = vshrl.u32 %v41, 16
  %v209 = vrot.slane %v207, 4
  %v210 = vshll.u32 %v41, 16
  %v212 = vrot.slane %v210, 5
  %v213 = vor.u32 %v209, %v212
  %v214 = vrot.slane %v213, 4
  %v216 = vshll.u32 %v113, 16
  %v218 = vrot.slane %v216, 5
  %v219 = vsel %vm177, %v214, %v218
  %v221 = vshrl.u32 %v42, 16
  %v223 = vrot.slane %v221, 4
  %v224 = vshll.u32 %v42, 16
  %v226 = vrot.slane %v224, 5
  %v227 = vor.u32 %v223, %v226
  %v228 = vrot.slane %v227, 4
  %v230 = vshll.u32 %v114, 16
  %v232 = vrot.slane %v230, 5
  %v233 = vsel %vm177, %v228, %v232
  %v235 = vshrl.u32 %v43, 16
  %v237 = vrot.slane %v235, 4
  %v238 = vshll.u32 %v43, 16
  %v240 = vrot.slane %v238, 5
  %v241 = vor.u32 %v237, %v240
  %v242 = vrot.slane %v241, 4
  %v244 = vshll.u32 %v115, 16
  %v246 = vrot.slane %v244, 5
  %v247 = vsel %vm177, %v242, %v246
  %v249 = vshrl.u32 %v44, 16
  %v251 = vrot.slane %v249, 4
  %v252 = vshll.u32 %v44, 16
  %v254 = vrot.slane %v252, 5
  %v255 = vor.u32 %v251, %v254
  %v256 = vrot.slane %v255, 4
  %v258 = vshll.u32 %v116, 16
  %v260 = vrot.slane %v258, 5
  %v261 = vsel %vm177, %v256, %v260
  %v263 = vshrl.u32 %v45, 16
  %v265 = vrot.slane %v263, 4
  %v266 = vshll.u32 %v45, 16
  %v268 = vrot.slane %v266, 5
  %v269 = vor.u32 %v265, %v268
  %v270 = vrot.slane %v269, 4
  %v272 = vshll.u32 %v117, 16
  %v274 = vrot.slane %v272, 5
  %v275 = vsel %vm177, %v270, %v274
  %v277 = vshrl.u32 %v46, 16
  %v279 = vrot.slane %v277, 4
  %v280 = vshll.u32 %v46, 16
  %v282 = vrot.slane %v280, 5
  %v283 = vor.u32 %v279, %v282
  %v284 = vrot.slane %v283, 4
  %v286 = vshll.u32 %v118, 16
  %v288 = vrot.slane %v286, 5
  %v289 = vsel %vm177, %v284, %v288
  %v291 = vshrl.u32 %v47, 16
  %v293 = vrot.slane %v291, 4
  %v294 = vshll.u32 %v47, 16
  %v296 = vrot.slane %v294, 5
  %v297 = vor.u32 %v293, %v296
  %v298 = vrot.slane %v297, 4
  %v300 = vshll.u32 %v119, 16
  %v302 = vrot.slane %v300, 5
  %v303 = vsel %vm177, %v298, %v302
  %v305 = vshrl.u32 %v48, 16
  %v307 = vrot.slane %v305, 4
  %v308 = vshll.u32 %v48, 16
  %v310 = vrot.slane %v308, 5
  %v311 = vor.u32 %v307, %v310
  %v312 = vrot.slane %v311, 4
  %v314 = vshll.u32 %v120, 16
  %v316 = vrot.slane %v314, 5
  %v317 = vsel %vm177, %v312, %v316
  %v319 = vshrl.u32 %v49, 16
  %v321 = vrot.slane %v319, 4
  %v322 = vshll.u32 %v49, 16
  %v324 = vrot.slane %v322, 5
  %v325 = vor.u32 %v321, %v324
  %v326 = vrot.slane %v325, 4
  %v328 = vshll.u32 %v121, 16
  %v330 = vrot.slane %v328, 5
  %v331 = vsel %vm177, %v326, %v330
  %v333 = vshrl.u32 %v50, 16
  %v335 = vrot.slane %v333, 4
  %v336 = vshll.u32 %v50, 16
  %v338 = vrot.slane %v336, 5
  %v339 = vor.u32 %v335, %v338
  %v340 = vrot.slane %v339, 4
  %v342 = vshll.u32 %v122, 16
  %v344 = vrot.slane %v342, 5
  %v345 = vsel %vm177, %v340, %v344
  %v347 = vshrl.u32 %v51, 16
  %v349 = vrot.slane %v347, 4
  %v350 = vshll.u32 %v51, 16
  %v352 = vrot.slane %v350, 5
  %v353 = vor.u32 %v349, %v352
  %v354 = vrot.slane %v353, 4
  %v356 = vshll.u32 %v123, 16
  %v358 = vrot.slane %v356, 5
  %v359 = vsel %vm177, %v354, %v358
  %v361 = vshrl.u32 %v52, 16
  %v363 = vrot.slane %v361, 4
  %v364 = vshll.u32 %v52, 16
  %v366 = vrot.slane %v364, 5
  %v367 = vor.u32 %v363, %v366
  %v368 = vrot.slane %v367, 4
  %v370 = vshll.u32 %v124, 16
  %v372 = vrot.slane %v370, 5
  %v373 = vsel %vm177, %v368, %v372
  %v375 = vshrl.u32 %v53, 16
  %v377 = vrot.slane %v375, 4
  %v378 = vshll.u32 %v53, 16
  %v380 = vrot.slane %v378, 5
  %v381 = vor.u32 %v377, %v380
  %v382 = vrot.slane %v381, 4
  %v384 = vshll.u32 %v125, 16
  %v386 = vrot.slane %v384, 5
  %v387 = vsel %vm177, %v382, %v386
  %v389 = vshrl.u32 %v54, 16
  %v391 = vrot.slane %v389, 4
  %v392 = vshll.u32 %v54, 16
  %v394 = vrot.slane %v392, 5
  %v395 = vor.u32 %v391, %v394
  %v396 = vrot.slane %v395, 4
  %v398 = vshll.u32 %v126, 16
  %v400 = vrot.slane %v398, 5
  %v401 = vsel %vm177, %v396, %v400
  %v403 = vshrl.u32 %v55, 16
  %v405 = vrot.slane %v403, 4
  %v406 = vshll.u32 %v55, 16
  %v408 = vrot.slane %v406, 5
  %v409 = vor.u32 %v405, %v408
  %v410 = vrot.slane %v409, 4
  %v412 = vshll.u32 %v127, 16
  %v414 = vrot.slane %v412, 5
  %v415 = vsel %vm177, %v410, %v414
  %v417 = vshrl.u32 %v56, 16
  %v419 = vrot.slane %v417, 4
  %v420 = vshll.u32 %v56, 16
  %v422 = vrot.slane %v420, 5
  %v423 = vor.u32 %v419, %v422
  %v424 = vrot.slane %v423, 4
  %v426 = vshll.u32 %v128, 16
  %v428 = vrot.slane %v426, 5
  %v429 = vsel %vm177, %v424, %v428
  %v431 = vshrl.u32 %v57, 16
  %v433 = vrot.slane %v431, 4
  %v434 = vshll.u32 %v57, 16
  %v436 = vrot.slane %v434, 5
  %v437 = vor.u32 %v433, %v436
  %v438 = vrot.slane %v437, 4
  %v440 = vshll.u32 %v129, 16
  %v442 = vrot.slane %v440, 5
  %v443 = vsel %vm177, %v438, %v442
  %v445 = vshrl.u32 %v58, 16
  %v447 = vrot.slane %v445, 4
  %v448 = vshll.u32 %v58, 16
  %v450 = vrot.slane %v448, 5
  %v451 = vor.u32 %v447, %v450
  %v452 = vrot.slane %v451, 4
  %v454 = vshll.u32 %v130, 16
  %v456 = vrot.slane %v454, 5
  %v457 = vsel %vm177, %v452, %v456
  %v459 = vshrl.u32 %v59, 16
  %v461 = vrot.slane %v459, 4
  %v462 = vshll.u32 %v59, 16
  %v464 = vrot.slane %v462, 5
  %v465 = vor.u32 %v461, %v464
  %v466 = vrot.slane %v465, 4
  %v468 = vshll.u32 %v131, 16
  %v470 = vrot.slane %v468, 5
  %v471 = vsel %vm177, %v466, %v470
  %v473 = vshrl.u32 %v60, 16
  %v475 = vrot.slane %v473, 4
  %v476 = vshll.u32 %v60, 16
  %v478 = vrot.slane %v476, 5
  %v479 = vor.u32 %v475, %v478
  %v480 = vrot.slane %v479, 4
  %v482 = vshll.u32 %v132, 16
  %v484 = vrot.slane %v482, 5
  %v485 = vsel %vm177, %v480, %v484
  %v487 = vshrl.u32 %v61, 16
  %v489 = vrot.slane %v487, 4
  %v490 = vshll.u32 %v61, 16
  %v492 = vrot.slane %v490, 5
  %v493 = vor.u32 %v489, %v492
  %v494 = vrot.slane %v493, 4
  %v496 = vshll.u32 %v133, 16
  %v498 = vrot.slane %v496, 5
  %v499 = vsel %vm177, %v494, %v498
  %v501 = vshrl.u32 %v62, 16
  %v503 = vrot.slane %v501, 4
  %v504 = vshll.u32 %v62, 16
  %v506 = vrot.slane %v504, 5
  %v507 = vor.u32 %v503, %v506
  %v508 = vrot.slane %v507, 4
  %v510 = vshll.u32 %v134, 16
  %v512 = vrot.slane %v510, 5
  %v513 = vsel %vm177, %v508, %v512
  %v515 = vshrl.u32 %v63, 16
  %v517 = vrot.slane %v515, 4
  %v518 = vshll.u32 %v63, 16
  %v520 = vrot.slane %v518, 5
  %v521 = vor.u32 %v517, %v520
  %v522 = vrot.slane %v521, 4
  %v524 = vshll.u32 %v135, 16
  %v526 = vrot.slane %v524, 5
  %v527 = vsel %vm177, %v522, %v526
  %v529 = vshrl.u32 %v64, 16
  %v531 = vrot.slane %v529, 4
  %v532 = vshll.u32 %v64, 16
  %v534 = vrot.slane %v532, 5
  %v535 = vor.u32 %v531, %v534
  %v536 = vrot.slane %v535, 4
  %v538 = vshll.u32 %v136, 16
  %v540 = vrot.slane %v538, 5
  %v541 = vsel %vm177, %v536, %v540
  %v543 = vshrl.u32 %v65, 16
  %v545 = vrot.slane %v543, 4
  %v546 = vshll.u32 %v65, 16
  %v548 = vrot.slane %v546, 5
  %v549 = vor.u32 %v545, %v548
  %v550 = vrot.slane %v549, 4
  %v552 = vshll.u32 %v137, 16
  %v554 = vrot.slane %v552, 5
  %v555 = vsel %vm177, %v550, %v554
  %v557 = vshrl.u32 %v66, 16
  %v559 = vrot.slane %v557, 4
  %v560 = vshll.u32 %v66, 16
  %v562 = vrot.slane %v560, 5
  %v563 = vor.u32 %v559, %v562
  %v564 = vrot.slane %v563, 4
  %v566 = vshll.u32 %v138, 16
  %v568 = vrot.slane %v566, 5
  %v569 = vsel %vm177, %v564, %v568
  %v571 = vshrl.u32 %v67, 16
  %v573 = vrot.slane %v571, 4
  %v574 = vshll.u32 %v67, 16
  %v576 = vrot.slane %v574, 5
  %v577 = vor.u32 %v573, %v576
  %v578 = vrot.slane %v577, 4
  %v580 = vshll.u32 %v139, 16
  %v582 = vrot.slane %v580, 5
  %v583 = vsel %vm177, %v578, %v582
  %v585 = vshrl.u32 %v68, 16
  %v587 = vrot.slane %v585, 4
  %v588 = vshll.u32 %v68, 16
  %v590 = vrot.slane %v588, 5
  %v591 = vor.u32 %v587, %v590
  %v592 = vrot.slane %v591, 4
  %v594 = vshll.u32 %v140, 16
  %v596 = vrot.slane %v594, 5
  %v597 = vsel %vm177, %v592, %v596
  %v599 = vshrl.u32 %v69, 16
  %v601 = vrot.slane %v599, 4
  %v602 = vshll.u32 %v69, 16
  %v604 = vrot.slane %v602, 5
  %v605 = vor.u32 %v601, %v604
  %v606 = vrot.slane %v605, 4
  %v608 = vshll.u32 %v141, 16
  %v610 = vrot.slane %v608, 5
  %v611 = vsel %vm177, %v606, %v610
  %v613 = vshrl.u32 %v70, 16
  %v615 = vrot.slane %v613, 4
  %v616 = vshll.u32 %v70, 16
  %v618 = vrot.slane %v616, 5
  %v619 = vor.u32 %v615, %v618
  %v620 = vrot.slane %v619, 4
  %v622 = vshll.u32 %v142, 16
  %v624 = vrot.slane %v622, 5
  %v625 = vsel %vm177, %v620, %v624
  %v627 = vshrl.u32 %v71, 16
  %v629 = vrot.slane %v627, 4
  %v630 = vshll.u32 %v71, 16
  %v632 = vrot.slane %v630, 5
  %v633 = vor.u32 %v629, %v632
  %v634 = vrot.slane %v633, 4
  %v636 = vshll.u32 %v143, 16
  %v638 = vrot.slane %v636, 5
  %v639 = vsel %vm177, %v634, %v638
  %v641 = vshrl.u32 %v72, 16
  %v643 = vrot.slane %v641, 4
  %v644 = vshll.u32 %v72, 16
  %v646 = vrot.slane %v644, 5
  %v647 = vor.u32 %v643, %v646
  %v648 = vrot.slane %v647, 4
  %v650 = vshll.u32 %v144, 16
  %v652 = vrot.slane %v650, 5
  %v653 = vsel %vm177, %v648, %v652
  %v655 = vshrl.u32 %v73, 16
  %v657 = vrot.slane %v655, 4
  %v658 = vshll.u32 %v73, 16
  %v660 = vrot.slane %v658, 5
  %v661 = vor.u32 %v657, %v660
  %v662 = vrot.slane %v661, 4
  %v664 = vshll.u32 %v145, 16
  %v666 = vrot.slane %v664, 5
  %v667 = vsel %vm177, %v662, %v666
  %v669 = vshrl.u32 %v74, 16
  %v671 = vrot.slane %v669, 4
  %v672 = vshll.u32 %v74, 16
  %v674 = vrot.slane %v672, 5
  %v675 = vor.u32 %v671, %v674
  %v676 = vrot.slane %v675, 4
  %v678 = vshll.u32 %v146, 16
  %v680 = vrot.slane %v678, 5
  %v681 = vsel %vm177, %v676, %v680
  %v683 = vshrl.u32 %v75, 16
  %v685 = vrot.slane %v683, 4
  %v686 = vshll.u32 %v75, 16
  %v688 = vrot.slane %v686, 5
  %v689 = vor.u32 %v685, %v688
  %v690 = vrot.slane %v689, 4
  %v692 = vshll.u32 %v147, 16
  %v694 = vrot.slane %v692, 5
  %v695 = vsel %vm177, %v690, %v694
  %v697 = vshrl.u32 %v76, 16
  %v699 = vrot.slane %v697, 4
  %v700 = vshll.u32 %v76, 16
  %v702 = vrot.slane %v700, 5
  %v703 = vor.u32 %v699, %v702
  %v704 = vrot.slane %v703, 4
  %v706 = vshll.u32 %v148, 16
  %v708 = vrot.slane %v706, 5
  %v709 = vsel %vm177, %v704, %v708
  %v711 = vshrl.u32 %v77, 16
  %v713 = vrot.slane %v711, 4
  %v714 = vshll.u32 %v77, 16
  %v716 = vrot.slane %v714, 5
  %v717 = vor.u32 %v713, %v716
  %v718 = vrot.slane %v717, 4
  %v720 = vshll.u32 %v149, 16
  %v722 = vrot.slane %v720, 5
  %v723 = vsel %vm177, %v718, %v722
  %v725 = vshrl.u32 %v78, 16
  %v727 = vrot.slane %v725, 4
  %v728 = vshll.u32 %v78, 16
  %v730 = vrot.slane %v728, 5
  %v731 = vor.u32 %v727, %v730
  %v732 = vrot.slane %v731, 4
  %v734 = vshll.u32 %v150, 16
  %v736 = vrot.slane %v734, 5
  %v737 = vsel %vm177, %v732, %v736
  %v739 = vshrl.u32 %v79, 16
  %v741 = vrot.slane %v739, 4
  %v742 = vshll.u32 %v79, 16
  %v744 = vrot.slane %v742, 5
  %v745 = vor.u32 %v741, %v744
  %v746 = vrot.slane %v745, 4
  %v748 = vshll.u32 %v151, 16
  %v750 = vrot.slane %v748, 5
  %v751 = vsel %vm177, %v746, %v750
  %v753 = vshrl.u32 %v80, 16
  %v755 = vrot.slane %v753, 4
  %v756 = vshll.u32 %v80, 16
  %v758 = vrot.slane %v756, 5
  %v759 = vor.u32 %v755, %v758
  %v760 = vrot.slane %v759, 4
  %v762 = vshll.u32 %v152, 16
  %v764 = vrot.slane %v762, 5
  %v765 = vsel %vm177, %v760, %v764
  %v767 = vshrl.u32 %v81, 16
  %v769 = vrot.slane %v767, 4
  %v770 = vshll.u32 %v81, 16
  %v772 = vrot.slane %v770, 5
  %v773 = vor.u32 %v769, %v772
  %v774 = vrot.slane %v773, 4
  %v776 = vshll.u32 %v153, 16
  %v778 = vrot.slane %v776, 5
  %v779 = vsel %vm177, %v774, %v778
  %v781 = vshrl.u32 %v82, 16
  %v783 = vrot.slane %v781, 4
  %v784 = vshll.u32 %v82, 16
  %v786 = vrot.slane %v784, 5
  %v787 = vor.u32 %v783, %v786
  %v788 = vrot.slane %v787, 4
  %v790 = vshll.u32 %v154, 16
  %v792 = vrot.slane %v790, 5
  %v793 = vsel %vm177, %v788, %v792
  %v795 = vshrl.u32 %v83, 16
  %v797 = vrot.slane %v795, 4
  %v798 = vshll.u32 %v83, 16
  %v800 = vrot.slane %v798, 5
  %v801 = vor.u32 %v797, %v800
  %v802 = vrot.slane %v801, 4
  %v804 = vshll.u32 %v155, 16
  %v806 = vrot.slane %v804, 5
  %v807 = vsel %vm177, %v802, %v806
  %v809 = vshrl.u32 %v84, 16
  %v811 = vrot.slane %v809, 4
  %v812 = vshll.u32 %v84, 16
  %v814 = vrot.slane %v812, 5
  %v815 = vor.u32 %v811, %v814
  %v816 = vrot.slane %v815, 4
  %v818 = vshll.u32 %v156, 16
  %v820 = vrot.slane %v818, 5
  %v821 = vsel %vm177, %v816, %v820
  %v823 = vshrl.u32 %v85, 16
  %v825 = vrot.slane %v823, 4
  %v826 = vshll.u32 %v85, 16
  %v828 = vrot.slane %v826, 5
  %v829 = vor.u32 %v825, %v828
  %v830 = vrot.slane %v829, 4
  %v832 = vshll.u32 %v157, 16
  %v834 = vrot.slane %v832, 5
  %v835 = vsel %vm177, %v830, %v834
  %v837 = vshrl.u32 %v86, 16
  %v839 = vrot.slane %v837, 4
  %v840 = vshll.u32 %v86, 16
  %v842 = vrot.slane %v840, 5
  %v843 = vor.u32 %v839, %v842
  %v844 = vrot.slane %v843, 4
  %v846 = vshll.u32 %v158, 16
  %v848 = vrot.slane %v846, 5
  %v849 = vsel %vm177, %v844, %v848
  %v851 = vshrl.u32 %v87, 16
  %v853 = vrot.slane %v851, 4
  %v854 = vshll.u32 %v87, 16
  %v856 = vrot.slane %v854, 5
  %v857 = vor.u32 %v853, %v856
  %v858 = vrot.slane %v857, 4
  %v860 = vshll.u32 %v159, 16
  %v862 = vrot.slane %v860, 5
  %v863 = vsel %vm177, %v858, %v862
  %v865 = vshrl.u32 %v88, 16
  %v867 = vrot.slane %v865, 4
  %v868 = vshll.u32 %v88, 16
  %v870 = vrot.slane %v868, 5
  %v871 = vor.u32 %v867, %v870
  %v872 = vrot.slane %v871, 4
  %v874 = vshll.u32 %v160, 16
  %v876 = vrot.slane %v874, 5
  %v877 = vsel %vm177, %v872, %v876
  %v879 = vshrl.u32 %v89, 16
  %v881 = vrot.slane %v879, 4
  %v882 = vshll.u32 %v89, 16
  %v884 = vrot.slane %v882, 5
  %v885 = vor.u32 %v881, %v884
  %v886 = vrot.slane %v885, 4
  %v888 = vshll.u32 %v161, 16
  %v890 = vrot.slane %v888, 5
  %v891 = vsel %vm177, %v886, %v890
  %v893 = vshrl.u32 %v90, 16
  %v895 = vrot.slane %v893, 4
  %v896 = vshll.u32 %v90, 16
  %v898 = vrot.slane %v896, 5
  %v899 = vor.u32 %v895, %v898
  %v900 = vrot.slane %v899, 4
  %v902 = vshll.u32 %v162, 16
  %v904 = vrot.slane %v902, 5
  %v905 = vsel %vm177, %v900, %v904
  %v907 = vshrl.u32 %v91, 16
  %v909 = vrot.slane %v907, 4
  %v910 = vshll.u32 %v91, 16
  %v912 = vrot.slane %v910, 5
  %v913 = vor.u32 %v909, %v912
  %v914 = vrot.slane %v913, 4
  %v916 = vshll.u32 %v163, 16
  %v918 = vrot.slane %v916, 5
  %v919 = vsel %vm177, %v914, %v918
  %v921 = vshrl.u32 %v92, 16
  %v923 = vrot.slane %v921, 4
  %v924 = vshll.u32 %v92, 16
  %v926 = vrot.slane %v924, 5
  %v927 = vor.u32 %v923, %v926
  %v928 = vrot.slane %v927, 4
  %v930 = vshll.u32 %v164, 16
  %v932 = vrot.slane %v930, 5
  %v933 = vsel %vm177, %v928, %v932
  %v935 = vshrl.u32 %v93, 16
  %v937 = vrot.slane %v935, 4
  %v938 = vshll.u32 %v93, 16
  %v940 = vrot.slane %v938, 5
  %v941 = vor.u32 %v937, %v940
  %v942 = vrot.slane %v941, 4
  %v944 = vshll.u32 %v165, 16
  %v946 = vrot.slane %v944, 5
  %v947 = vsel %vm177, %v942, %v946
  %v949 = vshrl.u32 %v94, 16
  %v951 = vrot.slane %v949, 4
  %v952 = vshll.u32 %v94, 16
  %v954 = vrot.slane %v952, 5
  %v955 = vor.u32 %v951, %v954
  %v956 = vrot.slane %v955, 4
  %v958 = vshll.u32 %v166, 16
  %v960 = vrot.slane %v958, 5
  %v961 = vsel %vm177, %v956, %v960
  %v963 = vshrl.u32 %v95, 16
  %v965 = vrot.slane %v963, 4
  %v966 = vshll.u32 %v95, 16
  %v968 = vrot.slane %v966, 5
  %v969 = vor.u32 %v965, %v968
  %v970 = vrot.slane %v969, 4
  %v972 = vshll.u32 %v167, 16
  %v974 = vrot.slane %v972, 5
  %v975 = vsel %vm177, %v970, %v974
  %v977 = vshrl.u32 %v96, 16
  %v979 = vrot.slane %v977, 4
  %v980 = vshll.u32 %v96, 16
  %v982 = vrot.slane %v980, 5
  %v983 = vor.u32 %v979, %v982
  %v984 = vrot.slane %v983, 4
  %v986 = vshll.u32 %v168, 16
  %v988 = vrot.slane %v986, 5
  %v989 = vsel %vm177, %v984, %v988
  %v991 = vshrl.u32 %v97, 16
  %v993 = vrot.slane %v991, 4
  %v994 = vshll.u32 %v97, 16
  %v996 = vrot.slane %v994, 5
  %v997 = vor.u32 %v993, %v996
  %v998 = vrot.slane %v997, 4
  %v1000 = vshll.u32 %v169, 16
  %v1002 = vrot.slane %v1000, 5
  %v1003 = vsel %vm177, %v998, %v1002
  %v1005 = vshrl.u32 %v98, 16
  %v1007 = vrot.slane %v1005, 4
  %v1008 = vshll.u32 %v98, 16
  %v1010 = vrot.slane %v1008, 5
  %v1011 = vor.u32 %v1007, %v1010
  %v1012 = vrot.slane %v1011, 4
  %v1014 = vshll.u32 %v170, 16
  %v1016 = vrot.slane %v1014, 5
  %v1017 = vsel %vm177, %v1012, %v1016
  %v1019 = vshrl.u32 %v99, 16
  %v1021 = vrot.slane %v1019, 4
  %v1022 = vshll.u32 %v99, 16
  %v1024 = vrot.slane %v1022, 5
  %v1025 = vor.u32 %v1021, %v1024
  %v1026 = vrot.slane %v1025, 4
  %v1028 = vshll.u32 %v171, 16
  %v1030 = vrot.slane %v1028, 5
  %v1031 = vsel %vm177, %v1026, %v1030
  %v1033 = vshrl.u32 %v100, 16
  %v1035 = vrot.slane %v1033, 4
  %v1036 = vshll.u32 %v100, 16
  %v1038 = vrot.slane %v1036, 5
  %v1039 = vor.u32 %v1035, %v1038
  %v1040 = vrot.slane %v1039, 4
  %v1042 = vshll.u32 %v172, 16
  %v1044 = vrot.slane %v1042, 5
  %v1045 = vsel %vm177, %v1040, %v1044
  %v1047 = vshrl.u32 %v101, 16
  %v1049 = vrot.slane %v1047, 4
  %v1050 = vshll.u32 %v101, 16
  %v1052 = vrot.slane %v1050, 5
  %v1053 = vor.u32 %v1049, %v1052
  %v1054 = vrot.slane %v1053, 4
  %v1056 = vshll.u32 %v173, 16
  %v1058 = vrot.slane %v1056, 5
  %v1059 = vsel %vm177, %v1054, %v1058
  %v1061 = vshrl.u32 %v102, 16
  %v1063 = vrot.slane %v1061, 4
  %v1064 = vshll.u32 %v102, 16
  %v1066 = vrot.slane %v1064, 5
  %v1067 = vor.u32 %v1063, %v1066
  %v1068 = vrot.slane %v1067, 4
  %v1070 = vshll.u32 %v174, 16
  %v1072 = vrot.slane %v1070, 5
  %v1073 = vsel %vm177, %v1068, %v1072
  %s1074 = scalar_lea.vmem %s1, 32
  %v1075 = vld [vmem:[%s1074] sm:$0xf]
  %v1076 = vld [vmem:[%s1074 + $0x4] sm:$0xf]
  %v1077 = vld [vmem:[%s1074 + $0x8] sm:$0xf]
  %v1078 = vld [vmem:[%s1074 + $0xc] sm:$0xf]
  %v1079 = vld [vmem:[%s1074 + $0x10] sm:$0xf]
  %v1080 = vld [vmem:[%s1074 + $0x14] sm:$0xf]
  %v1081 = vld [vmem:[%s1074 + $0x18] sm:$0xf]
  %v1082 = vld [vmem:[%s1074 + $0x1c] sm:$0xf]
  %v1083 = vunpack.c.l.b16 %v191
  %v1084 = vunpack.c.l.b16 %v205
  %v1085 = vunpack.c.l.b16 %v219
  %v1086 = vunpack.c.l.b16 %v233
  %v1087 = vunpack.c.l.b16 %v247
  %v1088 = vunpack.c.l.b16 %v261
  %v1089 = vunpack.c.l.b16 %v275
  %v1090 = vunpack.c.l.b16 %v289
  %v1091 = vunpack.c.l.b16 %v303
  %v1092 = vunpack.c.l.b16 %v317
  %v1093 = vunpack.c.l.b16 %v331
  %v1094 = vunpack.c.l.b16 %v345
  %v1095 = vunpack.c.l.b16 %v359
  %v1096 = vunpack.c.l.b16 %v373
  %v1097 = vunpack.c.l.b16 %v387
  %v1098 = vunpack.c.l.b16 %v401
  %v1099 = vunpack.c.l.b16 %v415
  %v1100 = vunpack.c.l.b16 %v429
  %v1101 = vunpack.c.l.b16 %v443
  %v1102 = vunpack.c.l.b16 %v457
  %v1103 = vunpack.c.l.b16 %v471
  %v1104 = vunpack.c.l.b16 %v485
  %v1105 = vunpack.c.l.b16 %v499
  %v1106 = vunpack.c.l.b16 %v513
  %v1107 = vunpack.c.l.b16 %v527
  %v1108 = vunpack.c.l.b16 %v541
  %v1109 = vunpack.c.l.b16 %v555
  %v1110 = vunpack.c.l.b16 %v569
  %v1111 = vunpack.c.l.b16 %v583
  %v1112 = vunpack.c.l.b16 %v597
  %v1113 = vunpack.c.l.b16 %v611
  %v1114 = vunpack.c.l.b16 %v625
  %v1115 = vunpack.c.l.b16 %v639
  %v1116 = vunpack.c.l.b16 %v653
  %v1117 = vunpack.c.l.b16 %v667
  %v1118 = vunpack.c.l.b16 %v681
  %v1119 = vunpack.c.l.b16 %v695
  %v1120 = vunpack.c.l.b16 %v709
  %v1121 = vunpack.c.l.b16 %v723
  %v1122 = vunpack.c.l.b16 %v737
  %v1123 = vunpack.c.l.b16 %v751
  %v1124 = vunpack.c.l.b16 %v765
  %v1125 = vunpack.c.l.b16 %v779
  %v1126 = vunpack.c.l.b16 %v793
  %v1127 = vunpack.c.l.b16 %v807
  %v1128 = vunpack.c.l.b16 %v821
  %v1129 = vunpack.c.l.b16 %v835
  %v1130 = vunpack.c.l.b16 %v849
  %v1131 = vunpack.c.l.b16 %v863
  %v1132 = vunpack.c.l.b16 %v877
  %v1133 = vunpack.c.l.b16 %v891
  %v1134 = vunpack.c.l.b16 %v905
  %v1135 = vunpack.c.l.b16 %v919
  %v1136 = vunpack.c.l.b16 %v933
  %v1137 = vunpack.c.l.b16 %v947
  %v1138 = vunpack.c.l.b16 %v961
  %v1139 = vunpack.c.l.b16 %v975
  %v1140 = vunpack.c.l.b16 %v989
  %v1141 = vunpack.c.l.b16 %v1003
  %v1142 = vunpack.c.l.b16 %v1017
  %v1143 = vunpack.c.l.b16 %v1031
  %v1144 = vunpack.c.l.b16 %v1045
  %v1145 = vunpack.c.l.b16 %v1059
  %v1146 = vunpack.c.l.b16 %v1073
  %v1147 = vpack.c.b16 %v1084, %v1083
  %v1148 = vpack.c.b16 %v1086, %v1085
  %v1149 = vpack.c.b16 %v1088, %v1087
  %v1150 = vpack.c.b16 %v1090, %v1089
  %v1151 = vpack.c.b16 %v1092, %v1091
  %v1152 = vpack.c.b16 %v1094, %v1093
  %v1153 = vpack.c.b16 %v1096, %v1095
  %v1154 = vpack.c.b16 %v1098, %v1097
  %v1155 = vpack.c.b16 %v1100, %v1099
  %v1156 = vpack.c.b16 %v1102, %v1101
  %v1157 = vpack.c.b16 %v1104, %v1103
  %v1158 = vpack.c.b16 %v1106, %v1105
  %v1159 = vpack.c.b16 %v1108, %v1107
  %v1160 = vpack.c.b16 %v1110, %v1109
  %v1161 = vpack.c.b16 %v1112, %v1111
  %v1162 = vpack.c.b16 %v1114, %v1113
  %v1163 = vpack.c.b16 %v1116, %v1115
  %v1164 = vpack.c.b16 %v1118, %v1117
  %v1165 = vpack.c.b16 %v1120, %v1119
  %v1166 = vpack.c.b16 %v1122, %v1121
  %v1167 = vpack.c.b16 %v1124, %v1123
  %v1168 = vpack.c.b16 %v1126, %v1125
  %v1169 = vpack.c.b16 %v1128, %v1127
  %v1170 = vpack.c.b16 %v1130, %v1129
  %v1171 = vpack.c.b16 %v1132, %v1131
  %v1172 = vpack.c.b16 %v1134, %v1133
  %v1173 = vpack.c.b16 %v1136, %v1135
  %v1174 = vpack.c.b16 %v1138, %v1137
  %v1175 = vpack.c.b16 %v1140, %v1139
  %v1176 = vpack.c.b16 %v1142, %v1141
  %v1177 = vpack.c.b16 %v1144, %v1143
  %v1178 = vpack.c.b16 %v1146, %v1145
  %v1187 = vunpack.c.l.b16 %v1075
  %v1188 = vunpack.c.l.b16 %v1076
  %v1189 = vunpack.c.l.b16 %v1077
  %v1190 = vunpack.c.l.b16 %v1078
  %v1191 = vunpack.c.l.b16 %v1079
  %v1192 = vunpack.c.l.b16 %v1080
  %v1193 = vunpack.c.l.b16 %v1081
  %v1194 = vunpack.c.l.b16 %v1082
  %v1195 = vpack.c.b16 %v1188, %v1187
  %v1196 = vpack.c.b16 %v1190, %v1189
  %v1197 = vpack.c.b16 %v1192, %v1191
  %v1198 = vpack.c.b16 %v1194, %v1193
  %vm1203 = vcmask 523264
  %v1205 = vsel %vm1203, %v1147, 0
  %v1208 = vsel %vm1203, %v1148, 0
  %v1211 = vsel %vm1203, %v1149, 0
  %v1214 = vsel %vm1203, %v1150, 0
  %v1217 = vsel %vm1203, %v1151, 0
  %v1220 = vsel %vm1203, %v1152, 0
  %v1223 = vsel %vm1203, %v1153, 0
  %v1226 = vsel %vm1203, %v1154, 0
  %v1229 = vsel %vm1203, %v1155, 0
  %v1232 = vsel %vm1203, %v1156, 0
  %v1235 = vsel %vm1203, %v1157, 0
  %v1238 = vsel %vm1203, %v1158, 0
  %v1241 = vsel %vm1203, %v1159, 0
  %v1244 = vsel %vm1203, %v1160, 0
  %v1247 = vsel %vm1203, %v1161, 0
  %v1250 = vsel %vm1203, %v1162, 0
  %v1253 = vsel %vm1203, %v1163, 0
  %v1256 = vsel %vm1203, %v1164, 0
  %v1259 = vsel %vm1203, %v1165, 0
  %v1262 = vsel %vm1203, %v1166, 0
  %v1265 = vsel %vm1203, %v1167, 0
  %v1268 = vsel %vm1203, %v1168, 0
  %v1271 = vsel %vm1203, %v1169, 0
  %v1274 = vsel %vm1203, %v1170, 0
  %v1277 = vsel %vm1203, %v1171, 0
  %v1280 = vsel %vm1203, %v1172, 0
  %v1283 = vsel %vm1203, %v1173, 0
  %v1286 = vsel %vm1203, %v1174, 0
  %v1289 = vsel %vm1203, %v1175, 0
  %v1292 = vsel %vm1203, %v1176, 0
  %v1295 = vsel %vm1203, %v1177, 0
  %v1298 = vsel %vm1203, %v1178, 0
  %1300 = vmatprep.subr.bf16.mxu0 0
  %1301 = vmatpush1.bf16.msra.mxu0 %v1195
  %1302 = vmatprep.subr.bf16.mxu0 0
  %1303 = vmatpush1.bf16.msra.mxu0 %v1196
  %1304 = vmatprep.subr.bf16.mxu0 0
  %1305 = vmatpush1.bf16.msra.mxu0 %v1197
  %1306 = vmatprep.subr.bf16.mxu0 0
  %1307 = vmatpush1.bf16.msra.mxu0 %v1198
  %1308 = vmatprep.subr.bf16.mxu0 0
  %1309 = vmatpush1.bf16.msra.mxu0 0
  %1310 = vmatprep.subr.bf16.mxu0 0
  %1311 = vmatpush1.bf16.msra.mxu0 0
  %1312 = vmatprep.subr.bf16.mxu0 0
  %1313 = vmatpush1.bf16.msra.mxu0 0
  %1314 = vmatprep.subr.bf16.mxu0 0
  %1315 = vmatpush1.bf16.msra.mxu0 0
  %1316 = vmatprep.subr.bf16.mxu0 0
  %1317 = vmatpush1.bf16.msra.mxu0 0
  %1318 = vmatprep.subr.bf16.mxu0 0
  %1319 = vmatpush1.bf16.msra.mxu0 0
  %1320 = vmatprep.subr.bf16.mxu0 0
  %1321 = vmatpush1.bf16.msra.mxu0 0
  %1322 = vmatprep.subr.bf16.mxu0 0
  %1323 = vmatpush1.bf16.msra.mxu0 0
  %1324 = vmatprep.subr.bf16.mxu0 0
  %1325 = vmatpush1.bf16.msra.mxu0 0
  %1326 = vmatprep.subr.bf16.mxu0 0
  %1327 = vmatpush1.bf16.msra.mxu0 0
  %1328 = vmatprep.subr.bf16.mxu0 0
  %1329 = vmatpush1.bf16.msra.mxu0 0
  %1330 = vmatprep.subr.bf16.mxu0 0
  %1331 = vmatpush1.bf16.msra.mxu0 0
  %1332 = vmatprep.mubr.bf16.mxu0 0
  %1333 = vmatmul.mubr.bf16.gmra.mrb[0].mxu0 %v1205
  %v1334 = vpop.f32.mrb[0].mxu0
  %v1335 = vadd.f32 0.0, %v1334
  %v1336 = vpop.f32.mrb[0].mxu0
  %v1337 = vpop.f32.mrb[0].mxu0
  %v1338 = vadd.f32 0.0, %v1337
  %v1339 = vpop.f32.mrb[0].mxu0
  %1340 = vmatprep.mubr.bf16.mxu0 0
  %1341 = vmatmul.mubr.bf16.gmra.mrb[0].mxu0 %v1208
  %v1342 = vpop.f32.mrb[0].mxu0
  %v1343 = vadd.f32 0.0, %v1342
  %v1344 = vpop.f32.mrb[0].mxu0
  %v1345 = vpop.f32.mrb[0].mxu0
  %v1346 = vadd.f32 0.0, %v1345
  %v1347 = vpop.f32.mrb[0].mxu0
  %1348 = vmatprep.mubr.bf16.mxu0 0
  %1349 = vmatmul.mubr.bf16.gmra.mrb[0].mxu0 %v1211
  %v1350 = vpop.f32.mrb[0].mxu0
  %v1351 = vadd.f32 0.0, %v1350
  %v1352 = vpop.f32.mrb[0].mxu0
  %v1353 = vpop.f32.mrb[0].mxu0
  %v1354 = vadd.f32 0.0, %v1353
  %v1355 = vpop.f32.mrb[0].mxu0
  %1356 = vmatprep.mubr.bf16.mxu0 0
  %1357 = vmatmul.mubr.bf16.gmra.mrb[0].mxu0 %v1214
  %v1358 = vpop.f32.mrb[0].mxu0
  %v1359 = vadd.f32 0.0, %v1358
  %v1360 = vpop.f32.mrb[0].mxu0
  %v1361 = vpop.f32.mrb[0].mxu0
  %v1362 = vadd.f32 0.0, %v1361
  %v1363 = vpop.f32.mrb[0].mxu0
  %1364 = vmatprep.mubr.bf16.mxu0 0
  %1365 = vmatmul.mubr.bf16.gmra.mrb[0].mxu0 %v1217
  %v1366 = vpop.f32.mrb[0].mxu0
  %v1367 = vadd.f32 0.0, %v1366
  %v1368 = vpop.f32.mrb[0].mxu0
  %v1369 = vpop.f32.mrb[0].mxu0
  %v1370 = vadd.f32 0.0, %v1369
  %v1371 = vpop.f32.mrb[0].mxu0
  %1372 = vmatprep.mubr.bf16.mxu0 0
  %1373 = vmatmul.mubr.bf16.gmra.mrb[0].mxu0 %v1220
  %v1374 = vpop.f32.mrb[0].mxu0
  %v1375 = vadd.f32 0.0, %v1374
  %v1376 = vpop.f32.mrb[0].mxu0
  %v1377 = vpop.f32.mrb[0].mxu0
  %v1378 = vadd.f32 0.0, %v1377
  %v1379 = vpop.f32.mrb[0].mxu0
  %1380 = vmatprep.mubr.bf16.mxu0 0
  %1381 = vmatmul.mubr.bf16.gmra.mrb[0].mxu0 %v1223
  %v1382 = vpop.f32.mrb[0].mxu0
  %v1383 = vadd.f32 0.0, %v1382
  %v1384 = vpop.f32.mrb[0].mxu0
  %v1385 = vpop.f32.mrb[0].mxu0
  %v1386 = vadd.f32 0.0, %v1385
  %v1387 = vpop.f32.mrb[0].mxu0
  %1388 = vmatprep.mubr.bf16.mxu0 0
  %1389 = vmatmul.mubr.bf16.gmra.mrb[0].mxu0 %v1226
  %v1390 = vpop.f32.mrb[0].mxu0
  %v1391 = vadd.f32 0.0, %v1390
  %v1392 = vpop.f32.mrb[0].mxu0
  %v1393 = vpop.f32.mrb[0].mxu0
  %v1394 = vadd.f32 0.0, %v1393
  %v1395 = vpop.f32.mrb[0].mxu0
  %1396 = vmatprep.mubr.bf16.mxu0 0
  %1397 = vmatmul.mubr.bf16.gmra.mrb[0].mxu0 %v1229
  %v1398 = vpop.f32.mrb[0].mxu0
  %v1399 = vadd.f32 0.0, %v1398
  %v1400 = vpop.f32.mrb[0].mxu0
  %v1401 = vpop.f32.mrb[0].mxu0
  %v1402 = vadd.f32 0.0, %v1401
  %v1403 = vpop.f32.mrb[0].mxu0
  %1404 = vmatprep.mubr.bf16.mxu0 0
  %1405 = vmatmul.mubr.bf16.gmra.mrb[0].mxu0 %v1232
  %v1406 = vpop.f32.mrb[0].mxu0
  %v1407 = vadd.f32 0.0, %v1406
  %v1408 = vpop.f32.mrb[0].mxu0
  %v1409 = vpop.f32.mrb[0].mxu0
  %v1410 = vadd.f32 0.0, %v1409
  %v1411 = vpop.f32.mrb[0].mxu0
  %1412 = vmatprep.mubr.bf16.mxu0 0
  %1413 = vmatmul.mubr.bf16.gmra.mrb[0].mxu0 %v1235
  %v1414 = vpop.f32.mrb[0].mxu0
  %v1415 = vadd.f32 0.0, %v1414
  %v1416 = vpop.f32.mrb[0].mxu0
  %v1417 = vpop.f32.mrb[0].mxu0
  %v1418 = vadd.f32 0.0, %v1417
  %v1419 = vpop.f32.mrb[0].mxu0
  %1420 = vmatprep.mubr.bf16.mxu0 0
  %1421 = vmatmul.mubr.bf16.gmra.mrb[0].mxu0 %v1238
  %v1422 = vpop.f32.mrb[0].mxu0
  %v1423 = vadd.f32 0.0, %v1422
  %v1424 = vpop.f32.mrb[0].mxu0
  %v1425 = vpop.f32.mrb[0].mxu0
  %v1426 = vadd.f32 0.0, %v1425
  %v1427 = vpop.f32.mrb[0].mxu0
  %1428 = vmatprep.mubr.bf16.mxu0 0
  %1429 = vmatmul.mubr.bf16.gmra.mrb[0].mxu0 %v1241
  %v1430 = vpop.f32.mrb[0].mxu0
  %v1431 = vadd.f32 0.0, %v1430
  %v1432 = vpop.f32.mrb[0].mxu0
  %v1433 = vpop.f32.mrb[0].mxu0
  %v1434 = vadd.f32 0.0, %v1433
  %v1435 = vpop.f32.mrb[0].mxu0
  %1436 = vmatprep.mubr.bf16.mxu0 0
  %1437 = vmatmul.mubr.bf16.gmra.mrb[0].mxu0 %v1244
  %v1438 = vpop.f32.mrb[0].mxu0
  %v1439 = vadd.f32 0.0, %v1438
  %v1440 = vpop.f32.mrb[0].mxu0
  %v1441 = vpop.f32.mrb[0].mxu0
  %v1442 = vadd.f32 0.0, %v1441
  %v1443 = vpop.f32.mrb[0].mxu0
  %1444 = vmatprep.mubr.bf16.mxu0 0
  %1445 = vmatmul.mubr.bf16.gmra.mrb[0].mxu0 %v1247
  %v1446 = vpop.f32.mrb[0].mxu0
  %v1447 = vadd.f32 0.0, %v1446
  %v1448 = vpop.f32.mrb[0].mxu0
  %v1449 = vpop.f32.mrb[0].mxu0
  %v1450 = vadd.f32 0.0, %v1449
  %v1451 = vpop.f32.mrb[0].mxu0
  %1452 = vmatprep.mubr.bf16.mxu0 0
  %1453 = vmatmul.mubr.bf16.gmra.mrb[0].mxu0 %v1250
  %v1454 = vpop.f32.mrb[0].mxu0
  %v1455 = vadd.f32 0.0, %v1454
  %v1456 = vpop.f32.mrb[0].mxu0
  %v1457 = vpop.f32.mrb[0].mxu0
  %v1458 = vadd.f32 0.0, %v1457
  %v1459 = vpop.f32.mrb[0].mxu0
  %1460 = vmatprep.mubr.bf16.mxu0 0
  %1461 = vmatmul.mubr.bf16.gmra.mrb[0].mxu0 %v1253
  %v1462 = vpop.f32.mrb[0].mxu0
  %v1463 = vadd.f32 0.0, %v1462
  %v1464 = vpop.f32.mrb[0].mxu0
  %v1465 = vpop.f32.mrb[0].mxu0
  %v1466 = vadd.f32 0.0, %v1465
  %v1467 = vpop.f32.mrb[0].mxu0
  %1468 = vmatprep.mubr.bf16.mxu0 0
  %1469 = vmatmul.mubr.bf16.gmra.mrb[0].mxu0 %v1256
  %v1470 = vpop.f32.mrb[0].mxu0
  %v1471 = vadd.f32 0.0, %v1470
  %v1472 = vpop.f32.mrb[0].mxu0
  %v1473 = vpop.f32.mrb[0].mxu0
  %v1474 = vadd.f32 0.0, %v1473
  %v1475 = vpop.f32.mrb[0].mxu0
  %1476 = vmatprep.mubr.bf16.mxu0 0
  %1477 = vmatmul.mubr.bf16.gmra.mrb[0].mxu0 %v1259
  %v1478 = vpop.f32.mrb[0].mxu0
  %v1479 = vadd.f32 0.0, %v1478
  %v1480 = vpop.f32.mrb[0].mxu0
  %v1481 = vpop.f32.mrb[0].mxu0
  %v1482 = vadd.f32 0.0, %v1481
  %v1483 = vpop.f32.mrb[0].mxu0
  %1484 = vmatprep.mubr.bf16.mxu0 0
  %1485 = vmatmul.mubr.bf16.gmra.mrb[0].mxu0 %v1262
  %v1486 = vpop.f32.mrb[0].mxu0
  %v1487 = vadd.f32 0.0, %v1486
  %v1488 = vpop.f32.mrb[0].mxu0
  %v1489 = vpop.f32.mrb[0].mxu0
  %v1490 = vadd.f32 0.0, %v1489
  %v1491 = vpop.f32.mrb[0].mxu0
  %1492 = vmatprep.mubr.bf16.mxu0 0
  %1493 = vmatmul.mubr.bf16.gmra.mrb[0].mxu0 %v1265
  %v1494 = vpop.f32.mrb[0].mxu0
  %v1495 = vadd.f32 0.0, %v1494
  %v1496 = vpop.f32.mrb[0].mxu0
  %v1497 = vpop.f32.mrb[0].mxu0
  %v1498 = vadd.f32 0.0, %v1497
  %v1499 = vpop.f32.mrb[0].mxu0
  %1500 = vmatprep.mubr.bf16.mxu0 0
  %1501 = vmatmul.mubr.bf16.gmra.mrb[0].mxu0 %v1268
  %v1502 = vpop.f32.mrb[0].mxu0
  %v1503 = vadd.f32 0.0, %v1502
  %v1504 = vpop.f32.mrb[0].mxu0
  %v1505 = vpop.f32.mrb[0].mxu0
  %v1506 = vadd.f32 0.0, %v1505
  %v1507 = vpop.f32.mrb[0].mxu0
  %1508 = vmatprep.mubr.bf16.mxu0 0
  %1509 = vmatmul.mubr.bf16.gmra.mrb[0].mxu0 %v1271
  %v1510 = vpop.f32.mrb[0].mxu0
  %v1511 = vadd.f32 0.0, %v1510
  %v1512 = vpop.f32.mrb[0].mxu0
  %v1513 = vpop.f32.mrb[0].mxu0
  %v1514 = vadd.f32 0.0, %v1513
  %v1515 = vpop.f32.mrb[0].mxu0
  %1516 = vmatprep.mubr.bf16.mxu0 0
  %1517 = vmatmul.mubr.bf16.gmra.mrb[0].mxu0 %v1274
  %v1518 = vpop.f32.mrb[0].mxu0
  %v1519 = vadd.f32 0.0, %v1518
  %v1520 = vpop.f32.mrb[0].mxu0
  %v1521 = vpop.f32.mrb[0].mxu0
  %v1522 = vadd.f32 0.0, %v1521
  %v1523 = vpop.f32.mrb[0].mxu0
  %1524 = vmatprep.mubr.bf16.mxu0 0
  %1525 = vmatmul.mubr.bf16.gmra.mrb[0].mxu0 %v1277
  %v1526 = vpop.f32.mrb[0].mxu0
  %v1527 = vadd.f32 0.0, %v1526
  %v1528 = vpop.f32.mrb[0].mxu0
  %v1529 = vpop.f32.mrb[0].mxu0
  %v1530 = vadd.f32 0.0, %v1529
  %v1531 = vpop.f32.mrb[0].mxu0
  %1532 = vmatprep.mubr.bf16.mxu0 0
  %1533 = vmatmul.mubr.bf16.gmra.mrb[0].mxu0 %v1280
  %v1534 = vpop.f32.mrb[0].mxu0
  %v1535 = vadd.f32 0.0, %v1534
  %v1536 = vpop.f32.mrb[0].mxu0
  %v1537 = vpop.f32.mrb[0].mxu0
  %v1538 = vadd.f32 0.0, %v1537
  %v1539 = vpop.f32.mrb[0].mxu0
  %1540 = vmatprep.mubr.bf16.mxu0 0
  %1541 = vmatmul.mubr.bf16.gmra.mrb[0].mxu0 %v1283
  %v1542 = vpop.f32.mrb[0].mxu0
  %v1543 = vadd.f32 0.0, %v1542
  %v1544 = vpop.f32.mrb[0].mxu0
  %v1545 = vpop.f32.mrb[0].mxu0
  %v1546 = vadd.f32 0.0, %v1545
  %v1547 = vpop.f32.mrb[0].mxu0
  %1548 = vmatprep.mubr.bf16.mxu0 0
  %1549 = vmatmul.mubr.bf16.gmra.mrb[0].mxu0 %v1286
  %v1550 = vpop.f32.mrb[0].mxu0
  %v1551 = vadd.f32 0.0, %v1550
  %v1552 = vpop.f32.mrb[0].mxu0
  %v1553 = vpop.f32.mrb[0].mxu0
  %v1554 = vadd.f32 0.0, %v1553
  %v1555 = vpop.f32.mrb[0].mxu0
  %1556 = vmatprep.mubr.bf16.mxu0 0
  %1557 = vmatmul.mubr.bf16.gmra.mrb[0].mxu0 %v1289
  %v1558 = vpop.f32.mrb[0].mxu0
  %v1559 = vadd.f32 0.0, %v1558
  %v1560 = vpop.f32.mrb[0].mxu0
  %v1561 = vpop.f32.mrb[0].mxu0
  %v1562 = vadd.f32 0.0, %v1561
  %v1563 = vpop.f32.mrb[0].mxu0
  %1564 = vmatprep.mubr.bf16.mxu0 0
  %1565 = vmatmul.mubr.bf16.gmra.mrb[0].mxu0 %v1292
  %v1566 = vpop.f32.mrb[0].mxu0
  %v1567 = vadd.f32 0.0, %v1566
  %v1568 = vpop.f32.mrb[0].mxu0
  %v1569 = vpop.f32.mrb[0].mxu0
  %v1570 = vadd.f32 0.0, %v1569
  %v1571 = vpop.f32.mrb[0].mxu0
  %1572 = vmatprep.mubr.bf16.mxu0 0
  %1573 = vmatmul.mubr.bf16.gmra.mrb[0].mxu0 %v1295
  %v1574 = vpop.f32.mrb[0].mxu0
  %v1575 = vadd.f32 0.0, %v1574
  %v1576 = vpop.f32.mrb[0].mxu0
  %v1577 = vpop.f32.mrb[0].mxu0
  %v1578 = vadd.f32 0.0, %v1577
  %v1579 = vpop.f32.mrb[0].mxu0
  %1580 = vmatprep.mubr.bf16.mxu0 0
  %1581 = vmatmul.mubr.bf16.gmra.mrb[0].mxu0 %v1298
  %v1582 = vpop.f32.mrb[0].mxu0
  %v1583 = vadd.f32 0.0, %v1582
  %v1584 = vpop.f32.mrb[0].mxu0
  %v1585 = vpop.f32.mrb[0].mxu0
  %v1586 = vadd.f32 0.0, %v1585
  %v1587 = vpop.f32.mrb[0].mxu0
  %1588 = vdwg.mxu0
  %v1653 = vunpack.c.l.b16 %v39
  %v1654 = vunpack.c.l.b16 %v40
  %v1655 = vunpack.c.l.b16 %v41
  %v1656 = vunpack.c.l.b16 %v42
  %v1657 = vunpack.c.l.b16 %v43
  %v1658 = vunpack.c.l.b16 %v44
  %v1659 = vunpack.c.l.b16 %v45
  %v1660 = vunpack.c.l.b16 %v46
  %v1661 = vunpack.c.l.b16 %v47
  %v1662 = vunpack.c.l.b16 %v48
  %v1663 = vunpack.c.l.b16 %v49
  %v1664 = vunpack.c.l.b16 %v50
  %v1665 = vunpack.c.l.b16 %v51
  %v1666 = vunpack.c.l.b16 %v52
  %v1667 = vunpack.c.l.b16 %v53
  %v1668 = vunpack.c.l.b16 %v54
  %v1669 = vunpack.c.l.b16 %v55
  %v1670 = vunpack.c.l.b16 %v56
  %v1671 = vunpack.c.l.b16 %v57
  %v1672 = vunpack.c.l.b16 %v58
  %v1673 = vunpack.c.l.b16 %v59
  %v1674 = vunpack.c.l.b16 %v60
  %v1675 = vunpack.c.l.b16 %v61
  %v1676 = vunpack.c.l.b16 %v62
  %v1677 = vunpack.c.l.b16 %v63
  %v1678 = vunpack.c.l.b16 %v64
  %v1679 = vunpack.c.l.b16 %v65
  %v1680 = vunpack.c.l.b16 %v66
  %v1681 = vunpack.c.l.b16 %v67
  %v1682 = vunpack.c.l.b16 %v68
  %v1683 = vunpack.c.l.b16 %v69
  %v1684 = vunpack.c.l.b16 %v70
  %v1685 = vunpack.c.l.b16 %v71
  %v1686 = vunpack.c.l.b16 %v72
  %v1687 = vunpack.c.l.b16 %v73
  %v1688 = vunpack.c.l.b16 %v74
  %v1689 = vunpack.c.l.b16 %v75
  %v1690 = vunpack.c.l.b16 %v76
  %v1691 = vunpack.c.l.b16 %v77
  %v1692 = vunpack.c.l.b16 %v78
  %v1693 = vunpack.c.l.b16 %v79
  %v1694 = vunpack.c.l.b16 %v80
  %v1695 = vunpack.c.l.b16 %v81
  %v1696 = vunpack.c.l.b16 %v82
  %v1697 = vunpack.c.l.b16 %v83
  %v1698 = vunpack.c.l.b16 %v84
  %v1699 = vunpack.c.l.b16 %v85
  %v1700 = vunpack.c.l.b16 %v86
  %v1701 = vunpack.c.l.b16 %v87
  %v1702 = vunpack.c.l.b16 %v88
  %v1703 = vunpack.c.l.b16 %v89
  %v1704 = vunpack.c.l.b16 %v90
  %v1705 = vunpack.c.l.b16 %v91
  %v1706 = vunpack.c.l.b16 %v92
  %v1707 = vunpack.c.l.b16 %v93
  %v1708 = vunpack.c.l.b16 %v94
  %v1709 = vunpack.c.l.b16 %v95
  %v1710 = vunpack.c.l.b16 %v96
  %v1711 = vunpack.c.l.b16 %v97
  %v1712 = vunpack.c.l.b16 %v98
  %v1713 = vunpack.c.l.b16 %v99
  %v1714 = vunpack.c.l.b16 %v100
  %v1715 = vunpack.c.l.b16 %v101
  %v1716 = vunpack.c.l.b16 %v102
  %v1717 = vpack.c.b16 %v1654, %v1653
  %v1718 = vpack.c.b16 %v1656, %v1655
  %v1719 = vpack.c.b16 %v1658, %v1657
  %v1720 = vpack.c.b16 %v1660, %v1659
  %v1721 = vpack.c.b16 %v1662, %v1661
  %v1722 = vpack.c.b16 %v1664, %v1663
  %v1723 = vpack.c.b16 %v1666, %v1665
  %v1724 = vpack.c.b16 %v1668, %v1667
  %v1725 = vpack.c.b16 %v1670, %v1669
  %v1726 = vpack.c.b16 %v1672, %v1671
  %v1727 = vpack.c.b16 %v1674, %v1673
  %v1728 = vpack.c.b16 %v1676, %v1675
  %v1729 = vpack.c.b16 %v1678, %v1677
  %v1730 = vpack.c.b16 %v1680, %v1679
  %v1731 = vpack.c.b16 %v1682, %v1681
  %v1732 = vpack.c.b16 %v1684, %v1683
  %v1733 = vpack.c.b16 %v1686, %v1685
  %v1734 = vpack.c.b16 %v1688, %v1687
  %v1735 = vpack.c.b16 %v1690, %v1689
  %v1736 = vpack.c.b16 %v1692, %v1691
  %v1737 = vpack.c.b16 %v1694, %v1693
  %v1738 = vpack.c.b16 %v1696, %v1695
  %v1739 = vpack.c.b16 %v1698, %v1697
  %v1740 = vpack.c.b16 %v1700, %v1699
  %v1741 = vpack.c.b16 %v1702, %v1701
  %v1742 = vpack.c.b16 %v1704, %v1703
  %v1743 = vpack.c.b16 %v1706, %v1705
  %v1744 = vpack.c.b16 %v1708, %v1707
  %v1745 = vpack.c.b16 %v1710, %v1709
  %v1746 = vpack.c.b16 %v1712, %v1711
  %v1747 = vpack.c.b16 %v1714, %v1713
  %v1748 = vpack.c.b16 %v1716, %v1715
  %v1757 = vunpack.c.l.b16 %v103
  %v1758 = vunpack.c.l.b16 %v104
  %v1759 = vunpack.c.l.b16 %v105
  %v1760 = vunpack.c.l.b16 %v106
  %v1761 = vunpack.c.l.b16 %v107
  %v1762 = vunpack.c.l.b16 %v108
  %v1763 = vunpack.c.l.b16 %v109
  %v1764 = vunpack.c.l.b16 %v110
  %v1765 = vpack.c.b16 %v1758, %v1757
  %v1766 = vpack.c.b16 %v1760, %v1759
  %v1767 = vpack.c.b16 %v1762, %v1761
  %v1768 = vpack.c.b16 %v1764, %v1763
  %v1774 = vsel %vm1203, %v1717, 0
  %v1777 = vsel %vm1203, %v1718, 0
  %v1780 = vsel %vm1203, %v1719, 0
  %v1783 = vsel %vm1203, %v1720, 0
  %v1786 = vsel %vm1203, %v1721, 0
  %v1789 = vsel %vm1203, %v1722, 0
  %v1792 = vsel %vm1203, %v1723, 0
  %v1795 = vsel %vm1203, %v1724, 0
  %v1798 = vsel %vm1203, %v1725, 0
  %v1801 = vsel %vm1203, %v1726, 0
  %v1804 = vsel %vm1203, %v1727, 0
  %v1807 = vsel %vm1203, %v1728, 0
  %v1810 = vsel %vm1203, %v1729, 0
  %v1813 = vsel %vm1203, %v1730, 0
  %v1816 = vsel %vm1203, %v1731, 0
  %v1819 = vsel %vm1203, %v1732, 0
  %v1822 = vsel %vm1203, %v1733, 0
  %v1825 = vsel %vm1203, %v1734, 0
  %v1828 = vsel %vm1203, %v1735, 0
  %v1831 = vsel %vm1203, %v1736, 0
  %v1834 = vsel %vm1203, %v1737, 0
  %v1837 = vsel %vm1203, %v1738, 0
  %v1840 = vsel %vm1203, %v1739, 0
  %v1843 = vsel %vm1203, %v1740, 0
  %v1846 = vsel %vm1203, %v1741, 0
  %v1849 = vsel %vm1203, %v1742, 0
  %v1852 = vsel %vm1203, %v1743, 0
  %v1855 = vsel %vm1203, %v1744, 0
  %v1858 = vsel %vm1203, %v1745, 0
  %v1861 = vsel %vm1203, %v1746, 0
  %v1864 = vsel %vm1203, %v1747, 0
  %v1867 = vsel %vm1203, %v1748, 0
  %1869 = vmatprep.subr.bf16.mxu0 0
  %1870 = vmatpush1.bf16.msra.mxu0 %v1765
  %1871 = vmatprep.subr.bf16.mxu0 0
  %1872 = vmatpush1.bf16.msra.mxu0 %v1766
  %1873 = vmatprep.subr.bf16.mxu0 0
  %1874 = vmatpush1.bf16.msra.mxu0 %v1767
  %1875 = vmatprep.subr.bf16.mxu0 0
  %1876 = vmatpush1.bf16.msra.mxu0 %v1768
  %1877 = vmatprep.subr.bf16.mxu0 0
  %1878 = vmatpush1.bf16.msra.mxu0 0
  %1879 = vmatprep.subr.bf16.mxu0 0
  %1880 = vmatpush1.bf16.msra.mxu0 0
  %1881 = vmatprep.subr.bf16.mxu0 0
  %1882 = vmatpush1.bf16.msra.mxu0 0
  %1883 = vmatprep.subr.bf16.mxu0 0
  %1884 = vmatpush1.bf16.msra.mxu0 0
  %1885 = vmatprep.subr.bf16.mxu0 0
  %1886 = vmatpush1.bf16.msra.mxu0 0
  %1887 = vmatprep.subr.bf16.mxu0 0
  %1888 = vmatpush1.bf16.msra.mxu0 0
  %1889 = vmatprep.subr.bf16.mxu0 0
  %1890 = vmatpush1.bf16.msra.mxu0 0
  %1891 = vmatprep.subr.bf16.mxu0 0
  %1892 = vmatpush1.bf16.msra.mxu0 0
  %1893 = vmatprep.subr.bf16.mxu0 0
  %1894 = vmatpush1.bf16.msra.mxu0 0
  %1895 = vmatprep.subr.bf16.mxu0 0
  %1896 = vmatpush1.bf16.msra.mxu0 0
  %1897 = vmatprep.subr.bf16.mxu0 0
  %1898 = vmatpush1.bf16.msra.mxu0 0
  %1899 = vmatprep.subr.bf16.mxu0 0
  %1900 = vmatpush1.bf16.msra.mxu0 0
  %1901 = vmatprep.mubr.bf16.mxu0 0
  %1902 = vmatmul.mubr.bf16.gmra.mrb[0].mxu0 %v1774
  %v1903 = vpop.f32.mrb[0].mxu0
  %v1904 = vadd.f32 %v1335, %v1903
  %v1905 = vpop.f32.mrb[0].mxu0
  %v1906 = vpop.f32.mrb[0].mxu0
  %v1907 = vadd.f32 %v1338, %v1906
  %v1908 = vpop.f32.mrb[0].mxu0
  %1909 = vmatprep.mubr.bf16.mxu0 0
  %1910 = vmatmul.mubr.bf16.gmra.mrb[0].mxu0 %v1777
  %v1911 = vpop.f32.mrb[0].mxu0
  %v1912 = vadd.f32 %v1343, %v1911
  %v1913 = vpop.f32.mrb[0].mxu0
  %v1914 = vpop.f32.mrb[0].mxu0
  %v1915 = vadd.f32 %v1346, %v1914
  %v1916 = vpop.f32.mrb[0].mxu0
  %1917 = vmatprep.mubr.bf16.mxu0 0
  %1918 = vmatmul.mubr.bf16.gmra.mrb[0].mxu0 %v1780
  %v1919 = vpop.f32.mrb[0].mxu0
  %v1920 = vadd.f32 %v1351, %v1919
  %v1921 = vpop.f32.mrb[0].mxu0
  %v1922 = vpop.f32.mrb[0].mxu0
  %v1923 = vadd.f32 %v1354, %v1922
  %v1924 = vpop.f32.mrb[0].mxu0
  %1925 = vmatprep.mubr.bf16.mxu0 0
  %1926 = vmatmul.mubr.bf16.gmra.mrb[0].mxu0 %v1783
  %v1927 = vpop.f32.mrb[0].mxu0
  %v1928 = vadd.f32 %v1359, %v1927
  %v1929 = vpop.f32.mrb[0].mxu0
  %v1930 = vpop.f32.mrb[0].mxu0
  %v1931 = vadd.f32 %v1362, %v1930
  %v1932 = vpop.f32.mrb[0].mxu0
  %1933 = vmatprep.mubr.bf16.mxu0 0
  %1934 = vmatmul.mubr.bf16.gmra.mrb[0].mxu0 %v1786
  %v1935 = vpop.f32.mrb[0].mxu0
  %v1936 = vadd.f32 %v1367, %v1935
  %v1937 = vpop.f32.mrb[0].mxu0
  %v1938 = vpop.f32.mrb[0].mxu0
  %v1939 = vadd.f32 %v1370, %v1938
  %v1940 = vpop.f32.mrb[0].mxu0
  %1941 = vmatprep.mubr.bf16.mxu0 0
  %1942 = vmatmul.mubr.bf16.gmra.mrb[0].mxu0 %v1789
  %v1943 = vpop.f32.mrb[0].mxu0
  %v1944 = vadd.f32 %v1375, %v1943
  %v1945 = vpop.f32.mrb[0].mxu0
  %v1946 = vpop.f32.mrb[0].mxu0
  %v1947 = vadd.f32 %v1378, %v1946
  %v1948 = vpop.f32.mrb[0].mxu0
  %1949 = vmatprep.mubr.bf16.mxu0 0
  %1950 = vmatmul.mubr.bf16.gmra.mrb[0].mxu0 %v1792
  %v1951 = vpop.f32.mrb[0].mxu0
  %v1952 = vadd.f32 %v1383, %v1951
  %v1953 = vpop.f32.mrb[0].mxu0
  %v1954 = vpop.f32.mrb[0].mxu0
  %v1955 = vadd.f32 %v1386, %v1954
  %v1956 = vpop.f32.mrb[0].mxu0
  %1957 = vmatprep.mubr.bf16.mxu0 0
  %1958 = vmatmul.mubr.bf16.gmra.mrb[0].mxu0 %v1795
  %v1959 = vpop.f32.mrb[0].mxu0
  %v1960 = vadd.f32 %v1391, %v1959
  %v1961 = vpop.f32.mrb[0].mxu0
  %v1962 = vpop.f32.mrb[0].mxu0
  %v1963 = vadd.f32 %v1394, %v1962
  %v1964 = vpop.f32.mrb[0].mxu0
  %1965 = vmatprep.mubr.bf16.mxu0 0
  %1966 = vmatmul.mubr.bf16.gmra.mrb[0].mxu0 %v1798
  %v1967 = vpop.f32.mrb[0].mxu0
  %v1968 = vadd.f32 %v1399, %v1967
  %v1969 = vpop.f32.mrb[0].mxu0
  %v1970 = vpop.f32.mrb[0].mxu0
  %v1971 = vadd.f32 %v1402, %v1970
  %v1972 = vpop.f32.mrb[0].mxu0
  %1973 = vmatprep.mubr.bf16.mxu0 0
  %1974 = vmatmul.mubr.bf16.gmra.mrb[0].mxu0 %v1801
  %v1975 = vpop.f32.mrb[0].mxu0
  %v1976 = vadd.f32 %v1407, %v1975
  %v1977 = vpop.f32.mrb[0].mxu0
  %v1978 = vpop.f32.mrb[0].mxu0
  %v1979 = vadd.f32 %v1410, %v1978
  %v1980 = vpop.f32.mrb[0].mxu0
  %1981 = vmatprep.mubr.bf16.mxu0 0
  %1982 = vmatmul.mubr.bf16.gmra.mrb[0].mxu0 %v1804
  %v1983 = vpop.f32.mrb[0].mxu0
  %v1984 = vadd.f32 %v1415, %v1983
  %v1985 = vpop.f32.mrb[0].mxu0
  %v1986 = vpop.f32.mrb[0].mxu0
  %v1987 = vadd.f32 %v1418, %v1986
  %v1988 = vpop.f32.mrb[0].mxu0
  %1989 = vmatprep.mubr.bf16.mxu0 0
  %1990 = vmatmul.mubr.bf16.gmra.mrb[0].mxu0 %v1807
  %v1991 = vpop.f32.mrb[0].mxu0
  %v1992 = vadd.f32 %v1423, %v1991
  %v1993 = vpop.f32.mrb[0].mxu0
  %v1994 = vpop.f32.mrb[0].mxu0
  %v1995 = vadd.f32 %v1426, %v1994
  %v1996 = vpop.f32.mrb[0].mxu0
  %1997 = vmatprep.mubr.bf16.mxu0 0
  %1998 = vmatmul.mubr.bf16.gmra.mrb[0].mxu0 %v1810
  %v1999 = vpop.f32.mrb[0].mxu0
  %v2000 = vadd.f32 %v1431, %v1999
  %v2001 = vpop.f32.mrb[0].mxu0
  %v2002 = vpop.f32.mrb[0].mxu0
  %v2003 = vadd.f32 %v1434, %v2002
  %v2004 = vpop.f32.mrb[0].mxu0
  %2005 = vmatprep.mubr.bf16.mxu0 0
  %2006 = vmatmul.mubr.bf16.gmra.mrb[0].mxu0 %v1813
  %v2007 = vpop.f32.mrb[0].mxu0
  %v2008 = vadd.f32 %v1439, %v2007
  %v2009 = vpop.f32.mrb[0].mxu0
  %v2010 = vpop.f32.mrb[0].mxu0
  %v2011 = vadd.f32 %v1442, %v2010
  %v2012 = vpop.f32.mrb[0].mxu0
  %2013 = vmatprep.mubr.bf16.mxu0 0
  %2014 = vmatmul.mubr.bf16.gmra.mrb[0].mxu0 %v1816
  %v2015 = vpop.f32.mrb[0].mxu0
  %v2016 = vadd.f32 %v1447, %v2015
  %v2017 = vpop.f32.mrb[0].mxu0
  %v2018 = vpop.f32.mrb[0].mxu0
  %v2019 = vadd.f32 %v1450, %v2018
  %v2020 = vpop.f32.mrb[0].mxu0
  %2021 = vmatprep.mubr.bf16.mxu0 0
  %2022 = vmatmul.mubr.bf16.gmra.mrb[0].mxu0 %v1819
  %v2023 = vpop.f32.mrb[0].mxu0
  %v2024 = vadd.f32 %v1455, %v2023
  %v2025 = vpop.f32.mrb[0].mxu0
  %v2026 = vpop.f32.mrb[0].mxu0
  %v2027 = vadd.f32 %v1458, %v2026
  %v2028 = vpop.f32.mrb[0].mxu0
  %2029 = vmatprep.mubr.bf16.mxu0 0
  %2030 = vmatmul.mubr.bf16.gmra.mrb[0].mxu0 %v1822
  %v2031 = vpop.f32.mrb[0].mxu0
  %v2032 = vadd.f32 %v1463, %v2031
  %v2033 = vpop.f32.mrb[0].mxu0
  %v2034 = vpop.f32.mrb[0].mxu0
  %v2035 = vadd.f32 %v1466, %v2034
  %v2036 = vpop.f32.mrb[0].mxu0
  %2037 = vmatprep.mubr.bf16.mxu0 0
  %2038 = vmatmul.mubr.bf16.gmra.mrb[0].mxu0 %v1825
  %v2039 = vpop.f32.mrb[0].mxu0
  %v2040 = vadd.f32 %v1471, %v2039
  %v2041 = vpop.f32.mrb[0].mxu0
  %v2042 = vpop.f32.mrb[0].mxu0
  %v2043 = vadd.f32 %v1474, %v2042
  %v2044 = vpop.f32.mrb[0].mxu0
  %2045 = vmatprep.mubr.bf16.mxu0 0
  %2046 = vmatmul.mubr.bf16.gmra.mrb[0].mxu0 %v1828
  %v2047 = vpop.f32.mrb[0].mxu0
  %v2048 = vadd.f32 %v1479, %v2047
  %v2049 = vpop.f32.mrb[0].mxu0
  %v2050 = vpop.f32.mrb[0].mxu0
  %v2051 = vadd.f32 %v1482, %v2050
  %v2052 = vpop.f32.mrb[0].mxu0
  %2053 = vmatprep.mubr.bf16.mxu0 0
  %2054 = vmatmul.mubr.bf16.gmra.mrb[0].mxu0 %v1831
  %v2055 = vpop.f32.mrb[0].mxu0
  %v2056 = vadd.f32 %v1487, %v2055
  %v2057 = vpop.f32.mrb[0].mxu0
  %v2058 = vpop.f32.mrb[0].mxu0
  %v2059 = vadd.f32 %v1490, %v2058
  %v2060 = vpop.f32.mrb[0].mxu0
  %2061 = vmatprep.mubr.bf16.mxu0 0
  %2062 = vmatmul.mubr.bf16.gmra.mrb[0].mxu0 %v1834
  %v2063 = vpop.f32.mrb[0].mxu0
  %v2064 = vadd.f32 %v1495, %v2063
  %v2065 = vpop.f32.mrb[0].mxu0
  %v2066 = vpop.f32.mrb[0].mxu0
  %v2067 = vadd.f32 %v1498, %v2066
  %v2068 = vpop.f32.mrb[0].mxu0
  %2069 = vmatprep.mubr.bf16.mxu0 0
  %2070 = vmatmul.mubr.bf16.gmra.mrb[0].mxu0 %v1837
  %v2071 = vpop.f32.mrb[0].mxu0
  %v2072 = vadd.f32 %v1503, %v2071
  %v2073 = vpop.f32.mrb[0].mxu0
  %v2074 = vpop.f32.mrb[0].mxu0
  %v2075 = vadd.f32 %v1506, %v2074
  %v2076 = vpop.f32.mrb[0].mxu0
  %2077 = vmatprep.mubr.bf16.mxu0 0
  %2078 = vmatmul.mubr.bf16.gmra.mrb[0].mxu0 %v1840
  %v2079 = vpop.f32.mrb[0].mxu0
  %v2080 = vadd.f32 %v1511, %v2079
  %v2081 = vpop.f32.mrb[0].mxu0
  %v2082 = vpop.f32.mrb[0].mxu0
  %v2083 = vadd.f32 %v1514, %v2082
  %v2084 = vpop.f32.mrb[0].mxu0
  %2085 = vmatprep.mubr.bf16.mxu0 0
  %2086 = vmatmul.mubr.bf16.gmra.mrb[0].mxu0 %v1843
  %v2087 = vpop.f32.mrb[0].mxu0
  %v2088 = vadd.f32 %v1519, %v2087
  %v2089 = vpop.f32.mrb[0].mxu0
  %v2090 = vpop.f32.mrb[0].mxu0
  %v2091 = vadd.f32 %v1522, %v2090
  %v2092 = vpop.f32.mrb[0].mxu0
  %2093 = vmatprep.mubr.bf16.mxu0 0
  %2094 = vmatmul.mubr.bf16.gmra.mrb[0].mxu0 %v1846
  %v2095 = vpop.f32.mrb[0].mxu0
  %v2096 = vadd.f32 %v1527, %v2095
  %v2097 = vpop.f32.mrb[0].mxu0
  %v2098 = vpop.f32.mrb[0].mxu0
  %v2099 = vadd.f32 %v1530, %v2098
  %v2100 = vpop.f32.mrb[0].mxu0
  %2101 = vmatprep.mubr.bf16.mxu0 0
  %2102 = vmatmul.mubr.bf16.gmra.mrb[0].mxu0 %v1849
  %v2103 = vpop.f32.mrb[0].mxu0
  %v2104 = vadd.f32 %v1535, %v2103
  %v2105 = vpop.f32.mrb[0].mxu0
  %v2106 = vpop.f32.mrb[0].mxu0
  %v2107 = vadd.f32 %v1538, %v2106
  %v2108 = vpop.f32.mrb[0].mxu0
  %2109 = vmatprep.mubr.bf16.mxu0 0
  %2110 = vmatmul.mubr.bf16.gmra.mrb[0].mxu0 %v1852
  %v2111 = vpop.f32.mrb[0].mxu0
  %v2112 = vadd.f32 %v1543, %v2111
  %v2113 = vpop.f32.mrb[0].mxu0
  %v2114 = vpop.f32.mrb[0].mxu0
  %v2115 = vadd.f32 %v1546, %v2114
  %v2116 = vpop.f32.mrb[0].mxu0
  %2117 = vmatprep.mubr.bf16.mxu0 0
  %2118 = vmatmul.mubr.bf16.gmra.mrb[0].mxu0 %v1855
  %v2119 = vpop.f32.mrb[0].mxu0
  %v2120 = vadd.f32 %v1551, %v2119
  %v2121 = vpop.f32.mrb[0].mxu0
  %v2122 = vpop.f32.mrb[0].mxu0
  %v2123 = vadd.f32 %v1554, %v2122
  %v2124 = vpop.f32.mrb[0].mxu0
  %2125 = vmatprep.mubr.bf16.mxu0 0
  %2126 = vmatmul.mubr.bf16.gmra.mrb[0].mxu0 %v1858
  %v2127 = vpop.f32.mrb[0].mxu0
  %v2128 = vadd.f32 %v1559, %v2127
  %v2129 = vpop.f32.mrb[0].mxu0
  %v2130 = vpop.f32.mrb[0].mxu0
  %v2131 = vadd.f32 %v1562, %v2130
  %v2132 = vpop.f32.mrb[0].mxu0
  %2133 = vmatprep.mubr.bf16.mxu0 0
  %2134 = vmatmul.mubr.bf16.gmra.mrb[0].mxu0 %v1861
  %v2135 = vpop.f32.mrb[0].mxu0
  %v2136 = vadd.f32 %v1567, %v2135
  %v2137 = vpop.f32.mrb[0].mxu0
  %v2138 = vpop.f32.mrb[0].mxu0
  %v2139 = vadd.f32 %v1570, %v2138
  %v2140 = vpop.f32.mrb[0].mxu0
  %2141 = vmatprep.mubr.bf16.mxu0 0
  %2142 = vmatmul.mubr.bf16.gmra.mrb[0].mxu0 %v1864
  %v2143 = vpop.f32.mrb[0].mxu0
  %v2144 = vadd.f32 %v1575, %v2143
  %v2145 = vpop.f32.mrb[0].mxu0
  %v2146 = vpop.f32.mrb[0].mxu0
  %v2147 = vadd.f32 %v1578, %v2146
  %v2148 = vpop.f32.mrb[0].mxu0
  %2149 = vmatprep.mubr.bf16.mxu0 0
  %2150 = vmatmul.mubr.bf16.gmra.mrb[0].mxu0 %v1867
  %v2151 = vpop.f32.mrb[0].mxu0
  %v2152 = vadd.f32 %v1583, %v2151
  %v2153 = vpop.f32.mrb[0].mxu0
  %v2154 = vpop.f32.mrb[0].mxu0
  %v2155 = vadd.f32 %v1586, %v2154
  %v2156 = vpop.f32.mrb[0].mxu0
  %2157 = vdwg.mxu0
  %s2158 = scalar_lea.vmem %s0, 8
  %v2159 = vld [vmem:[%s2158] sm:$0xf]
  %v2160 = vld [vmem:[%s2158 + $0x8] sm:$0xf]
  %v2161 = vld [vmem:[%s2158 + $0x10] sm:$0xf]
  %v2162 = vld [vmem:[%s2158 + $0x18] sm:$0xf]
  %v2163 = vld [vmem:[%s2158 + $0x20] sm:$0xf]
  %v2164 = vld [vmem:[%s2158 + $0x28] sm:$0xf]
  %v2165 = vld [vmem:[%s2158 + $0x30] sm:$0xf]
  %v2166 = vld [vmem:[%s2158 + $0x38] sm:$0xf]
  %v2167 = vld [vmem:[%s2158 + $0x48] sm:$0xf]
  %v2168 = vld [vmem:[%s2158 + $0x50] sm:$0xf]
  %v2169 = vld [vmem:[%s2158 + $0x58] sm:$0xf]
  %v2170 = vld [vmem:[%s2158 + $0x60] sm:$0xf]
  %v2171 = vld [vmem:[%s2158 + $0x68] sm:$0xf]
  %v2172 = vld [vmem:[%s2158 + $0x70] sm:$0xf]
  %v2173 = vld [vmem:[%s2158 + $0x78] sm:$0xf]
  %v2174 = vld [vmem:[%s2158 + $0x80] sm:$0xf]
  %v2175 = vld [vmem:[%s2158 + $0x90] sm:$0xf]
  %v2176 = vld [vmem:[%s2158 + $0x98] sm:$0xf]
  %v2177 = vld [vmem:[%s2158 + $0xa0] sm:$0xf]
  %v2178 = vld [vmem:[%s2158 + $0xa8] sm:$0xf]
  %v2179 = vld [vmem:[%s2158 + $0xb0] sm:$0xf]
  %v2180 = vld [vmem:[%s2158 + $0xb8] sm:$0xf]
  %v2181 = vld [vmem:[%s2158 + $0xc0] sm:$0xf]
  %v2182 = vld [vmem:[%s2158 + $0xc8] sm:$0xf]
  %v2183 = vld [vmem:[%s2158 + $0xd8] sm:$0xf]
  %v2184 = vld [vmem:[%s2158 + $0xe0] sm:$0xf]
  %v2185 = vld [vmem:[%s2158 + $0xe8] sm:$0xf]
  %v2186 = vld [vmem:[%s2158 + $0xf0] sm:$0xf]
  %v2187 = vld [vmem:[%s2158 + $0xf8] sm:$0xf]
  %v2188 = vld [vmem:[%s2158 + $0x100] sm:$0xf]
  %v2189 = vld [vmem:[%s2158 + $0x108] sm:$0xf]
  %v2190 = vld [vmem:[%s2158 + $0x110] sm:$0xf]
  %v2191 = vld [vmem:[%s2158 + $0x120] sm:$0xf]
  %v2192 = vld [vmem:[%s2158 + $0x128] sm:$0xf]
  %v2193 = vld [vmem:[%s2158 + $0x130] sm:$0xf]
  %v2194 = vld [vmem:[%s2158 + $0x138] sm:$0xf]
  %v2195 = vld [vmem:[%s2158 + $0x140] sm:$0xf]
  %v2196 = vld [vmem:[%s2158 + $0x148] sm:$0xf]
  %v2197 = vld [vmem:[%s2158 + $0x150] sm:$0xf]
  %v2198 = vld [vmem:[%s2158 + $0x158] sm:$0xf]
  %v2199 = vld [vmem:[%s2158 + $0x168] sm:$0xf]
  %v2200 = vld [vmem:[%s2158 + $0x170] sm:$0xf]
  %v2201 = vld [vmem:[%s2158 + $0x178] sm:$0xf]
  %v2202 = vld [vmem:[%s2158 + $0x180] sm:$0xf]
  %v2203 = vld [vmem:[%s2158 + $0x188] sm:$0xf]
  %v2204 = vld [vmem:[%s2158 + $0x190] sm:$0xf]
  %v2205 = vld [vmem:[%s2158 + $0x198] sm:$0xf]
  %v2206 = vld [vmem:[%s2158 + $0x1a0] sm:$0xf]
  %v2207 = vld [vmem:[%s2158 + $0x1b0] sm:$0xf]
  %v2208 = vld [vmem:[%s2158 + $0x1b8] sm:$0xf]
  %v2209 = vld [vmem:[%s2158 + $0x1c0] sm:$0xf]
  %v2210 = vld [vmem:[%s2158 + $0x1c8] sm:$0xf]
  %v2211 = vld [vmem:[%s2158 + $0x1d0] sm:$0xf]
  %v2212 = vld [vmem:[%s2158 + $0x1d8] sm:$0xf]
  %v2213 = vld [vmem:[%s2158 + $0x1e0] sm:$0xf]
  %v2214 = vld [vmem:[%s2158 + $0x1e8] sm:$0xf]
  %v2215 = vld [vmem:[%s2158 + $0x1f8] sm:$0xf]
  %v2216 = vld [vmem:[%s2158 + $0x200] sm:$0xf]
  %v2217 = vld [vmem:[%s2158 + $0x208] sm:$0xf]
  %v2218 = vld [vmem:[%s2158 + $0x210] sm:$0xf]
  %v2219 = vld [vmem:[%s2158 + $0x218] sm:$0xf]
  %v2220 = vld [vmem:[%s2158 + $0x220] sm:$0xf]
  %v2221 = vld [vmem:[%s2158 + $0x228] sm:$0xf]
  %v2222 = vld [vmem:[%s2158 + $0x230] sm:$0xf]
  %s2223 = scalar_lea.vmem %s1, 64
  %v2224 = vld [vmem:[%s2223] sm:$0xf]
  %v2225 = vld [vmem:[%s2223 + $0x4] sm:$0xf]
  %v2226 = vld [vmem:[%s2223 + $0x8] sm:$0xf]
  %v2227 = vld [vmem:[%s2223 + $0xc] sm:$0xf]
  %v2228 = vld [vmem:[%s2223 + $0x10] sm:$0xf]
  %v2229 = vld [vmem:[%s2223 + $0x14] sm:$0xf]
  %v2230 = vld [vmem:[%s2223 + $0x18] sm:$0xf]
  %v2231 = vld [vmem:[%s2223 + $0x1c] sm:$0xf]
  %v2296 = vunpack.c.l.b16 %v2159
  %v2297 = vunpack.c.l.b16 %v2160
  %v2298 = vunpack.c.l.b16 %v2161
  %v2299 = vunpack.c.l.b16 %v2162
  %v2300 = vunpack.c.l.b16 %v2163
  %v2301 = vunpack.c.l.b16 %v2164
  %v2302 = vunpack.c.l.b16 %v2165
  %v2303 = vunpack.c.l.b16 %v2166
  %v2304 = vunpack.c.l.b16 %v2167
  %v2305 = vunpack.c.l.b16 %v2168
  %v2306 = vunpack.c.l.b16 %v2169
  %v2307 = vunpack.c.l.b16 %v2170
  %v2308 = vunpack.c.l.b16 %v2171
  %v2309 = vunpack.c.l.b16 %v2172
  %v2310 = vunpack.c.l.b16 %v2173
  %v2311 = vunpack.c.l.b16 %v2174
  %v2312 = vunpack.c.l.b16 %v2175
  %v2313 = vunpack.c.l.b16 %v2176
  %v2314 = vunpack.c.l.b16 %v2177
  %v2315 = vunpack.c.l.b16 %v2178
  %v2316 = vunpack.c.l.b16 %v2179
  %v2317 = vunpack.c.l.b16 %v2180
  %v2318 = vunpack.c.l.b16 %v2181
  %v2319 = vunpack.c.l.b16 %v2182
  %v2320 = vunpack.c.l.b16 %v2183
  %v2321 = vunpack.c.l.b16 %v2184
  %v2322 = vunpack.c.l.b16 %v2185
  %v2323 = vunpack.c.l.b16 %v2186
  %v2324 = vunpack.c.l.b16 %v2187
  %v2325 = vunpack.c.l.b16 %v2188
  %v2326 = vunpack.c.l.b16 %v2189
  %v2327 = vunpack.c.l.b16 %v2190
  %v2328 = vunpack.c.l.b16 %v2191
  %v2329 = vunpack.c.l.b16 %v2192
  %v2330 = vunpack.c.l.b16 %v2193
  %v2331 = vunpack.c.l.b16 %v2194
  %v2332 = vunpack.c.l.b16 %v2195
  %v2333 = vunpack.c.l.b16 %v2196
  %v2334 = vunpack.c.l.b16 %v2197
  %v2335 = vunpack.c.l.b16 %v2198
  %v2336 = vunpack.c.l.b16 %v2199
  %v2337 = vunpack.c.l.b16 %v2200
  %v2338 = vunpack.c.l.b16 %v2201
  %v2339 = vunpack.c.l.b16 %v2202
  %v2340 = vunpack.c.l.b16 %v2203
  %v2341 = vunpack.c.l.b16 %v2204
  %v2342 = vunpack.c.l.b16 %v2205
  %v2343 = vunpack.c.l.b16 %v2206
  %v2344 = vunpack.c.l.b16 %v2207
  %v2345 = vunpack.c.l.b16 %v2208
  %v2346 = vunpack.c.l.b16 %v2209
  %v2347 = vunpack.c.l.b16 %v2210
  %v2348 = vunpack.c.l.b16 %v2211
  %v2349 = vunpack.c.l.b16 %v2212
  %v2350 = vunpack.c.l.b16 %v2213
  %v2351 = vunpack.c.l.b16 %v2214
  %v2352 = vunpack.c.l.b16 %v2215
  %v2353 = vunpack.c.l.b16 %v2216
  %v2354 = vunpack.c.l.b16 %v2217
  %v2355 = vunpack.c.l.b16 %v2218
  %v2356 = vunpack.c.l.b16 %v2219
  %v2357 = vunpack.c.l.b16 %v2220
  %v2358 = vunpack.c.l.b16 %v2221
  %v2359 = vunpack.c.l.b16 %v2222
  %v2360 = vpack.c.b16 %v2297, %v2296
  %v2361 = vpack.c.b16 %v2299, %v2298
  %v2362 = vpack.c.b16 %v2301, %v2300
  %v2363 = vpack.c.b16 %v2303, %v2302
  %v2364 = vpack.c.b16 %v2305, %v2304
  %v2365 = vpack.c.b16 %v2307, %v2306
  %v2366 = vpack.c.b16 %v2309, %v2308
  %v2367 = vpack.c.b16 %v2311, %v2310
  %v2368 = vpack.c.b16 %v2313, %v2312
  %v2369 = vpack.c.b16 %v2315, %v2314
  %v2370 = vpack.c.b16 %v2317, %v2316
  %v2371 = vpack.c.b16 %v2319, %v2318
  %v2372 = vpack.c.b16 %v2321, %v2320
  %v2373 = vpack.c.b16 %v2323, %v2322
  %v2374 = vpack.c.b16 %v2325, %v2324
  %v2375 = vpack.c.b16 %v2327, %v2326
  %v2376 = vpack.c.b16 %v2329, %v2328
  %v2377 = vpack.c.b16 %v2331, %v2330
  %v2378 = vpack.c.b16 %v2333, %v2332
  %v2379 = vpack.c.b16 %v2335, %v2334
  %v2380 = vpack.c.b16 %v2337, %v2336
  %v2381 = vpack.c.b16 %v2339, %v2338
  %v2382 = vpack.c.b16 %v2341, %v2340
  %v2383 = vpack.c.b16 %v2343, %v2342
  %v2384 = vpack.c.b16 %v2345, %v2344
  %v2385 = vpack.c.b16 %v2347, %v2346
  %v2386 = vpack.c.b16 %v2349, %v2348
  %v2387 = vpack.c.b16 %v2351, %v2350
  %v2388 = vpack.c.b16 %v2353, %v2352
  %v2389 = vpack.c.b16 %v2355, %v2354
  %v2390 = vpack.c.b16 %v2357, %v2356
  %v2391 = vpack.c.b16 %v2359, %v2358
  %v2400 = vunpack.c.l.b16 %v2224
  %v2401 = vunpack.c.l.b16 %v2225
  %v2402 = vunpack.c.l.b16 %v2226
  %v2403 = vunpack.c.l.b16 %v2227
  %v2404 = vunpack.c.l.b16 %v2228
  %v2405 = vunpack.c.l.b16 %v2229
  %v2406 = vunpack.c.l.b16 %v2230
  %v2407 = vunpack.c.l.b16 %v2231
  %v2408 = vpack.c.b16 %v2401, %v2400
  %v2409 = vpack.c.b16 %v2403, %v2402
  %v2410 = vpack.c.b16 %v2405, %v2404
  %v2411 = vpack.c.b16 %v2407, %v2406
  %v2417 = vsel %vm1203, %v2360, 0
  %v2420 = vsel %vm1203, %v2361, 0
  %v2423 = vsel %vm1203, %v2362, 0
  %v2426 = vsel %vm1203, %v2363, 0
  %v2429 = vsel %vm1203, %v2364, 0
  %v2432 = vsel %vm1203, %v2365, 0
  %v2435 = vsel %vm1203, %v2366, 0
  %v2438 = vsel %vm1203, %v2367, 0
  %v2441 = vsel %vm1203, %v2368, 0
  %v2444 = vsel %vm1203, %v2369, 0
  %v2447 = vsel %vm1203, %v2370, 0
  %v2450 = vsel %vm1203, %v2371, 0
  %v2453 = vsel %vm1203, %v2372, 0
  %v2456 = vsel %vm1203, %v2373, 0
  %v2459 = vsel %vm1203, %v2374, 0
  %v2462 = vsel %vm1203, %v2375, 0
  %v2465 = vsel %vm1203, %v2376, 0
  %v2468 = vsel %vm1203, %v2377, 0
  %v2471 = vsel %vm1203, %v2378, 0
  %v2474 = vsel %vm1203, %v2379, 0
  %v2477 = vsel %vm1203, %v2380, 0
  %v2480 = vsel %vm1203, %v2381, 0
  %v2483 = vsel %vm1203, %v2382, 0
  %v2486 = vsel %vm1203, %v2383, 0
  %v2489 = vsel %vm1203, %v2384, 0
  %v2492 = vsel %vm1203, %v2385, 0
  %v2495 = vsel %vm1203, %v2386, 0
  %v2498 = vsel %vm1203, %v2387, 0
  %v2501 = vsel %vm1203, %v2388, 0
  %v2504 = vsel %vm1203, %v2389, 0
  %v2507 = vsel %vm1203, %v2390, 0
  %v2510 = vsel %vm1203, %v2391, 0
  %2512 = vmatprep.subr.bf16.mxu0 0
  %2513 = vmatpush1.bf16.msra.mxu0 %v2408
  %2514 = vmatprep.subr.bf16.mxu0 0
  %2515 = vmatpush1.bf16.msra.mxu0 %v2409
  %2516 = vmatprep.subr.bf16.mxu0 0
  %2517 = vmatpush1.bf16.msra.mxu0 %v2410
  %2518 = vmatprep.subr.bf16.mxu0 0
  %2519 = vmatpush1.bf16.msra.mxu0 %v2411
  %2520 = vmatprep.subr.bf16.mxu0 0
  %2521 = vmatpush1.bf16.msra.mxu0 0
  %2522 = vmatprep.subr.bf16.mxu0 0
  %2523 = vmatpush1.bf16.msra.mxu0 0
  %2524 = vmatprep.subr.bf16.mxu0 0
  %2525 = vmatpush1.bf16.msra.mxu0 0
  %2526 = vmatprep.subr.bf16.mxu0 0
  %2527 = vmatpush1.bf16.msra.mxu0 0
  %2528 = vmatprep.subr.bf16.mxu0 0
  %2529 = vmatpush1.bf16.msra.mxu0 0
  %2530 = vmatprep.subr.bf16.mxu0 0
  %2531 = vmatpush1.bf16.msra.mxu0 0
  %2532 = vmatprep.subr.bf16.mxu0 0
  %2533 = vmatpush1.bf16.msra.mxu0 0
  %2534 = vmatprep.subr.bf16.mxu0 0
  %2535 = vmatpush1.bf16.msra.mxu0 0
  %2536 = vmatprep.subr.bf16.mxu0 0
  %2537 = vmatpush1.bf16.msra.mxu0 0
  %2538 = vmatprep.subr.bf16.mxu0 0
  %2539 = vmatpush1.bf16.msra.mxu0 0
  %2540 = vmatprep.subr.bf16.mxu0 0
  %2541 = vmatpush1.bf16.msra.mxu0 0
  %2542 = vmatprep.subr.bf16.mxu0 0
  %2543 = vmatpush1.bf16.msra.mxu0 0
  %2544 = vmatprep.mubr.bf16.mxu0 0
  %2545 = vmatmul.mubr.bf16.gmra.mrb[0].mxu0 %v2417
  %v2546 = vpop.f32.mrb[0].mxu0
  %v2547 = vadd.f32 0.0, %v2546
  %v2548 = vpop.f32.mrb[0].mxu0
  %v2549 = vpop.f32.mrb[0].mxu0
  %v2550 = vadd.f32 0.0, %v2549
  %v2551 = vpop.f32.mrb[0].mxu0
  %2552 = vmatprep.mubr.bf16.mxu0 0
  %2553 = vmatmul.mubr.bf16.gmra.mrb[0].mxu0 %v2420
  %v2554 = vpop.f32.mrb[0].mxu0
  %v2555 = vadd.f32 0.0, %v2554
  %v2556 = vpop.f32.mrb[0].mxu0
  %v2557 = vpop.f32.mrb[0].mxu0
  %v2558 = vadd.f32 0.0, %v2557
  %v2559 = vpop.f32.mrb[0].mxu0
  %2560 = vmatprep.mubr.bf16.mxu0 0
  %2561 = vmatmul.mubr.bf16.gmra.mrb[0].mxu0 %v2423
  %v2562 = vpop.f32.mrb[0].mxu0
  %v2563 = vadd.f32 0.0, %v2562
  %v2564 = vpop.f32.mrb[0].mxu0
  %v2565 = vpop.f32.mrb[0].mxu0
  %v2566 = vadd.f32 0.0, %v2565
  %v2567 = vpop.f32.mrb[0].mxu0
  %2568 = vmatprep.mubr.bf16.mxu0 0
  %2569 = vmatmul.mubr.bf16.gmra.mrb[0].mxu0 %v2426
  %v2570 = vpop.f32.mrb[0].mxu0
  %v2571 = vadd.f32 0.0, %v2570
  %v2572 = vpop.f32.mrb[0].mxu0
  %v2573 = vpop.f32.mrb[0].mxu0
  %v2574 = vadd.f32 0.0, %v2573
  %v2575 = vpop.f32.mrb[0].mxu0
  %2576 = vmatprep.mubr.bf16.mxu0 0
  %2577 = vmatmul.mubr.bf16.gmra.mrb[0].mxu0 %v2429
  %v2578 = vpop.f32.mrb[0].mxu0
  %v2579 = vadd.f32 0.0, %v2578
  %v2580 = vpop.f32.mrb[0].mxu0
  %v2581 = vpop.f32.mrb[0].mxu0
  %v2582 = vadd.f32 0.0, %v2581
  %v2583 = vpop.f32.mrb[0].mxu0
  %2584 = vmatprep.mubr.bf16.mxu0 0
  %2585 = vmatmul.mubr.bf16.gmra.mrb[0].mxu0 %v2432
  %v2586 = vpop.f32.mrb[0].mxu0
  %v2587 = vadd.f32 0.0, %v2586
  %v2588 = vpop.f32.mrb[0].mxu0
  %v2589 = vpop.f32.mrb[0].mxu0
  %v2590 = vadd.f32 0.0, %v2589
  %v2591 = vpop.f32.mrb[0].mxu0
  %2592 = vmatprep.mubr.bf16.mxu0 0
  %2593 = vmatmul.mubr.bf16.gmra.mrb[0].mxu0 %v2435
  %v2594 = vpop.f32.mrb[0].mxu0
  %v2595 = vadd.f32 0.0, %v2594
  %v2596 = vpop.f32.mrb[0].mxu0
  %v2597 = vpop.f32.mrb[0].mxu0
  %v2598 = vadd.f32 0.0, %v2597
  %v2599 = vpop.f32.mrb[0].mxu0
  %2600 = vmatprep.mubr.bf16.mxu0 0
  %2601 = vmatmul.mubr.bf16.gmra.mrb[0].mxu0 %v2438
  %v2602 = vpop.f32.mrb[0].mxu0
  %v2603 = vadd.f32 0.0, %v2602
  %v2604 = vpop.f32.mrb[0].mxu0
  %v2605 = vpop.f32.mrb[0].mxu0
  %v2606 = vadd.f32 0.0, %v2605
  %v2607 = vpop.f32.mrb[0].mxu0
  %2608 = vmatprep.mubr.bf16.mxu0 0
  %2609 = vmatmul.mubr.bf16.gmra.mrb[0].mxu0 %v2441
  %v2610 = vpop.f32.mrb[0].mxu0
  %v2611 = vadd.f32 0.0, %v2610
  %v2612 = vpop.f32.mrb[0].mxu0
  %v2613 = vpop.f32.mrb[0].mxu0
  %v2614 = vadd.f32 0.0, %v2613
  %v2615 = vpop.f32.mrb[0].mxu0
  %2616 = vmatprep.mubr.bf16.mxu0 0
  %2617 = vmatmul.mubr.bf16.gmra.mrb[0].mxu0 %v2444
  %v2618 = vpop.f32.mrb[0].mxu0
  %v2619 = vadd.f32 0.0, %v2618
  %v2620 = vpop.f32.mrb[0].mxu0
  %v2621 = vpop.f32.mrb[0].mxu0
  %v2622 = vadd.f32 0.0, %v2621
  %v2623 = vpop.f32.mrb[0].mxu0
  %2624 = vmatprep.mubr.bf16.mxu0 0
  %2625 = vmatmul.mubr.bf16.gmra.mrb[0].mxu0 %v2447
  %v2626 = vpop.f32.mrb[0].mxu0
  %v2627 = vadd.f32 0.0, %v2626
  %v2628 = vpop.f32.mrb[0].mxu0
  %v2629 = vpop.f32.mrb[0].mxu0
  %v2630 = vadd.f32 0.0, %v2629
  %v2631 = vpop.f32.mrb[0].mxu0
  %2632 = vmatprep.mubr.bf16.mxu0 0
  %2633 = vmatmul.mubr.bf16.gmra.mrb[0].mxu0 %v2450
  %v2634 = vpop.f32.mrb[0].mxu0
  %v2635 = vadd.f32 0.0, %v2634
  %v2636 = vpop.f32.mrb[0].mxu0
  %v2637 = vpop.f32.mrb[0].mxu0
  %v2638 = vadd.f32 0.0, %v2637
  %v2639 = vpop.f32.mrb[0].mxu0
  %2640 = vmatprep.mubr.bf16.mxu0 0
  %2641 = vmatmul.mubr.bf16.gmra.mrb[0].mxu0 %v2453
  %v2642 = vpop.f32.mrb[0].mxu0
  %v2643 = vadd.f32 0.0, %v2642
  %v2644 = vpop.f32.mrb[0].mxu0
  %v2645 = vpop.f32.mrb[0].mxu0
  %v2646 = vadd.f32 0.0, %v2645
  %v2647 = vpop.f32.mrb[0].mxu0
  %2648 = vmatprep.mubr.bf16.mxu0 0
  %2649 = vmatmul.mubr.bf16.gmra.mrb[0].mxu0 %v2456
  %v2650 = vpop.f32.mrb[0].mxu0
  %v2651 = vadd.f32 0.0, %v2650
  %v2652 = vpop.f32.mrb[0].mxu0
  %v2653 = vpop.f32.mrb[0].mxu0
  %v2654 = vadd.f32 0.0, %v2653
  %v2655 = vpop.f32.mrb[0].mxu0
  %2656 = vmatprep.mubr.bf16.mxu0 0
  %2657 = vmatmul.mubr.bf16.gmra.mrb[0].mxu0 %v2459
  %v2658 = vpop.f32.mrb[0].mxu0
  %v2659 = vadd.f32 0.0, %v2658
  %v2660 = vpop.f32.mrb[0].mxu0
  %v2661 = vpop.f32.mrb[0].mxu0
  %v2662 = vadd.f32 0.0, %v2661
  %v2663 = vpop.f32.mrb[0].mxu0
  %2664 = vmatprep.mubr.bf16.mxu0 0
  %2665 = vmatmul.mubr.bf16.gmra.mrb[0].mxu0 %v2462
  %v2666 = vpop.f32.mrb[0].mxu0
  %v2667 = vadd.f32 0.0, %v2666
  %v2668 = vpop.f32.mrb[0].mxu0
  %v2669 = vpop.f32.mrb[0].mxu0
  %v2670 = vadd.f32 0.0, %v2669
  %v2671 = vpop.f32.mrb[0].mxu0
  %2672 = vmatprep.mubr.bf16.mxu0 0
  %2673 = vmatmul.mubr.bf16.gmra.mrb[0].mxu0 %v2465
  %v2674 = vpop.f32.mrb[0].mxu0
  %v2675 = vadd.f32 0.0, %v2674
  %v2676 = vpop.f32.mrb[0].mxu0
  %v2677 = vpop.f32.mrb[0].mxu0
  %v2678 = vadd.f32 0.0, %v2677
  %v2679 = vpop.f32.mrb[0].mxu0
  %2680 = vmatprep.mubr.bf16.mxu0 0
  %2681 = vmatmul.mubr.bf16.gmra.mrb[0].mxu0 %v2468
  %v2682 = vpop.f32.mrb[0].mxu0
  %v2683 = vadd.f32 0.0, %v2682
  %v2684 = vpop.f32.mrb[0].mxu0
  %v2685 = vpop.f32.mrb[0].mxu0
  %v2686 = vadd.f32 0.0, %v2685
  %v2687 = vpop.f32.mrb[0].mxu0
  %2688 = vmatprep.mubr.bf16.mxu0 0
  %2689 = vmatmul.mubr.bf16.gmra.mrb[0].mxu0 %v2471
  %v2690 = vpop.f32.mrb[0].mxu0
  %v2691 = vadd.f32 0.0, %v2690
  %v2692 = vpop.f32.mrb[0].mxu0
  %v2693 = vpop.f32.mrb[0].mxu0
  %v2694 = vadd.f32 0.0, %v2693
  %v2695 = vpop.f32.mrb[0].mxu0
  %2696 = vmatprep.mubr.bf16.mxu0 0
  %2697 = vmatmul.mubr.bf16.gmra.mrb[0].mxu0 %v2474
  %v2698 = vpop.f32.mrb[0].mxu0
  %v2699 = vadd.f32 0.0, %v2698
  %v2700 = vpop.f32.mrb[0].mxu0
  %v2701 = vpop.f32.mrb[0].mxu0
  %v2702 = vadd.f32 0.0, %v2701
  %v2703 = vpop.f32.mrb[0].mxu0
  %2704 = vmatprep.mubr.bf16.mxu0 0
  %2705 = vmatmul.mubr.bf16.gmra.mrb[0].mxu0 %v2477
  %v2706 = vpop.f32.mrb[0].mxu0
  %v2707 = vadd.f32 0.0, %v2706
  %v2708 = vpop.f32.mrb[0].mxu0
  %v2709 = vpop.f32.mrb[0].mxu0
  %v2710 = vadd.f32 0.0, %v2709
  %v2711 = vpop.f32.mrb[0].mxu0
  %2712 = vmatprep.mubr.bf16.mxu0 0
  %2713 = vmatmul.mubr.bf16.gmra.mrb[0].mxu0 %v2480
  %v2714 = vpop.f32.mrb[0].mxu0
  %v2715 = vadd.f32 0.0, %v2714
  %v2716 = vpop.f32.mrb[0].mxu0
  %v2717 = vpop.f32.mrb[0].mxu0
  %v2718 = vadd.f32 0.0, %v2717
  %v2719 = vpop.f32.mrb[0].mxu0
  %2720 = vmatprep.mubr.bf16.mxu0 0
  %2721 = vmatmul.mubr.bf16.gmra.mrb[0].mxu0 %v2483
  %v2722 = vpop.f32.mrb[0].mxu0
  %v2723 = vadd.f32 0.0, %v2722
  %v2724 = vpop.f32.mrb[0].mxu0
  %v2725 = vpop.f32.mrb[0].mxu0
  %v2726 = vadd.f32 0.0, %v2725
  %v2727 = vpop.f32.mrb[0].mxu0
  %2728 = vmatprep.mubr.bf16.mxu0 0
  %2729 = vmatmul.mubr.bf16.gmra.mrb[0].mxu0 %v2486
  %v2730 = vpop.f32.mrb[0].mxu0
  %v2731 = vadd.f32 0.0, %v2730
  %v2732 = vpop.f32.mrb[0].mxu0
  %v2733 = vpop.f32.mrb[0].mxu0
  %v2734 = vadd.f32 0.0, %v2733
  %v2735 = vpop.f32.mrb[0].mxu0
  %2736 = vmatprep.mubr.bf16.mxu0 0
  %2737 = vmatmul.mubr.bf16.gmra.mrb[0].mxu0 %v2489
  %v2738 = vpop.f32.mrb[0].mxu0
  %v2739 = vadd.f32 0.0, %v2738
  %v2740 = vpop.f32.mrb[0].mxu0
  %v2741 = vpop.f32.mrb[0].mxu0
  %v2742 = vadd.f32 0.0, %v2741
  %v2743 = vpop.f32.mrb[0].mxu0
  %2744 = vmatprep.mubr.bf16.mxu0 0
  %2745 = vmatmul.mubr.bf16.gmra.mrb[0].mxu0 %v2492
  %v2746 = vpop.f32.mrb[0].mxu0
  %v2747 = vadd.f32 0.0, %v2746
  %v2748 = vpop.f32.mrb[0].mxu0
  %v2749 = vpop.f32.mrb[0].mxu0
  %v2750 = vadd.f32 0.0, %v2749
  %v2751 = vpop.f32.mrb[0].mxu0
  %2752 = vmatprep.mubr.bf16.mxu0 0
  %2753 = vmatmul.mubr.bf16.gmra.mrb[0].mxu0 %v2495
  %v2754 = vpop.f32.mrb[0].mxu0
  %v2755 = vadd.f32 0.0, %v2754
  %v2756 = vpop.f32.mrb[0].mxu0
  %v2757 = vpop.f32.mrb[0].mxu0
  %v2758 = vadd.f32 0.0, %v2757
  %v2759 = vpop.f32.mrb[0].mxu0
  %2760 = vmatprep.mubr.bf16.mxu0 0
  %2761 = vmatmul.mubr.bf16.gmra.mrb[0].mxu0 %v2498
  %v2762 = vpop.f32.mrb[0].mxu0
  %v2763 = vadd.f32 0.0, %v2762
  %v2764 = vpop.f32.mrb[0].mxu0
  %v2765 = vpop.f32.mrb[0].mxu0
  %v2766 = vadd.f32 0.0, %v2765
  %v2767 = vpop.f32.mrb[0].mxu0
  %2768 = vmatprep.mubr.bf16.mxu0 0
  %2769 = vmatmul.mubr.bf16.gmra.mrb[0].mxu0 %v2501
  %v2770 = vpop.f32.mrb[0].mxu0
  %v2771 = vadd.f32 0.0, %v2770
  %v2772 = vpop.f32.mrb[0].mxu0
  %v2773 = vpop.f32.mrb[0].mxu0
  %v2774 = vadd.f32 0.0, %v2773
  %v2775 = vpop.f32.mrb[0].mxu0
  %2776 = vmatprep.mubr.bf16.mxu0 0
  %2777 = vmatmul.mubr.bf16.gmra.mrb[0].mxu0 %v2504
  %v2778 = vpop.f32.mrb[0].mxu0
  %v2779 = vadd.f32 0.0, %v2778
  %v2780 = vpop.f32.mrb[0].mxu0
  %v2781 = vpop.f32.mrb[0].mxu0
  %v2782 = vadd.f32 0.0, %v2781
  %v2783 = vpop.f32.mrb[0].mxu0
  %2784 = vmatprep.mubr.bf16.mxu0 0
  %2785 = vmatmul.mubr.bf16.gmra.mrb[0].mxu0 %v2507
  %v2786 = vpop.f32.mrb[0].mxu0
  %v2787 = vadd.f32 0.0, %v2786
  %v2788 = vpop.f32.mrb[0].mxu0
  %v2789 = vpop.f32.mrb[0].mxu0
  %v2790 = vadd.f32 0.0, %v2789
  %v2791 = vpop.f32.mrb[0].mxu0
  %2792 = vmatprep.mubr.bf16.mxu0 0
  %2793 = vmatmul.mubr.bf16.gmra.mrb[0].mxu0 %v2510
  %v2794 = vpop.f32.mrb[0].mxu0
  %v2795 = vadd.f32 0.0, %v2794
  %v2796 = vpop.f32.mrb[0].mxu0
  %v2797 = vpop.f32.mrb[0].mxu0
  %v2798 = vadd.f32 0.0, %v2797
  %v2799 = vpop.f32.mrb[0].mxu0
  %2800 = vdwg.mxu0
  %v2801 = vadd.f32 %v1904, %v2547
  %v2802 = vadd.f32 %v1907, %v2550
  %v2803 = vadd.f32 %v1912, %v2555
  %v2804 = vadd.f32 %v1915, %v2558
  %v2805 = vadd.f32 %v1920, %v2563
  %v2806 = vadd.f32 %v1923, %v2566
  %v2807 = vadd.f32 %v1928, %v2571
  %v2808 = vadd.f32 %v1931, %v2574
  %v2809 = vadd.f32 %v1936, %v2579
  %v2810 = vadd.f32 %v1939, %v2582
  %v2811 = vadd.f32 %v1944, %v2587
  %v2812 = vadd.f32 %v1947, %v2590
  %v2813 = vadd.f32 %v1952, %v2595
  %v2814 = vadd.f32 %v1955, %v2598
  %v2815 = vadd.f32 %v1960, %v2603
  %v2816 = vadd.f32 %v1963, %v2606
  %v2817 = vadd.f32 %v1968, %v2611
  %v2818 = vadd.f32 %v1971, %v2614
  %v2819 = vadd.f32 %v1976, %v2619
  %v2820 = vadd.f32 %v1979, %v2622
  %v2821 = vadd.f32 %v1984, %v2627
  %v2822 = vadd.f32 %v1987, %v2630
  %v2823 = vadd.f32 %v1992, %v2635
  %v2824 = vadd.f32 %v1995, %v2638
  %v2825 = vadd.f32 %v2000, %v2643
  %v2826 = vadd.f32 %v2003, %v2646
  %v2827 = vadd.f32 %v2008, %v2651
  %v2828 = vadd.f32 %v2011, %v2654
  %v2829 = vadd.f32 %v2016, %v2659
  %v2830 = vadd.f32 %v2019, %v2662
  %v2831 = vadd.f32 %v2024, %v2667
  %v2832 = vadd.f32 %v2027, %v2670
  %v2833 = vadd.f32 %v2032, %v2675
  %v2834 = vadd.f32 %v2035, %v2678
  %v2835 = vadd.f32 %v2040, %v2683
  %v2836 = vadd.f32 %v2043, %v2686
  %v2837 = vadd.f32 %v2048, %v2691
  %v2838 = vadd.f32 %v2051, %v2694
  %v2839 = vadd.f32 %v2056, %v2699
  %v2840 = vadd.f32 %v2059, %v2702
  %v2841 = vadd.f32 %v2064, %v2707
  %v2842 = vadd.f32 %v2067, %v2710
  %v2843 = vadd.f32 %v2072, %v2715
  %v2844 = vadd.f32 %v2075, %v2718
  %v2845 = vadd.f32 %v2080, %v2723
  %v2846 = vadd.f32 %v2083, %v2726
  %v2847 = vadd.f32 %v2088, %v2731
  %v2848 = vadd.f32 %v2091, %v2734
  %v2849 = vadd.f32 %v2096, %v2739
  %v2850 = vadd.f32 %v2099, %v2742
  %v2851 = vadd.f32 %v2104, %v2747
  %v2852 = vadd.f32 %v2107, %v2750
  %v2853 = vadd.f32 %v2112, %v2755
  %v2854 = vadd.f32 %v2115, %v2758
  %v2855 = vadd.f32 %v2120, %v2763
  %v2856 = vadd.f32 %v2123, %v2766
  %v2857 = vadd.f32 %v2128, %v2771
  %v2858 = vadd.f32 %v2131, %v2774
  %v2859 = vadd.f32 %v2136, %v2779
  %v2860 = vadd.f32 %v2139, %v2782
  %v2861 = vadd.f32 %v2144, %v2787
  %v2862 = vadd.f32 %v2147, %v2790
  %v2863 = vadd.f32 %v2152, %v2795
  %v2864 = vadd.f32 %v2155, %v2798
  %v2865 = vld [vmem:[%s2158] sm:$0xf]
  %v2866 = vld [vmem:[%s2158 + $0x4] sm:$0x1]
  %v2867 = vld [vmem:[%s2158 + $0x8] sm:$0xf]
  %v2868 = vld [vmem:[%s2158 + $0xc] sm:$0x1]
  %v2869 = vld [vmem:[%s2158 + $0x10] sm:$0xf]
  %v2870 = vld [vmem:[%s2158 + $0x14] sm:$0x1]
  %v2871 = vld [vmem:[%s2158 + $0x18] sm:$0xf]
  %v2872 = vld [vmem:[%s2158 + $0x1c] sm:$0x1]
  %v2873 = vld [vmem:[%s2158 + $0x20] sm:$0xf]
  %v2874 = vld [vmem:[%s2158 + $0x24] sm:$0x1]
  %v2875 = vld [vmem:[%s2158 + $0x28] sm:$0xf]
  %v2876 = vld [vmem:[%s2158 + $0x2c] sm:$0x1]
  %v2877 = vld [vmem:[%s2158 + $0x30] sm:$0xf]
  %v2878 = vld [vmem:[%s2158 + $0x34] sm:$0x1]
  %v2879 = vld [vmem:[%s2158 + $0x38] sm:$0xf]
  %v2880 = vld [vmem:[%s2158 + $0x3c] sm:$0x1]
  %v2881 = vld [vmem:[%s2158 + $0x48] sm:$0xf]
  %v2882 = vld [vmem:[%s2158 + $0x4c] sm:$0x1]
  %v2883 = vld [vmem:[%s2158 + $0x50] sm:$0xf]
  %v2884 = vld [vmem:[%s2158 + $0x54] sm:$0x1]
  %v2885 = vld [vmem:[%s2158 + $0x58] sm:$0xf]
  %v2886 = vld [vmem:[%s2158 + $0x5c] sm:$0x1]
  %v2887 = vld [vmem:[%s2158 + $0x60] sm:$0xf]
  %v2888 = vld [vmem:[%s2158 + $0x64] sm:$0x1]
  %v2889 = vld [vmem:[%s2158 + $0x68] sm:$0xf]
  %v2890 = vld [vmem:[%s2158 + $0x6c] sm:$0x1]
  %v2891 = vld [vmem:[%s2158 + $0x70] sm:$0xf]
  %v2892 = vld [vmem:[%s2158 + $0x74] sm:$0x1]
  %v2893 = vld [vmem:[%s2158 + $0x78] sm:$0xf]
  %v2894 = vld [vmem:[%s2158 + $0x7c] sm:$0x1]
  %v2895 = vld [vmem:[%s2158 + $0x80] sm:$0xf]
  %v2896 = vld [vmem:[%s2158 + $0x84] sm:$0x1]
  %v2897 = vld [vmem:[%s2158 + $0x90] sm:$0xf]
  %v2898 = vld [vmem:[%s2158 + $0x94] sm:$0x1]
  %v2899 = vld [vmem:[%s2158 + $0x98] sm:$0xf]
  %v2900 = vld [vmem:[%s2158 + $0x9c] sm:$0x1]
  %v2901 = vld [vmem:[%s2158 + $0xa0] sm:$0xf]
  %v2902 = vld [vmem:[%s2158 + $0xa4] sm:$0x1]
  %v2903 = vld [vmem:[%s2158 + $0xa8] sm:$0xf]
  %v2904 = vld [vmem:[%s2158 + $0xac] sm:$0x1]
  %v2905 = vld [vmem:[%s2158 + $0xb0] sm:$0xf]
  %v2906 = vld [vmem:[%s2158 + $0xb4] sm:$0x1]
  %v2907 = vld [vmem:[%s2158 + $0xb8] sm:$0xf]
  %v2908 = vld [vmem:[%s2158 + $0xbc] sm:$0x1]
  %v2909 = vld [vmem:[%s2158 + $0xc0] sm:$0xf]
  %v2910 = vld [vmem:[%s2158 + $0xc4] sm:$0x1]
  %v2911 = vld [vmem:[%s2158 + $0xc8] sm:$0xf]
  %v2912 = vld [vmem:[%s2158 + $0xcc] sm:$0x1]
  %v2913 = vld [vmem:[%s2158 + $0xd8] sm:$0xf]
  %v2914 = vld [vmem:[%s2158 + $0xdc] sm:$0x1]
  %v2915 = vld [vmem:[%s2158 + $0xe0] sm:$0xf]
  %v2916 = vld [vmem:[%s2158 + $0xe4] sm:$0x1]
  %v2917 = vld [vmem:[%s2158 + $0xe8] sm:$0xf]
  %v2918 = vld [vmem:[%s2158 + $0xec] sm:$0x1]
  %v2919 = vld [vmem:[%s2158 + $0xf0] sm:$0xf]
  %v2920 = vld [vmem:[%s2158 + $0xf4] sm:$0x1]
  %v2921 = vld [vmem:[%s2158 + $0xf8] sm:$0xf]
  %v2922 = vld [vmem:[%s2158 + $0xfc] sm:$0x1]
  %v2923 = vld [vmem:[%s2158 + $0x100] sm:$0xf]
  %v2924 = vld [vmem:[%s2158 + $0x104] sm:$0x1]
  %v2925 = vld [vmem:[%s2158 + $0x108] sm:$0xf]
  %v2926 = vld [vmem:[%s2158 + $0x10c] sm:$0x1]
  %v2927 = vld [vmem:[%s2158 + $0x110] sm:$0xf]
  %v2928 = vld [vmem:[%s2158 + $0x114] sm:$0x1]
  %v2929 = vld [vmem:[%s2158 + $0x120] sm:$0xf]
  %v2930 = vld [vmem:[%s2158 + $0x124] sm:$0x1]
  %v2931 = vld [vmem:[%s2158 + $0x128] sm:$0xf]
  %v2932 = vld [vmem:[%s2158 + $0x12c] sm:$0x1]
  %v2933 = vld [vmem:[%s2158 + $0x130] sm:$0xf]
  %v2934 = vld [vmem:[%s2158 + $0x134] sm:$0x1]
  %v2935 = vld [vmem:[%s2158 + $0x138] sm:$0xf]
  %v2936 = vld [vmem:[%s2158 + $0x13c] sm:$0x1]
  %v2937 = vld [vmem:[%s2158 + $0x140] sm:$0xf]
  %v2938 = vld [vmem:[%s2158 + $0x144] sm:$0x1]
  %v2939 = vld [vmem:[%s2158 + $0x148] sm:$0xf]
  %v2940 = vld [vmem:[%s2158 + $0x14c] sm:$0x1]
  %v2941 = vld [vmem:[%s2158 + $0x150] sm:$0xf]
  %v2942 = vld [vmem:[%s2158 + $0x154] sm:$0x1]
  %v2943 = vld [vmem:[%s2158 + $0x158] sm:$0xf]
  %v2944 = vld [vmem:[%s2158 + $0x15c] sm:$0x1]
  %v2945 = vld [vmem:[%s2158 + $0x168] sm:$0xf]
  %v2946 = vld [vmem:[%s2158 + $0x16c] sm:$0x1]
  %v2947 = vld [vmem:[%s2158 + $0x170] sm:$0xf]
  %v2948 = vld [vmem:[%s2158 + $0x174] sm:$0x1]
  %v2949 = vld [vmem:[%s2158 + $0x178] sm:$0xf]
  %v2950 = vld [vmem:[%s2158 + $0x17c] sm:$0x1]
  %v2951 = vld [vmem:[%s2158 + $0x180] sm:$0xf]
  %v2952 = vld [vmem:[%s2158 + $0x184] sm:$0x1]
  %v2953 = vld [vmem:[%s2158 + $0x188] sm:$0xf]
  %v2954 = vld [vmem:[%s2158 + $0x18c] sm:$0x1]
  %v2955 = vld [vmem:[%s2158 + $0x190] sm:$0xf]
  %v2956 = vld [vmem:[%s2158 + $0x194] sm:$0x1]
  %v2957 = vld [vmem:[%s2158 + $0x198] sm:$0xf]
  %v2958 = vld [vmem:[%s2158 + $0x19c] sm:$0x1]
  %v2959 = vld [vmem:[%s2158 + $0x1a0] sm:$0xf]
  %v2960 = vld [vmem:[%s2158 + $0x1a4] sm:$0x1]
  %v2961 = vld [vmem:[%s2158 + $0x1b0] sm:$0xf]
  %v2962 = vld [vmem:[%s2158 + $0x1b4] sm:$0x1]
  %v2963 = vld [vmem:[%s2158 + $0x1b8] sm:$0xf]
  %v2964 = vld [vmem:[%s2158 + $0x1bc] sm:$0x1]
  %v2965 = vld [vmem:[%s2158 + $0x1c0] sm:$0xf]
  %v2966 = vld [vmem:[%s2158 + $0x1c4] sm:$0x1]
  %v2967 = vld [vmem:[%s2158 + $0x1c8] sm:$0xf]
  %v2968 = vld [vmem:[%s2158 + $0x1cc] sm:$0x1]
  %v2969 = vld [vmem:[%s2158 + $0x1d0] sm:$0xf]
  %v2970 = vld [vmem:[%s2158 + $0x1d4] sm:$0x1]
  %v2971 = vld [vmem:[%s2158 + $0x1d8] sm:$0xf]
  %v2972 = vld [vmem:[%s2158 + $0x1dc] sm:$0x1]
  %v2973 = vld [vmem:[%s2158 + $0x1e0] sm:$0xf]
  %v2974 = vld [vmem:[%s2158 + $0x1e4] sm:$0x1]
  %v2975 = vld [vmem:[%s2158 + $0x1e8] sm:$0xf]
  %v2976 = vld [vmem:[%s2158 + $0x1ec] sm:$0x1]
  %v2977 = vld [vmem:[%s2158 + $0x1f8] sm:$0xf]
  %v2978 = vld [vmem:[%s2158 + $0x1fc] sm:$0x1]
  %v2979 = vld [vmem:[%s2158 + $0x200] sm:$0xf]
  %v2980 = vld [vmem:[%s2158 + $0x204] sm:$0x1]
  %v2981 = vld [vmem:[%s2158 + $0x208] sm:$0xf]
  %v2982 = vld [vmem:[%s2158 + $0x20c] sm:$0x1]
  %v2983 = vld [vmem:[%s2158 + $0x210] sm:$0xf]
  %v2984 = vld [vmem:[%s2158 + $0x214] sm:$0x1]
  %v2985 = vld [vmem:[%s2158 + $0x218] sm:$0xf]
  %v2986 = vld [vmem:[%s2158 + $0x21c] sm:$0x1]
  %v2987 = vld [vmem:[%s2158 + $0x220] sm:$0xf]
  %v2988 = vld [vmem:[%s2158 + $0x224] sm:$0x1]
  %v2989 = vld [vmem:[%s2158 + $0x228] sm:$0xf]
  %v2990 = vld [vmem:[%s2158 + $0x22c] sm:$0x1]
  %v2991 = vld [vmem:[%s2158 + $0x230] sm:$0xf]
  %v2992 = vld [vmem:[%s2158 + $0x234] sm:$0x1]
  %v2994 = vshrl.u32 %v2865, 16
  %v2996 = vrot.slane %v2994, 4
  %v2997 = vshll.u32 %v2865, 16
  %v2999 = vrot.slane %v2997, 5
  %v3000 = vor.u32 %v2996, %v2999
  %v3001 = vrot.slane %v3000, 4
  %v3003 = vshll.u32 %v2866, 16
  %v3005 = vrot.slane %v3003, 5
  %v3006 = vsel %vm177, %v3001, %v3005
  %v3008 = vshrl.u32 %v2867, 16
  %v3010 = vrot.slane %v3008, 4
  %v3011 = vshll.u32 %v2867, 16
  %v3013 = vrot.slane %v3011, 5
  %v3014 = vor.u32 %v3010, %v3013
  %v3015 = vrot.slane %v3014, 4
  %v3017 = vshll.u32 %v2868, 16
  %v3019 = vrot.slane %v3017, 5
  %v3020 = vsel %vm177, %v3015, %v3019
  %v3022 = vshrl.u32 %v2869, 16
  %v3024 = vrot.slane %v3022, 4
  %v3025 = vshll.u32 %v2869, 16
  %v3027 = vrot.slane %v3025, 5
  %v3028 = vor.u32 %v3024, %v3027
  %v3029 = vrot.slane %v3028, 4
  %v3031 = vshll.u32 %v2870, 16
  %v3033 = vrot.slane %v3031, 5
  %v3034 = vsel %vm177, %v3029, %v3033
  %v3036 = vshrl.u32 %v2871, 16
  %v3038 = vrot.slane %v3036, 4
  %v3039 = vshll.u32 %v2871, 16
  %v3041 = vrot.slane %v3039, 5
  %v3042 = vor.u32 %v3038, %v3041
  %v3043 = vrot.slane %v3042, 4
  %v3045 = vshll.u32 %v2872, 16
  %v3047 = vrot.slane %v3045, 5
  %v3048 = vsel %vm177, %v3043, %v3047
  %v3050 = vshrl.u32 %v2873, 16
  %v3052 = vrot.slane %v3050, 4
  %v3053 = vshll.u32 %v2873, 16
  %v3055 = vrot.slane %v3053, 5
  %v3056 = vor.u32 %v3052, %v3055
  %v3057 = vrot.slane %v3056, 4
  %v3059 = vshll.u32 %v2874, 16
  %v3061 = vrot.slane %v3059, 5
  %v3062 = vsel %vm177, %v3057, %v3061
  %v3064 = vshrl.u32 %v2875, 16
  %v3066 = vrot.slane %v3064, 4
  %v3067 = vshll.u32 %v2875, 16
  %v3069 = vrot.slane %v3067, 5
  %v3070 = vor.u32 %v3066, %v3069
  %v3071 = vrot.slane %v3070, 4
  %v3073 = vshll.u32 %v2876, 16
  %v3075 = vrot.slane %v3073, 5
  %v3076 = vsel %vm177, %v3071, %v3075
  %v3078 = vshrl.u32 %v2877, 16
  %v3080 = vrot.slane %v3078, 4
  %v3081 = vshll.u32 %v2877, 16
  %v3083 = vrot.slane %v3081, 5
  %v3084 = vor.u32 %v3080, %v3083
  %v3085 = vrot.slane %v3084, 4
  %v3087 = vshll.u32 %v2878, 16
  %v3089 = vrot.slane %v3087, 5
  %v3090 = vsel %vm177, %v3085, %v3089
  %v3092 = vshrl.u32 %v2879, 16
  %v3094 = vrot.slane %v3092, 4
  %v3095 = vshll.u32 %v2879, 16
  %v3097 = vrot.slane %v3095, 5
  %v3098 = vor.u32 %v3094, %v3097
  %v3099 = vrot.slane %v3098, 4
  %v3101 = vshll.u32 %v2880, 16
  %v3103 = vrot.slane %v3101, 5
  %v3104 = vsel %vm177, %v3099, %v3103
  %v3106 = vshrl.u32 %v2881, 16
  %v3108 = vrot.slane %v3106, 4
  %v3109 = vshll.u32 %v2881, 16
  %v3111 = vrot.slane %v3109, 5
  %v3112 = vor.u32 %v3108, %v3111
  %v3113 = vrot.slane %v3112, 4
  %v3115 = vshll.u32 %v2882, 16
  %v3117 = vrot.slane %v3115, 5
  %v3118 = vsel %vm177, %v3113, %v3117
  %v3120 = vshrl.u32 %v2883, 16
  %v3122 = vrot.slane %v3120, 4
  %v3123 = vshll.u32 %v2883, 16
  %v3125 = vrot.slane %v3123, 5
  %v3126 = vor.u32 %v3122, %v3125
  %v3127 = vrot.slane %v3126, 4
  %v3129 = vshll.u32 %v2884, 16
  %v3131 = vrot.slane %v3129, 5
  %v3132 = vsel %vm177, %v3127, %v3131
  %v3134 = vshrl.u32 %v2885, 16
  %v3136 = vrot.slane %v3134, 4
  %v3137 = vshll.u32 %v2885, 16
  %v3139 = vrot.slane %v3137, 5
  %v3140 = vor.u32 %v3136, %v3139
  %v3141 = vrot.slane %v3140, 4
  %v3143 = vshll.u32 %v2886, 16
  %v3145 = vrot.slane %v3143, 5
  %v3146 = vsel %vm177, %v3141, %v3145
  %v3148 = vshrl.u32 %v2887, 16
  %v3150 = vrot.slane %v3148, 4
  %v3151 = vshll.u32 %v2887, 16
  %v3153 = vrot.slane %v3151, 5
  %v3154 = vor.u32 %v3150, %v3153
  %v3155 = vrot.slane %v3154, 4
  %v3157 = vshll.u32 %v2888, 16
  %v3159 = vrot.slane %v3157, 5
  %v3160 = vsel %vm177, %v3155, %v3159
  %v3162 = vshrl.u32 %v2889, 16
  %v3164 = vrot.slane %v3162, 4
  %v3165 = vshll.u32 %v2889, 16
  %v3167 = vrot.slane %v3165, 5
  %v3168 = vor.u32 %v3164, %v3167
  %v3169 = vrot.slane %v3168, 4
  %v3171 = vshll.u32 %v2890, 16
  %v3173 = vrot.slane %v3171, 5
  %v3174 = vsel %vm177, %v3169, %v3173
  %v3176 = vshrl.u32 %v2891, 16
  %v3178 = vrot.slane %v3176, 4
  %v3179 = vshll.u32 %v2891, 16
  %v3181 = vrot.slane %v3179, 5
  %v3182 = vor.u32 %v3178, %v3181
  %v3183 = vrot.slane %v3182, 4
  %v3185 = vshll.u32 %v2892, 16
  %v3187 = vrot.slane %v3185, 5
  %v3188 = vsel %vm177, %v3183, %v3187
  %v3190 = vshrl.u32 %v2893, 16
  %v3192 = vrot.slane %v3190, 4
  %v3193 = vshll.u32 %v2893, 16
  %v3195 = vrot.slane %v3193, 5
  %v3196 = vor.u32 %v3192, %v3195
  %v3197 = vrot.slane %v3196, 4
  %v3199 = vshll.u32 %v2894, 16
  %v3201 = vrot.slane %v3199, 5
  %v3202 = vsel %vm177, %v3197, %v3201
  %v3204 = vshrl.u32 %v2895, 16
  %v3206 = vrot.slane %v3204, 4
  %v3207 = vshll.u32 %v2895, 16
  %v3209 = vrot.slane %v3207, 5
  %v3210 = vor.u32 %v3206, %v3209
  %v3211 = vrot.slane %v3210, 4
  %v3213 = vshll.u32 %v2896, 16
  %v3215 = vrot.slane %v3213, 5
  %v3216 = vsel %vm177, %v3211, %v3215
  %v3218 = vshrl.u32 %v2897, 16
  %v3220 = vrot.slane %v3218, 4
  %v3221 = vshll.u32 %v2897, 16
  %v3223 = vrot.slane %v3221, 5
  %v3224 = vor.u32 %v3220, %v3223
  %v3225 = vrot.slane %v3224, 4
  %v3227 = vshll.u32 %v2898, 16
  %v3229 = vrot.slane %v3227, 5
  %v3230 = vsel %vm177, %v3225, %v3229
  %v3232 = vshrl.u32 %v2899, 16
  %v3234 = vrot.slane %v3232, 4
  %v3235 = vshll.u32 %v2899, 16
  %v3237 = vrot.slane %v3235, 5
  %v3238 = vor.u32 %v3234, %v3237
  %v3239 = vrot.slane %v3238, 4
  %v3241 = vshll.u32 %v2900, 16
  %v3243 = vrot.slane %v3241, 5
  %v3244 = vsel %vm177, %v3239, %v3243
  %v3246 = vshrl.u32 %v2901, 16
  %v3248 = vrot.slane %v3246, 4
  %v3249 = vshll.u32 %v2901, 16
  %v3251 = vrot.slane %v3249, 5
  %v3252 = vor.u32 %v3248, %v3251
  %v3253 = vrot.slane %v3252, 4
  %v3255 = vshll.u32 %v2902, 16
  %v3257 = vrot.slane %v3255, 5
  %v3258 = vsel %vm177, %v3253, %v3257
  %v3260 = vshrl.u32 %v2903, 16
  %v3262 = vrot.slane %v3260, 4
  %v3263 = vshll.u32 %v2903, 16
  %v3265 = vrot.slane %v3263, 5
  %v3266 = vor.u32 %v3262, %v3265
  %v3267 = vrot.slane %v3266, 4
  %v3269 = vshll.u32 %v2904, 16
  %v3271 = vrot.slane %v3269, 5
  %v3272 = vsel %vm177, %v3267, %v3271
  %v3274 = vshrl.u32 %v2905, 16
  %v3276 = vrot.slane %v3274, 4
  %v3277 = vshll.u32 %v2905, 16
  %v3279 = vrot.slane %v3277, 5
  %v3280 = vor.u32 %v3276, %v3279
  %v3281 = vrot.slane %v3280, 4
  %v3283 = vshll.u32 %v2906, 16
  %v3285 = vrot.slane %v3283, 5
  %v3286 = vsel %vm177, %v3281, %v3285
  %v3288 = vshrl.u32 %v2907, 16
  %v3290 = vrot.slane %v3288, 4
  %v3291 = vshll.u32 %v2907, 16
  %v3293 = vrot.slane %v3291, 5
  %v3294 = vor.u32 %v3290, %v3293
  %v3295 = vrot.slane %v3294, 4
  %v3297 = vshll.u32 %v2908, 16
  %v3299 = vrot.slane %v3297, 5
  %v3300 = vsel %vm177, %v3295, %v3299
  %v3302 = vshrl.u32 %v2909, 16
  %v3304 = vrot.slane %v3302, 4
  %v3305 = vshll.u32 %v2909, 16
  %v3307 = vrot.slane %v3305, 5
  %v3308 = vor.u32 %v3304, %v3307
  %v3309 = vrot.slane %v3308, 4
  %v3311 = vshll.u32 %v2910, 16
  %v3313 = vrot.slane %v3311, 5
  %v3314 = vsel %vm177, %v3309, %v3313
  %v3316 = vshrl.u32 %v2911, 16
  %v3318 = vrot.slane %v3316, 4
  %v3319 = vshll.u32 %v2911, 16
  %v3321 = vrot.slane %v3319, 5
  %v3322 = vor.u32 %v3318, %v3321
  %v3323 = vrot.slane %v3322, 4
  %v3325 = vshll.u32 %v2912, 16
  %v3327 = vrot.slane %v3325, 5
  %v3328 = vsel %vm177, %v3323, %v3327
  %v3330 = vshrl.u32 %v2913, 16
  %v3332 = vrot.slane %v3330, 4
  %v3333 = vshll.u32 %v2913, 16
  %v3335 = vrot.slane %v3333, 5
  %v3336 = vor.u32 %v3332, %v3335
  %v3337 = vrot.slane %v3336, 4
  %v3339 = vshll.u32 %v2914, 16
  %v3341 = vrot.slane %v3339, 5
  %v3342 = vsel %vm177, %v3337, %v3341
  %v3344 = vshrl.u32 %v2915, 16
  %v3346 = vrot.slane %v3344, 4
  %v3347 = vshll.u32 %v2915, 16
  %v3349 = vrot.slane %v3347, 5
  %v3350 = vor.u32 %v3346, %v3349
  %v3351 = vrot.slane %v3350, 4
  %v3353 = vshll.u32 %v2916, 16
  %v3355 = vrot.slane %v3353, 5
  %v3356 = vsel %vm177, %v3351, %v3355
  %v3358 = vshrl.u32 %v2917, 16
  %v3360 = vrot.slane %v3358, 4
  %v3361 = vshll.u32 %v2917, 16
  %v3363 = vrot.slane %v3361, 5
  %v3364 = vor.u32 %v3360, %v3363
  %v3365 = vrot.slane %v3364, 4
  %v3367 = vshll.u32 %v2918, 16
  %v3369 = vrot.slane %v3367, 5
  %v3370 = vsel %vm177, %v3365, %v3369
  %v3372 = vshrl.u32 %v2919, 16
  %v3374 = vrot.slane %v3372, 4
  %v3375 = vshll.u32 %v2919, 16
  %v3377 = vrot.slane %v3375, 5
  %v3378 = vor.u32 %v3374, %v3377
  %v3379 = vrot.slane %v3378, 4
  %v3381 = vshll.u32 %v2920, 16
  %v3383 = vrot.slane %v3381, 5
  %v3384 = vsel %vm177, %v3379, %v3383
  %v3386 = vshrl.u32 %v2921, 16
  %v3388 = vrot.slane %v3386, 4
  %v3389 = vshll.u32 %v2921, 16
  %v3391 = vrot.slane %v3389, 5
  %v3392 = vor.u32 %v3388, %v3391
  %v3393 = vrot.slane %v3392, 4
  %v3395 = vshll.u32 %v2922, 16
  %v3397 = vrot.slane %v3395, 5
  %v3398 = vsel %vm177, %v3393, %v3397
  %v3400 = vshrl.u32 %v2923, 16
  %v3402 = vrot.slane %v3400, 4
  %v3403 = vshll.u32 %v2923, 16
  %v3405 = vrot.slane %v3403, 5
  %v3406 = vor.u32 %v3402, %v3405
  %v3407 = vrot.slane %v3406, 4
  %v3409 = vshll.u32 %v2924, 16
  %v3411 = vrot.slane %v3409, 5
  %v3412 = vsel %vm177, %v3407, %v3411
  %v3414 = vshrl.u32 %v2925, 16
  %v3416 = vrot.slane %v3414, 4
  %v3417 = vshll.u32 %v2925, 16
  %v3419 = vrot.slane %v3417, 5
  %v3420 = vor.u32 %v3416, %v3419
  %v3421 = vrot.slane %v3420, 4
  %v3423 = vshll.u32 %v2926, 16
  %v3425 = vrot.slane %v3423, 5
  %v3426 = vsel %vm177, %v3421, %v3425
  %v3428 = vshrl.u32 %v2927, 16
  %v3430 = vrot.slane %v3428, 4
  %v3431 = vshll.u32 %v2927, 16
  %v3433 = vrot.slane %v3431, 5
  %v3434 = vor.u32 %v3430, %v3433
  %v3435 = vrot.slane %v3434, 4
  %v3437 = vshll.u32 %v2928, 16
  %v3439 = vrot.slane %v3437, 5
  %v3440 = vsel %vm177, %v3435, %v3439
  %v3442 = vshrl.u32 %v2929, 16
  %v3444 = vrot.slane %v3442, 4
  %v3445 = vshll.u32 %v2929, 16
  %v3447 = vrot.slane %v3445, 5
  %v3448 = vor.u32 %v3444, %v3447
  %v3449 = vrot.slane %v3448, 4
  %v3451 = vshll.u32 %v2930, 16
  %v3453 = vrot.slane %v3451, 5
  %v3454 = vsel %vm177, %v3449, %v3453
  %v3456 = vshrl.u32 %v2931, 16
  %v3458 = vrot.slane %v3456, 4
  %v3459 = vshll.u32 %v2931, 16
  %v3461 = vrot.slane %v3459, 5
  %v3462 = vor.u32 %v3458, %v3461
  %v3463 = vrot.slane %v3462, 4
  %v3465 = vshll.u32 %v2932, 16
  %v3467 = vrot.slane %v3465, 5
  %v3468 = vsel %vm177, %v3463, %v3467
  %v3470 = vshrl.u32 %v2933, 16
  %v3472 = vrot.slane %v3470, 4
  %v3473 = vshll.u32 %v2933, 16
  %v3475 = vrot.slane %v3473, 5
  %v3476 = vor.u32 %v3472, %v3475
  %v3477 = vrot.slane %v3476, 4
  %v3479 = vshll.u32 %v2934, 16
  %v3481 = vrot.slane %v3479, 5
  %v3482 = vsel %vm177, %v3477, %v3481
  %v3484 = vshrl.u32 %v2935, 16
  %v3486 = vrot.slane %v3484, 4
  %v3487 = vshll.u32 %v2935, 16
  %v3489 = vrot.slane %v3487, 5
  %v3490 = vor.u32 %v3486, %v3489
  %v3491 = vrot.slane %v3490, 4
  %v3493 = vshll.u32 %v2936, 16
  %v3495 = vrot.slane %v3493, 5
  %v3496 = vsel %vm177, %v3491, %v3495
  %v3498 = vshrl.u32 %v2937, 16
  %v3500 = vrot.slane %v3498, 4
  %v3501 = vshll.u32 %v2937, 16
  %v3503 = vrot.slane %v3501, 5
  %v3504 = vor.u32 %v3500, %v3503
  %v3505 = vrot.slane %v3504, 4
  %v3507 = vshll.u32 %v2938, 16
  %v3509 = vrot.slane %v3507, 5
  %v3510 = vsel %vm177, %v3505, %v3509
  %v3512 = vshrl.u32 %v2939, 16
  %v3514 = vrot.slane %v3512, 4
  %v3515 = vshll.u32 %v2939, 16
  %v3517 = vrot.slane %v3515, 5
  %v3518 = vor.u32 %v3514, %v3517
  %v3519 = vrot.slane %v3518, 4
  %v3521 = vshll.u32 %v2940, 16
  %v3523 = vrot.slane %v3521, 5
  %v3524 = vsel %vm177, %v3519, %v3523
  %v3526 = vshrl.u32 %v2941, 16
  %v3528 = vrot.slane %v3526, 4
  %v3529 = vshll.u32 %v2941, 16
  %v3531 = vrot.slane %v3529, 5
  %v3532 = vor.u32 %v3528, %v3531
  %v3533 = vrot.slane %v3532, 4
  %v3535 = vshll.u32 %v2942, 16
  %v3537 = vrot.slane %v3535, 5
  %v3538 = vsel %vm177, %v3533, %v3537
  %v3540 = vshrl.u32 %v2943, 16
  %v3542 = vrot.slane %v3540, 4
  %v3543 = vshll.u32 %v2943, 16
  %v3545 = vrot.slane %v3543, 5
  %v3546 = vor.u32 %v3542, %v3545
  %v3547 = vrot.slane %v3546, 4
  %v3549 = vshll.u32 %v2944, 16
  %v3551 = vrot.slane %v3549, 5
  %v3552 = vsel %vm177, %v3547, %v3551
  %v3554 = vshrl.u32 %v2945, 16
  %v3556 = vrot.slane %v3554, 4
  %v3557 = vshll.u32 %v2945, 16
  %v3559 = vrot.slane %v3557, 5
  %v3560 = vor.u32 %v3556, %v3559
  %v3561 = vrot.slane %v3560, 4
  %v3563 = vshll.u32 %v2946, 16
  %v3565 = vrot.slane %v3563, 5
  %v3566 = vsel %vm177, %v3561, %v3565
  %v3568 = vshrl.u32 %v2947, 16
  %v3570 = vrot.slane %v3568, 4
  %v3571 = vshll.u32 %v2947, 16
  %v3573 = vrot.slane %v3571, 5
  %v3574 = vor.u32 %v3570, %v3573
  %v3575 = vrot.slane %v3574, 4
  %v3577 = vshll.u32 %v2948, 16
  %v3579 = vrot.slane %v3577, 5
  %v3580 = vsel %vm177, %v3575, %v3579
  %v3582 = vshrl.u32 %v2949, 16
  %v3584 = vrot.slane %v3582, 4
  %v3585 = vshll.u32 %v2949, 16
  %v3587 = vrot.slane %v3585, 5
  %v3588 = vor.u32 %v3584, %v3587
  %v3589 = vrot.slane %v3588, 4
  %v3591 = vshll.u32 %v2950, 16
  %v3593 = vrot.slane %v3591, 5
  %v3594 = vsel %vm177, %v3589, %v3593
  %v3596 = vshrl.u32 %v2951, 16
  %v3598 = vrot.slane %v3596, 4
  %v3599 = vshll.u32 %v2951, 16
  %v3601 = vrot.slane %v3599, 5
  %v3602 = vor.u32 %v3598, %v3601
  %v3603 = vrot.slane %v3602, 4
  %v3605 = vshll.u32 %v2952, 16
  %v3607 = vrot.slane %v3605, 5
  %v3608 = vsel %vm177, %v3603, %v3607
  %v3610 = vshrl.u32 %v2953, 16
  %v3612 = vrot.slane %v3610, 4
  %v3613 = vshll.u32 %v2953, 16
  %v3615 = vrot.slane %v3613, 5
  %v3616 = vor.u32 %v3612, %v3615
  %v3617 = vrot.slane %v3616, 4
  %v3619 = vshll.u32 %v2954, 16
  %v3621 = vrot.slane %v3619, 5
  %v3622 = vsel %vm177, %v3617, %v3621
  %v3624 = vshrl.u32 %v2955, 16
  %v3626 = vrot.slane %v3624, 4
  %v3627 = vshll.u32 %v2955, 16
  %v3629 = vrot.slane %v3627, 5
  %v3630 = vor.u32 %v3626, %v3629
  %v3631 = vrot.slane %v3630, 4
  %v3633 = vshll.u32 %v2956, 16
  %v3635 = vrot.slane %v3633, 5
  %v3636 = vsel %vm177, %v3631, %v3635
  %v3638 = vshrl.u32 %v2957, 16
  %v3640 = vrot.slane %v3638, 4
  %v3641 = vshll.u32 %v2957, 16
  %v3643 = vrot.slane %v3641, 5
  %v3644 = vor.u32 %v3640, %v3643
  %v3645 = vrot.slane %v3644, 4
  %v3647 = vshll.u32 %v2958, 16
  %v3649 = vrot.slane %v3647, 5
  %v3650 = vsel %vm177, %v3645, %v3649
  %v3652 = vshrl.u32 %v2959, 16
  %v3654 = vrot.slane %v3652, 4
  %v3655 = vshll.u32 %v2959, 16
  %v3657 = vrot.slane %v3655, 5
  %v3658 = vor.u32 %v3654, %v3657
  %v3659 = vrot.slane %v3658, 4
  %v3661 = vshll.u32 %v2960, 16
  %v3663 = vrot.slane %v3661, 5
  %v3664 = vsel %vm177, %v3659, %v3663
  %v3666 = vshrl.u32 %v2961, 16
  %v3668 = vrot.slane %v3666, 4
  %v3669 = vshll.u32 %v2961, 16
  %v3671 = vrot.slane %v3669, 5
  %v3672 = vor.u32 %v3668, %v3671
  %v3673 = vrot.slane %v3672, 4
  %v3675 = vshll.u32 %v2962, 16
  %v3677 = vrot.slane %v3675, 5
  %v3678 = vsel %vm177, %v3673, %v3677
  %v3680 = vshrl.u32 %v2963, 16
  %v3682 = vrot.slane %v3680, 4
  %v3683 = vshll.u32 %v2963, 16
  %v3685 = vrot.slane %v3683, 5
  %v3686 = vor.u32 %v3682, %v3685
  %v3687 = vrot.slane %v3686, 4
  %v3689 = vshll.u32 %v2964, 16
  %v3691 = vrot.slane %v3689, 5
  %v3692 = vsel %vm177, %v3687, %v3691
  %v3694 = vshrl.u32 %v2965, 16
  %v3696 = vrot.slane %v3694, 4
  %v3697 = vshll.u32 %v2965, 16
  %v3699 = vrot.slane %v3697, 5
  %v3700 = vor.u32 %v3696, %v3699
  %v3701 = vrot.slane %v3700, 4
  %v3703 = vshll.u32 %v2966, 16
  %v3705 = vrot.slane %v3703, 5
  %v3706 = vsel %vm177, %v3701, %v3705
  %v3708 = vshrl.u32 %v2967, 16
  %v3710 = vrot.slane %v3708, 4
  %v3711 = vshll.u32 %v2967, 16
  %v3713 = vrot.slane %v3711, 5
  %v3714 = vor.u32 %v3710, %v3713
  %v3715 = vrot.slane %v3714, 4
  %v3717 = vshll.u32 %v2968, 16
  %v3719 = vrot.slane %v3717, 5
  %v3720 = vsel %vm177, %v3715, %v3719
  %v3722 = vshrl.u32 %v2969, 16
  %v3724 = vrot.slane %v3722, 4
  %v3725 = vshll.u32 %v2969, 16
  %v3727 = vrot.slane %v3725, 5
  %v3728 = vor.u32 %v3724, %v3727
  %v3729 = vrot.slane %v3728, 4
  %v3731 = vshll.u32 %v2970, 16
  %v3733 = vrot.slane %v3731, 5
  %v3734 = vsel %vm177, %v3729, %v3733
  %v3736 = vshrl.u32 %v2971, 16
  %v3738 = vrot.slane %v3736, 4
  %v3739 = vshll.u32 %v2971, 16
  %v3741 = vrot.slane %v3739, 5
  %v3742 = vor.u32 %v3738, %v3741
  %v3743 = vrot.slane %v3742, 4
  %v3745 = vshll.u32 %v2972, 16
  %v3747 = vrot.slane %v3745, 5
  %v3748 = vsel %vm177, %v3743, %v3747
  %v3750 = vshrl.u32 %v2973, 16
  %v3752 = vrot.slane %v3750, 4
  %v3753 = vshll.u32 %v2973, 16
  %v3755 = vrot.slane %v3753, 5
  %v3756 = vor.u32 %v3752, %v3755
  %v3757 = vrot.slane %v3756, 4
  %v3759 = vshll.u32 %v2974, 16
  %v3761 = vrot.slane %v3759, 5
  %v3762 = vsel %vm177, %v3757, %v3761
  %v3764 = vshrl.u32 %v2975, 16
  %v3766 = vrot.slane %v3764, 4
  %v3767 = vshll.u32 %v2975, 16
  %v3769 = vrot.slane %v3767, 5
  %v3770 = vor.u32 %v3766, %v3769
  %v3771 = vrot.slane %v3770, 4
  %v3773 = vshll.u32 %v2976, 16
  %v3775 = vrot.slane %v3773, 5
  %v3776 = vsel %vm177, %v3771, %v3775
  %v3778 = vshrl.u32 %v2977, 16
  %v3780 = vrot.slane %v3778, 4
  %v3781 = vshll.u32 %v2977, 16
  %v3783 = vrot.slane %v3781, 5
  %v3784 = vor.u32 %v3780, %v3783
  %v3785 = vrot.slane %v3784, 4
  %v3787 = vshll.u32 %v2978, 16
  %v3789 = vrot.slane %v3787, 5
  %v3790 = vsel %vm177, %v3785, %v3789
  %v3792 = vshrl.u32 %v2979, 16
  %v3794 = vrot.slane %v3792, 4
  %v3795 = vshll.u32 %v2979, 16
  %v3797 = vrot.slane %v3795, 5
  %v3798 = vor.u32 %v3794, %v3797
  %v3799 = vrot.slane %v3798, 4
  %v3801 = vshll.u32 %v2980, 16
  %v3803 = vrot.slane %v3801, 5
  %v3804 = vsel %vm177, %v3799, %v3803
  %v3806 = vshrl.u32 %v2981, 16
  %v3808 = vrot.slane %v3806, 4
  %v3809 = vshll.u32 %v2981, 16
  %v3811 = vrot.slane %v3809, 5
  %v3812 = vor.u32 %v3808, %v3811
  %v3813 = vrot.slane %v3812, 4
  %v3815 = vshll.u32 %v2982, 16
  %v3817 = vrot.slane %v3815, 5
  %v3818 = vsel %vm177, %v3813, %v3817
  %v3820 = vshrl.u32 %v2983, 16
  %v3822 = vrot.slane %v3820, 4
  %v3823 = vshll.u32 %v2983, 16
  %v3825 = vrot.slane %v3823, 5
  %v3826 = vor.u32 %v3822, %v3825
  %v3827 = vrot.slane %v3826, 4
  %v3829 = vshll.u32 %v2984, 16
  %v3831 = vrot.slane %v3829, 5
  %v3832 = vsel %vm177, %v3827, %v3831
  %v3834 = vshrl.u32 %v2985, 16
  %v3836 = vrot.slane %v3834, 4
  %v3837 = vshll.u32 %v2985, 16
  %v3839 = vrot.slane %v3837, 5
  %v3840 = vor.u32 %v3836, %v3839
  %v3841 = vrot.slane %v3840, 4
  %v3843 = vshll.u32 %v2986, 16
  %v3845 = vrot.slane %v3843, 5
  %v3846 = vsel %vm177, %v3841, %v3845
  %v3848 = vshrl.u32 %v2987, 16
  %v3850 = vrot.slane %v3848, 4
  %v3851 = vshll.u32 %v2987, 16
  %v3853 = vrot.slane %v3851, 5
  %v3854 = vor.u32 %v3850, %v3853
  %v3855 = vrot.slane %v3854, 4
  %v3857 = vshll.u32 %v2988, 16
  %v3859 = vrot.slane %v3857, 5
  %v3860 = vsel %vm177, %v3855, %v3859
  %v3862 = vshrl.u32 %v2989, 16
  %v3864 = vrot.slane %v3862, 4
  %v3865 = vshll.u32 %v2989, 16
  %v3867 = vrot.slane %v3865, 5
  %v3868 = vor.u32 %v3864, %v3867
  %v3869 = vrot.slane %v3868, 4
  %v3871 = vshll.u32 %v2990, 16
  %v3873 = vrot.slane %v3871, 5
  %v3874 = vsel %vm177, %v3869, %v3873
  %v3876 = vshrl.u32 %v2991, 16
  %v3878 = vrot.slane %v3876, 4
  %v3879 = vshll.u32 %v2991, 16
  %v3881 = vrot.slane %v3879, 5
  %v3882 = vor.u32 %v3878, %v3881
  %v3883 = vrot.slane %v3882, 4
  %v3885 = vshll.u32 %v2992, 16
  %v3887 = vrot.slane %v3885, 5
  %v3888 = vsel %vm177, %v3883, %v3887
  %s3889 = scalar_lea.vmem %s1, 96
  %v3890 = vld [vmem:[%s3889] sm:$0xf]
  %v3891 = vld [vmem:[%s3889 + $0x4] sm:$0xf]
  %v3892 = vld [vmem:[%s3889 + $0x8] sm:$0xf]
  %v3893 = vld [vmem:[%s3889 + $0xc] sm:$0xf]
  %v3894 = vld [vmem:[%s3889 + $0x10] sm:$0xf]
  %v3895 = vld [vmem:[%s3889 + $0x14] sm:$0xf]
  %v3896 = vld [vmem:[%s3889 + $0x18] sm:$0xf]
  %v3897 = vld [vmem:[%s3889 + $0x1c] sm:$0xf]
  %v3898 = vunpack.c.l.b16 %v3006
  %v3899 = vunpack.c.l.b16 %v3020
  %v3900 = vunpack.c.l.b16 %v3034
  %v3901 = vunpack.c.l.b16 %v3048
  %v3902 = vunpack.c.l.b16 %v3062
  %v3903 = vunpack.c.l.b16 %v3076
  %v3904 = vunpack.c.l.b16 %v3090
  %v3905 = vunpack.c.l.b16 %v3104
  %v3906 = vunpack.c.l.b16 %v3118
  %v3907 = vunpack.c.l.b16 %v3132
  %v3908 = vunpack.c.l.b16 %v3146
  %v3909 = vunpack.c.l.b16 %v3160
  %v3910 = vunpack.c.l.b16 %v3174
  %v3911 = vunpack.c.l.b16 %v3188
  %v3912 = vunpack.c.l.b16 %v3202
  %v3913 = vunpack.c.l.b16 %v3216
  %v3914 = vunpack.c.l.b16 %v3230
  %v3915 = vunpack.c.l.b16 %v3244
  %v3916 = vunpack.c.l.b16 %v3258
  %v3917 = vunpack.c.l.b16 %v3272
  %v3918 = vunpack.c.l.b16 %v3286
  %v3919 = vunpack.c.l.b16 %v3300
  %v3920 = vunpack.c.l.b16 %v3314
  %v3921 = vunpack.c.l.b16 %v3328
  %v3922 = vunpack.c.l.b16 %v3342
  %v3923 = vunpack.c.l.b16 %v3356
  %v3924 = vunpack.c.l.b16 %v3370
  %v3925 = vunpack.c.l.b16 %v3384
  %v3926 = vunpack.c.l.b16 %v3398
  %v3927 = vunpack.c.l.b16 %v3412
  %v3928 = vunpack.c.l.b16 %v3426
  %v3929 = vunpack.c.l.b16 %v3440
  %v3930 = vunpack.c.l.b16 %v3454
  %v3931 = vunpack.c.l.b16 %v3468
  %v3932 = vunpack.c.l.b16 %v3482
  %v3933 = vunpack.c.l.b16 %v3496
  %v3934 = vunpack.c.l.b16 %v3510
  %v3935 = vunpack.c.l.b16 %v3524
  %v3936 = vunpack.c.l.b16 %v3538
  %v3937 = vunpack.c.l.b16 %v3552
  %v3938 = vunpack.c.l.b16 %v3566
  %v3939 = vunpack.c.l.b16 %v3580
  %v3940 = vunpack.c.l.b16 %v3594
  %v3941 = vunpack.c.l.b16 %v3608
  %v3942 = vunpack.c.l.b16 %v3622
  %v3943 = vunpack.c.l.b16 %v3636
  %v3944 = vunpack.c.l.b16 %v3650
  %v3945 = vunpack.c.l.b16 %v3664
  %v3946 = vunpack.c.l.b16 %v3678
  %v3947 = vunpack.c.l.b16 %v3692
  %v3948 = vunpack.c.l.b16 %v3706
  %v3949 = vunpack.c.l.b16 %v3720
  %v3950 = vunpack.c.l.b16 %v3734
  %v3951 = vunpack.c.l.b16 %v3748
  %v3952 = vunpack.c.l.b16 %v3762
  %v3953 = vunpack.c.l.b16 %v3776
  %v3954 = vunpack.c.l.b16 %v3790
  %v3955 = vunpack.c.l.b16 %v3804
  %v3956 = vunpack.c.l.b16 %v3818
  %v3957 = vunpack.c.l.b16 %v3832
  %v3958 = vunpack.c.l.b16 %v3846
  %v3959 = vunpack.c.l.b16 %v3860
  %v3960 = vunpack.c.l.b16 %v3874
  %v3961 = vunpack.c.l.b16 %v3888
  %v3962 = vpack.c.b16 %v3899, %v3898
  %v3963 = vpack.c.b16 %v3901, %v3900
  %v3964 = vpack.c.b16 %v3903, %v3902
  %v3965 = vpack.c.b16 %v3905, %v3904
  %v3966 = vpack.c.b16 %v3907, %v3906
  %v3967 = vpack.c.b16 %v3909, %v3908
  %v3968 = vpack.c.b16 %v3911, %v3910
  %v3969 = vpack.c.b16 %v3913, %v3912
  %v3970 = vpack.c.b16 %v3915, %v3914
  %v3971 = vpack.c.b16 %v3917, %v3916
  %v3972 = vpack.c.b16 %v3919, %v3918
  %v3973 = vpack.c.b16 %v3921, %v3920
  %v3974 = vpack.c.b16 %v3923, %v3922
  %v3975 = vpack.c.b16 %v3925, %v3924
  %v3976 = vpack.c.b16 %v3927, %v3926
  %v3977 = vpack.c.b16 %v3929, %v3928
  %v3978 = vpack.c.b16 %v3931, %v3930
  %v3979 = vpack.c.b16 %v3933, %v3932
  %v3980 = vpack.c.b16 %v3935, %v3934
  %v3981 = vpack.c.b16 %v3937, %v3936
  %v3982 = vpack.c.b16 %v3939, %v3938
  %v3983 = vpack.c.b16 %v3941, %v3940
  %v3984 = vpack.c.b16 %v3943, %v3942
  %v3985 = vpack.c.b16 %v3945, %v3944
  %v3986 = vpack.c.b16 %v3947, %v3946
  %v3987 = vpack.c.b16 %v3949, %v3948
  %v3988 = vpack.c.b16 %v3951, %v3950
  %v3989 = vpack.c.b16 %v3953, %v3952
  %v3990 = vpack.c.b16 %v3955, %v3954
  %v3991 = vpack.c.b16 %v3957, %v3956
  %v3992 = vpack.c.b16 %v3959, %v3958
  %v3993 = vpack.c.b16 %v3961, %v3960
  %v4002 = vunpack.c.l.b16 %v3890
  %v4003 = vunpack.c.l.b16 %v3891
  %v4004 = vunpack.c.l.b16 %v3892
  %v4005 = vunpack.c.l.b16 %v3893
  %v4006 = vunpack.c.l.b16 %v3894
  %v4007 = vunpack.c.l.b16 %v3895
  %v4008 = vunpack.c.l.b16 %v3896
  %v4009 = vunpack.c.l.b16 %v3897
  %v4010 = vpack.c.b16 %v4003, %v4002
  %v4011 = vpack.c.b16 %v4005, %v4004
  %v4012 = vpack.c.b16 %v4007, %v4006
  %v4013 = vpack.c.b16 %v4009, %v4008
  %v4019 = vsel %vm1203, %v3962, 0
  %v4022 = vsel %vm1203, %v3963, 0
  %v4025 = vsel %vm1203, %v3964, 0
  %v4028 = vsel %vm1203, %v3965, 0
  %v4031 = vsel %vm1203, %v3966, 0
  %v4034 = vsel %vm1203, %v3967, 0
  %v4037 = vsel %vm1203, %v3968, 0
  %v4040 = vsel %vm1203, %v3969, 0
  %v4043 = vsel %vm1203, %v3970, 0
  %v4046 = vsel %vm1203, %v3971, 0
  %v4049 = vsel %vm1203, %v3972, 0
  %v4052 = vsel %vm1203, %v3973, 0
  %v4055 = vsel %vm1203, %v3974, 0
  %v4058 = vsel %vm1203, %v3975, 0
  %v4061 = vsel %vm1203, %v3976, 0
  %v4064 = vsel %vm1203, %v3977, 0
  %v4067 = vsel %vm1203, %v3978, 0
  %v4070 = vsel %vm1203, %v3979, 0
  %v4073 = vsel %vm1203, %v3980, 0
  %v4076 = vsel %vm1203, %v3981, 0
  %v4079 = vsel %vm1203, %v3982, 0
  %v4082 = vsel %vm1203, %v3983, 0
  %v4085 = vsel %vm1203, %v3984, 0
  %v4088 = vsel %vm1203, %v3985, 0
  %v4091 = vsel %vm1203, %v3986, 0
  %v4094 = vsel %vm1203, %v3987, 0
  %v4097 = vsel %vm1203, %v3988, 0
  %v4100 = vsel %vm1203, %v3989, 0
  %v4103 = vsel %vm1203, %v3990, 0
  %v4106 = vsel %vm1203, %v3991, 0
  %v4109 = vsel %vm1203, %v3992, 0
  %v4112 = vsel %vm1203, %v3993, 0
  %4114 = vmatprep.subr.bf16.mxu0 0
  %4115 = vmatpush1.bf16.msra.mxu0 %v4010
  %4116 = vmatprep.subr.bf16.mxu0 0
  %4117 = vmatpush1.bf16.msra.mxu0 %v4011
  %4118 = vmatprep.subr.bf16.mxu0 0
  %4119 = vmatpush1.bf16.msra.mxu0 %v4012
  %4120 = vmatprep.subr.bf16.mxu0 0
  %4121 = vmatpush1.bf16.msra.mxu0 %v4013
  %4122 = vmatprep.subr.bf16.mxu0 0
  %4123 = vmatpush1.bf16.msra.mxu0 0
  %4124 = vmatprep.subr.bf16.mxu0 0
  %4125 = vmatpush1.bf16.msra.mxu0 0
  %4126 = vmatprep.subr.bf16.mxu0 0
  %4127 = vmatpush1.bf16.msra.mxu0 0
  %4128 = vmatprep.subr.bf16.mxu0 0
  %4129 = vmatpush1.bf16.msra.mxu0 0
  %4130 = vmatprep.subr.bf16.mxu0 0
  %4131 = vmatpush1.bf16.msra.mxu0 0
  %4132 = vmatprep.subr.bf16.mxu0 0
  %4133 = vmatpush1.bf16.msra.mxu0 0
  %4134 = vmatprep.subr.bf16.mxu0 0
  %4135 = vmatpush1.bf16.msra.mxu0 0
  %4136 = vmatprep.subr.bf16.mxu0 0
  %4137 = vmatpush1.bf16.msra.mxu0 0
  %4138 = vmatprep.subr.bf16.mxu0 0
  %4139 = vmatpush1.bf16.msra.mxu0 0
  %4140 = vmatprep.subr.bf16.mxu0 0
  %4141 = vmatpush1.bf16.msra.mxu0 0
  %4142 = vmatprep.subr.bf16.mxu0 0
  %4143 = vmatpush1.bf16.msra.mxu0 0
  %4144 = vmatprep.subr.bf16.mxu0 0
  %4145 = vmatpush1.bf16.msra.mxu0 0
  %4146 = vmatprep.mubr.bf16.mxu0 0
  %4147 = vmatmul.mubr.bf16.gmra.mrb[0].mxu0 %v4019
  %v4148 = vpop.f32.mrb[0].mxu0
  %v4149 = vadd.f32 0.0, %v4148
  %v4150 = vpop.f32.mrb[0].mxu0
  %v4151 = vpop.f32.mrb[0].mxu0
  %v4152 = vadd.f32 0.0, %v4151
  %v4153 = vpop.f32.mrb[0].mxu0
  %4154 = vmatprep.mubr.bf16.mxu0 0
  %4155 = vmatmul.mubr.bf16.gmra.mrb[0].mxu0 %v4022
  %v4156 = vpop.f32.mrb[0].mxu0
  %v4157 = vadd.f32 0.0, %v4156
  %v4158 = vpop.f32.mrb[0].mxu0
  %v4159 = vpop.f32.mrb[0].mxu0
  %v4160 = vadd.f32 0.0, %v4159
  %v4161 = vpop.f32.mrb[0].mxu0
  %4162 = vmatprep.mubr.bf16.mxu0 0
  %4163 = vmatmul.mubr.bf16.gmra.mrb[0].mxu0 %v4025
  %v4164 = vpop.f32.mrb[0].mxu0
  %v4165 = vadd.f32 0.0, %v4164
  %v4166 = vpop.f32.mrb[0].mxu0
  %v4167 = vpop.f32.mrb[0].mxu0
  %v4168 = vadd.f32 0.0, %v4167
  %v4169 = vpop.f32.mrb[0].mxu0
  %4170 = vmatprep.mubr.bf16.mxu0 0
  %4171 = vmatmul.mubr.bf16.gmra.mrb[0].mxu0 %v4028
  %v4172 = vpop.f32.mrb[0].mxu0
  %v4173 = vadd.f32 0.0, %v4172
  %v4174 = vpop.f32.mrb[0].mxu0
  %v4175 = vpop.f32.mrb[0].mxu0
  %v4176 = vadd.f32 0.0, %v4175
  %v4177 = vpop.f32.mrb[0].mxu0
  %4178 = vmatprep.mubr.bf16.mxu0 0
  %4179 = vmatmul.mubr.bf16.gmra.mrb[0].mxu0 %v4031
  %v4180 = vpop.f32.mrb[0].mxu0
  %v4181 = vadd.f32 0.0, %v4180
  %v4182 = vpop.f32.mrb[0].mxu0
  %v4183 = vpop.f32.mrb[0].mxu0
  %v4184 = vadd.f32 0.0, %v4183
  %v4185 = vpop.f32.mrb[0].mxu0
  %4186 = vmatprep.mubr.bf16.mxu0 0
  %4187 = vmatmul.mubr.bf16.gmra.mrb[0].mxu0 %v4034
  %v4188 = vpop.f32.mrb[0].mxu0
  %v4189 = vadd.f32 0.0, %v4188
  %v4190 = vpop.f32.mrb[0].mxu0
  %v4191 = vpop.f32.mrb[0].mxu0
  %v4192 = vadd.f32 0.0, %v4191
  %v4193 = vpop.f32.mrb[0].mxu0
  %4194 = vmatprep.mubr.bf16.mxu0 0
  %4195 = vmatmul.mubr.bf16.gmra.mrb[0].mxu0 %v4037
  %v4196 = vpop.f32.mrb[0].mxu0
  %v4197 = vadd.f32 0.0, %v4196
  %v4198 = vpop.f32.mrb[0].mxu0
  %v4199 = vpop.f32.mrb[0].mxu0
  %v4200 = vadd.f32 0.0, %v4199
  %v4201 = vpop.f32.mrb[0].mxu0
  %4202 = vmatprep.mubr.bf16.mxu0 0
  %4203 = vmatmul.mubr.bf16.gmra.mrb[0].mxu0 %v4040
  %v4204 = vpop.f32.mrb[0].mxu0
  %v4205 = vadd.f32 0.0, %v4204
  %v4206 = vpop.f32.mrb[0].mxu0
  %v4207 = vpop.f32.mrb[0].mxu0
  %v4208 = vadd.f32 0.0, %v4207
  %v4209 = vpop.f32.mrb[0].mxu0
  %4210 = vmatprep.mubr.bf16.mxu0 0
  %4211 = vmatmul.mubr.bf16.gmra.mrb[0].mxu0 %v4043
  %v4212 = vpop.f32.mrb[0].mxu0
  %v4213 = vadd.f32 0.0, %v4212
  %v4214 = vpop.f32.mrb[0].mxu0
  %v4215 = vpop.f32.mrb[0].mxu0
  %v4216 = vadd.f32 0.0, %v4215
  %v4217 = vpop.f32.mrb[0].mxu0
  %4218 = vmatprep.mubr.bf16.mxu0 0
  %4219 = vmatmul.mubr.bf16.gmra.mrb[0].mxu0 %v4046
  %v4220 = vpop.f32.mrb[0].mxu0
  %v4221 = vadd.f32 0.0, %v4220
  %v4222 = vpop.f32.mrb[0].mxu0
  %v4223 = vpop.f32.mrb[0].mxu0
  %v4224 = vadd.f32 0.0, %v4223
  %v4225 = vpop.f32.mrb[0].mxu0
  %4226 = vmatprep.mubr.bf16.mxu0 0
  %4227 = vmatmul.mubr.bf16.gmra.mrb[0].mxu0 %v4049
  %v4228 = vpop.f32.mrb[0].mxu0
  %v4229 = vadd.f32 0.0, %v4228
  %v4230 = vpop.f32.mrb[0].mxu0
  %v4231 = vpop.f32.mrb[0].mxu0
  %v4232 = vadd.f32 0.0, %v4231
  %v4233 = vpop.f32.mrb[0].mxu0
  %4234 = vmatprep.mubr.bf16.mxu0 0
  %4235 = vmatmul.mubr.bf16.gmra.mrb[0].mxu0 %v4052
  %v4236 = vpop.f32.mrb[0].mxu0
  %v4237 = vadd.f32 0.0, %v4236
  %v4238 = vpop.f32.mrb[0].mxu0
  %v4239 = vpop.f32.mrb[0].mxu0
  %v4240 = vadd.f32 0.0, %v4239
  %v4241 = vpop.f32.mrb[0].mxu0
  %4242 = vmatprep.mubr.bf16.mxu0 0
  %4243 = vmatmul.mubr.bf16.gmra.mrb[0].mxu0 %v4055
  %v4244 = vpop.f32.mrb[0].mxu0
  %v4245 = vadd.f32 0.0, %v4244
  %v4246 = vpop.f32.mrb[0].mxu0
  %v4247 = vpop.f32.mrb[0].mxu0
  %v4248 = vadd.f32 0.0, %v4247
  %v4249 = vpop.f32.mrb[0].mxu0
  %4250 = vmatprep.mubr.bf16.mxu0 0
  %4251 = vmatmul.mubr.bf16.gmra.mrb[0].mxu0 %v4058
  %v4252 = vpop.f32.mrb[0].mxu0
  %v4253 = vadd.f32 0.0, %v4252
  %v4254 = vpop.f32.mrb[0].mxu0
  %v4255 = vpop.f32.mrb[0].mxu0
  %v4256 = vadd.f32 0.0, %v4255
  %v4257 = vpop.f32.mrb[0].mxu0
  %4258 = vmatprep.mubr.bf16.mxu0 0
  %4259 = vmatmul.mubr.bf16.gmra.mrb[0].mxu0 %v4061
  %v4260 = vpop.f32.mrb[0].mxu0
  %v4261 = vadd.f32 0.0, %v4260
  %v4262 = vpop.f32.mrb[0].mxu0
  %v4263 = vpop.f32.mrb[0].mxu0
  %v4264 = vadd.f32 0.0, %v4263
  %v4265 = vpop.f32.mrb[0].mxu0
  %4266 = vmatprep.mubr.bf16.mxu0 0
  %4267 = vmatmul.mubr.bf16.gmra.mrb[0].mxu0 %v4064
  %v4268 = vpop.f32.mrb[0].mxu0
  %v4269 = vadd.f32 0.0, %v4268
  %v4270 = vpop.f32.mrb[0].mxu0
  %v4271 = vpop.f32.mrb[0].mxu0
  %v4272 = vadd.f32 0.0, %v4271
  %v4273 = vpop.f32.mrb[0].mxu0
  %4274 = vmatprep.mubr.bf16.mxu0 0
  %4275 = vmatmul.mubr.bf16.gmra.mrb[0].mxu0 %v4067
  %v4276 = vpop.f32.mrb[0].mxu0
  %v4277 = vadd.f32 0.0, %v4276
  %v4278 = vpop.f32.mrb[0].mxu0
  %v4279 = vpop.f32.mrb[0].mxu0
  %v4280 = vadd.f32 0.0, %v4279
  %v4281 = vpop.f32.mrb[0].mxu0
  %4282 = vmatprep.mubr.bf16.mxu0 0
  %4283 = vmatmul.mubr.bf16.gmra.mrb[0].mxu0 %v4070
  %v4284 = vpop.f32.mrb[0].mxu0
  %v4285 = vadd.f32 0.0, %v4284
  %v4286 = vpop.f32.mrb[0].mxu0
  %v4287 = vpop.f32.mrb[0].mxu0
  %v4288 = vadd.f32 0.0, %v4287
  %v4289 = vpop.f32.mrb[0].mxu0
  %4290 = vmatprep.mubr.bf16.mxu0 0
  %4291 = vmatmul.mubr.bf16.gmra.mrb[0].mxu0 %v4073
  %v4292 = vpop.f32.mrb[0].mxu0
  %v4293 = vadd.f32 0.0, %v4292
  %v4294 = vpop.f32.mrb[0].mxu0
  %v4295 = vpop.f32.mrb[0].mxu0
  %v4296 = vadd.f32 0.0, %v4295
  %v4297 = vpop.f32.mrb[0].mxu0
  %4298 = vmatprep.mubr.bf16.mxu0 0
  %4299 = vmatmul.mubr.bf16.gmra.mrb[0].mxu0 %v4076
  %v4300 = vpop.f32.mrb[0].mxu0
  %v4301 = vadd.f32 0.0, %v4300
  %v4302 = vpop.f32.mrb[0].mxu0
  %v4303 = vpop.f32.mrb[0].mxu0
  %v4304 = vadd.f32 0.0, %v4303
  %v4305 = vpop.f32.mrb[0].mxu0
  %4306 = vmatprep.mubr.bf16.mxu0 0
  %4307 = vmatmul.mubr.bf16.gmra.mrb[0].mxu0 %v4079
  %v4308 = vpop.f32.mrb[0].mxu0
  %v4309 = vadd.f32 0.0, %v4308
  %v4310 = vpop.f32.mrb[0].mxu0
  %v4311 = vpop.f32.mrb[0].mxu0
  %v4312 = vadd.f32 0.0, %v4311
  %v4313 = vpop.f32.mrb[0].mxu0
  %4314 = vmatprep.mubr.bf16.mxu0 0
  %4315 = vmatmul.mubr.bf16.gmra.mrb[0].mxu0 %v4082
  %v4316 = vpop.f32.mrb[0].mxu0
  %v4317 = vadd.f32 0.0, %v4316
  %v4318 = vpop.f32.mrb[0].mxu0
  %v4319 = vpop.f32.mrb[0].mxu0
  %v4320 = vadd.f32 0.0, %v4319
  %v4321 = vpop.f32.mrb[0].mxu0
  %4322 = vmatprep.mubr.bf16.mxu0 0
  %4323 = vmatmul.mubr.bf16.gmra.mrb[0].mxu0 %v4085
  %v4324 = vpop.f32.mrb[0].mxu0
  %v4325 = vadd.f32 0.0, %v4324
  %v4326 = vpop.f32.mrb[0].mxu0
  %v4327 = vpop.f32.mrb[0].mxu0
  %v4328 = vadd.f32 0.0, %v4327
  %v4329 = vpop.f32.mrb[0].mxu0
  %4330 = vmatprep.mubr.bf16.mxu0 0
  %4331 = vmatmul.mubr.bf16.gmra.mrb[0].mxu0 %v4088
  %v4332 = vpop.f32.mrb[0].mxu0
  %v4333 = vadd.f32 0.0, %v4332
  %v4334 = vpop.f32.mrb[0].mxu0
  %v4335 = vpop.f32.mrb[0].mxu0
  %v4336 = vadd.f32 0.0, %v4335
  %v4337 = vpop.f32.mrb[0].mxu0
  %4338 = vmatprep.mubr.bf16.mxu0 0
  %4339 = vmatmul.mubr.bf16.gmra.mrb[0].mxu0 %v4091
  %v4340 = vpop.f32.mrb[0].mxu0
  %v4341 = vadd.f32 0.0, %v4340
  %v4342 = vpop.f32.mrb[0].mxu0
  %v4343 = vpop.f32.mrb[0].mxu0
  %v4344 = vadd.f32 0.0, %v4343
  %v4345 = vpop.f32.mrb[0].mxu0
  %4346 = vmatprep.mubr.bf16.mxu0 0
  %4347 = vmatmul.mubr.bf16.gmra.mrb[0].mxu0 %v4094
  %v4348 = vpop.f32.mrb[0].mxu0
  %v4349 = vadd.f32 0.0, %v4348
  %v4350 = vpop.f32.mrb[0].mxu0
  %v4351 = vpop.f32.mrb[0].mxu0
  %v4352 = vadd.f32 0.0, %v4351
  %v4353 = vpop.f32.mrb[0].mxu0
  %4354 = vmatprep.mubr.bf16.mxu0 0
  %4355 = vmatmul.mubr.bf16.gmra.mrb[0].mxu0 %v4097
  %v4356 = vpop.f32.mrb[0].mxu0
  %v4357 = vadd.f32 0.0, %v4356
  %v4358 = vpop.f32.mrb[0].mxu0
  %v4359 = vpop.f32.mrb[0].mxu0
  %v4360 = vadd.f32 0.0, %v4359
  %v4361 = vpop.f32.mrb[0].mxu0
  %4362 = vmatprep.mubr.bf16.mxu0 0
  %4363 = vmatmul.mubr.bf16.gmra.mrb[0].mxu0 %v4100
  %v4364 = vpop.f32.mrb[0].mxu0
  %v4365 = vadd.f32 0.0, %v4364
  %v4366 = vpop.f32.mrb[0].mxu0
  %v4367 = vpop.f32.mrb[0].mxu0
  %v4368 = vadd.f32 0.0, %v4367
  %v4369 = vpop.f32.mrb[0].mxu0
  %4370 = vmatprep.mubr.bf16.mxu0 0
  %4371 = vmatmul.mubr.bf16.gmra.mrb[0].mxu0 %v4103
  %v4372 = vpop.f32.mrb[0].mxu0
  %v4373 = vadd.f32 0.0, %v4372
  %v4374 = vpop.f32.mrb[0].mxu0
  %v4375 = vpop.f32.mrb[0].mxu0
  %v4376 = vadd.f32 0.0, %v4375
  %v4377 = vpop.f32.mrb[0].mxu0
  %4378 = vmatprep.mubr.bf16.mxu0 0
  %4379 = vmatmul.mubr.bf16.gmra.mrb[0].mxu0 %v4106
  %v4380 = vpop.f32.mrb[0].mxu0
  %v4381 = vadd.f32 0.0, %v4380
  %v4382 = vpop.f32.mrb[0].mxu0
  %v4383 = vpop.f32.mrb[0].mxu0
  %v4384 = vadd.f32 0.0, %v4383
  %v4385 = vpop.f32.mrb[0].mxu0
  %4386 = vmatprep.mubr.bf16.mxu0 0
  %4387 = vmatmul.mubr.bf16.gmra.mrb[0].mxu0 %v4109
  %v4388 = vpop.f32.mrb[0].mxu0
  %v4389 = vadd.f32 0.0, %v4388
  %v4390 = vpop.f32.mrb[0].mxu0
  %v4391 = vpop.f32.mrb[0].mxu0
  %v4392 = vadd.f32 0.0, %v4391
  %v4393 = vpop.f32.mrb[0].mxu0
  %4394 = vmatprep.mubr.bf16.mxu0 0
  %4395 = vmatmul.mubr.bf16.gmra.mrb[0].mxu0 %v4112
  %v4396 = vpop.f32.mrb[0].mxu0
  %v4397 = vadd.f32 0.0, %v4396
  %v4398 = vpop.f32.mrb[0].mxu0
  %v4399 = vpop.f32.mrb[0].mxu0
  %v4400 = vadd.f32 0.0, %v4399
  %v4401 = vpop.f32.mrb[0].mxu0
  %4402 = vdwg.mxu0
  %v4403 = vadd.f32 %v2801, %v4149
  %v4404 = vadd.f32 %v2802, %v4152
  %v4405 = vadd.f32 %v2803, %v4157
  %v4406 = vadd.f32 %v2804, %v4160
  %v4407 = vadd.f32 %v2805, %v4165
  %v4408 = vadd.f32 %v2806, %v4168
  %v4409 = vadd.f32 %v2807, %v4173
  %v4410 = vadd.f32 %v2808, %v4176
  %v4411 = vadd.f32 %v2809, %v4181
  %v4412 = vadd.f32 %v2810, %v4184
  %v4413 = vadd.f32 %v2811, %v4189
  %v4414 = vadd.f32 %v2812, %v4192
  %v4415 = vadd.f32 %v2813, %v4197
  %v4416 = vadd.f32 %v2814, %v4200
  %v4417 = vadd.f32 %v2815, %v4205
  %v4418 = vadd.f32 %v2816, %v4208
  %v4419 = vadd.f32 %v2817, %v4213
  %v4420 = vadd.f32 %v2818, %v4216
  %v4421 = vadd.f32 %v2819, %v4221
  %v4422 = vadd.f32 %v2820, %v4224
  %v4423 = vadd.f32 %v2821, %v4229
  %v4424 = vadd.f32 %v2822, %v4232
  %v4425 = vadd.f32 %v2823, %v4237
  %v4426 = vadd.f32 %v2824, %v4240
  %v4427 = vadd.f32 %v2825, %v4245
  %v4428 = vadd.f32 %v2826, %v4248
  %v4429 = vadd.f32 %v2827, %v4253
  %v4430 = vadd.f32 %v2828, %v4256
  %v4431 = vadd.f32 %v2829, %v4261
  %v4432 = vadd.f32 %v2830, %v4264
  %v4433 = vadd.f32 %v2831, %v4269
  %v4434 = vadd.f32 %v2832, %v4272
  %v4435 = vadd.f32 %v2833, %v4277
  %v4436 = vadd.f32 %v2834, %v4280
  %v4437 = vadd.f32 %v2835, %v4285
  %v4438 = vadd.f32 %v2836, %v4288
  %v4439 = vadd.f32 %v2837, %v4293
  %v4440 = vadd.f32 %v2838, %v4296
  %v4441 = vadd.f32 %v2839, %v4301
  %v4442 = vadd.f32 %v2840, %v4304
  %v4443 = vadd.f32 %v2841, %v4309
  %v4444 = vadd.f32 %v2842, %v4312
  %v4445 = vadd.f32 %v2843, %v4317
  %v4446 = vadd.f32 %v2844, %v4320
  %v4447 = vadd.f32 %v2845, %v4325
  %v4448 = vadd.f32 %v2846, %v4328
  %v4449 = vadd.f32 %v2847, %v4333
  %v4450 = vadd.f32 %v2848, %v4336
  %v4451 = vadd.f32 %v2849, %v4341
  %v4452 = vadd.f32 %v2850, %v4344
  %v4453 = vadd.f32 %v2851, %v4349
  %v4454 = vadd.f32 %v2852, %v4352
  %v4455 = vadd.f32 %v2853, %v4357
  %v4456 = vadd.f32 %v2854, %v4360
  %v4457 = vadd.f32 %v2855, %v4365
  %v4458 = vadd.f32 %v2856, %v4368
  %v4459 = vadd.f32 %v2857, %v4373
  %v4460 = vadd.f32 %v2858, %v4376
  %v4461 = vadd.f32 %v2859, %v4381
  %v4462 = vadd.f32 %v2860, %v4384
  %v4463 = vadd.f32 %v2861, %v4389
  %v4464 = vadd.f32 %v2862, %v4392
  %v4465 = vadd.f32 %v2863, %v4397
  %v4466 = vadd.f32 %v2864, %v4400
  %v4467 = vld [vmem:[%s2] sm:$0x1]
  %v4469 = vlaneseq
  %v4470 = vshrl.u32 %v4469, 7
  %v4471 = vsub.s32 0, %v4470
  %v4472 = vrot.slane %v4467, %v4471
  %v4474 = vadd.f32 %v4403, %v4472
  %v4475 = vadd.f32 %v4404, %v4472
  %v4476 = vadd.f32 %v4405, %v4472
  %v4477 = vadd.f32 %v4406, %v4472
  %v4478 = vadd.f32 %v4407, %v4472
  %v4479 = vadd.f32 %v4408, %v4472
  %v4480 = vadd.f32 %v4409, %v4472
  %v4481 = vadd.f32 %v4410, %v4472
  %v4482 = vadd.f32 %v4411, %v4472
  %v4483 = vadd.f32 %v4412, %v4472
  %v4484 = vadd.f32 %v4413, %v4472
  %v4485 = vadd.f32 %v4414, %v4472
  %v4486 = vadd.f32 %v4415, %v4472
  %v4487 = vadd.f32 %v4416, %v4472
  %v4488 = vadd.f32 %v4417, %v4472
  %v4489 = vadd.f32 %v4418, %v4472
  %v4490 = vadd.f32 %v4419, %v4472
  %v4491 = vadd.f32 %v4420, %v4472
  %v4492 = vadd.f32 %v4421, %v4472
  %v4493 = vadd.f32 %v4422, %v4472
  %v4494 = vadd.f32 %v4423, %v4472
  %v4495 = vadd.f32 %v4424, %v4472
  %v4496 = vadd.f32 %v4425, %v4472
  %v4497 = vadd.f32 %v4426, %v4472
  %v4498 = vadd.f32 %v4427, %v4472
  %v4499 = vadd.f32 %v4428, %v4472
  %v4500 = vadd.f32 %v4429, %v4472
  %v4501 = vadd.f32 %v4430, %v4472
  %v4502 = vadd.f32 %v4431, %v4472
  %v4503 = vadd.f32 %v4432, %v4472
  %v4504 = vadd.f32 %v4433, %v4472
  %v4505 = vadd.f32 %v4434, %v4472
  %v4506 = vadd.f32 %v4435, %v4472
  %v4507 = vadd.f32 %v4436, %v4472
  %v4508 = vadd.f32 %v4437, %v4472
  %v4509 = vadd.f32 %v4438, %v4472
  %v4510 = vadd.f32 %v4439, %v4472
  %v4511 = vadd.f32 %v4440, %v4472
  %v4512 = vadd.f32 %v4441, %v4472
  %v4513 = vadd.f32 %v4442, %v4472
  %v4514 = vadd.f32 %v4443, %v4472
  %v4515 = vadd.f32 %v4444, %v4472
  %v4516 = vadd.f32 %v4445, %v4472
  %v4517 = vadd.f32 %v4446, %v4472
  %v4518 = vadd.f32 %v4447, %v4472
  %v4519 = vadd.f32 %v4448, %v4472
  %v4520 = vadd.f32 %v4449, %v4472
  %v4521 = vadd.f32 %v4450, %v4472
  %v4522 = vadd.f32 %v4451, %v4472
  %v4523 = vadd.f32 %v4452, %v4472
  %v4524 = vadd.f32 %v4453, %v4472
  %v4525 = vadd.f32 %v4454, %v4472
  %v4526 = vadd.f32 %v4455, %v4472
  %v4527 = vadd.f32 %v4456, %v4472
  %v4528 = vadd.f32 %v4457, %v4472
  %v4529 = vadd.f32 %v4458, %v4472
  %v4530 = vadd.f32 %v4459, %v4472
  %v4531 = vadd.f32 %v4460, %v4472
  %v4532 = vadd.f32 %v4461, %v4472
  %v4533 = vadd.f32 %v4462, %v4472
  %v4534 = vadd.f32 %v4463, %v4472
  %v4535 = vadd.f32 %v4464, %v4472
  %v4536 = vadd.f32 %v4465, %v4472
  %v4537 = vadd.f32 %v4466, %v4472
  %v4538 = vmax.f32 %v4474, 0.0
  %v4539 = vmax.f32 %v4475, 0.0
  %v4540 = vmax.f32 %v4476, 0.0
  %v4541 = vmax.f32 %v4477, 0.0
  %v4542 = vmax.f32 %v4478, 0.0
  %v4543 = vmax.f32 %v4479, 0.0
  %v4544 = vmax.f32 %v4480, 0.0
  %v4545 = vmax.f32 %v4481, 0.0
  %v4546 = vmax.f32 %v4482, 0.0
  %v4547 = vmax.f32 %v4483, 0.0
  %v4548 = vmax.f32 %v4484, 0.0
  %v4549 = vmax.f32 %v4485, 0.0
  %v4550 = vmax.f32 %v4486, 0.0
  %v4551 = vmax.f32 %v4487, 0.0
  %v4552 = vmax.f32 %v4488, 0.0
  %v4553 = vmax.f32 %v4489, 0.0
  %v4554 = vmax.f32 %v4490, 0.0
  %v4555 = vmax.f32 %v4491, 0.0
  %v4556 = vmax.f32 %v4492, 0.0
  %v4557 = vmax.f32 %v4493, 0.0
  %v4558 = vmax.f32 %v4494, 0.0
  %v4559 = vmax.f32 %v4495, 0.0
  %v4560 = vmax.f32 %v4496, 0.0
  %v4561 = vmax.f32 %v4497, 0.0
  %v4562 = vmax.f32 %v4498, 0.0
  %v4563 = vmax.f32 %v4499, 0.0
  %v4564 = vmax.f32 %v4500, 0.0
  %v4565 = vmax.f32 %v4501, 0.0
  %v4566 = vmax.f32 %v4502, 0.0
  %v4567 = vmax.f32 %v4503, 0.0
  %v4568 = vmax.f32 %v4504, 0.0
  %v4569 = vmax.f32 %v4505, 0.0
  %v4570 = vmax.f32 %v4506, 0.0
  %v4571 = vmax.f32 %v4507, 0.0
  %v4572 = vmax.f32 %v4508, 0.0
  %v4573 = vmax.f32 %v4509, 0.0
  %v4574 = vmax.f32 %v4510, 0.0
  %v4575 = vmax.f32 %v4511, 0.0
  %v4576 = vmax.f32 %v4512, 0.0
  %v4577 = vmax.f32 %v4513, 0.0
  %v4578 = vmax.f32 %v4514, 0.0
  %v4579 = vmax.f32 %v4515, 0.0
  %v4580 = vmax.f32 %v4516, 0.0
  %v4581 = vmax.f32 %v4517, 0.0
  %v4582 = vmax.f32 %v4518, 0.0
  %v4583 = vmax.f32 %v4519, 0.0
  %v4584 = vmax.f32 %v4520, 0.0
  %v4585 = vmax.f32 %v4521, 0.0
  %v4586 = vmax.f32 %v4522, 0.0
  %v4587 = vmax.f32 %v4523, 0.0
  %v4588 = vmax.f32 %v4524, 0.0
  %v4589 = vmax.f32 %v4525, 0.0
  %v4590 = vmax.f32 %v4526, 0.0
  %v4591 = vmax.f32 %v4527, 0.0
  %v4592 = vmax.f32 %v4528, 0.0
  %v4593 = vmax.f32 %v4529, 0.0
  %v4594 = vmax.f32 %v4530, 0.0
  %v4595 = vmax.f32 %v4531, 0.0
  %v4596 = vmax.f32 %v4532, 0.0
  %v4597 = vmax.f32 %v4533, 0.0
  %v4598 = vmax.f32 %v4534, 0.0
  %v4599 = vmax.f32 %v4535, 0.0
  %v4600 = vmax.f32 %v4536, 0.0
  %v4601 = vmax.f32 %v4537, 0.0
  %v4602 = vpack.c.bf16 %v4539, %v4538
  %v4603 = vpack.c.bf16 %v4541, %v4540
  %v4604 = vpack.c.bf16 %v4543, %v4542
  %v4605 = vpack.c.bf16 %v4545, %v4544
  %v4606 = vpack.c.bf16 %v4547, %v4546
  %v4607 = vpack.c.bf16 %v4549, %v4548
  %v4608 = vpack.c.bf16 %v4551, %v4550
  %v4609 = vpack.c.bf16 %v4553, %v4552
  %v4610 = vpack.c.bf16 %v4555, %v4554
  %v4611 = vpack.c.bf16 %v4557, %v4556
  %v4612 = vpack.c.bf16 %v4559, %v4558
  %v4613 = vpack.c.bf16 %v4561, %v4560
  %v4614 = vpack.c.bf16 %v4563, %v4562
  %v4615 = vpack.c.bf16 %v4565, %v4564
  %v4616 = vpack.c.bf16 %v4567, %v4566
  %v4617 = vpack.c.bf16 %v4569, %v4568
  %v4618 = vpack.c.bf16 %v4571, %v4570
  %v4619 = vpack.c.bf16 %v4573, %v4572
  %v4620 = vpack.c.bf16 %v4575, %v4574
  %v4621 = vpack.c.bf16 %v4577, %v4576
  %v4622 = vpack.c.bf16 %v4579, %v4578
  %v4623 = vpack.c.bf16 %v4581, %v4580
  %v4624 = vpack.c.bf16 %v4583, %v4582
  %v4625 = vpack.c.bf16 %v4585, %v4584
  %v4626 = vpack.c.bf16 %v4587, %v4586
  %v4627 = vpack.c.bf16 %v4589, %v4588
  %v4628 = vpack.c.bf16 %v4591, %v4590
  %v4629 = vpack.c.bf16 %v4593, %v4592
  %v4630 = vpack.c.bf16 %v4595, %v4594
  %v4631 = vpack.c.bf16 %v4597, %v4596
  %v4632 = vpack.c.bf16 %v4599, %v4598
  %v4633 = vpack.c.bf16 %v4601, %v4600
  %v4634 = vld [vmem:[%s3] sm:$0xff]
  %v4635 = vld [vmem:[%s3 + $0x8] sm:$0xff]
  %v4636 = vld [vmem:[%s3 + $0x10] sm:$0xff]
  %v4637 = vld [vmem:[%s3 + $0x18] sm:$0xff]
  %v4638 = vld [vmem:[%s3 + $0x20] sm:$0xff]
  %v4639 = vld [vmem:[%s3 + $0x28] sm:$0xff]
  %v4640 = vld [vmem:[%s3 + $0x30] sm:$0xff]
  %v4641 = vld [vmem:[%s3 + $0x38] sm:$0xff]
  %v4642 = vld [vmem:[%s3 + $0x40] sm:$0xff]
  %v4643 = vld [vmem:[%s3 + $0x48] sm:$0xff]
  %v4644 = vld [vmem:[%s3 + $0x50] sm:$0xff]
  %v4645 = vld [vmem:[%s3 + $0x58] sm:$0xff]
  %v4646 = vld [vmem:[%s3 + $0x60] sm:$0xff]
  %v4647 = vld [vmem:[%s3 + $0x68] sm:$0xff]
  %v4648 = vld [vmem:[%s3 + $0x70] sm:$0xff]
  %v4649 = vld [vmem:[%s3 + $0x78] sm:$0xff]
  %v4650 = vld [vmem:[%s3 + $0x80] sm:$0xff]
  %v4651 = vld [vmem:[%s3 + $0x88] sm:$0xff]
  %v4652 = vld [vmem:[%s3 + $0x90] sm:$0xff]
  %v4653 = vld [vmem:[%s3 + $0x98] sm:$0xff]
  %v4654 = vld [vmem:[%s3 + $0xa0] sm:$0xff]
  %v4655 = vld [vmem:[%s3 + $0xa8] sm:$0xff]
  %v4656 = vld [vmem:[%s3 + $0xb0] sm:$0xff]
  %v4657 = vld [vmem:[%s3 + $0xb8] sm:$0xff]
  %v4658 = vld [vmem:[%s3 + $0xc0] sm:$0xff]
  %v4659 = vld [vmem:[%s3 + $0xc8] sm:$0xff]
  %v4660 = vld [vmem:[%s3 + $0xd0] sm:$0xff]
  %v4661 = vld [vmem:[%s3 + $0xd8] sm:$0xff]
  %v4662 = vld [vmem:[%s3 + $0xe0] sm:$0xff]
  %v4663 = vld [vmem:[%s3 + $0xe8] sm:$0xff]
  %v4664 = vld [vmem:[%s3 + $0xf0] sm:$0xff]
  %v4665 = vld [vmem:[%s3 + $0xf8] sm:$0xff]
  %v4666 = vld [vmem:[%s3 + $0x100] sm:$0xff]
  %v4667 = vld [vmem:[%s3 + $0x108] sm:$0xff]
  %v4668 = vld [vmem:[%s3 + $0x110] sm:$0xff]
  %v4669 = vld [vmem:[%s3 + $0x118] sm:$0xff]
  %v4670 = vld [vmem:[%s3 + $0x120] sm:$0xff]
  %v4671 = vld [vmem:[%s3 + $0x128] sm:$0xff]
  %v4672 = vld [vmem:[%s3 + $0x130] sm:$0xff]
  %v4673 = vld [vmem:[%s3 + $0x138] sm:$0xff]
  %v4674 = vld [vmem:[%s3 + $0x140] sm:$0xff]
  %v4675 = vld [vmem:[%s3 + $0x148] sm:$0xff]
  %v4676 = vld [vmem:[%s3 + $0x150] sm:$0xff]
  %v4677 = vld [vmem:[%s3 + $0x158] sm:$0xff]
  %v4678 = vld [vmem:[%s3 + $0x160] sm:$0xff]
  %v4679 = vld [vmem:[%s3 + $0x168] sm:$0xff]
  %v4680 = vld [vmem:[%s3 + $0x170] sm:$0xff]
  %v4681 = vld [vmem:[%s3 + $0x178] sm:$0xff]
  %v4682 = vld [vmem:[%s3 + $0x180] sm:$0xff]
  %v4683 = vld [vmem:[%s3 + $0x188] sm:$0xff]
  %v4684 = vld [vmem:[%s3 + $0x190] sm:$0xff]
  %v4685 = vld [vmem:[%s3 + $0x198] sm:$0xff]
  %v4686 = vld [vmem:[%s3 + $0x1a0] sm:$0xff]
  %v4687 = vld [vmem:[%s3 + $0x1a8] sm:$0xff]
  %v4688 = vld [vmem:[%s3 + $0x1b0] sm:$0xff]
  %v4689 = vld [vmem:[%s3 + $0x1b8] sm:$0xff]
  %v4690 = vld [vmem:[%s3 + $0x1c0] sm:$0xff]
  %v4691 = vld [vmem:[%s3 + $0x1c8] sm:$0xff]
  %v4692 = vld [vmem:[%s3 + $0x1d0] sm:$0xff]
  %v4693 = vld [vmem:[%s3 + $0x1d8] sm:$0xff]
  %v4694 = vld [vmem:[%s3 + $0x1e0] sm:$0xff]
  %v4695 = vld [vmem:[%s3 + $0x1e8] sm:$0xff]
  %v4696 = vld [vmem:[%s3 + $0x1f0] sm:$0xff]
  %v4697 = vld [vmem:[%s3 + $0x1f8] sm:$0xff]
  %v4698 = vld [vmem:[%s3 + $0x200] sm:$0xff]
  %v4699 = vld [vmem:[%s3 + $0x208] sm:$0xff]
  %v4700 = vld [vmem:[%s3 + $0x210] sm:$0xff]
  %v4701 = vld [vmem:[%s3 + $0x218] sm:$0xff]
  %v4702 = vld [vmem:[%s3 + $0x220] sm:$0xff]
  %v4703 = vld [vmem:[%s3 + $0x228] sm:$0xff]
  %v4704 = vld [vmem:[%s3 + $0x230] sm:$0xff]
  %v4705 = vld [vmem:[%s3 + $0x238] sm:$0xff]
  %v4706 = vld [vmem:[%s3 + $0x240] sm:$0xff]
  %v4707 = vld [vmem:[%s3 + $0x248] sm:$0xff]
  %v4708 = vld [vmem:[%s3 + $0x250] sm:$0xff]
  %v4709 = vld [vmem:[%s3 + $0x258] sm:$0xff]
  %v4710 = vld [vmem:[%s3 + $0x260] sm:$0xff]
  %v4711 = vld [vmem:[%s3 + $0x268] sm:$0xff]
  %v4712 = vld [vmem:[%s3 + $0x270] sm:$0xff]
  %v4713 = vld [vmem:[%s3 + $0x278] sm:$0xff]
  %v4714 = vld [vmem:[%s3 + $0x280] sm:$0xff]
  %v4715 = vld [vmem:[%s3 + $0x288] sm:$0xff]
  %v4716 = vld [vmem:[%s3 + $0x290] sm:$0xff]
  %v4717 = vld [vmem:[%s3 + $0x298] sm:$0xff]
  %v4718 = vld [vmem:[%s3 + $0x2a0] sm:$0xff]
  %v4719 = vld [vmem:[%s3 + $0x2a8] sm:$0xff]
  %v4720 = vld [vmem:[%s3 + $0x2b0] sm:$0xff]
  %v4721 = vld [vmem:[%s3 + $0x2b8] sm:$0xff]
  %v4722 = vld [vmem:[%s3 + $0x2c0] sm:$0xff]
  %v4723 = vld [vmem:[%s3 + $0x2c8] sm:$0xff]
  %v4724 = vld [vmem:[%s3 + $0x2d0] sm:$0xff]
  %v4725 = vld [vmem:[%s3 + $0x2d8] sm:$0xff]
  %v4726 = vld [vmem:[%s3 + $0x2e0] sm:$0xff]
  %v4727 = vld [vmem:[%s3 + $0x2e8] sm:$0xff]
  %v4728 = vld [vmem:[%s3 + $0x2f0] sm:$0xff]
  %v4729 = vld [vmem:[%s3 + $0x2f8] sm:$0xff]
  %v4730 = vld [vmem:[%s3 + $0x300] sm:$0xff]
  %v4731 = vld [vmem:[%s3 + $0x308] sm:$0xff]
  %v4732 = vld [vmem:[%s3 + $0x310] sm:$0xff]
  %v4733 = vld [vmem:[%s3 + $0x318] sm:$0xff]
  %v4734 = vld [vmem:[%s3 + $0x320] sm:$0xff]
  %v4735 = vld [vmem:[%s3 + $0x328] sm:$0xff]
  %v4736 = vld [vmem:[%s3 + $0x330] sm:$0xff]
  %v4737 = vld [vmem:[%s3 + $0x338] sm:$0xff]
  %v4738 = vld [vmem:[%s3 + $0x340] sm:$0xff]
  %v4739 = vld [vmem:[%s3 + $0x348] sm:$0xff]
  %v4740 = vld [vmem:[%s3 + $0x350] sm:$0xff]
  %v4741 = vld [vmem:[%s3 + $0x358] sm:$0xff]
  %v4742 = vld [vmem:[%s3 + $0x360] sm:$0xff]
  %v4743 = vld [vmem:[%s3 + $0x368] sm:$0xff]
  %v4744 = vld [vmem:[%s3 + $0x370] sm:$0xff]
  %v4745 = vld [vmem:[%s3 + $0x378] sm:$0xff]
  %v4746 = vld [vmem:[%s3 + $0x380] sm:$0xff]
  %v4747 = vld [vmem:[%s3 + $0x388] sm:$0xff]
  %v4748 = vld [vmem:[%s3 + $0x390] sm:$0xff]
  %v4749 = vld [vmem:[%s3 + $0x398] sm:$0xff]
  %v4750 = vld [vmem:[%s3 + $0x3a0] sm:$0xff]
  %v4751 = vld [vmem:[%s3 + $0x3a8] sm:$0xff]
  %v4752 = vld [vmem:[%s3 + $0x3b0] sm:$0xff]
  %v4753 = vld [vmem:[%s3 + $0x3b8] sm:$0xff]
  %v4754 = vld [vmem:[%s3 + $0x3c0] sm:$0xff]
  %v4755 = vld [vmem:[%s3 + $0x3c8] sm:$0xff]
  %v4756 = vld [vmem:[%s3 + $0x3d0] sm:$0xff]
  %v4757 = vld [vmem:[%s3 + $0x3d8] sm:$0xff]
  %v4758 = vld [vmem:[%s3 + $0x3e0] sm:$0xff]
  %v4759 = vld [vmem:[%s3 + $0x3e8] sm:$0xff]
  %v4760 = vld [vmem:[%s3 + $0x3f0] sm:$0xff]
  %v4761 = vld [vmem:[%s3 + $0x3f8] sm:$0xff]
  %v4762 = vld [vmem:[%s3 + $0x400] sm:$0xff]
  %v4763 = vld [vmem:[%s3 + $0x408] sm:$0xff]
  %v4764 = vld [vmem:[%s3 + $0x410] sm:$0xff]
  %v4765 = vld [vmem:[%s3 + $0x418] sm:$0xff]
  %v4766 = vld [vmem:[%s3 + $0x420] sm:$0xff]
  %v4767 = vld [vmem:[%s3 + $0x428] sm:$0xff]
  %v4768 = vld [vmem:[%s3 + $0x430] sm:$0xff]
  %v4769 = vld [vmem:[%s3 + $0x438] sm:$0xff]
  %v4770 = vld [vmem:[%s3 + $0x440] sm:$0xff]
  %v4771 = vld [vmem:[%s3 + $0x448] sm:$0xff]
  %v4772 = vld [vmem:[%s3 + $0x450] sm:$0xff]
  %v4773 = vld [vmem:[%s3 + $0x458] sm:$0xff]
  %v4774 = vld [vmem:[%s3 + $0x460] sm:$0xff]
  %v4775 = vld [vmem:[%s3 + $0x468] sm:$0xff]
  %v4776 = vld [vmem:[%s3 + $0x470] sm:$0xff]
  %v4777 = vld [vmem:[%s3 + $0x478] sm:$0xff]
  %v4778 = vld [vmem:[%s3 + $0x480] sm:$0xff]
  %v4779 = vld [vmem:[%s3 + $0x488] sm:$0xff]
  %v4780 = vld [vmem:[%s3 + $0x490] sm:$0xff]
  %v4781 = vld [vmem:[%s3 + $0x498] sm:$0xff]
  %v4782 = vld [vmem:[%s3 + $0x4a0] sm:$0xff]
  %v4783 = vld [vmem:[%s3 + $0x4a8] sm:$0xff]
  %v4784 = vld [vmem:[%s3 + $0x4b0] sm:$0xff]
  %v4785 = vld [vmem:[%s3 + $0x4b8] sm:$0xff]
  %v4786 = vld [vmem:[%s3 + $0x4c0] sm:$0xff]
  %v4787 = vld [vmem:[%s3 + $0x4c8] sm:$0xff]
  %v4788 = vld [vmem:[%s3 + $0x4d0] sm:$0xff]
  %v4789 = vld [vmem:[%s3 + $0x4d8] sm:$0xff]
  %v4790 = vld [vmem:[%s3 + $0x4e0] sm:$0xff]
  %v4791 = vld [vmem:[%s3 + $0x4e8] sm:$0xff]
  %v4792 = vld [vmem:[%s3 + $0x4f0] sm:$0xff]
  %v4793 = vld [vmem:[%s3 + $0x4f8] sm:$0xff]
  %v4794 = vld [vmem:[%s3 + $0x500] sm:$0xff]
  %v4795 = vld [vmem:[%s3 + $0x508] sm:$0xff]
  %v4796 = vld [vmem:[%s3 + $0x510] sm:$0xff]
  %v4797 = vld [vmem:[%s3 + $0x518] sm:$0xff]
  %v4798 = vld [vmem:[%s3 + $0x520] sm:$0xff]
  %v4799 = vld [vmem:[%s3 + $0x528] sm:$0xff]
  %v4800 = vld [vmem:[%s3 + $0x530] sm:$0xff]
  %v4801 = vld [vmem:[%s3 + $0x538] sm:$0xff]
  %v4802 = vld [vmem:[%s3 + $0x540] sm:$0xff]
  %v4803 = vld [vmem:[%s3 + $0x548] sm:$0xff]
  %v4804 = vld [vmem:[%s3 + $0x550] sm:$0xff]
  %v4805 = vld [vmem:[%s3 + $0x558] sm:$0xff]
  %v4806 = vld [vmem:[%s3 + $0x560] sm:$0xff]
  %v4807 = vld [vmem:[%s3 + $0x568] sm:$0xff]
  %v4808 = vld [vmem:[%s3 + $0x570] sm:$0xff]
  %v4809 = vld [vmem:[%s3 + $0x578] sm:$0xff]
  %v4810 = vld [vmem:[%s3 + $0x580] sm:$0xff]
  %v4811 = vld [vmem:[%s3 + $0x588] sm:$0xff]
  %v4812 = vld [vmem:[%s3 + $0x590] sm:$0xff]
  %v4813 = vld [vmem:[%s3 + $0x598] sm:$0xff]
  %v4814 = vld [vmem:[%s3 + $0x5a0] sm:$0xff]
  %v4815 = vld [vmem:[%s3 + $0x5a8] sm:$0xff]
  %v4816 = vld [vmem:[%s3 + $0x5b0] sm:$0xff]
  %v4817 = vld [vmem:[%s3 + $0x5b8] sm:$0xff]
  %v4818 = vld [vmem:[%s3 + $0x5c0] sm:$0xff]
  %v4819 = vld [vmem:[%s3 + $0x5c8] sm:$0xff]
  %v4820 = vld [vmem:[%s3 + $0x5d0] sm:$0xff]
  %v4821 = vld [vmem:[%s3 + $0x5d8] sm:$0xff]
  %v4822 = vld [vmem:[%s3 + $0x5e0] sm:$0xff]
  %v4823 = vld [vmem:[%s3 + $0x5e8] sm:$0xff]
  %v4824 = vld [vmem:[%s3 + $0x5f0] sm:$0xff]
  %v4825 = vld [vmem:[%s3 + $0x5f8] sm:$0xff]
  %v4826 = vld [vmem:[%s3 + $0x600] sm:$0xff]
  %v4827 = vld [vmem:[%s3 + $0x608] sm:$0xff]
  %v4828 = vld [vmem:[%s3 + $0x610] sm:$0xff]
  %v4829 = vld [vmem:[%s3 + $0x618] sm:$0xff]
  %v4830 = vld [vmem:[%s3 + $0x620] sm:$0xff]
  %v4831 = vld [vmem:[%s3 + $0x628] sm:$0xff]
  %v4832 = vld [vmem:[%s3 + $0x630] sm:$0xff]
  %v4833 = vld [vmem:[%s3 + $0x638] sm:$0xff]
  %v4834 = vld [vmem:[%s3 + $0x640] sm:$0xff]
  %v4835 = vld [vmem:[%s3 + $0x648] sm:$0xff]
  %v4836 = vld [vmem:[%s3 + $0x650] sm:$0xff]
  %v4837 = vld [vmem:[%s3 + $0x658] sm:$0xff]
  %v4838 = vld [vmem:[%s3 + $0x660] sm:$0xff]
  %v4839 = vld [vmem:[%s3 + $0x668] sm:$0xff]
  %v4840 = vld [vmem:[%s3 + $0x670] sm:$0xff]
  %v4841 = vld [vmem:[%s3 + $0x678] sm:$0xff]
  %v4842 = vld [vmem:[%s3 + $0x680] sm:$0xff]
  %v4843 = vld [vmem:[%s3 + $0x688] sm:$0xff]
  %v4844 = vld [vmem:[%s3 + $0x690] sm:$0xff]
  %v4845 = vld [vmem:[%s3 + $0x698] sm:$0xff]
  %v4846 = vld [vmem:[%s3 + $0x6a0] sm:$0xff]
  %v4847 = vld [vmem:[%s3 + $0x6a8] sm:$0xff]
  %v4848 = vld [vmem:[%s3 + $0x6b0] sm:$0xff]
  %v4849 = vld [vmem:[%s3 + $0x6b8] sm:$0xff]
  %v4850 = vld [vmem:[%s3 + $0x6c0] sm:$0xff]
  %v4851 = vld [vmem:[%s3 + $0x6c8] sm:$0xff]
  %v4852 = vld [vmem:[%s3 + $0x6d0] sm:$0xff]
  %v4853 = vld [vmem:[%s3 + $0x6d8] sm:$0xff]
  %v4854 = vld [vmem:[%s3 + $0x6e0] sm:$0xff]
  %v4855 = vld [vmem:[%s3 + $0x6e8] sm:$0xff]
  %v4856 = vld [vmem:[%s3 + $0x6f0] sm:$0xff]
  %v4857 = vld [vmem:[%s3 + $0x6f8] sm:$0xff]
  %v4858 = vld [vmem:[%s3 + $0x700] sm:$0xff]
  %v4859 = vld [vmem:[%s3 + $0x708] sm:$0xff]
  %v4860 = vld [vmem:[%s3 + $0x710] sm:$0xff]
  %v4861 = vld [vmem:[%s3 + $0x718] sm:$0xff]
  %v4862 = vld [vmem:[%s3 + $0x720] sm:$0xff]
  %v4863 = vld [vmem:[%s3 + $0x728] sm:$0xff]
  %v4864 = vld [vmem:[%s3 + $0x730] sm:$0xff]
  %v4865 = vld [vmem:[%s3 + $0x738] sm:$0xff]
  %v4866 = vld [vmem:[%s3 + $0x740] sm:$0xff]
  %v4867 = vld [vmem:[%s3 + $0x748] sm:$0xff]
  %v4868 = vld [vmem:[%s3 + $0x750] sm:$0xff]
  %v4869 = vld [vmem:[%s3 + $0x758] sm:$0xff]
  %v4870 = vld [vmem:[%s3 + $0x760] sm:$0xff]
  %v4871 = vld [vmem:[%s3 + $0x768] sm:$0xff]
  %v4872 = vld [vmem:[%s3 + $0x770] sm:$0xff]
  %v4873 = vld [vmem:[%s3 + $0x778] sm:$0xff]
  %v4874 = vld [vmem:[%s3 + $0x780] sm:$0xff]
  %v4875 = vld [vmem:[%s3 + $0x788] sm:$0xff]
  %v4876 = vld [vmem:[%s3 + $0x790] sm:$0xff]
  %v4877 = vld [vmem:[%s3 + $0x798] sm:$0xff]
  %v4878 = vld [vmem:[%s3 + $0x7a0] sm:$0xff]
  %v4879 = vld [vmem:[%s3 + $0x7a8] sm:$0xff]
  %v4880 = vld [vmem:[%s3 + $0x7b0] sm:$0xff]
  %v4881 = vld [vmem:[%s3 + $0x7b8] sm:$0xff]
  %v4882 = vld [vmem:[%s3 + $0x7c0] sm:$0xff]
  %v4883 = vld [vmem:[%s3 + $0x7c8] sm:$0xff]
  %v4884 = vld [vmem:[%s3 + $0x7d0] sm:$0xff]
  %v4885 = vld [vmem:[%s3 + $0x7d8] sm:$0xff]
  %v4886 = vld [vmem:[%s3 + $0x7e0] sm:$0xff]
  %v4887 = vld [vmem:[%s3 + $0x7e8] sm:$0xff]
  %v4888 = vld [vmem:[%s3 + $0x7f0] sm:$0xff]
  %v4889 = vld [vmem:[%s3 + $0x7f8] sm:$0xff]
  %v4890 = vld [vmem:[%s4] sm:$0x3]
  %v4899 = vunpack.c.l.b16 %v4602
  %v4900 = vunpack.c.l.b16 %v4606
  %v4901 = vunpack.c.l.b16 %v4610
  %v4902 = vunpack.c.l.b16 %v4614
  %v4903 = vunpack.c.l.b16 %v4618
  %v4904 = vunpack.c.l.b16 %v4622
  %v4905 = vunpack.c.l.b16 %v4626
  %v4906 = vunpack.c.l.b16 %v4630
  %v4907 = vrot.slane %v4900, 7
  %vm4908 = vcmask 1041409
  %v4909 = vsel %vm4908, %v4907, %v4899
  %v4910 = vrot.slane %v4901, 6
  %vm4911 = vcmask 1042434
  %v4912 = vsel %vm4911, %v4910, %v4909
  %v4913 = vrot.slane %v4902, 5
  %vm4914 = vcmask 1043459
  %v4915 = vsel %vm4914, %v4913, %v4912
  %v4916 = vrot.slane %v4903, 4
  %vm4917 = vcmask 1044484
  %v4918 = vsel %vm4917, %v4916, %v4915
  %v4919 = vrot.slane %v4904, 3
  %vm4920 = vcmask 1045509
  %v4921 = vsel %vm4920, %v4919, %v4918
  %v4922 = vrot.slane %v4905, 2
  %vm4923 = vcmask 1046534
  %v4924 = vsel %vm4923, %v4922, %v4921
  %v4925 = vrot.slane %v4906, 1
  %vm4926 = vcmask 1047559
  %v4927 = vsel %vm4926, %v4925, %v4924
  %v4928 = vpack.c.b16 %v4927, %v4927
  %v4930 = vrot.slane %v4899, 1
  %v4931 = vsel %vm4908, %v4900, %v4930
  %v4932 = vrot.slane %v4901, 7
  %v4933 = vsel %vm4911, %v4932, %v4931
  %v4934 = vrot.slane %v4902, 6
  %v4935 = vsel %vm4914, %v4934, %v4933
  %v4936 = vrot.slane %v4903, 5
  %v4937 = vsel %vm4917, %v4936, %v4935
  %v4938 = vrot.slane %v4904, 4
  %v4939 = vsel %vm4920, %v4938, %v4937
  %v4940 = vrot.slane %v4905, 3
  %v4941 = vsel %vm4923, %v4940, %v4939
  %v4942 = vrot.slane %v4906, 2
  %v4943 = vsel %vm4926, %v4942, %v4941
  %v4944 = vpack.c.b16 %v4943, %v4943
  %v4946 = vrot.slane %v4899, 2
  %v4947 = vrot.slane %v4900, 1
  %v4948 = vsel %vm4908, %v4947, %v4946
  %v4949 = vsel %vm4911, %v4901, %v4948
  %v4950 = vrot.slane %v4902, 7
  %v4951 = vsel %vm4914, %v4950, %v4949
  %v4952 = vrot.slane %v4903, 6
  %v4953 = vsel %vm4917, %v4952, %v4951
  %v4954 = vrot.slane %v4904, 5
  %v4955 = vsel %vm4920, %v4954, %v4953
  %v4956 = vrot.slane %v4905, 4
  %v4957 = vsel %vm4923, %v4956, %v4955
  %v4958 = vrot.slane %v4906, 3
  %v4959 = vsel %vm4926, %v4958, %v4957
  %v4960 = vpack.c.b16 %v4959, %v4959
  %v4962 = vrot.slane %v4899, 3
  %v4963 = vrot.slane %v4900, 2
  %v4964 = vsel %vm4908, %v4963, %v4962
  %v4965 = vrot.slane %v4901, 1
  %v4966 = vsel %vm4911, %v4965, %v4964
  %v4967 = vsel %vm4914, %v4902, %v4966
  %v4968 = vrot.slane %v4903, 7
  %v4969 = vsel %vm4917, %v4968, %v4967
  %v4970 = vrot.slane %v4904, 6
  %v4971 = vsel %vm4920, %v4970, %v4969
  %v4972 = vrot.slane %v4905, 5
  %v4973 = vsel %vm4923, %v4972, %v4971
  %v4974 = vrot.slane %v4906, 4
  %v4975 = vsel %vm4926, %v4974, %v4973
  %v4976 = vpack.c.b16 %v4975, %v4975
  %v4978 = vunpack.c.h.b16 %v4602
  %v4979 = vunpack.c.h.b16 %v4606
  %v4980 = vunpack.c.h.b16 %v4610
  %v4981 = vunpack.c.h.b16 %v4614
  %v4982 = vunpack.c.h.b16 %v4618
  %v4983 = vunpack.c.h.b16 %v4622
  %v4984 = vunpack.c.h.b16 %v4626
  %v4985 = vunpack.c.h.b16 %v4630
  %v4986 = vrot.slane %v4979, 7
  %v4987 = vsel %vm4908, %v4986, %v4978
  %v4988 = vrot.slane %v4980, 6
  %v4989 = vsel %vm4911, %v4988, %v4987
  %v4990 = vrot.slane %v4981, 5
  %v4991 = vsel %vm4914, %v4990, %v4989
  %v4992 = vrot.slane %v4982, 4
  %v4993 = vsel %vm4917, %v4992, %v4991
  %v4994 = vrot.slane %v4983, 3
  %v4995 = vsel %vm4920, %v4994, %v4993
  %v4996 = vrot.slane %v4984, 2
  %v4997 = vsel %vm4923, %v4996, %v4995
  %v4998 = vrot.slane %v4985, 1
  %v4999 = vsel %vm4926, %v4998, %v4997
  %v5000 = vpack.c.b16 %v4999, %v4999
  %v5002 = vrot.slane %v4978, 1
  %v5003 = vsel %vm4908, %v4979, %v5002
  %v5004 = vrot.slane %v4980, 7
  %v5005 = vsel %vm4911, %v5004, %v5003
  %v5006 = vrot.slane %v4981, 6
  %v5007 = vsel %vm4914, %v5006, %v5005
  %v5008 = vrot.slane %v4982, 5
  %v5009 = vsel %vm4917, %v5008, %v5007
  %v5010 = vrot.slane %v4983, 4
  %v5011 = vsel %vm4920, %v5010, %v5009
  %v5012 = vrot.slane %v4984, 3
  %v5013 = vsel %vm4923, %v5012, %v5011
  %v5014 = vrot.slane %v4985, 2
  %v5015 = vsel %vm4926, %v5014, %v5013
  %v5016 = vpack.c.b16 %v5015, %v5015
  %v5018 = vrot.slane %v4978, 2
  %v5019 = vrot.slane %v4979, 1
  %v5020 = vsel %vm4908, %v5019, %v5018
  %v5021 = vsel %vm4911, %v4980, %v5020
  %v5022 = vrot.slane %v4981, 7
  %v5023 = vsel %vm4914, %v5022, %v5021
  %v5024 = vrot.slane %v4982, 6
  %v5025 = vsel %vm4917, %v5024, %v5023
  %v5026 = vrot.slane %v4983, 5
  %v5027 = vsel %vm4920, %v5026, %v5025
  %v5028 = vrot.slane %v4984, 4
  %v5029 = vsel %vm4923, %v5028, %v5027
  %v5030 = vrot.slane %v4985, 3
  %v5031 = vsel %vm4926, %v5030, %v5029
  %v5032 = vpack.c.b16 %v5031, %v5031
  %v5034 = vrot.slane %v4978, 3
  %v5035 = vrot.slane %v4979, 2
  %v5036 = vsel %vm4908, %v5035, %v5034
  %v5037 = vrot.slane %v4980, 1
  %v5038 = vsel %vm4911, %v5037, %v5036
  %v5039 = vsel %vm4914, %v4981, %v5038
  %v5040 = vrot.slane %v4982, 7
  %v5041 = vsel %vm4917, %v5040, %v5039
  %v5042 = vrot.slane %v4983, 6
  %v5043 = vsel %vm4920, %v5042, %v5041
  %v5044 = vrot.slane %v4984, 5
  %v5045 = vsel %vm4923, %v5044, %v5043
  %v5046 = vrot.slane %v4985, 4
  %v5047 = vsel %vm4926, %v5046, %v5045
  %v5048 = vpack.c.b16 %v5047, %v5047
  %v5058 = vunpack.c.l.b16 %v4603
  %v5059 = vunpack.c.l.b16 %v4607
  %v5060 = vunpack.c.l.b16 %v4611
  %v5061 = vunpack.c.l.b16 %v4615
  %v5062 = vunpack.c.l.b16 %v4619
  %v5063 = vunpack.c.l.b16 %v4623
  %v5064 = vunpack.c.l.b16 %v4627
  %v5065 = vunpack.c.l.b16 %v4631
  %v5066 = vrot.slane %v5059, 7
  %v5067 = vsel %vm4908, %v5066, %v5058
  %v5068 = vrot.slane %v5060, 6
  %v5069 = vsel %vm4911, %v5068, %v5067
  %v5070 = vrot.slane %v5061, 5
  %v5071 = vsel %vm4914, %v5070, %v5069
  %v5072 = vrot.slane %v5062, 4
  %v5073 = vsel %vm4917, %v5072, %v5071
  %v5074 = vrot.slane %v5063, 3
  %v5075 = vsel %vm4920, %v5074, %v5073
  %v5076 = vrot.slane %v5064, 2
  %v5077 = vsel %vm4923, %v5076, %v5075
  %v5078 = vrot.slane %v5065, 1
  %v5079 = vsel %vm4926, %v5078, %v5077
  %v5080 = vpack.c.b16 %v5079, %v5079
  %v5082 = vrot.slane %v5058, 1
  %v5083 = vsel %vm4908, %v5059, %v5082
  %v5084 = vrot.slane %v5060, 7
  %v5085 = vsel %vm4911, %v5084, %v5083
  %v5086 = vrot.slane %v5061, 6
  %v5087 = vsel %vm4914, %v5086, %v5085
  %v5088 = vrot.slane %v5062, 5
  %v5089 = vsel %vm4917, %v5088, %v5087
  %v5090 = vrot.slane %v5063, 4
  %v5091 = vsel %vm4920, %v5090, %v5089
  %v5092 = vrot.slane %v5064, 3
  %v5093 = vsel %vm4923, %v5092, %v5091
  %v5094 = vrot.slane %v5065, 2
  %v5095 = vsel %vm4926, %v5094, %v5093
  %v5096 = vpack.c.b16 %v5095, %v5095
  %v5098 = vrot.slane %v5058, 2
  %v5099 = vrot.slane %v5059, 1
  %v5100 = vsel %vm4908, %v5099, %v5098
  %v5101 = vsel %vm4911, %v5060, %v5100
  %v5102 = vrot.slane %v5061, 7
  %v5103 = vsel %vm4914, %v5102, %v5101
  %v5104 = vrot.slane %v5062, 6
  %v5105 = vsel %vm4917, %v5104, %v5103
  %v5106 = vrot.slane %v5063, 5
  %v5107 = vsel %vm4920, %v5106, %v5105
  %v5108 = vrot.slane %v5064, 4
  %v5109 = vsel %vm4923, %v5108, %v5107
  %v5110 = vrot.slane %v5065, 3
  %v5111 = vsel %vm4926, %v5110, %v5109
  %v5112 = vpack.c.b16 %v5111, %v5111
  %v5114 = vrot.slane %v5058, 3
  %v5115 = vrot.slane %v5059, 2
  %v5116 = vsel %vm4908, %v5115, %v5114
  %v5117 = vrot.slane %v5060, 1
  %v5118 = vsel %vm4911, %v5117, %v5116
  %v5119 = vsel %vm4914, %v5061, %v5118
  %v5120 = vrot.slane %v5062, 7
  %v5121 = vsel %vm4917, %v5120, %v5119
  %v5122 = vrot.slane %v5063, 6
  %v5123 = vsel %vm4920, %v5122, %v5121
  %v5124 = vrot.slane %v5064, 5
  %v5125 = vsel %vm4923, %v5124, %v5123
  %v5126 = vrot.slane %v5065, 4
  %v5127 = vsel %vm4926, %v5126, %v5125
  %v5128 = vpack.c.b16 %v5127, %v5127
  %v5130 = vunpack.c.h.b16 %v4603
  %v5131 = vunpack.c.h.b16 %v4607
  %v5132 = vunpack.c.h.b16 %v4611
  %v5133 = vunpack.c.h.b16 %v4615
  %v5134 = vunpack.c.h.b16 %v4619
  %v5135 = vunpack.c.h.b16 %v4623
  %v5136 = vunpack.c.h.b16 %v4627
  %v5137 = vunpack.c.h.b16 %v4631
  %v5138 = vrot.slane %v5131, 7
  %v5139 = vsel %vm4908, %v5138, %v5130
  %v5140 = vrot.slane %v5132, 6
  %v5141 = vsel %vm4911, %v5140, %v5139
  %v5142 = vrot.slane %v5133, 5
  %v5143 = vsel %vm4914, %v5142, %v5141
  %v5144 = vrot.slane %v5134, 4
  %v5145 = vsel %vm4917, %v5144, %v5143
  %v5146 = vrot.slane %v5135, 3
  %v5147 = vsel %vm4920, %v5146, %v5145
  %v5148 = vrot.slane %v5136, 2
  %v5149 = vsel %vm4923, %v5148, %v5147
  %v5150 = vrot.slane %v5137, 1
  %v5151 = vsel %vm4926, %v5150, %v5149
  %v5152 = vpack.c.b16 %v5151, %v5151
  %v5154 = vrot.slane %v5130, 1
  %v5155 = vsel %vm4908, %v5131, %v5154
  %v5156 = vrot.slane %v5132, 7
  %v5157 = vsel %vm4911, %v5156, %v5155
  %v5158 = vrot.slane %v5133, 6
  %v5159 = vsel %vm4914, %v5158, %v5157
  %v5160 = vrot.slane %v5134, 5
  %v5161 = vsel %vm4917, %v5160, %v5159
  %v5162 = vrot.slane %v5135, 4
  %v5163 = vsel %vm4920, %v5162, %v5161
  %v5164 = vrot.slane %v5136, 3
  %v5165 = vsel %vm4923, %v5164, %v5163
  %v5166 = vrot.slane %v5137, 2
  %v5167 = vsel %vm4926, %v5166, %v5165
  %v5168 = vpack.c.b16 %v5167, %v5167
  %v5170 = vrot.slane %v5130, 2
  %v5171 = vrot.slane %v5131, 1
  %v5172 = vsel %vm4908, %v5171, %v5170
  %v5173 = vsel %vm4911, %v5132, %v5172
  %v5174 = vrot.slane %v5133, 7
  %v5175 = vsel %vm4914, %v5174, %v5173
  %v5176 = vrot.slane %v5134, 6
  %v5177 = vsel %vm4917, %v5176, %v5175
  %v5178 = vrot.slane %v5135, 5
  %v5179 = vsel %vm4920, %v5178, %v5177
  %v5180 = vrot.slane %v5136, 4
  %v5181 = vsel %vm4923, %v5180, %v5179
  %v5182 = vrot.slane %v5137, 3
  %v5183 = vsel %vm4926, %v5182, %v5181
  %v5184 = vpack.c.b16 %v5183, %v5183
  %v5186 = vrot.slane %v5130, 3
  %v5187 = vrot.slane %v5131, 2
  %v5188 = vsel %vm4908, %v5187, %v5186
  %v5189 = vrot.slane %v5132, 1
  %v5190 = vsel %vm4911, %v5189, %v5188
  %v5191 = vsel %vm4914, %v5133, %v5190
  %v5192 = vrot.slane %v5134, 7
  %v5193 = vsel %vm4917, %v5192, %v5191
  %v5194 = vrot.slane %v5135, 6
  %v5195 = vsel %vm4920, %v5194, %v5193
  %v5196 = vrot.slane %v5136, 5
  %v5197 = vsel %vm4923, %v5196, %v5195
  %v5198 = vrot.slane %v5137, 4
  %v5199 = vsel %vm4926, %v5198, %v5197
  %v5200 = vpack.c.b16 %v5199, %v5199
  %v5203 = vlaneseq
  %v5204 = vshrl.u32 %v5203, 7
  %v5205 = vsub.s32 0, %v5204
  %v5206 = vrot.slane %v4890, %v5205
  %v5207 = vlaneseq
  %v5208 = vshrl.u32 %v5207, 7
  %v5209 = vsub.s32 1, %v5208
  %v5210 = vrot.slane %v4890, %v5209
  %v5469 = vunpack.c.l.b16 %v4634
  %v5470 = vunpack.c.h.b16 %v4634
  %v5471 = vunpack.c.l.b16 %v4635
  %v5472 = vunpack.c.h.b16 %v4635
  %v5473 = vunpack.c.l.b16 %v4636
  %v5474 = vunpack.c.h.b16 %v4636
  %v5475 = vunpack.c.l.b16 %v4637
  %v5476 = vunpack.c.h.b16 %v4637
  %v5477 = vunpack.c.l.b16 %v4638
  %v5478 = vunpack.c.h.b16 %v4638
  %v5479 = vunpack.c.l.b16 %v4639
  %v5480 = vunpack.c.h.b16 %v4639
  %v5481 = vunpack.c.l.b16 %v4640
  %v5482 = vunpack.c.h.b16 %v4640
  %v5483 = vunpack.c.l.b16 %v4641
  %v5484 = vunpack.c.h.b16 %v4641
  %v5485 = vunpack.c.l.b16 %v4642
  %v5486 = vunpack.c.h.b16 %v4642
  %v5487 = vunpack.c.l.b16 %v4643
  %v5488 = vunpack.c.h.b16 %v4643
  %v5489 = vunpack.c.l.b16 %v4644
  %v5490 = vunpack.c.h.b16 %v4644
  %v5491 = vunpack.c.l.b16 %v4645
  %v5492 = vunpack.c.h.b16 %v4645
  %v5493 = vunpack.c.l.b16 %v4646
  %v5494 = vunpack.c.h.b16 %v4646
  %v5495 = vunpack.c.l.b16 %v4647
  %v5496 = vunpack.c.h.b16 %v4647
  %v5497 = vunpack.c.l.b16 %v4648
  %v5498 = vunpack.c.h.b16 %v4648
  %v5499 = vunpack.c.l.b16 %v4649
  %v5500 = vunpack.c.h.b16 %v4649
  %v5501 = vunpack.c.l.b16 %v4650
  %v5502 = vunpack.c.h.b16 %v4650
  %v5503 = vunpack.c.l.b16 %v4651
  %v5504 = vunpack.c.h.b16 %v4651
  %v5505 = vunpack.c.l.b16 %v4652
  %v5506 = vunpack.c.h.b16 %v4652
  %v5507 = vunpack.c.l.b16 %v4653
  %v5508 = vunpack.c.h.b16 %v4653
  %v5509 = vunpack.c.l.b16 %v4654
  %v5510 = vunpack.c.h.b16 %v4654
  %v5511 = vunpack.c.l.b16 %v4655
  %v5512 = vunpack.c.h.b16 %v4655
  %v5513 = vunpack.c.l.b16 %v4656
  %v5514 = vunpack.c.h.b16 %v4656
  %v5515 = vunpack.c.l.b16 %v4657
  %v5516 = vunpack.c.h.b16 %v4657
  %v5517 = vunpack.c.l.b16 %v4658
  %v5518 = vunpack.c.h.b16 %v4658
  %v5519 = vunpack.c.l.b16 %v4659
  %v5520 = vunpack.c.h.b16 %v4659
  %v5521 = vunpack.c.l.b16 %v4660
  %v5522 = vunpack.c.h.b16 %v4660
  %v5523 = vunpack.c.l.b16 %v4661
  %v5524 = vunpack.c.h.b16 %v4661
  %v5525 = vunpack.c.l.b16 %v4662
  %v5526 = vunpack.c.h.b16 %v4662
  %v5527 = vunpack.c.l.b16 %v4663
  %v5528 = vunpack.c.h.b16 %v4663
  %v5529 = vunpack.c.l.b16 %v4664
  %v5530 = vunpack.c.h.b16 %v4664
  %v5531 = vunpack.c.l.b16 %v4665
  %v5532 = vunpack.c.h.b16 %v4665
  %v5533 = vunpack.c.l.b16 %v4666
  %v5534 = vunpack.c.h.b16 %v4666
  %v5535 = vunpack.c.l.b16 %v4667
  %v5536 = vunpack.c.h.b16 %v4667
  %v5537 = vunpack.c.l.b16 %v4668
  %v5538 = vunpack.c.h.b16 %v4668
  %v5539 = vunpack.c.l.b16 %v4669
  %v5540 = vunpack.c.h.b16 %v4669
  %v5541 = vunpack.c.l.b16 %v4670
  %v5542 = vunpack.c.h.b16 %v4670
  %v5543 = vunpack.c.l.b16 %v4671
  %v5544 = vunpack.c.h.b16 %v4671
  %v5545 = vunpack.c.l.b16 %v4672
  %v5546 = vunpack.c.h.b16 %v4672
  %v5547 = vunpack.c.l.b16 %v4673
  %v5548 = vunpack.c.h.b16 %v4673
  %v5549 = vunpack.c.l.b16 %v4674
  %v5550 = vunpack.c.h.b16 %v4674
  %v5551 = vunpack.c.l.b16 %v4675
  %v5552 = vunpack.c.h.b16 %v4675
  %v5553 = vunpack.c.l.b16 %v4676
  %v5554 = vunpack.c.h.b16 %v4676
  %v5555 = vunpack.c.l.b16 %v4677
  %v5556 = vunpack.c.h.b16 %v4677
  %v5557 = vunpack.c.l.b16 %v4678
  %v5558 = vunpack.c.h.b16 %v4678
  %v5559 = vunpack.c.l.b16 %v4679
  %v5560 = vunpack.c.h.b16 %v4679
  %v5561 = vunpack.c.l.b16 %v4680
  %v5562 = vunpack.c.h.b16 %v4680
  %v5563 = vunpack.c.l.b16 %v4681
  %v5564 = vunpack.c.h.b16 %v4681
  %v5565 = vunpack.c.l.b16 %v4682
  %v5566 = vunpack.c.h.b16 %v4682
  %v5567 = vunpack.c.l.b16 %v4683
  %v5568 = vunpack.c.h.b16 %v4683
  %v5569 = vunpack.c.l.b16 %v4684
  %v5570 = vunpack.c.h.b16 %v4684
  %v5571 = vunpack.c.l.b16 %v4685
  %v5572 = vunpack.c.h.b16 %v4685
  %v5573 = vunpack.c.l.b16 %v4686
  %v5574 = vunpack.c.h.b16 %v4686
  %v5575 = vunpack.c.l.b16 %v4687
  %v5576 = vunpack.c.h.b16 %v4687
  %v5577 = vunpack.c.l.b16 %v4688
  %v5578 = vunpack.c.h.b16 %v4688
  %v5579 = vunpack.c.l.b16 %v4689
  %v5580 = vunpack.c.h.b16 %v4689
  %v5581 = vunpack.c.l.b16 %v4690
  %v5582 = vunpack.c.h.b16 %v4690
  %v5583 = vunpack.c.l.b16 %v4691
  %v5584 = vunpack.c.h.b16 %v4691
  %v5585 = vunpack.c.l.b16 %v4692
  %v5586 = vunpack.c.h.b16 %v4692
  %v5587 = vunpack.c.l.b16 %v4693
  %v5588 = vunpack.c.h.b16 %v4693
  %v5589 = vunpack.c.l.b16 %v4694
  %v5590 = vunpack.c.h.b16 %v4694
  %v5591 = vunpack.c.l.b16 %v4695
  %v5592 = vunpack.c.h.b16 %v4695
  %v5593 = vunpack.c.l.b16 %v4696
  %v5594 = vunpack.c.h.b16 %v4696
  %v5595 = vunpack.c.l.b16 %v4697
  %v5596 = vunpack.c.h.b16 %v4697
  %v5597 = vunpack.c.l.b16 %v4698
  %v5598 = vunpack.c.h.b16 %v4698
  %v5599 = vunpack.c.l.b16 %v4699
  %v5600 = vunpack.c.h.b16 %v4699
  %v5601 = vunpack.c.l.b16 %v4700
  %v5602 = vunpack.c.h.b16 %v4700
  %v5603 = vunpack.c.l.b16 %v4701
  %v5604 = vunpack.c.h.b16 %v4701
  %v5605 = vunpack.c.l.b16 %v4702
  %v5606 = vunpack.c.h.b16 %v4702
  %v5607 = vunpack.c.l.b16 %v4703
  %v5608 = vunpack.c.h.b16 %v4703
  %v5609 = vunpack.c.l.b16 %v4704
  %v5610 = vunpack.c.h.b16 %v4704
  %v5611 = vunpack.c.l.b16 %v4705
  %v5612 = vunpack.c.h.b16 %v4705
  %v5613 = vunpack.c.l.b16 %v4706
  %v5614 = vunpack.c.h.b16 %v4706
  %v5615 = vunpack.c.l.b16 %v4707
  %v5616 = vunpack.c.h.b16 %v4707
  %v5617 = vunpack.c.l.b16 %v4708
  %v5618 = vunpack.c.h.b16 %v4708
  %v5619 = vunpack.c.l.b16 %v4709
  %v5620 = vunpack.c.h.b16 %v4709
  %v5621 = vunpack.c.l.b16 %v4710
  %v5622 = vunpack.c.h.b16 %v4710
  %v5623 = vunpack.c.l.b16 %v4711
  %v5624 = vunpack.c.h.b16 %v4711
  %v5625 = vunpack.c.l.b16 %v4712
  %v5626 = vunpack.c.h.b16 %v4712
  %v5627 = vunpack.c.l.b16 %v4713
  %v5628 = vunpack.c.h.b16 %v4713
  %v5629 = vunpack.c.l.b16 %v4714
  %v5630 = vunpack.c.h.b16 %v4714
  %v5631 = vunpack.c.l.b16 %v4715
  %v5632 = vunpack.c.h.b16 %v4715
  %v5633 = vunpack.c.l.b16 %v4716
  %v5634 = vunpack.c.h.b16 %v4716
  %v5635 = vunpack.c.l.b16 %v4717
  %v5636 = vunpack.c.h.b16 %v4717
  %v5637 = vunpack.c.l.b16 %v4718
  %v5638 = vunpack.c.h.b16 %v4718
  %v5639 = vunpack.c.l.b16 %v4719
  %v5640 = vunpack.c.h.b16 %v4719
  %v5641 = vunpack.c.l.b16 %v4720
  %v5642 = vunpack.c.h.b16 %v4720
  %v5643 = vunpack.c.l.b16 %v4721
  %v5644 = vunpack.c.h.b16 %v4721
  %v5645 = vunpack.c.l.b16 %v4722
  %v5646 = vunpack.c.h.b16 %v4722
  %v5647 = vunpack.c.l.b16 %v4723
  %v5648 = vunpack.c.h.b16 %v4723
  %v5649 = vunpack.c.l.b16 %v4724
  %v5650 = vunpack.c.h.b16 %v4724
  %v5651 = vunpack.c.l.b16 %v4725
  %v5652 = vunpack.c.h.b16 %v4725
  %v5653 = vunpack.c.l.b16 %v4726
  %v5654 = vunpack.c.h.b16 %v4726
  %v5655 = vunpack.c.l.b16 %v4727
  %v5656 = vunpack.c.h.b16 %v4727
  %v5657 = vunpack.c.l.b16 %v4728
  %v5658 = vunpack.c.h.b16 %v4728
  %v5659 = vunpack.c.l.b16 %v4729
  %v5660 = vunpack.c.h.b16 %v4729
  %v5661 = vunpack.c.l.b16 %v4730
  %v5662 = vunpack.c.h.b16 %v4730
  %v5663 = vunpack.c.l.b16 %v4731
  %v5664 = vunpack.c.h.b16 %v4731
  %v5665 = vunpack.c.l.b16 %v4732
  %v5666 = vunpack.c.h.b16 %v4732
  %v5667 = vunpack.c.l.b16 %v4733
  %v5668 = vunpack.c.h.b16 %v4733
  %v5669 = vunpack.c.l.b16 %v4734
  %v5670 = vunpack.c.h.b16 %v4734
  %v5671 = vunpack.c.l.b16 %v4735
  %v5672 = vunpack.c.h.b16 %v4735
  %v5673 = vunpack.c.l.b16 %v4736
  %v5674 = vunpack.c.h.b16 %v4736
  %v5675 = vunpack.c.l.b16 %v4737
  %v5676 = vunpack.c.h.b16 %v4737
  %v5677 = vunpack.c.l.b16 %v4738
  %v5678 = vunpack.c.h.b16 %v4738
  %v5679 = vunpack.c.l.b16 %v4739
  %v5680 = vunpack.c.h.b16 %v4739
  %v5681 = vunpack.c.l.b16 %v4740
  %v5682 = vunpack.c.h.b16 %v4740
  %v5683 = vunpack.c.l.b16 %v4741
  %v5684 = vunpack.c.h.b16 %v4741
  %v5685 = vunpack.c.l.b16 %v4742
  %v5686 = vunpack.c.h.b16 %v4742
  %v5687 = vunpack.c.l.b16 %v4743
  %v5688 = vunpack.c.h.b16 %v4743
  %v5689 = vunpack.c.l.b16 %v4744
  %v5690 = vunpack.c.h.b16 %v4744
  %v5691 = vunpack.c.l.b16 %v4745
  %v5692 = vunpack.c.h.b16 %v4745
  %v5693 = vunpack.c.l.b16 %v4746
  %v5694 = vunpack.c.h.b16 %v4746
  %v5695 = vunpack.c.l.b16 %v4747
  %v5696 = vunpack.c.h.b16 %v4747
  %v5697 = vunpack.c.l.b16 %v4748
  %v5698 = vunpack.c.h.b16 %v4748
  %v5699 = vunpack.c.l.b16 %v4749
  %v5700 = vunpack.c.h.b16 %v4749
  %v5701 = vunpack.c.l.b16 %v4750
  %v5702 = vunpack.c.h.b16 %v4750
  %v5703 = vunpack.c.l.b16 %v4751
  %v5704 = vunpack.c.h.b16 %v4751
  %v5705 = vunpack.c.l.b16 %v4752
  %v5706 = vunpack.c.h.b16 %v4752
  %v5707 = vunpack.c.l.b16 %v4753
  %v5708 = vunpack.c.h.b16 %v4753
  %v5709 = vunpack.c.l.b16 %v4754
  %v5710 = vunpack.c.h.b16 %v4754
  %v5711 = vunpack.c.l.b16 %v4755
  %v5712 = vunpack.c.h.b16 %v4755
  %v5713 = vunpack.c.l.b16 %v4756
  %v5714 = vunpack.c.h.b16 %v4756
  %v5715 = vunpack.c.l.b16 %v4757
  %v5716 = vunpack.c.h.b16 %v4757
  %v5717 = vunpack.c.l.b16 %v4758
  %v5718 = vunpack.c.h.b16 %v4758
  %v5719 = vunpack.c.l.b16 %v4759
  %v5720 = vunpack.c.h.b16 %v4759
  %v5721 = vunpack.c.l.b16 %v4760
  %v5722 = vunpack.c.h.b16 %v4760
  %v5723 = vunpack.c.l.b16 %v4761
  %v5724 = vunpack.c.h.b16 %v4761
  %v5725 = vunpack.c.l.b16 %v4762
  %v5726 = vunpack.c.h.b16 %v4762
  %v5727 = vunpack.c.l.b16 %v4763
  %v5728 = vunpack.c.h.b16 %v4763
  %v5729 = vunpack.c.l.b16 %v4764
  %v5730 = vunpack.c.h.b16 %v4764
  %v5731 = vunpack.c.l.b16 %v4765
  %v5732 = vunpack.c.h.b16 %v4765
  %v5733 = vunpack.c.l.b16 %v4766
  %v5734 = vunpack.c.h.b16 %v4766
  %v5735 = vunpack.c.l.b16 %v4767
  %v5736 = vunpack.c.h.b16 %v4767
  %v5737 = vunpack.c.l.b16 %v4768
  %v5738 = vunpack.c.h.b16 %v4768
  %v5739 = vunpack.c.l.b16 %v4769
  %v5740 = vunpack.c.h.b16 %v4769
  %v5741 = vunpack.c.l.b16 %v4770
  %v5742 = vunpack.c.h.b16 %v4770
  %v5743 = vunpack.c.l.b16 %v4771
  %v5744 = vunpack.c.h.b16 %v4771
  %v5745 = vunpack.c.l.b16 %v4772
  %v5746 = vunpack.c.h.b16 %v4772
  %v5747 = vunpack.c.l.b16 %v4773
  %v5748 = vunpack.c.h.b16 %v4773
  %v5749 = vunpack.c.l.b16 %v4774
  %v5750 = vunpack.c.h.b16 %v4774
  %v5751 = vunpack.c.l.b16 %v4775
  %v5752 = vunpack.c.h.b16 %v4775
  %v5753 = vunpack.c.l.b16 %v4776
  %v5754 = vunpack.c.h.b16 %v4776
  %v5755 = vunpack.c.l.b16 %v4777
  %v5756 = vunpack.c.h.b16 %v4777
  %v5757 = vunpack.c.l.b16 %v4778
  %v5758 = vunpack.c.h.b16 %v4778
  %v5759 = vunpack.c.l.b16 %v4779
  %v5760 = vunpack.c.h.b16 %v4779
  %v5761 = vunpack.c.l.b16 %v4780
  %v5762 = vunpack.c.h.b16 %v4780
  %v5763 = vunpack.c.l.b16 %v4781
  %v5764 = vunpack.c.h.b16 %v4781
  %v5765 = vunpack.c.l.b16 %v4782
  %v5766 = vunpack.c.h.b16 %v4782
  %v5767 = vunpack.c.l.b16 %v4783
  %v5768 = vunpack.c.h.b16 %v4783
  %v5769 = vunpack.c.l.b16 %v4784
  %v5770 = vunpack.c.h.b16 %v4784
  %v5771 = vunpack.c.l.b16 %v4785
  %v5772 = vunpack.c.h.b16 %v4785
  %v5773 = vunpack.c.l.b16 %v4786
  %v5774 = vunpack.c.h.b16 %v4786
  %v5775 = vunpack.c.l.b16 %v4787
  %v5776 = vunpack.c.h.b16 %v4787
  %v5777 = vunpack.c.l.b16 %v4788
  %v5778 = vunpack.c.h.b16 %v4788
  %v5779 = vunpack.c.l.b16 %v4789
  %v5780 = vunpack.c.h.b16 %v4789
  %v5781 = vunpack.c.l.b16 %v4790
  %v5782 = vunpack.c.h.b16 %v4790
  %v5783 = vunpack.c.l.b16 %v4791
  %v5784 = vunpack.c.h.b16 %v4791
  %v5785 = vunpack.c.l.b16 %v4792
  %v5786 = vunpack.c.h.b16 %v4792
  %v5787 = vunpack.c.l.b16 %v4793
  %v5788 = vunpack.c.h.b16 %v4793
  %v5789 = vunpack.c.l.b16 %v4794
  %v5790 = vunpack.c.h.b16 %v4794
  %v5791 = vunpack.c.l.b16 %v4795
  %v5792 = vunpack.c.h.b16 %v4795
  %v5793 = vunpack.c.l.b16 %v4796
  %v5794 = vunpack.c.h.b16 %v4796
  %v5795 = vunpack.c.l.b16 %v4797
  %v5796 = vunpack.c.h.b16 %v4797
  %v5797 = vunpack.c.l.b16 %v4798
  %v5798 = vunpack.c.h.b16 %v4798
  %v5799 = vunpack.c.l.b16 %v4799
  %v5800 = vunpack.c.h.b16 %v4799
  %v5801 = vunpack.c.l.b16 %v4800
  %v5802 = vunpack.c.h.b16 %v4800
  %v5803 = vunpack.c.l.b16 %v4801
  %v5804 = vunpack.c.h.b16 %v4801
  %v5805 = vunpack.c.l.b16 %v4802
  %v5806 = vunpack.c.h.b16 %v4802
  %v5807 = vunpack.c.l.b16 %v4803
  %v5808 = vunpack.c.h.b16 %v4803
  %v5809 = vunpack.c.l.b16 %v4804
  %v5810 = vunpack.c.h.b16 %v4804
  %v5811 = vunpack.c.l.b16 %v4805
  %v5812 = vunpack.c.h.b16 %v4805
  %v5813 = vunpack.c.l.b16 %v4806
  %v5814 = vunpack.c.h.b16 %v4806
  %v5815 = vunpack.c.l.b16 %v4807
  %v5816 = vunpack.c.h.b16 %v4807
  %v5817 = vunpack.c.l.b16 %v4808
  %v5818 = vunpack.c.h.b16 %v4808
  %v5819 = vunpack.c.l.b16 %v4809
  %v5820 = vunpack.c.h.b16 %v4809
  %v5821 = vunpack.c.l.b16 %v4810
  %v5822 = vunpack.c.h.b16 %v4810
  %v5823 = vunpack.c.l.b16 %v4811
  %v5824 = vunpack.c.h.b16 %v4811
  %v5825 = vunpack.c.l.b16 %v4812
  %v5826 = vunpack.c.h.b16 %v4812
  %v5827 = vunpack.c.l.b16 %v4813
  %v5828 = vunpack.c.h.b16 %v4813
  %v5829 = vunpack.c.l.b16 %v4814
  %v5830 = vunpack.c.h.b16 %v4814
  %v5831 = vunpack.c.l.b16 %v4815
  %v5832 = vunpack.c.h.b16 %v4815
  %v5833 = vunpack.c.l.b16 %v4816
  %v5834 = vunpack.c.h.b16 %v4816
  %v5835 = vunpack.c.l.b16 %v4817
  %v5836 = vunpack.c.h.b16 %v4817
  %v5837 = vunpack.c.l.b16 %v4818
  %v5838 = vunpack.c.h.b16 %v4818
  %v5839 = vunpack.c.l.b16 %v4819
  %v5840 = vunpack.c.h.b16 %v4819
  %v5841 = vunpack.c.l.b16 %v4820
  %v5842 = vunpack.c.h.b16 %v4820
  %v5843 = vunpack.c.l.b16 %v4821
  %v5844 = vunpack.c.h.b16 %v4821
  %v5845 = vunpack.c.l.b16 %v4822
  %v5846 = vunpack.c.h.b16 %v4822
  %v5847 = vunpack.c.l.b16 %v4823
  %v5848 = vunpack.c.h.b16 %v4823
  %v5849 = vunpack.c.l.b16 %v4824
  %v5850 = vunpack.c.h.b16 %v4824
  %v5851 = vunpack.c.l.b16 %v4825
  %v5852 = vunpack.c.h.b16 %v4825
  %v5853 = vunpack.c.l.b16 %v4826
  %v5854 = vunpack.c.h.b16 %v4826
  %v5855 = vunpack.c.l.b16 %v4827
  %v5856 = vunpack.c.h.b16 %v4827
  %v5857 = vunpack.c.l.b16 %v4828
  %v5858 = vunpack.c.h.b16 %v4828
  %v5859 = vunpack.c.l.b16 %v4829
  %v5860 = vunpack.c.h.b16 %v4829
  %v5861 = vunpack.c.l.b16 %v4830
  %v5862 = vunpack.c.h.b16 %v4830
  %v5863 = vunpack.c.l.b16 %v4831
  %v5864 = vunpack.c.h.b16 %v4831
  %v5865 = vunpack.c.l.b16 %v4832
  %v5866 = vunpack.c.h.b16 %v4832
  %v5867 = vunpack.c.l.b16 %v4833
  %v5868 = vunpack.c.h.b16 %v4833
  %v5869 = vunpack.c.l.b16 %v4834
  %v5870 = vunpack.c.h.b16 %v4834
  %v5871 = vunpack.c.l.b16 %v4835
  %v5872 = vunpack.c.h.b16 %v4835
  %v5873 = vunpack.c.l.b16 %v4836
  %v5874 = vunpack.c.h.b16 %v4836
  %v5875 = vunpack.c.l.b16 %v4837
  %v5876 = vunpack.c.h.b16 %v4837
  %v5877 = vunpack.c.l.b16 %v4838
  %v5878 = vunpack.c.h.b16 %v4838
  %v5879 = vunpack.c.l.b16 %v4839
  %v5880 = vunpack.c.h.b16 %v4839
  %v5881 = vunpack.c.l.b16 %v4840
  %v5882 = vunpack.c.h.b16 %v4840
  %v5883 = vunpack.c.l.b16 %v4841
  %v5884 = vunpack.c.h.b16 %v4841
  %v5885 = vunpack.c.l.b16 %v4842
  %v5886 = vunpack.c.h.b16 %v4842
  %v5887 = vunpack.c.l.b16 %v4843
  %v5888 = vunpack.c.h.b16 %v4843
  %v5889 = vunpack.c.l.b16 %v4844
  %v5890 = vunpack.c.h.b16 %v4844
  %v5891 = vunpack.c.l.b16 %v4845
  %v5892 = vunpack.c.h.b16 %v4845
  %v5893 = vunpack.c.l.b16 %v4846
  %v5894 = vunpack.c.h.b16 %v4846
  %v5895 = vunpack.c.l.b16 %v4847
  %v5896 = vunpack.c.h.b16 %v4847
  %v5897 = vunpack.c.l.b16 %v4848
  %v5898 = vunpack.c.h.b16 %v4848
  %v5899 = vunpack.c.l.b16 %v4849
  %v5900 = vunpack.c.h.b16 %v4849
  %v5901 = vunpack.c.l.b16 %v4850
  %v5902 = vunpack.c.h.b16 %v4850
  %v5903 = vunpack.c.l.b16 %v4851
  %v5904 = vunpack.c.h.b16 %v4851
  %v5905 = vunpack.c.l.b16 %v4852
  %v5906 = vunpack.c.h.b16 %v4852
  %v5907 = vunpack.c.l.b16 %v4853
  %v5908 = vunpack.c.h.b16 %v4853
  %v5909 = vunpack.c.l.b16 %v4854
  %v5910 = vunpack.c.h.b16 %v4854
  %v5911 = vunpack.c.l.b16 %v4855
  %v5912 = vunpack.c.h.b16 %v4855
  %v5913 = vunpack.c.l.b16 %v4856
  %v5914 = vunpack.c.h.b16 %v4856
  %v5915 = vunpack.c.l.b16 %v4857
  %v5916 = vunpack.c.h.b16 %v4857
  %v5917 = vunpack.c.l.b16 %v4858
  %v5918 = vunpack.c.h.b16 %v4858
  %v5919 = vunpack.c.l.b16 %v4859
  %v5920 = vunpack.c.h.b16 %v4859
  %v5921 = vunpack.c.l.b16 %v4860
  %v5922 = vunpack.c.h.b16 %v4860
  %v5923 = vunpack.c.l.b16 %v4861
  %v5924 = vunpack.c.h.b16 %v4861
  %v5925 = vunpack.c.l.b16 %v4862
  %v5926 = vunpack.c.h.b16 %v4862
  %v5927 = vunpack.c.l.b16 %v4863
  %v5928 = vunpack.c.h.b16 %v4863
  %v5929 = vunpack.c.l.b16 %v4864
  %v5930 = vunpack.c.h.b16 %v4864
  %v5931 = vunpack.c.l.b16 %v4865
  %v5932 = vunpack.c.h.b16 %v4865
  %v5933 = vunpack.c.l.b16 %v4866
  %v5934 = vunpack.c.h.b16 %v4866
  %v5935 = vunpack.c.l.b16 %v4867
  %v5936 = vunpack.c.h.b16 %v4867
  %v5937 = vunpack.c.l.b16 %v4868
  %v5938 = vunpack.c.h.b16 %v4868
  %v5939 = vunpack.c.l.b16 %v4869
  %v5940 = vunpack.c.h.b16 %v4869
  %v5941 = vunpack.c.l.b16 %v4870
  %v5942 = vunpack.c.h.b16 %v4870
  %v5943 = vunpack.c.l.b16 %v4871
  %v5944 = vunpack.c.h.b16 %v4871
  %v5945 = vunpack.c.l.b16 %v4872
  %v5946 = vunpack.c.h.b16 %v4872
  %v5947 = vunpack.c.l.b16 %v4873
  %v5948 = vunpack.c.h.b16 %v4873
  %v5949 = vunpack.c.l.b16 %v4874
  %v5950 = vunpack.c.h.b16 %v4874
  %v5951 = vunpack.c.l.b16 %v4875
  %v5952 = vunpack.c.h.b16 %v4875
  %v5953 = vunpack.c.l.b16 %v4876
  %v5954 = vunpack.c.h.b16 %v4876
  %v5955 = vunpack.c.l.b16 %v4877
  %v5956 = vunpack.c.h.b16 %v4877
  %v5957 = vunpack.c.l.b16 %v4878
  %v5958 = vunpack.c.h.b16 %v4878
  %v5959 = vunpack.c.l.b16 %v4879
  %v5960 = vunpack.c.h.b16 %v4879
  %v5961 = vunpack.c.l.b16 %v4880
  %v5962 = vunpack.c.h.b16 %v4880
  %v5963 = vunpack.c.l.b16 %v4881
  %v5964 = vunpack.c.h.b16 %v4881
  %v5965 = vunpack.c.l.b16 %v4882
  %v5966 = vunpack.c.h.b16 %v4882
  %v5967 = vunpack.c.l.b16 %v4883
  %v5968 = vunpack.c.h.b16 %v4883
  %v5969 = vunpack.c.l.b16 %v4884
  %v5970 = vunpack.c.h.b16 %v4884
  %v5971 = vunpack.c.l.b16 %v4885
  %v5972 = vunpack.c.h.b16 %v4885
  %v5973 = vunpack.c.l.b16 %v4886
  %v5974 = vunpack.c.h.b16 %v4886
  %v5975 = vunpack.c.l.b16 %v4887
  %v5976 = vunpack.c.h.b16 %v4887
  %v5977 = vunpack.c.l.b16 %v4888
  %v5978 = vunpack.c.h.b16 %v4888
  %v5979 = vunpack.c.l.b16 %v4889
  %v5980 = vunpack.c.h.b16 %v4889
  %v5981 = vpack.c.b16 %v5471, %v5469
  %v5982 = vpack.c.b16 %v5472, %v5470
  %v5983 = vpack.c.b16 %v5475, %v5473
  %v5984 = vpack.c.b16 %v5476, %v5474
  %v5985 = vpack.c.b16 %v5479, %v5477
  %v5986 = vpack.c.b16 %v5480, %v5478
  %v5987 = vpack.c.b16 %v5483, %v5481
  %v5988 = vpack.c.b16 %v5484, %v5482
  %v5989 = vpack.c.b16 %v5487, %v5485
  %v5990 = vpack.c.b16 %v5488, %v5486
  %v5991 = vpack.c.b16 %v5491, %v5489
  %v5992 = vpack.c.b16 %v5492, %v5490
  %v5993 = vpack.c.b16 %v5495, %v5493
  %v5994 = vpack.c.b16 %v5496, %v5494
  %v5995 = vpack.c.b16 %v5499, %v5497
  %v5996 = vpack.c.b16 %v5500, %v5498
  %v5997 = vpack.c.b16 %v5503, %v5501
  %v5998 = vpack.c.b16 %v5504, %v5502
  %v5999 = vpack.c.b16 %v5507, %v5505
  %v6000 = vpack.c.b16 %v5508, %v5506
  %v6001 = vpack.c.b16 %v5511, %v5509
  %v6002 = vpack.c.b16 %v5512, %v5510
  %v6003 = vpack.c.b16 %v5515, %v5513
  %v6004 = vpack.c.b16 %v5516, %v5514
  %v6005 = vpack.c.b16 %v5519, %v5517
  %v6006 = vpack.c.b16 %v5520, %v5518
  %v6007 = vpack.c.b16 %v5523, %v5521
  %v6008 = vpack.c.b16 %v5524, %v5522
  %v6009 = vpack.c.b16 %v5527, %v5525
  %v6010 = vpack.c.b16 %v5528, %v5526
  %v6011 = vpack.c.b16 %v5531, %v5529
  %v6012 = vpack.c.b16 %v5532, %v5530
  %v6013 = vpack.c.b16 %v5535, %v5533
  %v6014 = vpack.c.b16 %v5536, %v5534
  %v6015 = vpack.c.b16 %v5539, %v5537
  %v6016 = vpack.c.b16 %v5540, %v5538
  %v6017 = vpack.c.b16 %v5543, %v5541
  %v6018 = vpack.c.b16 %v5544, %v5542
  %v6019 = vpack.c.b16 %v5547, %v5545
  %v6020 = vpack.c.b16 %v5548, %v5546
  %v6021 = vpack.c.b16 %v5551, %v5549
  %v6022 = vpack.c.b16 %v5552, %v5550
  %v6023 = vpack.c.b16 %v5555, %v5553
  %v6024 = vpack.c.b16 %v5556, %v5554
  %v6025 = vpack.c.b16 %v5559, %v5557
  %v6026 = vpack.c.b16 %v5560, %v5558
  %v6027 = vpack.c.b16 %v5563, %v5561
  %v6028 = vpack.c.b16 %v5564, %v5562
  %v6029 = vpack.c.b16 %v5567, %v5565
  %v6030 = vpack.c.b16 %v5568, %v5566
  %v6031 = vpack.c.b16 %v5571, %v5569
  %v6032 = vpack.c.b16 %v5572, %v5570
  %v6033 = vpack.c.b16 %v5575, %v5573
  %v6034 = vpack.c.b16 %v5576, %v5574
  %v6035 = vpack.c.b16 %v5579, %v5577
  %v6036 = vpack.c.b16 %v5580, %v5578
  %v6037 = vpack.c.b16 %v5583, %v5581
  %v6038 = vpack.c.b16 %v5584, %v5582
  %v6039 = vpack.c.b16 %v5587, %v5585
  %v6040 = vpack.c.b16 %v5588, %v5586
  %v6041 = vpack.c.b16 %v5591, %v5589
  %v6042 = vpack.c.b16 %v5592, %v5590
  %v6043 = vpack.c.b16 %v5595, %v5593
  %v6044 = vpack.c.b16 %v5596, %v5594
  %v6045 = vpack.c.b16 %v5599, %v5597
  %v6046 = vpack.c.b16 %v5600, %v5598
  %v6047 = vpack.c.b16 %v5603, %v5601
  %v6048 = vpack.c.b16 %v5604, %v5602
  %v6049 = vpack.c.b16 %v5607, %v5605
  %v6050 = vpack.c.b16 %v5608, %v5606
  %v6051 = vpack.c.b16 %v5611, %v5609
  %v6052 = vpack.c.b16 %v5612, %v5610
  %v6053 = vpack.c.b16 %v5615, %v5613
  %v6054 = vpack.c.b16 %v5616, %v5614
  %v6055 = vpack.c.b16 %v5619, %v5617
  %v6056 = vpack.c.b16 %v5620, %v5618
  %v6057 = vpack.c.b16 %v5623, %v5621
  %v6058 = vpack.c.b16 %v5624, %v5622
  %v6059 = vpack.c.b16 %v5627, %v5625
  %v6060 = vpack.c.b16 %v5628, %v5626
  %v6061 = vpack.c.b16 %v5631, %v5629
  %v6062 = vpack.c.b16 %v5632, %v5630
  %v6063 = vpack.c.b16 %v5635, %v5633
  %v6064 = vpack.c.b16 %v5636, %v5634
  %v6065 = vpack.c.b16 %v5639, %v5637
  %v6066 = vpack.c.b16 %v5640, %v5638
  %v6067 = vpack.c.b16 %v5643, %v5641
  %v6068 = vpack.c.b16 %v5644, %v5642
  %v6069 = vpack.c.b16 %v5647, %v5645
  %v6070 = vpack.c.b16 %v5648, %v5646
  %v6071 = vpack.c.b16 %v5651, %v5649
  %v6072 = vpack.c.b16 %v5652, %v5650
  %v6073 = vpack.c.b16 %v5655, %v5653
  %v6074 = vpack.c.b16 %v5656, %v5654
  %v6075 = vpack.c.b16 %v5659, %v5657
  %v6076 = vpack.c.b16 %v5660, %v5658
  %v6077 = vpack.c.b16 %v5663, %v5661
  %v6078 = vpack.c.b16 %v5664, %v5662
  %v6079 = vpack.c.b16 %v5667, %v5665
  %v6080 = vpack.c.b16 %v5668, %v5666
  %v6081 = vpack.c.b16 %v5671, %v5669
  %v6082 = vpack.c.b16 %v5672, %v5670
  %v6083 = vpack.c.b16 %v5675, %v5673
  %v6084 = vpack.c.b16 %v5676, %v5674
  %v6085 = vpack.c.b16 %v5679, %v5677
  %v6086 = vpack.c.b16 %v5680, %v5678
  %v6087 = vpack.c.b16 %v5683, %v5681
  %v6088 = vpack.c.b16 %v5684, %v5682
  %v6089 = vpack.c.b16 %v5687, %v5685
  %v6090 = vpack.c.b16 %v5688, %v5686
  %v6091 = vpack.c.b16 %v5691, %v5689
  %v6092 = vpack.c.b16 %v5692, %v5690
  %v6093 = vpack.c.b16 %v5695, %v5693
  %v6094 = vpack.c.b16 %v5696, %v5694
  %v6095 = vpack.c.b16 %v5699, %v5697
  %v6096 = vpack.c.b16 %v5700, %v5698
  %v6097 = vpack.c.b16 %v5703, %v5701
  %v6098 = vpack.c.b16 %v5704, %v5702
  %v6099 = vpack.c.b16 %v5707, %v5705
  %v6100 = vpack.c.b16 %v5708, %v5706
  %v6101 = vpack.c.b16 %v5711, %v5709
  %v6102 = vpack.c.b16 %v5712, %v5710
  %v6103 = vpack.c.b16 %v5715, %v5713
  %v6104 = vpack.c.b16 %v5716, %v5714
  %v6105 = vpack.c.b16 %v5719, %v5717
  %v6106 = vpack.c.b16 %v5720, %v5718
  %v6107 = vpack.c.b16 %v5723, %v5721
  %v6108 = vpack.c.b16 %v5724, %v5722
  %v6109 = vpack.c.b16 %v5727, %v5725
  %v6110 = vpack.c.b16 %v5728, %v5726
  %v6111 = vpack.c.b16 %v5731, %v5729
  %v6112 = vpack.c.b16 %v5732, %v5730
  %v6113 = vpack.c.b16 %v5735, %v5733
  %v6114 = vpack.c.b16 %v5736, %v5734
  %v6115 = vpack.c.b16 %v5739, %v5737
  %v6116 = vpack.c.b16 %v5740, %v5738
  %v6117 = vpack.c.b16 %v5743, %v5741
  %v6118 = vpack.c.b16 %v5744, %v5742
  %v6119 = vpack.c.b16 %v5747, %v5745
  %v6120 = vpack.c.b16 %v5748, %v5746
  %v6121 = vpack.c.b16 %v5751, %v5749
  %v6122 = vpack.c.b16 %v5752, %v5750
  %v6123 = vpack.c.b16 %v5755, %v5753
  %v6124 = vpack.c.b16 %v5756, %v5754
  %v6125 = vpack.c.b16 %v5759, %v5757
  %v6126 = vpack.c.b16 %v5760, %v5758
  %v6127 = vpack.c.b16 %v5763, %v5761
  %v6128 = vpack.c.b16 %v5764, %v5762
  %v6129 = vpack.c.b16 %v5767, %v5765
  %v6130 = vpack.c.b16 %v5768, %v5766
  %v6131 = vpack.c.b16 %v5771, %v5769
  %v6132 = vpack.c.b16 %v5772, %v5770
  %v6133 = vpack.c.b16 %v5775, %v5773
  %v6134 = vpack.c.b16 %v5776, %v5774
  %v6135 = vpack.c.b16 %v5779, %v5777
  %v6136 = vpack.c.b16 %v5780, %v5778
  %v6137 = vpack.c.b16 %v5783, %v5781
  %v6138 = vpack.c.b16 %v5784, %v5782
  %v6139 = vpack.c.b16 %v5787, %v5785
  %v6140 = vpack.c.b16 %v5788, %v5786
  %v6141 = vpack.c.b16 %v5791, %v5789
  %v6142 = vpack.c.b16 %v5792, %v5790
  %v6143 = vpack.c.b16 %v5795, %v5793
  %v6144 = vpack.c.b16 %v5796, %v5794
  %v6145 = vpack.c.b16 %v5799, %v5797
  %v6146 = vpack.c.b16 %v5800, %v5798
  %v6147 = vpack.c.b16 %v5803, %v5801
  %v6148 = vpack.c.b16 %v5804, %v5802
  %v6149 = vpack.c.b16 %v5807, %v5805
  %v6150 = vpack.c.b16 %v5808, %v5806
  %v6151 = vpack.c.b16 %v5811, %v5809
  %v6152 = vpack.c.b16 %v5812, %v5810
  %v6153 = vpack.c.b16 %v5815, %v5813
  %v6154 = vpack.c.b16 %v5816, %v5814
  %v6155 = vpack.c.b16 %v5819, %v5817
  %v6156 = vpack.c.b16 %v5820, %v5818
  %v6157 = vpack.c.b16 %v5823, %v5821
  %v6158 = vpack.c.b16 %v5824, %v5822
  %v6159 = vpack.c.b16 %v5827, %v5825
  %v6160 = vpack.c.b16 %v5828, %v5826
  %v6161 = vpack.c.b16 %v5831, %v5829
  %v6162 = vpack.c.b16 %v5832, %v5830
  %v6163 = vpack.c.b16 %v5835, %v5833
  %v6164 = vpack.c.b16 %v5836, %v5834
  %v6165 = vpack.c.b16 %v5839, %v5837
  %v6166 = vpack.c.b16 %v5840, %v5838
  %v6167 = vpack.c.b16 %v5843, %v5841
  %v6168 = vpack.c.b16 %v5844, %v5842
  %v6169 = vpack.c.b16 %v5847, %v5845
  %v6170 = vpack.c.b16 %v5848, %v5846
  %v6171 = vpack.c.b16 %v5851, %v5849
  %v6172 = vpack.c.b16 %v5852, %v5850
  %v6173 = vpack.c.b16 %v5855, %v5853
  %v6174 = vpack.c.b16 %v5856, %v5854
  %v6175 = vpack.c.b16 %v5859, %v5857
  %v6176 = vpack.c.b16 %v5860, %v5858
  %v6177 = vpack.c.b16 %v5863, %v5861
  %v6178 = vpack.c.b16 %v5864, %v5862
  %v6179 = vpack.c.b16 %v5867, %v5865
  %v6180 = vpack.c.b16 %v5868, %v5866
  %v6181 = vpack.c.b16 %v5871, %v5869
  %v6182 = vpack.c.b16 %v5872, %v5870
  %v6183 = vpack.c.b16 %v5875, %v5873
  %v6184 = vpack.c.b16 %v5876, %v5874
  %v6185 = vpack.c.b16 %v5879, %v5877
  %v6186 = vpack.c.b16 %v5880, %v5878
  %v6187 = vpack.c.b16 %v5883, %v5881
  %v6188 = vpack.c.b16 %v5884, %v5882
  %v6189 = vpack.c.b16 %v5887, %v5885
  %v6190 = vpack.c.b16 %v5888, %v5886
  %v6191 = vpack.c.b16 %v5891, %v5889
  %v6192 = vpack.c.b16 %v5892, %v5890
  %v6193 = vpack.c.b16 %v5895, %v5893
  %v6194 = vpack.c.b16 %v5896, %v5894
  %v6195 = vpack.c.b16 %v5899, %v5897
  %v6196 = vpack.c.b16 %v5900, %v5898
  %v6197 = vpack.c.b16 %v5903, %v5901
  %v6198 = vpack.c.b16 %v5904, %v5902
  %v6199 = vpack.c.b16 %v5907, %v5905
  %v6200 = vpack.c.b16 %v5908, %v5906
  %v6201 = vpack.c.b16 %v5911, %v5909
  %v6202 = vpack.c.b16 %v5912, %v5910
  %v6203 = vpack.c.b16 %v5915, %v5913
  %v6204 = vpack.c.b16 %v5916, %v5914
  %v6205 = vpack.c.b16 %v5919, %v5917
  %v6206 = vpack.c.b16 %v5920, %v5918
  %v6207 = vpack.c.b16 %v5923, %v5921
  %v6208 = vpack.c.b16 %v5924, %v5922
  %v6209 = vpack.c.b16 %v5927, %v5925
  %v6210 = vpack.c.b16 %v5928, %v5926
  %v6211 = vpack.c.b16 %v5931, %v5929
  %v6212 = vpack.c.b16 %v5932, %v5930
  %v6213 = vpack.c.b16 %v5935, %v5933
  %v6214 = vpack.c.b16 %v5936, %v5934
  %v6215 = vpack.c.b16 %v5939, %v5937
  %v6216 = vpack.c.b16 %v5940, %v5938
  %v6217 = vpack.c.b16 %v5943, %v5941
  %v6218 = vpack.c.b16 %v5944, %v5942
  %v6219 = vpack.c.b16 %v5947, %v5945
  %v6220 = vpack.c.b16 %v5948, %v5946
  %v6221 = vpack.c.b16 %v5951, %v5949
  %v6222 = vpack.c.b16 %v5952, %v5950
  %v6223 = vpack.c.b16 %v5955, %v5953
  %v6224 = vpack.c.b16 %v5956, %v5954
  %v6225 = vpack.c.b16 %v5959, %v5957
  %v6226 = vpack.c.b16 %v5960, %v5958
  %v6227 = vpack.c.b16 %v5963, %v5961
  %v6228 = vpack.c.b16 %v5964, %v5962
  %v6229 = vpack.c.b16 %v5967, %v5965
  %v6230 = vpack.c.b16 %v5968, %v5966
  %v6231 = vpack.c.b16 %v5971, %v5969
  %v6232 = vpack.c.b16 %v5972, %v5970
  %v6233 = vpack.c.b16 %v5975, %v5973
  %v6234 = vpack.c.b16 %v5976, %v5974
  %v6235 = vpack.c.b16 %v5979, %v5977
  %v6236 = vpack.c.b16 %v5980, %v5978
  %6493 = vmatprep.subr.bf16.mxu0 %v5982
  %6494 = vmatpush1.bf16.msra.mxu0 %v5981
  %6495 = vmatprep.subr.bf16.mxu0 %v5984
  %6496 = vmatpush1.bf16.msra.mxu0 %v5983
  %6497 = vmatprep.subr.bf16.mxu0 %v5986
  %6498 = vmatpush1.bf16.msra.mxu0 %v5985
  %6499 = vmatprep.subr.bf16.mxu0 %v5988
  %6500 = vmatpush1.bf16.msra.mxu0 %v5987
  %6501 = vmatprep.subr.bf16.mxu0 %v5990
  %6502 = vmatpush1.bf16.msra.mxu0 %v5989
  %6503 = vmatprep.subr.bf16.mxu0 %v5992
  %6504 = vmatpush1.bf16.msra.mxu0 %v5991
  %6505 = vmatprep.subr.bf16.mxu0 %v5994
  %6506 = vmatpush1.bf16.msra.mxu0 %v5993
  %6507 = vmatprep.subr.bf16.mxu0 %v5996
  %6508 = vmatpush1.bf16.msra.mxu0 %v5995
  %6509 = vmatprep.subr.bf16.mxu0 %v5998
  %6510 = vmatpush1.bf16.msra.mxu0 %v5997
  %6511 = vmatprep.subr.bf16.mxu0 %v6000
  %6512 = vmatpush1.bf16.msra.mxu0 %v5999
  %6513 = vmatprep.subr.bf16.mxu0 %v6002
  %6514 = vmatpush1.bf16.msra.mxu0 %v6001
  %6515 = vmatprep.subr.bf16.mxu0 %v6004
  %6516 = vmatpush1.bf16.msra.mxu0 %v6003
  %6517 = vmatprep.subr.bf16.mxu0 %v6006
  %6518 = vmatpush1.bf16.msra.mxu0 %v6005
  %6519 = vmatprep.subr.bf16.mxu0 %v6008
  %6520 = vmatpush1.bf16.msra.mxu0 %v6007
  %6521 = vmatprep.subr.bf16.mxu0 %v6010
  %6522 = vmatpush1.bf16.msra.mxu0 %v6009
  %6523 = vmatprep.subr.bf16.mxu0 %v6012
  %6524 = vmatpush1.bf16.msra.mxu0 %v6011
  %6525 = vmatprep.mubr.bf16.mxu0 %v4944
  %6526 = vmatmul.mubr.bf16.gmra.mrb[0].mxu0 %v4928
  %v6527 = vpop.f32.mrb[0].mxu0
  %v6528 = vadd.f32 %v5206, %v6527
  %v6529 = vpop.f32.mrb[0].mxu0
  %v6530 = vadd.f32 %v5210, %v6529
  %v6531 = vpop.f32.mrb[0].mxu0
  %v6532 = vpop.f32.mrb[0].mxu0
  %6533 = vdwg.mxu0
  %6534 = vmatprep.subr.bf16.mxu0 %v6014
  %6535 = vmatpush1.bf16.msra.mxu0 %v6013
  %6536 = vmatprep.subr.bf16.mxu0 %v6016
  %6537 = vmatpush1.bf16.msra.mxu0 %v6015
  %6538 = vmatprep.subr.bf16.mxu0 %v6018
  %6539 = vmatpush1.bf16.msra.mxu0 %v6017
  %6540 = vmatprep.subr.bf16.mxu0 %v6020
  %6541 = vmatpush1.bf16.msra.mxu0 %v6019
  %6542 = vmatprep.subr.bf16.mxu0 %v6022
  %6543 = vmatpush1.bf16.msra.mxu0 %v6021
  %6544 = vmatprep.subr.bf16.mxu0 %v6024
  %6545 = vmatpush1.bf16.msra.mxu0 %v6023
  %6546 = vmatprep.subr.bf16.mxu0 %v6026
  %6547 = vmatpush1.bf16.msra.mxu0 %v6025
  %6548 = vmatprep.subr.bf16.mxu0 %v6028
  %6549 = vmatpush1.bf16.msra.mxu0 %v6027
  %6550 = vmatprep.subr.bf16.mxu0 %v6030
  %6551 = vmatpush1.bf16.msra.mxu0 %v6029
  %6552 = vmatprep.subr.bf16.mxu0 %v6032
  %6553 = vmatpush1.bf16.msra.mxu0 %v6031
  %6554 = vmatprep.subr.bf16.mxu0 %v6034
  %6555 = vmatpush1.bf16.msra.mxu0 %v6033
  %6556 = vmatprep.subr.bf16.mxu0 %v6036
  %6557 = vmatpush1.bf16.msra.mxu0 %v6035
  %6558 = vmatprep.subr.bf16.mxu0 %v6038
  %6559 = vmatpush1.bf16.msra.mxu0 %v6037
  %6560 = vmatprep.subr.bf16.mxu0 %v6040
  %6561 = vmatpush1.bf16.msra.mxu0 %v6039
  %6562 = vmatprep.subr.bf16.mxu0 %v6042
  %6563 = vmatpush1.bf16.msra.mxu0 %v6041
  %6564 = vmatprep.subr.bf16.mxu0 %v6044
  %6565 = vmatpush1.bf16.msra.mxu0 %v6043
  %6566 = vmatprep.mubr.bf16.mxu0 %v4976
  %6567 = vmatmul.mubr.bf16.gmra.mrb[0].mxu0 %v4960
  %v6568 = vpop.f32.mrb[0].mxu0
  %v6569 = vadd.f32 %v6528, %v6568
  %v6570 = vpop.f32.mrb[0].mxu0
  %v6571 = vadd.f32 %v6530, %v6570
  %v6572 = vpop.f32.mrb[0].mxu0
  %v6573 = vpop.f32.mrb[0].mxu0
  %6574 = vdwg.mxu0
  %6575 = vmatprep.subr.bf16.mxu0 %v6046
  %6576 = vmatpush1.bf16.msra.mxu0 %v6045
  %6577 = vmatprep.subr.bf16.mxu0 %v6048
  %6578 = vmatpush1.bf16.msra.mxu0 %v6047
  %6579 = vmatprep.subr.bf16.mxu0 %v6050
  %6580 = vmatpush1.bf16.msra.mxu0 %v6049
  %6581 = vmatprep.subr.bf16.mxu0 %v6052
  %6582 = vmatpush1.bf16.msra.mxu0 %v6051
  %6583 = vmatprep.subr.bf16.mxu0 %v6054
  %6584 = vmatpush1.bf16.msra.mxu0 %v6053
  %6585 = vmatprep.subr.bf16.mxu0 %v6056
  %6586 = vmatpush1.bf16.msra.mxu0 %v6055
  %6587 = vmatprep.subr.bf16.mxu0 %v6058
  %6588 = vmatpush1.bf16.msra.mxu0 %v6057
  %6589 = vmatprep.subr.bf16.mxu0 %v6060
  %6590 = vmatpush1.bf16.msra.mxu0 %v6059
  %6591 = vmatprep.subr.bf16.mxu0 %v6062
  %6592 = vmatpush1.bf16.msra.mxu0 %v6061
  %6593 = vmatprep.subr.bf16.mxu0 %v6064
  %6594 = vmatpush1.bf16.msra.mxu0 %v6063
  %6595 = vmatprep.subr.bf16.mxu0 %v6066
  %6596 = vmatpush1.bf16.msra.mxu0 %v6065
  %6597 = vmatprep.subr.bf16.mxu0 %v6068
  %6598 = vmatpush1.bf16.msra.mxu0 %v6067
  %6599 = vmatprep.subr.bf16.mxu0 %v6070
  %6600 = vmatpush1.bf16.msra.mxu0 %v6069
  %6601 = vmatprep.subr.bf16.mxu0 %v6072
  %6602 = vmatpush1.bf16.msra.mxu0 %v6071
  %6603 = vmatprep.subr.bf16.mxu0 %v6074
  %6604 = vmatpush1.bf16.msra.mxu0 %v6073
  %6605 = vmatprep.subr.bf16.mxu0 %v6076
  %6606 = vmatpush1.bf16.msra.mxu0 %v6075
  %6607 = vmatprep.mubr.bf16.mxu0 %v5016
  %6608 = vmatmul.mubr.bf16.gmra.mrb[0].mxu0 %v5000
  %v6609 = vpop.f32.mrb[0].mxu0
  %v6610 = vadd.f32 %v6569, %v6609
  %v6611 = vpop.f32.mrb[0].mxu0
  %v6612 = vadd.f32 %v6571, %v6611
  %v6613 = vpop.f32.mrb[0].mxu0
  %v6614 = vpop.f32.mrb[0].mxu0
  %6615 = vdwg.mxu0
  %6616 = vmatprep.subr.bf16.mxu0 %v6078
  %6617 = vmatpush1.bf16.msra.mxu0 %v6077
  %6618 = vmatprep.subr.bf16.mxu0 %v6080
  %6619 = vmatpush1.bf16.msra.mxu0 %v6079
  %6620 = vmatprep.subr.bf16.mxu0 %v6082
  %6621 = vmatpush1.bf16.msra.mxu0 %v6081
  %6622 = vmatprep.subr.bf16.mxu0 %v6084
  %6623 = vmatpush1.bf16.msra.mxu0 %v6083
  %6624 = vmatprep.subr.bf16.mxu0 %v6086
  %6625 = vmatpush1.bf16.msra.mxu0 %v6085
  %6626 = vmatprep.subr.bf16.mxu0 %v6088
  %6627 = vmatpush1.bf16.msra.mxu0 %v6087
  %6628 = vmatprep.subr.bf16.mxu0 %v6090
  %6629 = vmatpush1.bf16.msra.mxu0 %v6089
  %6630 = vmatprep.subr.bf16.mxu0 %v6092
  %6631 = vmatpush1.bf16.msra.mxu0 %v6091
  %6632 = vmatprep.subr.bf16.mxu0 %v6094
  %6633 = vmatpush1.bf16.msra.mxu0 %v6093
  %6634 = vmatprep.subr.bf16.mxu0 %v6096
  %6635 = vmatpush1.bf16.msra.mxu0 %v6095
  %6636 = vmatprep.subr.bf16.mxu0 %v6098
  %6637 = vmatpush1.bf16.msra.mxu0 %v6097
  %6638 = vmatprep.subr.bf16.mxu0 %v6100
  %6639 = vmatpush1.bf16.msra.mxu0 %v6099
  %6640 = vmatprep.subr.bf16.mxu0 %v6102
  %6641 = vmatpush1.bf16.msra.mxu0 %v6101
  %6642 = vmatprep.subr.bf16.mxu0 %v6104
  %6643 = vmatpush1.bf16.msra.mxu0 %v6103
  %6644 = vmatprep.subr.bf16.mxu0 %v6106
  %6645 = vmatpush1.bf16.msra.mxu0 %v6105
  %6646 = vmatprep.subr.bf16.mxu0 %v6108
  %6647 = vmatpush1.bf16.msra.mxu0 %v6107
  %6648 = vmatprep.mubr.bf16.mxu0 %v5048
  %6649 = vmatmul.mubr.bf16.gmra.mrb[0].mxu0 %v5032
  %v6650 = vpop.f32.mrb[0].mxu0
  %v6651 = vadd.f32 %v6610, %v6650
  %v6652 = vpop.f32.mrb[0].mxu0
  %v6653 = vadd.f32 %v6612, %v6652
  %v6654 = vpop.f32.mrb[0].mxu0
  %v6655 = vpop.f32.mrb[0].mxu0
  %6656 = vdwg.mxu0
  %6657 = vmatprep.subr.bf16.mxu0 %v6110
  %6658 = vmatpush1.bf16.msra.mxu0 %v6109
  %6659 = vmatprep.subr.bf16.mxu0 %v6112
  %6660 = vmatpush1.bf16.msra.mxu0 %v6111
  %6661 = vmatprep.subr.bf16.mxu0 %v6114
  %6662 = vmatpush1.bf16.msra.mxu0 %v6113
  %6663 = vmatprep.subr.bf16.mxu0 %v6116
  %6664 = vmatpush1.bf16.msra.mxu0 %v6115
  %6665 = vmatprep.subr.bf16.mxu0 %v6118
  %6666 = vmatpush1.bf16.msra.mxu0 %v6117
  %6667 = vmatprep.subr.bf16.mxu0 %v6120
  %6668 = vmatpush1.bf16.msra.mxu0 %v6119
  %6669 = vmatprep.subr.bf16.mxu0 %v6122
  %6670 = vmatpush1.bf16.msra.mxu0 %v6121
  %6671 = vmatprep.subr.bf16.mxu0 %v6124
  %6672 = vmatpush1.bf16.msra.mxu0 %v6123
  %6673 = vmatprep.subr.bf16.mxu0 %v6126
  %6674 = vmatpush1.bf16.msra.mxu0 %v6125
  %6675 = vmatprep.subr.bf16.mxu0 %v6128
  %6676 = vmatpush1.bf16.msra.mxu0 %v6127
  %6677 = vmatprep.subr.bf16.mxu0 %v6130
  %6678 = vmatpush1.bf16.msra.mxu0 %v6129
  %6679 = vmatprep.subr.bf16.mxu0 %v6132
  %6680 = vmatpush1.bf16.msra.mxu0 %v6131
  %6681 = vmatprep.subr.bf16.mxu0 %v6134
  %6682 = vmatpush1.bf16.msra.mxu0 %v6133
  %6683 = vmatprep.subr.bf16.mxu0 %v6136
  %6684 = vmatpush1.bf16.msra.mxu0 %v6135
  %6685 = vmatprep.subr.bf16.mxu0 %v6138
  %6686 = vmatpush1.bf16.msra.mxu0 %v6137
  %6687 = vmatprep.subr.bf16.mxu0 %v6140
  %6688 = vmatpush1.bf16.msra.mxu0 %v6139
  %6689 = vmatprep.mubr.bf16.mxu0 %v5096
  %6690 = vmatmul.mubr.bf16.gmra.mrb[0].mxu0 %v5080
  %v6691 = vpop.f32.mrb[0].mxu0
  %v6692 = vadd.f32 %v6651, %v6691
  %v6693 = vpop.f32.mrb[0].mxu0
  %v6694 = vadd.f32 %v6653, %v6693
  %v6695 = vpop.f32.mrb[0].mxu0
  %v6696 = vpop.f32.mrb[0].mxu0
  %6697 = vdwg.mxu0
  %6698 = vmatprep.subr.bf16.mxu0 %v6142
  %6699 = vmatpush1.bf16.msra.mxu0 %v6141
  %6700 = vmatprep.subr.bf16.mxu0 %v6144
  %6701 = vmatpush1.bf16.msra.mxu0 %v6143
  %6702 = vmatprep.subr.bf16.mxu0 %v6146
  %6703 = vmatpush1.bf16.msra.mxu0 %v6145
  %6704 = vmatprep.subr.bf16.mxu0 %v6148
  %6705 = vmatpush1.bf16.msra.mxu0 %v6147
  %6706 = vmatprep.subr.bf16.mxu0 %v6150
  %6707 = vmatpush1.bf16.msra.mxu0 %v6149
  %6708 = vmatprep.subr.bf16.mxu0 %v6152
  %6709 = vmatpush1.bf16.msra.mxu0 %v6151
  %6710 = vmatprep.subr.bf16.mxu0 %v6154
  %6711 = vmatpush1.bf16.msra.mxu0 %v6153
  %6712 = vmatprep.subr.bf16.mxu0 %v6156
  %6713 = vmatpush1.bf16.msra.mxu0 %v6155
  %6714 = vmatprep.subr.bf16.mxu0 %v6158
  %6715 = vmatpush1.bf16.msra.mxu0 %v6157
  %6716 = vmatprep.subr.bf16.mxu0 %v6160
  %6717 = vmatpush1.bf16.msra.mxu0 %v6159
  %6718 = vmatprep.subr.bf16.mxu0 %v6162
  %6719 = vmatpush1.bf16.msra.mxu0 %v6161
  %6720 = vmatprep.subr.bf16.mxu0 %v6164
  %6721 = vmatpush1.bf16.msra.mxu0 %v6163
  %6722 = vmatprep.subr.bf16.mxu0 %v6166
  %6723 = vmatpush1.bf16.msra.mxu0 %v6165
  %6724 = vmatprep.subr.bf16.mxu0 %v6168
  %6725 = vmatpush1.bf16.msra.mxu0 %v6167
  %6726 = vmatprep.subr.bf16.mxu0 %v6170
  %6727 = vmatpush1.bf16.msra.mxu0 %v6169
  %6728 = vmatprep.subr.bf16.mxu0 %v6172
  %6729 = vmatpush1.bf16.msra.mxu0 %v6171
  %6730 = vmatprep.mubr.bf16.mxu0 %v5128
  %6731 = vmatmul.mubr.bf16.gmra.mrb[0].mxu0 %v5112
  %v6732 = vpop.f32.mrb[0].mxu0
  %v6733 = vadd.f32 %v6692, %v6732
  %v6734 = vpop.f32.mrb[0].mxu0
  %v6735 = vadd.f32 %v6694, %v6734
  %v6736 = vpop.f32.mrb[0].mxu0
  %v6737 = vpop.f32.mrb[0].mxu0
  %6738 = vdwg.mxu0
  %6739 = vmatprep.subr.bf16.mxu0 %v6174
  %6740 = vmatpush1.bf16.msra.mxu0 %v6173
  %6741 = vmatprep.subr.bf16.mxu0 %v6176
  %6742 = vmatpush1.bf16.msra.mxu0 %v6175
  %6743 = vmatprep.subr.bf16.mxu0 %v6178
  %6744 = vmatpush1.bf16.msra.mxu0 %v6177
  %6745 = vmatprep.subr.bf16.mxu0 %v6180
  %6746 = vmatpush1.bf16.msra.mxu0 %v6179
  %6747 = vmatprep.subr.bf16.mxu0 %v6182
  %6748 = vmatpush1.bf16.msra.mxu0 %v6181
  %6749 = vmatprep.subr.bf16.mxu0 %v6184
  %6750 = vmatpush1.bf16.msra.mxu0 %v6183
  %6751 = vmatprep.subr.bf16.mxu0 %v6186
  %6752 = vmatpush1.bf16.msra.mxu0 %v6185
  %6753 = vmatprep.subr.bf16.mxu0 %v6188
  %6754 = vmatpush1.bf16.msra.mxu0 %v6187
  %6755 = vmatprep.subr.bf16.mxu0 %v6190
  %6756 = vmatpush1.bf16.msra.mxu0 %v6189
  %6757 = vmatprep.subr.bf16.mxu0 %v6192
  %6758 = vmatpush1.bf16.msra.mxu0 %v6191
  %6759 = vmatprep.subr.bf16.mxu0 %v6194
  %6760 = vmatpush1.bf16.msra.mxu0 %v6193
  %6761 = vmatprep.subr.bf16.mxu0 %v6196
  %6762 = vmatpush1.bf16.msra.mxu0 %v6195
  %6763 = vmatprep.subr.bf16.mxu0 %v6198
  %6764 = vmatpush1.bf16.msra.mxu0 %v6197
  %6765 = vmatprep.subr.bf16.mxu0 %v6200
  %6766 = vmatpush1.bf16.msra.mxu0 %v6199
  %6767 = vmatprep.subr.bf16.mxu0 %v6202
  %6768 = vmatpush1.bf16.msra.mxu0 %v6201
  %6769 = vmatprep.subr.bf16.mxu0 %v6204
  %6770 = vmatpush1.bf16.msra.mxu0 %v6203
  %6771 = vmatprep.mubr.bf16.mxu0 %v5168
  %6772 = vmatmul.mubr.bf16.gmra.mrb[0].mxu0 %v5152
  %v6773 = vpop.f32.mrb[0].mxu0
  %v6774 = vadd.f32 %v6733, %v6773
  %v6775 = vpop.f32.mrb[0].mxu0
  %v6776 = vadd.f32 %v6735, %v6775
  %v6777 = vpop.f32.mrb[0].mxu0
  %v6778 = vpop.f32.mrb[0].mxu0
  %6779 = vdwg.mxu0
  %6780 = vmatprep.subr.bf16.mxu0 %v6206
  %6781 = vmatpush1.bf16.msra.mxu0 %v6205
  %6782 = vmatprep.subr.bf16.mxu0 %v6208
  %6783 = vmatpush1.bf16.msra.mxu0 %v6207
  %6784 = vmatprep.subr.bf16.mxu0 %v6210
  %6785 = vmatpush1.bf16.msra.mxu0 %v6209
  %6786 = vmatprep.subr.bf16.mxu0 %v6212
  %6787 = vmatpush1.bf16.msra.mxu0 %v6211
  %6788 = vmatprep.subr.bf16.mxu0 %v6214
  %6789 = vmatpush1.bf16.msra.mxu0 %v6213
  %6790 = vmatprep.subr.bf16.mxu0 %v6216
  %6791 = vmatpush1.bf16.msra.mxu0 %v6215
  %6792 = vmatprep.subr.bf16.mxu0 %v6218
  %6793 = vmatpush1.bf16.msra.mxu0 %v6217
  %6794 = vmatprep.subr.bf16.mxu0 %v6220
  %6795 = vmatpush1.bf16.msra.mxu0 %v6219
  %6796 = vmatprep.subr.bf16.mxu0 %v6222
  %6797 = vmatpush1.bf16.msra.mxu0 %v6221
  %6798 = vmatprep.subr.bf16.mxu0 %v6224
  %6799 = vmatpush1.bf16.msra.mxu0 %v6223
  %6800 = vmatprep.subr.bf16.mxu0 %v6226
  %6801 = vmatpush1.bf16.msra.mxu0 %v6225
  %6802 = vmatprep.subr.bf16.mxu0 %v6228
  %6803 = vmatpush1.bf16.msra.mxu0 %v6227
  %6804 = vmatprep.subr.bf16.mxu0 %v6230
  %6805 = vmatpush1.bf16.msra.mxu0 %v6229
  %6806 = vmatprep.subr.bf16.mxu0 %v6232
  %6807 = vmatpush1.bf16.msra.mxu0 %v6231
  %6808 = vmatprep.subr.bf16.mxu0 %v6234
  %6809 = vmatpush1.bf16.msra.mxu0 %v6233
  %6810 = vmatprep.subr.bf16.mxu0 %v6236
  %6811 = vmatpush1.bf16.msra.mxu0 %v6235
  %6812 = vmatprep.mubr.bf16.mxu0 %v5200
  %6813 = vmatmul.mubr.bf16.gmra.mrb[0].mxu0 %v5184
  %v6814 = vpop.f32.mrb[0].mxu0
  %v6815 = vadd.f32 %v6774, %v6814
  %v6816 = vpop.f32.mrb[0].mxu0
  %v6817 = vadd.f32 %v6776, %v6816
  %v6818 = vpop.f32.mrb[0].mxu0
  %v6819 = vpop.f32.mrb[0].mxu0
  %6820 = vdwg.mxu0
  %v6821 = vmax.f32 %v6815, 0.0
  %v6822 = vmax.f32 %v6817, 0.0
  %v6823 = vpack.c.bf16 %v6821, %v6821
  %v6824 = vpack.c.bf16 %v6822, %v6822
  %v6825 = vsel %vm4914, %v4907, %v4899
  %v6826 = vsel %vm4917, %v4910, %v6825
  %v6827 = vsel %vm4920, %v4913, %v6826
  %v6828 = vsel %vm4923, %v4916, %v6827
  %v6829 = vsel %vm4926, %v4919, %v6828
  %v6830 = vsel %vm4908, %v4925, %v4922
  %v6831 = vpack.c.b16 %v6830, %v6829
  %v6832 = vsel %vm4914, %v4900, %v4930
  %v6833 = vsel %vm4917, %v4932, %v6832
  %v6834 = vsel %vm4920, %v4934, %v6833
  %v6835 = vsel %vm4923, %v4936, %v6834
  %v6836 = vsel %vm4926, %v4938, %v6835
  %v6837 = vsel %vm4908, %v4942, %v4940
  %v6838 = vpack.c.b16 %v6837, %v6836
  %v6839 = vsel %vm4914, %v4947, %v4946
  %v6840 = vsel %vm4917, %v4901, %v6839
  %v6841 = vsel %vm4920, %v4950, %v6840
  %v6842 = vsel %vm4923, %v4952, %v6841
  %v6843 = vsel %vm4926, %v4954, %v6842
  %v6844 = vsel %vm4908, %v4958, %v4956
  %v6845 = vpack.c.b16 %v6844, %v6843
  %v6846 = vsel %vm4914, %v4963, %v4962
  %v6847 = vsel %vm4917, %v4965, %v6846
  %v6848 = vsel %vm4920, %v4902, %v6847
  %v6849 = vsel %vm4923, %v4968, %v6848
  %v6850 = vsel %vm4926, %v4970, %v6849
  %v6851 = vsel %vm4908, %v4974, %v4972
  %v6852 = vpack.c.b16 %v6851, %v6850
  %v6853 = vsel %vm4914, %v4986, %v4978
  %v6854 = vsel %vm4917, %v4988, %v6853
  %v6855 = vsel %vm4920, %v4990, %v6854
  %v6856 = vsel %vm4923, %v4992, %v6855
  %v6857 = vsel %vm4926, %v4994, %v6856
  %v6858 = vsel %vm4908, %v4998, %v4996
  %v6859 = vpack.c.b16 %v6858, %v6857
  %v6860 = vsel %vm4914, %v4979, %v5002
  %v6861 = vsel %vm4917, %v5004, %v6860
  %v6862 = vsel %vm4920, %v5006, %v6861
  %v6863 = vsel %vm4923, %v5008, %v6862
  %v6864 = vsel %vm4926, %v5010, %v6863
  %v6865 = vsel %vm4908, %v5014, %v5012
  %v6866 = vpack.c.b16 %v6865, %v6864
  %v6867 = vsel %vm4914, %v5019, %v5018
  %v6868 = vsel %vm4917, %v4980, %v6867
  %v6869 = vsel %vm4920, %v5022, %v6868
  %v6870 = vsel %vm4923, %v5024, %v6869
  %v6871 = vsel %vm4926, %v5026, %v6870
  %v6872 = vsel %vm4908, %v5030, %v5028
  %v6873 = vpack.c.b16 %v6872, %v6871
  %v6874 = vsel %vm4914, %v5035, %v5034
  %v6875 = vsel %vm4917, %v5037, %v6874
  %v6876 = vsel %vm4920, %v4981, %v6875
  %v6877 = vsel %vm4923, %v5040, %v6876
  %v6878 = vsel %vm4926, %v5042, %v6877
  %v6879 = vsel %vm4908, %v5046, %v5044
  %v6880 = vpack.c.b16 %v6879, %v6878
  %v6881 = vsel %vm4914, %v5066, %v5058
  %v6882 = vsel %vm4917, %v5068, %v6881
  %v6883 = vsel %vm4920, %v5070, %v6882
  %v6884 = vsel %vm4923, %v5072, %v6883
  %v6885 = vsel %vm4926, %v5074, %v6884
  %v6886 = vsel %vm4908, %v5078, %v5076
  %v6887 = vpack.c.b16 %v6886, %v6885
  %v6888 = vsel %vm4914, %v5059, %v5082
  %v6889 = vsel %vm4917, %v5084, %v6888
  %v6890 = vsel %vm4920, %v5086, %v6889
  %v6891 = vsel %vm4923, %v5088, %v6890
  %v6892 = vsel %vm4926, %v5090, %v6891
  %v6893 = vsel %vm4908, %v5094, %v5092
  %v6894 = vpack.c.b16 %v6893, %v6892
  %v6895 = vsel %vm4914, %v5099, %v5098
  %v6896 = vsel %vm4917, %v5060, %v6895
  %v6897 = vsel %vm4920, %v5102, %v6896
  %v6898 = vsel %vm4923, %v5104, %v6897
  %v6899 = vsel %vm4926, %v5106, %v6898
  %v6900 = vsel %vm4908, %v5110, %v5108
  %v6901 = vpack.c.b16 %v6900, %v6899
  %v6902 = vsel %vm4914, %v5115, %v5114
  %v6903 = vsel %vm4917, %v5117, %v6902
  %v6904 = vsel %vm4920, %v5061, %v6903
  %v6905 = vsel %vm4923, %v5120, %v6904
  %v6906 = vsel %vm4926, %v5122, %v6905
  %v6907 = vsel %vm4908, %v5126, %v5124
  %v6908 = vpack.c.b16 %v6907, %v6906
  %v6909 = vsel %vm4914, %v5138, %v5130
  %v6910 = vsel %vm4917, %v5140, %v6909
  %v6911 = vsel %vm4920, %v5142, %v6910
  %v6912 = vsel %vm4923, %v5144, %v6911
  %v6913 = vsel %vm4926, %v5146, %v6912
  %v6914 = vsel %vm4908, %v5150, %v5148
  %v6915 = vpack.c.b16 %v6914, %v6913
  %v6916 = vsel %vm4914, %v5131, %v5154
  %v6917 = vsel %vm4917, %v5156, %v6916
  %v6918 = vsel %vm4920, %v5158, %v6917
  %v6919 = vsel %vm4923, %v5160, %v6918
  %v6920 = vsel %vm4926, %v5162, %v6919
  %v6921 = vsel %vm4908, %v5166, %v5164
  %v6922 = vpack.c.b16 %v6921, %v6920
  %v6923 = vsel %vm4914, %v5171, %v5170
  %v6924 = vsel %vm4917, %v5132, %v6923
  %v6925 = vsel %vm4920, %v5174, %v6924
  %v6926 = vsel %vm4923, %v5176, %v6925
  %v6927 = vsel %vm4926, %v5178, %v6926
  %v6928 = vsel %vm4908, %v5182, %v5180
  %v6929 = vpack.c.b16 %v6928, %v6927
  %v6930 = vsel %vm4914, %v5187, %v5186
  %v6931 = vsel %vm4917, %v5189, %v6930
  %v6932 = vsel %vm4920, %v5133, %v6931
  %v6933 = vsel %vm4923, %v5192, %v6932
  %v6934 = vsel %vm4926, %v5194, %v6933
  %v6935 = vsel %vm4908, %v5198, %v5196
  %v6936 = vpack.c.b16 %v6935, %v6934
  %v6937 = vrot.slane %v6831, 1
  %v6938 = vrot.slane %v6838, 1
  %v6939 = vrot.slane %v6845, 1
  %v6940 = vrot.slane %v6852, 1
  %v6941 = vrot.slane %v6859, 1
  %v6942 = vrot.slane %v6866, 1
  %v6943 = vrot.slane %v6873, 1
  %v6944 = vrot.slane %v6880, 1
  %v6945 = vrot.slane %v6887, 1
  %v6946 = vrot.slane %v6894, 1
  %v6947 = vrot.slane %v6901, 1
  %v6948 = vrot.slane %v6908, 1
  %v6949 = vrot.slane %v6915, 1
  %v6950 = vrot.slane %v6922, 1
  %v6951 = vrot.slane %v6929, 1
  %v6952 = vrot.slane %v6936, 1
  %6969 = vmatprep.subr.bf16.mxu0 %v5982
  %6970 = vmatpush1.bf16.msra.mxu0 %v5981
  %6971 = vmatprep.subr.bf16.mxu0 %v5984
  %6972 = vmatpush1.bf16.msra.mxu0 %v5983
  %6973 = vmatprep.subr.bf16.mxu0 %v5986
  %6974 = vmatpush1.bf16.msra.mxu0 %v5985
  %6975 = vmatprep.subr.bf16.mxu0 %v5988
  %6976 = vmatpush1.bf16.msra.mxu0 %v5987
  %6977 = vmatprep.subr.bf16.mxu0 %v5990
  %6978 = vmatpush1.bf16.msra.mxu0 %v5989
  %6979 = vmatprep.subr.bf16.mxu0 %v5992
  %6980 = vmatpush1.bf16.msra.mxu0 %v5991
  %6981 = vmatprep.subr.bf16.mxu0 %v5994
  %6982 = vmatpush1.bf16.msra.mxu0 %v5993
  %6983 = vmatprep.subr.bf16.mxu0 %v5996
  %6984 = vmatpush1.bf16.msra.mxu0 %v5995
  %6985 = vmatprep.subr.bf16.mxu0 %v5998
  %6986 = vmatpush1.bf16.msra.mxu0 %v5997
  %6987 = vmatprep.subr.bf16.mxu0 %v6000
  %6988 = vmatpush1.bf16.msra.mxu0 %v5999
  %6989 = vmatprep.subr.bf16.mxu0 %v6002
  %6990 = vmatpush1.bf16.msra.mxu0 %v6001
  %6991 = vmatprep.subr.bf16.mxu0 %v6004
  %6992 = vmatpush1.bf16.msra.mxu0 %v6003
  %6993 = vmatprep.subr.bf16.mxu0 %v6006
  %6994 = vmatpush1.bf16.msra.mxu0 %v6005
  %6995 = vmatprep.subr.bf16.mxu0 %v6008
  %6996 = vmatpush1.bf16.msra.mxu0 %v6007
  %6997 = vmatprep.subr.bf16.mxu0 %v6010
  %6998 = vmatpush1.bf16.msra.mxu0 %v6009
  %6999 = vmatprep.subr.bf16.mxu0 %v6012
  %7000 = vmatpush1.bf16.msra.mxu0 %v6011
  %7001 = vmatprep.mubr.bf16.mxu0 %v6938
  %7002 = vmatmul.mubr.bf16.gmra.mrb[0].mxu0 %v6937
  %v7003 = vpop.f32.mrb[0].mxu0
  %v7004 = vadd.f32 %v5206, %v7003
  %v7005 = vpop.f32.mrb[0].mxu0
  %v7006 = vadd.f32 %v5210, %v7005
  %v7007 = vpop.f32.mrb[0].mxu0
  %v7008 = vpop.f32.mrb[0].mxu0
  %7009 = vdwg.mxu0
  %7010 = vmatprep.subr.bf16.mxu0 %v6014
  %7011 = vmatpush1.bf16.msra.mxu0 %v6013
  %7012 = vmatprep.subr.bf16.mxu0 %v6016
  %7013 = vmatpush1.bf16.msra.mxu0 %v6015
  %7014 = vmatprep.subr.bf16.mxu0 %v6018
  %7015 = vmatpush1.bf16.msra.mxu0 %v6017
  %7016 = vmatprep.subr.bf16.mxu0 %v6020
  %7017 = vmatpush1.bf16.msra.mxu0 %v6019
  %7018 = vmatprep.subr.bf16.mxu0 %v6022
  %7019 = vmatpush1.bf16.msra.mxu0 %v6021
  %7020 = vmatprep.subr.bf16.mxu0 %v6024
  %7021 = vmatpush1.bf16.msra.mxu0 %v6023
  %7022 = vmatprep.subr.bf16.mxu0 %v6026
  %7023 = vmatpush1.bf16.msra.mxu0 %v6025
  %7024 = vmatprep.subr.bf16.mxu0 %v6028
  %7025 = vmatpush1.bf16.msra.mxu0 %v6027
  %7026 = vmatprep.subr.bf16.mxu0 %v6030
  %7027 = vmatpush1.bf16.msra.mxu0 %v6029
  %7028 = vmatprep.subr.bf16.mxu0 %v6032
  %7029 = vmatpush1.bf16.msra.mxu0 %v6031
  %7030 = vmatprep.subr.bf16.mxu0 %v6034
  %7031 = vmatpush1.bf16.msra.mxu0 %v6033
  %7032 = vmatprep.subr.bf16.mxu0 %v6036
  %7033 = vmatpush1.bf16.msra.mxu0 %v6035
  %7034 = vmatprep.subr.bf16.mxu0 %v6038
  %7035 = vmatpush1.bf16.msra.mxu0 %v6037
  %7036 = vmatprep.subr.bf16.mxu0 %v6040
  %7037 = vmatpush1.bf16.msra.mxu0 %v6039
  %7038 = vmatprep.subr.bf16.mxu0 %v6042
  %7039 = vmatpush1.bf16.msra.mxu0 %v6041
  %7040 = vmatprep.subr.bf16.mxu0 %v6044
  %7041 = vmatpush1.bf16.msra.mxu0 %v6043
  %7042 = vmatprep.mubr.bf16.mxu0 %v6940
  %7043 = vmatmul.mubr.bf16.gmra.mrb[0].mxu0 %v6939
  %v7044 = vpop.f32.mrb[0].mxu0
  %v7045 = vadd.f32 %v7004, %v7044
  %v7046 = vpop.f32.mrb[0].mxu0
  %v7047 = vadd.f32 %v7006, %v7046
  %v7048 = vpop.f32.mrb[0].mxu0
  %v7049 = vpop.f32.mrb[0].mxu0
  %7050 = vdwg.mxu0
  %7051 = vmatprep.subr.bf16.mxu0 %v6046
  %7052 = vmatpush1.bf16.msra.mxu0 %v6045
  %7053 = vmatprep.subr.bf16.mxu0 %v6048
  %7054 = vmatpush1.bf16.msra.mxu0 %v6047
  %7055 = vmatprep.subr.bf16.mxu0 %v6050
  %7056 = vmatpush1.bf16.msra.mxu0 %v6049
  %7057 = vmatprep.subr.bf16.mxu0 %v6052
  %7058 = vmatpush1.bf16.msra.mxu0 %v6051
  %7059 = vmatprep.subr.bf16.mxu0 %v6054
  %7060 = vmatpush1.bf16.msra.mxu0 %v6053
  %7061 = vmatprep.subr.bf16.mxu0 %v6056
  %7062 = vmatpush1.bf16.msra.mxu0 %v6055
  %7063 = vmatprep.subr.bf16.mxu0 %v6058
  %7064 = vmatpush1.bf16.msra.mxu0 %v6057
  %7065 = vmatprep.subr.bf16.mxu0 %v6060
  %7066 = vmatpush1.bf16.msra.mxu0 %v6059
  %7067 = vmatprep.subr.bf16.mxu0 %v6062
  %7068 = vmatpush1.bf16.msra.mxu0 %v6061
  %7069 = vmatprep.subr.bf16.mxu0 %v6064
  %7070 = vmatpush1.bf16.msra.mxu0 %v6063
  %7071 = vmatprep.subr.bf16.mxu0 %v6066
  %7072 = vmatpush1.bf16.msra.mxu0 %v6065
  %7073 = vmatprep.subr.bf16.mxu0 %v6068
  %7074 = vmatpush1.bf16.msra.mxu0 %v6067
  %7075 = vmatprep.subr.bf16.mxu0 %v6070
  %7076 = vmatpush1.bf16.msra.mxu0 %v6069
  %7077 = vmatprep.subr.bf16.mxu0 %v6072
  %7078 = vmatpush1.bf16.msra.mxu0 %v6071
  %7079 = vmatprep.subr.bf16.mxu0 %v6074
  %7080 = vmatpush1.bf16.msra.mxu0 %v6073
  %7081 = vmatprep.subr.bf16.mxu0 %v6076
  %7082 = vmatpush1.bf16.msra.mxu0 %v6075
  %7083 = vmatprep.mubr.bf16.mxu0 %v6942
  %7084 = vmatmul.mubr.bf16.gmra.mrb[0].mxu0 %v6941
  %v7085 = vpop.f32.mrb[0].mxu0
  %v7086 = vadd.f32 %v7045, %v7085
  %v7087 = vpop.f32.mrb[0].mxu0
  %v7088 = vadd.f32 %v7047, %v7087
  %v7089 = vpop.f32.mrb[0].mxu0
  %v7090 = vpop.f32.mrb[0].mxu0
  %7091 = vdwg.mxu0
  %7092 = vmatprep.subr.bf16.mxu0 %v6078
  %7093 = vmatpush1.bf16.msra.mxu0 %v6077
  %7094 = vmatprep.subr.bf16.mxu0 %v6080
  %7095 = vmatpush1.bf16.msra.mxu0 %v6079
  %7096 = vmatprep.subr.bf16.mxu0 %v6082
  %7097 = vmatpush1.bf16.msra.mxu0 %v6081
  %7098 = vmatprep.subr.bf16.mxu0 %v6084
  %7099 = vmatpush1.bf16.msra.mxu0 %v6083
  %7100 = vmatprep.subr.bf16.mxu0 %v6086
  %7101 = vmatpush1.bf16.msra.mxu0 %v6085
  %7102 = vmatprep.subr.bf16.mxu0 %v6088
  %7103 = vmatpush1.bf16.msra.mxu0 %v6087
  %7104 = vmatprep.subr.bf16.mxu0 %v6090
  %7105 = vmatpush1.bf16.msra.mxu0 %v6089
  %7106 = vmatprep.subr.bf16.mxu0 %v6092
  %7107 = vmatpush1.bf16.msra.mxu0 %v6091
  %7108 = vmatprep.subr.bf16.mxu0 %v6094
  %7109 = vmatpush1.bf16.msra.mxu0 %v6093
  %7110 = vmatprep.subr.bf16.mxu0 %v6096
  %7111 = vmatpush1.bf16.msra.mxu0 %v6095
  %7112 = vmatprep.subr.bf16.mxu0 %v6098
  %7113 = vmatpush1.bf16.msra.mxu0 %v6097
  %7114 = vmatprep.subr.bf16.mxu0 %v6100
  %7115 = vmatpush1.bf16.msra.mxu0 %v6099
  %7116 = vmatprep.subr.bf16.mxu0 %v6102
  %7117 = vmatpush1.bf16.msra.mxu0 %v6101
  %7118 = vmatprep.subr.bf16.mxu0 %v6104
  %7119 = vmatpush1.bf16.msra.mxu0 %v6103
  %7120 = vmatprep.subr.bf16.mxu0 %v6106
  %7121 = vmatpush1.bf16.msra.mxu0 %v6105
  %7122 = vmatprep.subr.bf16.mxu0 %v6108
  %7123 = vmatpush1.bf16.msra.mxu0 %v6107
  %7124 = vmatprep.mubr.bf16.mxu0 %v6944
  %7125 = vmatmul.mubr.bf16.gmra.mrb[0].mxu0 %v6943
  %v7126 = vpop.f32.mrb[0].mxu0
  %v7127 = vadd.f32 %v7086, %v7126
  %v7128 = vpop.f32.mrb[0].mxu0
  %v7129 = vadd.f32 %v7088, %v7128
  %v7130 = vpop.f32.mrb[0].mxu0
  %v7131 = vpop.f32.mrb[0].mxu0
  %7132 = vdwg.mxu0
  %7133 = vmatprep.subr.bf16.mxu0 %v6110
  %7134 = vmatpush1.bf16.msra.mxu0 %v6109
  %7135 = vmatprep.subr.bf16.mxu0 %v6112
  %7136 = vmatpush1.bf16.msra.mxu0 %v6111
  %7137 = vmatprep.subr.bf16.mxu0 %v6114
  %7138 = vmatpush1.bf16.msra.mxu0 %v6113
  %7139 = vmatprep.subr.bf16.mxu0 %v6116
  %7140 = vmatpush1.bf16.msra.mxu0 %v6115
  %7141 = vmatprep.subr.bf16.mxu0 %v6118
  %7142 = vmatpush1.bf16.msra.mxu0 %v6117
  %7143 = vmatprep.subr.bf16.mxu0 %v6120
  %7144 = vmatpush1.bf16.msra.mxu0 %v6119
  %7145 = vmatprep.subr.bf16.mxu0 %v6122
  %7146 = vmatpush1.bf16.msra.mxu0 %v6121
  %7147 = vmatprep.subr.bf16.mxu0 %v6124
  %7148 = vmatpush1.bf16.msra.mxu0 %v6123
  %7149 = vmatprep.subr.bf16.mxu0 %v6126
  %7150 = vmatpush1.bf16.msra.mxu0 %v6125
  %7151 = vmatprep.subr.bf16.mxu0 %v6128
  %7152 = vmatpush1.bf16.msra.mxu0 %v6127
  %7153 = vmatprep.subr.bf16.mxu0 %v6130
  %7154 = vmatpush1.bf16.msra.mxu0 %v6129
  %7155 = vmatprep.subr.bf16.mxu0 %v6132
  %7156 = vmatpush1.bf16.msra.mxu0 %v6131
  %7157 = vmatprep.subr.bf16.mxu0 %v6134
  %7158 = vmatpush1.bf16.msra.mxu0 %v6133
  %7159 = vmatprep.subr.bf16.mxu0 %v6136
  %7160 = vmatpush1.bf16.msra.mxu0 %v6135
  %7161 = vmatprep.subr.bf16.mxu0 %v6138
  %7162 = vmatpush1.bf16.msra.mxu0 %v6137
  %7163 = vmatprep.subr.bf16.mxu0 %v6140
  %7164 = vmatpush1.bf16.msra.mxu0 %v6139
  %7165 = vmatprep.mubr.bf16.mxu0 %v6946
  %7166 = vmatmul.mubr.bf16.gmra.mrb[0].mxu0 %v6945
  %v7167 = vpop.f32.mrb[0].mxu0
  %v7168 = vadd.f32 %v7127, %v7167
  %v7169 = vpop.f32.mrb[0].mxu0
  %v7170 = vadd.f32 %v7129, %v7169
  %v7171 = vpop.f32.mrb[0].mxu0
  %v7172 = vpop.f32.mrb[0].mxu0
  %7173 = vdwg.mxu0
  %7174 = vmatprep.subr.bf16.mxu0 %v6142
  %7175 = vmatpush1.bf16.msra.mxu0 %v6141
  %7176 = vmatprep.subr.bf16.mxu0 %v6144
  %7177 = vmatpush1.bf16.msra.mxu0 %v6143
  %7178 = vmatprep.subr.bf16.mxu0 %v6146
  %7179 = vmatpush1.bf16.msra.mxu0 %v6145
  %7180 = vmatprep.subr.bf16.mxu0 %v6148
  %7181 = vmatpush1.bf16.msra.mxu0 %v6147
  %7182 = vmatprep.subr.bf16.mxu0 %v6150
  %7183 = vmatpush1.bf16.msra.mxu0 %v6149
  %7184 = vmatprep.subr.bf16.mxu0 %v6152
  %7185 = vmatpush1.bf16.msra.mxu0 %v6151
  %7186 = vmatprep.subr.bf16.mxu0 %v6154
  %7187 = vmatpush1.bf16.msra.mxu0 %v6153
  %7188 = vmatprep.subr.bf16.mxu0 %v6156
  %7189 = vmatpush1.bf16.msra.mxu0 %v6155
  %7190 = vmatprep.subr.bf16.mxu0 %v6158
  %7191 = vmatpush1.bf16.msra.mxu0 %v6157
  %7192 = vmatprep.subr.bf16.mxu0 %v6160
  %7193 = vmatpush1.bf16.msra.mxu0 %v6159
  %7194 = vmatprep.subr.bf16.mxu0 %v6162
  %7195 = vmatpush1.bf16.msra.mxu0 %v6161
  %7196 = vmatprep.subr.bf16.mxu0 %v6164
  %7197 = vmatpush1.bf16.msra.mxu0 %v6163
  %7198 = vmatprep.subr.bf16.mxu0 %v6166
  %7199 = vmatpush1.bf16.msra.mxu0 %v6165
  %7200 = vmatprep.subr.bf16.mxu0 %v6168
  %7201 = vmatpush1.bf16.msra.mxu0 %v6167
  %7202 = vmatprep.subr.bf16.mxu0 %v6170
  %7203 = vmatpush1.bf16.msra.mxu0 %v6169
  %7204 = vmatprep.subr.bf16.mxu0 %v6172
  %7205 = vmatpush1.bf16.msra.mxu0 %v6171
  %7206 = vmatprep.mubr.bf16.mxu0 %v6948
  %7207 = vmatmul.mubr.bf16.gmra.mrb[0].mxu0 %v6947
  %v7208 = vpop.f32.mrb[0].mxu0
  %v7209 = vadd.f32 %v7168, %v7208
  %v7210 = vpop.f32.mrb[0].mxu0
  %v7211 = vadd.f32 %v7170, %v7210
  %v7212 = vpop.f32.mrb[0].mxu0
  %v7213 = vpop.f32.mrb[0].mxu0
  %7214 = vdwg.mxu0
  %7215 = vmatprep.subr.bf16.mxu0 %v6174
  %7216 = vmatpush1.bf16.msra.mxu0 %v6173
  %7217 = vmatprep.subr.bf16.mxu0 %v6176
  %7218 = vmatpush1.bf16.msra.mxu0 %v6175
  %7219 = vmatprep.subr.bf16.mxu0 %v6178
  %7220 = vmatpush1.bf16.msra.mxu0 %v6177
  %7221 = vmatprep.subr.bf16.mxu0 %v6180
  %7222 = vmatpush1.bf16.msra.mxu0 %v6179
  %7223 = vmatprep.subr.bf16.mxu0 %v6182
  %7224 = vmatpush1.bf16.msra.mxu0 %v6181
  %7225 = vmatprep.subr.bf16.mxu0 %v6184
  %7226 = vmatpush1.bf16.msra.mxu0 %v6183
  %7227 = vmatprep.subr.bf16.mxu0 %v6186
  %7228 = vmatpush1.bf16.msra.mxu0 %v6185
  %7229 = vmatprep.subr.bf16.mxu0 %v6188
  %7230 = vmatpush1.bf16.msra.mxu0 %v6187
  %7231 = vmatprep.subr.bf16.mxu0 %v6190
  %7232 = vmatpush1.bf16.msra.mxu0 %v6189
  %7233 = vmatprep.subr.bf16.mxu0 %v6192
  %7234 = vmatpush1.bf16.msra.mxu0 %v6191
  %7235 = vmatprep.subr.bf16.mxu0 %v6194
  %7236 = vmatpush1.bf16.msra.mxu0 %v6193
  %7237 = vmatprep.subr.bf16.mxu0 %v6196
  %7238 = vmatpush1.bf16.msra.mxu0 %v6195
  %7239 = vmatprep.subr.bf16.mxu0 %v6198
  %7240 = vmatpush1.bf16.msra.mxu0 %v6197
  %7241 = vmatprep.subr.bf16.mxu0 %v6200
  %7242 = vmatpush1.bf16.msra.mxu0 %v6199
  %7243 = vmatprep.subr.bf16.mxu0 %v6202
  %7244 = vmatpush1.bf16.msra.mxu0 %v6201
  %7245 = vmatprep.subr.bf16.mxu0 %v6204
  %7246 = vmatpush1.bf16.msra.mxu0 %v6203
  %7247 = vmatprep.mubr.bf16.mxu0 %v6950
  %7248 = vmatmul.mubr.bf16.gmra.mrb[0].mxu0 %v6949
  %v7249 = vpop.f32.mrb[0].mxu0
  %v7250 = vadd.f32 %v7209, %v7249
  %v7251 = vpop.f32.mrb[0].mxu0
  %v7252 = vadd.f32 %v7211, %v7251
  %v7253 = vpop.f32.mrb[0].mxu0
  %v7254 = vpop.f32.mrb[0].mxu0
  %7255 = vdwg.mxu0
  %7256 = vmatprep.subr.bf16.mxu0 %v6206
  %7257 = vmatpush1.bf16.msra.mxu0 %v6205
  %7258 = vmatprep.subr.bf16.mxu0 %v6208
  %7259 = vmatpush1.bf16.msra.mxu0 %v6207
  %7260 = vmatprep.subr.bf16.mxu0 %v6210
  %7261 = vmatpush1.bf16.msra.mxu0 %v6209
  %7262 = vmatprep.subr.bf16.mxu0 %v6212
  %7263 = vmatpush1.bf16.msra.mxu0 %v6211
  %7264 = vmatprep.subr.bf16.mxu0 %v6214
  %7265 = vmatpush1.bf16.msra.mxu0 %v6213
  %7266 = vmatprep.subr.bf16.mxu0 %v6216
  %7267 = vmatpush1.bf16.msra.mxu0 %v6215
  %7268 = vmatprep.subr.bf16.mxu0 %v6218
  %7269 = vmatpush1.bf16.msra.mxu0 %v6217
  %7270 = vmatprep.subr.bf16.mxu0 %v6220
  %7271 = vmatpush1.bf16.msra.mxu0 %v6219
  %7272 = vmatprep.subr.bf16.mxu0 %v6222
  %7273 = vmatpush1.bf16.msra.mxu0 %v6221
  %7274 = vmatprep.subr.bf16.mxu0 %v6224
  %7275 = vmatpush1.bf16.msra.mxu0 %v6223
  %7276 = vmatprep.subr.bf16.mxu0 %v6226
  %7277 = vmatpush1.bf16.msra.mxu0 %v6225
  %7278 = vmatprep.subr.bf16.mxu0 %v6228
  %7279 = vmatpush1.bf16.msra.mxu0 %v6227
  %7280 = vmatprep.subr.bf16.mxu0 %v6230
  %7281 = vmatpush1.bf16.msra.mxu0 %v6229
  %7282 = vmatprep.subr.bf16.mxu0 %v6232
  %7283 = vmatpush1.bf16.msra.mxu0 %v6231
  %7284 = vmatprep.subr.bf16.mxu0 %v6234
  %7285 = vmatpush1.bf16.msra.mxu0 %v6233
  %7286 = vmatprep.subr.bf16.mxu0 %v6236
  %7287 = vmatpush1.bf16.msra.mxu0 %v6235
  %7288 = vmatprep.mubr.bf16.mxu0 %v6952
  %7289 = vmatmul.mubr.bf16.gmra.mrb[0].mxu0 %v6951
  %v7290 = vpop.f32.mrb[0].mxu0
  %v7291 = vadd.f32 %v7250, %v7290
  %v7292 = vpop.f32.mrb[0].mxu0
  %v7293 = vadd.f32 %v7252, %v7292
  %v7294 = vpop.f32.mrb[0].mxu0
  %v7295 = vpop.f32.mrb[0].mxu0
  %7296 = vdwg.mxu0
  %v7297 = vmax.f32 %v7291, 0.0
  %v7298 = vmax.f32 %v7293, 0.0
  %v7299 = vpack.c.bf16 %v7297, %v7297
  %v7300 = vpack.c.bf16 %v7298, %v7298
  %v7301 = vsel %vm4920, %v4907, %v4899
  %v7302 = vsel %vm4923, %v4910, %v7301
  %v7303 = vsel %vm4926, %v4913, %v7302
  %v7304 = vsel %vm4908, %v4919, %v4916
  %v7305 = vsel %vm4911, %v4922, %v7304
  %v7306 = vsel %vm4914, %v4925, %v7305
  %v7307 = vpack.c.b16 %v7306, %v7303
  %v7308 = vsel %vm4920, %v4900, %v4930
  %v7309 = vsel %vm4923, %v4932, %v7308
  %v7310 = vsel %vm4926, %v4934, %v7309
  %v7311 = vsel %vm4908, %v4938, %v4936
  %v7312 = vsel %vm4911, %v4940, %v7311
  %v7313 = vsel %vm4914, %v4942, %v7312
  %v7314 = vpack.c.b16 %v7313, %v7310
  %v7315 = vsel %vm4920, %v4947, %v4946
  %v7316 = vsel %vm4923, %v4901, %v7315
  %v7317 = vsel %vm4926, %v4950, %v7316
  %v7318 = vsel %vm4908, %v4954, %v4952
  %v7319 = vsel %vm4911, %v4956, %v7318
  %v7320 = vsel %vm4914, %v4958, %v7319
  %v7321 = vpack.c.b16 %v7320, %v7317
  %v7322 = vsel %vm4920, %v4963, %v4962
  %v7323 = vsel %vm4923, %v4965, %v7322
  %v7324 = vsel %vm4926, %v4902, %v7323
  %v7325 = vsel %vm4908, %v4970, %v4968
  %v7326 = vsel %vm4911, %v4972, %v7325
  %v7327 = vsel %vm4914, %v4974, %v7326
  %v7328 = vpack.c.b16 %v7327, %v7324
  %v7329 = vsel %vm4920, %v4986, %v4978
  %v7330 = vsel %vm4923, %v4988, %v7329
  %v7331 = vsel %vm4926, %v4990, %v7330
  %v7332 = vsel %vm4908, %v4994, %v4992
  %v7333 = vsel %vm4911, %v4996, %v7332
  %v7334 = vsel %vm4914, %v4998, %v7333
  %v7335 = vpack.c.b16 %v7334, %v7331
  %v7336 = vsel %vm4920, %v4979, %v5002
  %v7337 = vsel %vm4923, %v5004, %v7336
  %v7338 = vsel %vm4926, %v5006, %v7337
  %v7339 = vsel %vm4908, %v5010, %v5008
  %v7340 = vsel %vm4911, %v5012, %v7339
  %v7341 = vsel %vm4914, %v5014, %v7340
  %v7342 = vpack.c.b16 %v7341, %v7338
  %v7343 = vsel %vm4920, %v5019, %v5018
  %v7344 = vsel %vm4923, %v4980, %v7343
  %v7345 = vsel %vm4926, %v5022, %v7344
  %v7346 = vsel %vm4908, %v5026, %v5024
  %v7347 = vsel %vm4911, %v5028, %v7346
  %v7348 = vsel %vm4914, %v5030, %v7347
  %v7349 = vpack.c.b16 %v7348, %v7345
  %v7350 = vsel %vm4920, %v5035, %v5034
  %v7351 = vsel %vm4923, %v5037, %v7350
  %v7352 = vsel %vm4926, %v4981, %v7351
  %v7353 = vsel %vm4908, %v5042, %v5040
  %v7354 = vsel %vm4911, %v5044, %v7353
  %v7355 = vsel %vm4914, %v5046, %v7354
  %v7356 = vpack.c.b16 %v7355, %v7352
  %v7357 = vsel %vm4920, %v5066, %v5058
  %v7358 = vsel %vm4923, %v5068, %v7357
  %v7359 = vsel %vm4926, %v5070, %v7358
  %v7360 = vsel %vm4908, %v5074, %v5072
  %v7361 = vsel %vm4911, %v5076, %v7360
  %v7362 = vsel %vm4914, %v5078, %v7361
  %v7363 = vpack.c.b16 %v7362, %v7359
  %v7364 = vsel %vm4920, %v5059, %v5082
  %v7365 = vsel %vm4923, %v5084, %v7364
  %v7366 = vsel %vm4926, %v5086, %v7365
  %v7367 = vsel %vm4908, %v5090, %v5088
  %v7368 = vsel %vm4911, %v5092, %v7367
  %v7369 = vsel %vm4914, %v5094, %v7368
  %v7370 = vpack.c.b16 %v7369, %v7366
  %v7371 = vsel %vm4920, %v5099, %v5098
  %v7372 = vsel %vm4923, %v5060, %v7371
  %v7373 = vsel %vm4926, %v5102, %v7372
  %v7374 = vsel %vm4908, %v5106, %v5104
  %v7375 = vsel %vm4911, %v5108, %v7374
  %v7376 = vsel %vm4914, %v5110, %v7375
  %v7377 = vpack.c.b16 %v7376, %v7373
  %v7378 = vsel %vm4920, %v5115, %v5114
  %v7379 = vsel %vm4923, %v5117, %v7378
  %v7380 = vsel %vm4926, %v5061, %v7379
  %v7381 = vsel %vm4908, %v5122, %v5120
  %v7382 = vsel %vm4911, %v5124, %v7381
  %v7383 = vsel %vm4914, %v5126, %v7382
  %v7384 = vpack.c.b16 %v7383, %v7380
  %v7385 = vsel %vm4920, %v5138, %v5130
  %v7386 = vsel %vm4923, %v5140, %v7385
  %v7387 = vsel %vm4926, %v5142, %v7386
  %v7388 = vsel %vm4908, %v5146, %v5144
  %v7389 = vsel %vm4911, %v5148, %v7388
  %v7390 = vsel %vm4914, %v5150, %v7389
  %v7391 = vpack.c.b16 %v7390, %v7387
  %v7392 = vsel %vm4920, %v5131, %v5154
  %v7393 = vsel %vm4923, %v5156, %v7392
  %v7394 = vsel %vm4926, %v5158, %v7393
  %v7395 = vsel %vm4908, %v5162, %v5160
  %v7396 = vsel %vm4911, %v5164, %v7395
  %v7397 = vsel %vm4914, %v5166, %v7396
  %v7398 = vpack.c.b16 %v7397, %v7394
  %v7399 = vsel %vm4920, %v5171, %v5170
  %v7400 = vsel %vm4923, %v5132, %v7399
  %v7401 = vsel %vm4926, %v5174, %v7400
  %v7402 = vsel %vm4908, %v5178, %v5176
  %v7403 = vsel %vm4911, %v5180, %v7402
  %v7404 = vsel %vm4914, %v5182, %v7403
  %v7405 = vpack.c.b16 %v7404, %v7401
  %v7406 = vsel %vm4920, %v5187, %v5186
  %v7407 = vsel %vm4923, %v5189, %v7406
  %v7408 = vsel %vm4926, %v5133, %v7407
  %v7409 = vsel %vm4908, %v5194, %v5192
  %v7410 = vsel %vm4911, %v5196, %v7409
  %v7411 = vsel %vm4914, %v5198, %v7410
  %v7412 = vpack.c.b16 %v7411, %v7408
  %v7413 = vrot.slane %v7307, 2
  %v7414 = vrot.slane %v7314, 2
  %v7415 = vrot.slane %v7321, 2
  %v7416 = vrot.slane %v7328, 2
  %v7417 = vrot.slane %v7335, 2
  %v7418 = vrot.slane %v7342, 2
  %v7419 = vrot.slane %v7349, 2
  %v7420 = vrot.slane %v7356, 2
  %v7421 = vrot.slane %v7363, 2
  %v7422 = vrot.slane %v7370, 2
  %v7423 = vrot.slane %v7377, 2
  %v7424 = vrot.slane %v7384, 2
  %v7425 = vrot.slane %v7391, 2
  %v7426 = vrot.slane %v7398, 2
  %v7427 = vrot.slane %v7405, 2
  %v7428 = vrot.slane %v7412, 2
  %7445 = vmatprep.subr.bf16.mxu0 %v5982
  %7446 = vmatpush1.bf16.msra.mxu0 %v5981
  %7447 = vmatprep.subr.bf16.mxu0 %v5984
  %7448 = vmatpush1.bf16.msra.mxu0 %v5983
  %7449 = vmatprep.subr.bf16.mxu0 %v5986
  %7450 = vmatpush1.bf16.msra.mxu0 %v5985
  %7451 = vmatprep.subr.bf16.mxu0 %v5988
  %7452 = vmatpush1.bf16.msra.mxu0 %v5987
  %7453 = vmatprep.subr.bf16.mxu0 %v5990
  %7454 = vmatpush1.bf16.msra.mxu0 %v5989
  %7455 = vmatprep.subr.bf16.mxu0 %v5992
  %7456 = vmatpush1.bf16.msra.mxu0 %v5991
  %7457 = vmatprep.subr.bf16.mxu0 %v5994
  %7458 = vmatpush1.bf16.msra.mxu0 %v5993
  %7459 = vmatprep.subr.bf16.mxu0 %v5996
  %7460 = vmatpush1.bf16.msra.mxu0 %v5995
  %7461 = vmatprep.subr.bf16.mxu0 %v5998
  %7462 = vmatpush1.bf16.msra.mxu0 %v5997
  %7463 = vmatprep.subr.bf16.mxu0 %v6000
  %7464 = vmatpush1.bf16.msra.mxu0 %v5999
  %7465 = vmatprep.subr.bf16.mxu0 %v6002
  %7466 = vmatpush1.bf16.msra.mxu0 %v6001
  %7467 = vmatprep.subr.bf16.mxu0 %v6004
  %7468 = vmatpush1.bf16.msra.mxu0 %v6003
  %7469 = vmatprep.subr.bf16.mxu0 %v6006
  %7470 = vmatpush1.bf16.msra.mxu0 %v6005
  %7471 = vmatprep.subr.bf16.mxu0 %v6008
  %7472 = vmatpush1.bf16.msra.mxu0 %v6007
  %7473 = vmatprep.subr.bf16.mxu0 %v6010
  %7474 = vmatpush1.bf16.msra.mxu0 %v6009
  %7475 = vmatprep.subr.bf16.mxu0 %v6012
  %7476 = vmatpush1.bf16.msra.mxu0 %v6011
  %7477 = vmatprep.mubr.bf16.mxu0 %v7414
  %7478 = vmatmul.mubr.bf16.gmra.mrb[0].mxu0 %v7413
  %v7479 = vpop.f32.mrb[0].mxu0
  %v7480 = vadd.f32 %v5206, %v7479
  %v7481 = vpop.f32.mrb[0].mxu0
  %v7482 = vadd.f32 %v5210, %v7481
  %v7483 = vpop.f32.mrb[0].mxu0
  %v7484 = vpop.f32.mrb[0].mxu0
  %7485 = vdwg.mxu0
  %7486 = vmatprep.subr.bf16.mxu0 %v6014
  %7487 = vmatpush1.bf16.msra.mxu0 %v6013
  %7488 = vmatprep.subr.bf16.mxu0 %v6016
  %7489 = vmatpush1.bf16.msra.mxu0 %v6015
  %7490 = vmatprep.subr.bf16.mxu0 %v6018
  %7491 = vmatpush1.bf16.msra.mxu0 %v6017
  %7492 = vmatprep.subr.bf16.mxu0 %v6020
  %7493 = vmatpush1.bf16.msra.mxu0 %v6019
  %7494 = vmatprep.subr.bf16.mxu0 %v6022
  %7495 = vmatpush1.bf16.msra.mxu0 %v6021
  %7496 = vmatprep.subr.bf16.mxu0 %v6024
  %7497 = vmatpush1.bf16.msra.mxu0 %v6023
  %7498 = vmatprep.subr.bf16.mxu0 %v6026
  %7499 = vmatpush1.bf16.msra.mxu0 %v6025
  %7500 = vmatprep.subr.bf16.mxu0 %v6028
  %7501 = vmatpush1.bf16.msra.mxu0 %v6027
  %7502 = vmatprep.subr.bf16.mxu0 %v6030
  %7503 = vmatpush1.bf16.msra.mxu0 %v6029
  %7504 = vmatprep.subr.bf16.mxu0 %v6032
  %7505 = vmatpush1.bf16.msra.mxu0 %v6031
  %7506 = vmatprep.subr.bf16.mxu0 %v6034
  %7507 = vmatpush1.bf16.msra.mxu0 %v6033
  %7508 = vmatprep.subr.bf16.mxu0 %v6036
  %7509 = vmatpush1.bf16.msra.mxu0 %v6035
  %7510 = vmatprep.subr.bf16.mxu0 %v6038
  %7511 = vmatpush1.bf16.msra.mxu0 %v6037
  %7512 = vmatprep.subr.bf16.mxu0 %v6040
  %7513 = vmatpush1.bf16.msra.mxu0 %v6039
  %7514 = vmatprep.subr.bf16.mxu0 %v6042
  %7515 = vmatpush1.bf16.msra.mxu0 %v6041
  %7516 = vmatprep.subr.bf16.mxu0 %v6044
  %7517 = vmatpush1.bf16.msra.mxu0 %v6043
  %7518 = vmatprep.mubr.bf16.mxu0 %v7416
  %7519 = vmatmul.mubr.bf16.gmra.mrb[0].mxu0 %v7415
  %v7520 = vpop.f32.mrb[0].mxu0
  %v7521 = vadd.f32 %v7480, %v7520
  %v7522 = vpop.f32.mrb[0].mxu0
  %v7523 = vadd.f32 %v7482, %v7522
  %v7524 = vpop.f32.mrb[0].mxu0
  %v7525 = vpop.f32.mrb[0].mxu0
  %7526 = vdwg.mxu0
  %7527 = vmatprep.subr.bf16.mxu0 %v6046
  %7528 = vmatpush1.bf16.msra.mxu0 %v6045
  %7529 = vmatprep.subr.bf16.mxu0 %v6048
  %7530 = vmatpush1.bf16.msra.mxu0 %v6047
  %7531 = vmatprep.subr.bf16.mxu0 %v6050
  %7532 = vmatpush1.bf16.msra.mxu0 %v6049
  %7533 = vmatprep.subr.bf16.mxu0 %v6052
  %7534 = vmatpush1.bf16.msra.mxu0 %v6051
  %7535 = vmatprep.subr.bf16.mxu0 %v6054
  %7536 = vmatpush1.bf16.msra.mxu0 %v6053
  %7537 = vmatprep.subr.bf16.mxu0 %v6056
  %7538 = vmatpush1.bf16.msra.mxu0 %v6055
  %7539 = vmatprep.subr.bf16.mxu0 %v6058
  %7540 = vmatpush1.bf16.msra.mxu0 %v6057
  %7541 = vmatprep.subr.bf16.mxu0 %v6060
  %7542 = vmatpush1.bf16.msra.mxu0 %v6059
  %7543 = vmatprep.subr.bf16.mxu0 %v6062
  %7544 = vmatpush1.bf16.msra.mxu0 %v6061
  %7545 = vmatprep.subr.bf16.mxu0 %v6064
  %7546 = vmatpush1.bf16.msra.mxu0 %v6063
  %7547 = vmatprep.subr.bf16.mxu0 %v6066
  %7548 = vmatpush1.bf16.msra.mxu0 %v6065
  %7549 = vmatprep.subr.bf16.mxu0 %v6068
  %7550 = vmatpush1.bf16.msra.mxu0 %v6067
  %7551 = vmatprep.subr.bf16.mxu0 %v6070
  %7552 = vmatpush1.bf16.msra.mxu0 %v6069
  %7553 = vmatprep.subr.bf16.mxu0 %v6072
  %7554 = vmatpush1.bf16.msra.mxu0 %v6071
  %7555 = vmatprep.subr.bf16.mxu0 %v6074
  %7556 = vmatpush1.bf16.msra.mxu0 %v6073
  %7557 = vmatprep.subr.bf16.mxu0 %v6076
  %7558 = vmatpush1.bf16.msra.mxu0 %v6075
  %7559 = vmatprep.mubr.bf16.mxu0 %v7418
  %7560 = vmatmul.mubr.bf16.gmra.mrb[0].mxu0 %v7417
  %v7561 = vpop.f32.mrb[0].mxu0
  %v7562 = vadd.f32 %v7521, %v7561
  %v7563 = vpop.f32.mrb[0].mxu0
  %v7564 = vadd.f32 %v7523, %v7563
  %v7565 = vpop.f32.mrb[0].mxu0
  %v7566 = vpop.f32.mrb[0].mxu0
  %7567 = vdwg.mxu0
  %7568 = vmatprep.subr.bf16.mxu0 %v6078
  %7569 = vmatpush1.bf16.msra.mxu0 %v6077
  %7570 = vmatprep.subr.bf16.mxu0 %v6080
  %7571 = vmatpush1.bf16.msra.mxu0 %v6079
  %7572 = vmatprep.subr.bf16.mxu0 %v6082
  %7573 = vmatpush1.bf16.msra.mxu0 %v6081
  %7574 = vmatprep.subr.bf16.mxu0 %v6084
  %7575 = vmatpush1.bf16.msra.mxu0 %v6083
  %7576 = vmatprep.subr.bf16.mxu0 %v6086
  %7577 = vmatpush1.bf16.msra.mxu0 %v6085
  %7578 = vmatprep.subr.bf16.mxu0 %v6088
  %7579 = vmatpush1.bf16.msra.mxu0 %v6087
  %7580 = vmatprep.subr.bf16.mxu0 %v6090
  %7581 = vmatpush1.bf16.msra.mxu0 %v6089
  %7582 = vmatprep.subr.bf16.mxu0 %v6092
  %7583 = vmatpush1.bf16.msra.mxu0 %v6091
  %7584 = vmatprep.subr.bf16.mxu0 %v6094
  %7585 = vmatpush1.bf16.msra.mxu0 %v6093
  %7586 = vmatprep.subr.bf16.mxu0 %v6096
  %7587 = vmatpush1.bf16.msra.mxu0 %v6095
  %7588 = vmatprep.subr.bf16.mxu0 %v6098
  %7589 = vmatpush1.bf16.msra.mxu0 %v6097
  %7590 = vmatprep.subr.bf16.mxu0 %v6100
  %7591 = vmatpush1.bf16.msra.mxu0 %v6099
  %7592 = vmatprep.subr.bf16.mxu0 %v6102
  %7593 = vmatpush1.bf16.msra.mxu0 %v6101
  %7594 = vmatprep.subr.bf16.mxu0 %v6104
  %7595 = vmatpush1.bf16.msra.mxu0 %v6103
  %7596 = vmatprep.subr.bf16.mxu0 %v6106
  %7597 = vmatpush1.bf16.msra.mxu0 %v6105
  %7598 = vmatprep.subr.bf16.mxu0 %v6108
  %7599 = vmatpush1.bf16.msra.mxu0 %v6107
  %7600 = vmatprep.mubr.bf16.mxu0 %v7420
  %7601 = vmatmul.mubr.bf16.gmra.mrb[0].mxu0 %v7419
  %v7602 = vpop.f32.mrb[0].mxu0
  %v7603 = vadd.f32 %v7562, %v7602
  %v7604 = vpop.f32.mrb[0].mxu0
  %v7605 = vadd.f32 %v7564, %v7604
  %v7606 = vpop.f32.mrb[0].mxu0
  %v7607 = vpop.f32.mrb[0].mxu0
  %7608 = vdwg.mxu0
  %7609 = vmatprep.subr.bf16.mxu0 %v6110
  %7610 = vmatpush1.bf16.msra.mxu0 %v6109
  %7611 = vmatprep.subr.bf16.mxu0 %v6112
  %7612 = vmatpush1.bf16.msra.mxu0 %v6111
  %7613 = vmatprep.subr.bf16.mxu0 %v6114
  %7614 = vmatpush1.bf16.msra.mxu0 %v6113
  %7615 = vmatprep.subr.bf16.mxu0 %v6116
  %7616 = vmatpush1.bf16.msra.mxu0 %v6115
  %7617 = vmatprep.subr.bf16.mxu0 %v6118
  %7618 = vmatpush1.bf16.msra.mxu0 %v6117
  %7619 = vmatprep.subr.bf16.mxu0 %v6120
  %7620 = vmatpush1.bf16.msra.mxu0 %v6119
  %7621 = vmatprep.subr.bf16.mxu0 %v6122
  %7622 = vmatpush1.bf16.msra.mxu0 %v6121
  %7623 = vmatprep.subr.bf16.mxu0 %v6124
  %7624 = vmatpush1.bf16.msra.mxu0 %v6123
  %7625 = vmatprep.subr.bf16.mxu0 %v6126
  %7626 = vmatpush1.bf16.msra.mxu0 %v6125
  %7627 = vmatprep.subr.bf16.mxu0 %v6128
  %7628 = vmatpush1.bf16.msra.mxu0 %v6127
  %7629 = vmatprep.subr.bf16.mxu0 %v6130
  %7630 = vmatpush1.bf16.msra.mxu0 %v6129
  %7631 = vmatprep.subr.bf16.mxu0 %v6132
  %7632 = vmatpush1.bf16.msra.mxu0 %v6131
  %7633 = vmatprep.subr.bf16.mxu0 %v6134
  %7634 = vmatpush1.bf16.msra.mxu0 %v6133
  %7635 = vmatprep.subr.bf16.mxu0 %v6136
  %7636 = vmatpush1.bf16.msra.mxu0 %v6135
  %7637 = vmatprep.subr.bf16.mxu0 %v6138
  %7638 = vmatpush1.bf16.msra.mxu0 %v6137
  %7639 = vmatprep.subr.bf16.mxu0 %v6140
  %7640 = vmatpush1.bf16.msra.mxu0 %v6139
  %7641 = vmatprep.mubr.bf16.mxu0 %v7422
  %7642 = vmatmul.mubr.bf16.gmra.mrb[0].mxu0 %v7421
  %v7643 = vpop.f32.mrb[0].mxu0
  %v7644 = vadd.f32 %v7603, %v7643
  %v7645 = vpop.f32.mrb[0].mxu0
  %v7646 = vadd.f32 %v7605, %v7645
  %v7647 = vpop.f32.mrb[0].mxu0
  %v7648 = vpop.f32.mrb[0].mxu0
  %7649 = vdwg.mxu0
  %7650 = vmatprep.subr.bf16.mxu0 %v6142
  %7651 = vmatpush1.bf16.msra.mxu0 %v6141
  %7652 = vmatprep.subr.bf16.mxu0 %v6144
  %7653 = vmatpush1.bf16.msra.mxu0 %v6143
  %7654 = vmatprep.subr.bf16.mxu0 %v6146
  %7655 = vmatpush1.bf16.msra.mxu0 %v6145
  %7656 = vmatprep.subr.bf16.mxu0 %v6148
  %7657 = vmatpush1.bf16.msra.mxu0 %v6147
  %7658 = vmatprep.subr.bf16.mxu0 %v6150
  %7659 = vmatpush1.bf16.msra.mxu0 %v6149
  %7660 = vmatprep.subr.bf16.mxu0 %v6152
  %7661 = vmatpush1.bf16.msra.mxu0 %v6151
  %7662 = vmatprep.subr.bf16.mxu0 %v6154
  %7663 = vmatpush1.bf16.msra.mxu0 %v6153
  %7664 = vmatprep.subr.bf16.mxu0 %v6156
  %7665 = vmatpush1.bf16.msra.mxu0 %v6155
  %7666 = vmatprep.subr.bf16.mxu0 %v6158
  %7667 = vmatpush1.bf16.msra.mxu0 %v6157
  %7668 = vmatprep.subr.bf16.mxu0 %v6160
  %7669 = vmatpush1.bf16.msra.mxu0 %v6159
  %7670 = vmatprep.subr.bf16.mxu0 %v6162
  %7671 = vmatpush1.bf16.msra.mxu0 %v6161
  %7672 = vmatprep.subr.bf16.mxu0 %v6164
  %7673 = vmatpush1.bf16.msra.mxu0 %v6163
  %7674 = vmatprep.subr.bf16.mxu0 %v6166
  %7675 = vmatpush1.bf16.msra.mxu0 %v6165
  %7676 = vmatprep.subr.bf16.mxu0 %v6168
  %7677 = vmatpush1.bf16.msra.mxu0 %v6167
  %7678 = vmatprep.subr.bf16.mxu0 %v6170
  %7679 = vmatpush1.bf16.msra.mxu0 %v6169
  %7680 = vmatprep.subr.bf16.mxu0 %v6172
  %7681 = vmatpush1.bf16.msra.mxu0 %v6171
  %7682 = vmatprep.mubr.bf16.mxu0 %v7424
  %7683 = vmatmul.mubr.bf16.gmra.mrb[0].mxu0 %v7423
  %v7684 = vpop.f32.mrb[0].mxu0
  %v7685 = vadd.f32 %v7644, %v7684
  %v7686 = vpop.f32.mrb[0].mxu0
  %v7687 = vadd.f32 %v7646, %v7686
  %v7688 = vpop.f32.mrb[0].mxu0
  %v7689 = vpop.f32.mrb[0].mxu0
  %7690 = vdwg.mxu0
  %7691 = vmatprep.subr.bf16.mxu0 %v6174
  %7692 = vmatpush1.bf16.msra.mxu0 %v6173
  %7693 = vmatprep.subr.bf16.mxu0 %v6176
  %7694 = vmatpush1.bf16.msra.mxu0 %v6175
  %7695 = vmatprep.subr.bf16.mxu0 %v6178
  %7696 = vmatpush1.bf16.msra.mxu0 %v6177
  %7697 = vmatprep.subr.bf16.mxu0 %v6180
  %7698 = vmatpush1.bf16.msra.mxu0 %v6179
  %7699 = vmatprep.subr.bf16.mxu0 %v6182
  %7700 = vmatpush1.bf16.msra.mxu0 %v6181
  %7701 = vmatprep.subr.bf16.mxu0 %v6184
  %7702 = vmatpush1.bf16.msra.mxu0 %v6183
  %7703 = vmatprep.subr.bf16.mxu0 %v6186
  %7704 = vmatpush1.bf16.msra.mxu0 %v6185
  %7705 = vmatprep.subr.bf16.mxu0 %v6188
  %7706 = vmatpush1.bf16.msra.mxu0 %v6187
  %7707 = vmatprep.subr.bf16.mxu0 %v6190
  %7708 = vmatpush1.bf16.msra.mxu0 %v6189
  %7709 = vmatprep.subr.bf16.mxu0 %v6192
  %7710 = vmatpush1.bf16.msra.mxu0 %v6191
  %7711 = vmatprep.subr.bf16.mxu0 %v6194
  %7712 = vmatpush1.bf16.msra.mxu0 %v6193
  %7713 = vmatprep.subr.bf16.mxu0 %v6196
  %7714 = vmatpush1.bf16.msra.mxu0 %v6195
  %7715 = vmatprep.subr.bf16.mxu0 %v6198
  %7716 = vmatpush1.bf16.msra.mxu0 %v6197
  %7717 = vmatprep.subr.bf16.mxu0 %v6200
  %7718 = vmatpush1.bf16.msra.mxu0 %v6199
  %7719 = vmatprep.subr.bf16.mxu0 %v6202
  %7720 = vmatpush1.bf16.msra.mxu0 %v6201
  %7721 = vmatprep.subr.bf16.mxu0 %v6204
  %7722 = vmatpush1.bf16.msra.mxu0 %v6203
  %7723 = vmatprep.mubr.bf16.mxu0 %v7426
  %7724 = vmatmul.mubr.bf16.gmra.mrb[0].mxu0 %v7425
  %v7725 = vpop.f32.mrb[0].mxu0
  %v7726 = vadd.f32 %v7685, %v7725
  %v7727 = vpop.f32.mrb[0].mxu0
  %v7728 = vadd.f32 %v7687, %v7727
  %v7729 = vpop.f32.mrb[0].mxu0
  %v7730 = vpop.f32.mrb[0].mxu0
  %7731 = vdwg.mxu0
  %7732 = vmatprep.subr.bf16.mxu0 %v6206
  %7733 = vmatpush1.bf16.msra.mxu0 %v6205
  %7734 = vmatprep.subr.bf16.mxu0 %v6208
  %7735 = vmatpush1.bf16.msra.mxu0 %v6207
  %7736 = vmatprep.subr.bf16.mxu0 %v6210
  %7737 = vmatpush1.bf16.msra.mxu0 %v6209
  %7738 = vmatprep.subr.bf16.mxu0 %v6212
  %7739 = vmatpush1.bf16.msra.mxu0 %v6211
  %7740 = vmatprep.subr.bf16.mxu0 %v6214
  %7741 = vmatpush1.bf16.msra.mxu0 %v6213
  %7742 = vmatprep.subr.bf16.mxu0 %v6216
  %7743 = vmatpush1.bf16.msra.mxu0 %v6215
  %7744 = vmatprep.subr.bf16.mxu0 %v6218
  %7745 = vmatpush1.bf16.msra.mxu0 %v6217
  %7746 = vmatprep.subr.bf16.mxu0 %v6220
  %7747 = vmatpush1.bf16.msra.mxu0 %v6219
  %7748 = vmatprep.subr.bf16.mxu0 %v6222
  %7749 = vmatpush1.bf16.msra.mxu0 %v6221
  %7750 = vmatprep.subr.bf16.mxu0 %v6224
  %7751 = vmatpush1.bf16.msra.mxu0 %v6223
  %7752 = vmatprep.subr.bf16.mxu0 %v6226
  %7753 = vmatpush1.bf16.msra.mxu0 %v6225
  %7754 = vmatprep.subr.bf16.mxu0 %v6228
  %7755 = vmatpush1.bf16.msra.mxu0 %v6227
  %7756 = vmatprep.subr.bf16.mxu0 %v6230
  %7757 = vmatpush1.bf16.msra.mxu0 %v6229
  %7758 = vmatprep.subr.bf16.mxu0 %v6232
  %7759 = vmatpush1.bf16.msra.mxu0 %v6231
  %7760 = vmatprep.subr.bf16.mxu0 %v6234
  %7761 = vmatpush1.bf16.msra.mxu0 %v6233
  %7762 = vmatprep.subr.bf16.mxu0 %v6236
  %7763 = vmatpush1.bf16.msra.mxu0 %v6235
  %7764 = vmatprep.mubr.bf16.mxu0 %v7428
  %7765 = vmatmul.mubr.bf16.gmra.mrb[0].mxu0 %v7427
  %v7766 = vpop.f32.mrb[0].mxu0
  %v7767 = vadd.f32 %v7726, %v7766
  %v7768 = vpop.f32.mrb[0].mxu0
  %v7769 = vadd.f32 %v7728, %v7768
  %v7770 = vpop.f32.mrb[0].mxu0
  %v7771 = vpop.f32.mrb[0].mxu0
  %7772 = vdwg.mxu0
  %v7773 = vmax.f32 %v7767, 0.0
  %v7774 = vmax.f32 %v7769, 0.0
  %v7775 = vpack.c.bf16 %v7773, %v7773
  %v7776 = vpack.c.bf16 %v7774, %v7774
  %v7785 = vunpack.c.l.b16 %v4604
  %v7786 = vunpack.c.l.b16 %v4608
  %v7787 = vunpack.c.l.b16 %v4612
  %v7788 = vunpack.c.l.b16 %v4616
  %v7789 = vunpack.c.l.b16 %v4620
  %v7790 = vunpack.c.l.b16 %v4624
  %v7791 = vunpack.c.l.b16 %v4628
  %v7792 = vunpack.c.l.b16 %v4632
  %v7793 = vrot.slane %v7786, 7
  %v7794 = vsel %vm4908, %v7793, %v7785
  %v7795 = vrot.slane %v7787, 6
  %v7796 = vsel %vm4911, %v7795, %v7794
  %v7797 = vrot.slane %v7788, 5
  %v7798 = vsel %vm4914, %v7797, %v7796
  %v7799 = vrot.slane %v7789, 4
  %v7800 = vsel %vm4917, %v7799, %v7798
  %v7801 = vrot.slane %v7790, 3
  %v7802 = vsel %vm4920, %v7801, %v7800
  %v7803 = vrot.slane %v7791, 2
  %v7804 = vsel %vm4923, %v7803, %v7802
  %v7805 = vrot.slane %v7792, 1
  %v7806 = vsel %vm4926, %v7805, %v7804
  %v7807 = vpack.c.b16 %v7806, %v7806
  %v7809 = vrot.slane %v7785, 1
  %v7810 = vsel %vm4908, %v7786, %v7809
  %v7811 = vrot.slane %v7787, 7
  %v7812 = vsel %vm4911, %v7811, %v7810
  %v7813 = vrot.slane %v7788, 6
  %v7814 = vsel %vm4914, %v7813, %v7812
  %v7815 = vrot.slane %v7789, 5
  %v7816 = vsel %vm4917, %v7815, %v7814
  %v7817 = vrot.slane %v7790, 4
  %v7818 = vsel %vm4920, %v7817, %v7816
  %v7819 = vrot.slane %v7791, 3
  %v7820 = vsel %vm4923, %v7819, %v7818
  %v7821 = vrot.slane %v7792, 2
  %v7822 = vsel %vm4926, %v7821, %v7820
  %v7823 = vpack.c.b16 %v7822, %v7822
  %v7825 = vrot.slane %v7785, 2
  %v7826 = vrot.slane %v7786, 1
  %v7827 = vsel %vm4908, %v7826, %v7825
  %v7828 = vsel %vm4911, %v7787, %v7827
  %v7829 = vrot.slane %v7788, 7
  %v7830 = vsel %vm4914, %v7829, %v7828
  %v7831 = vrot.slane %v7789, 6
  %v7832 = vsel %vm4917, %v7831, %v7830
  %v7833 = vrot.slane %v7790, 5
  %v7834 = vsel %vm4920, %v7833, %v7832
  %v7835 = vrot.slane %v7791, 4
  %v7836 = vsel %vm4923, %v7835, %v7834
  %v7837 = vrot.slane %v7792, 3
  %v7838 = vsel %vm4926, %v7837, %v7836
  %v7839 = vpack.c.b16 %v7838, %v7838
  %v7841 = vrot.slane %v7785, 3
  %v7842 = vrot.slane %v7786, 2
  %v7843 = vsel %vm4908, %v7842, %v7841
  %v7844 = vrot.slane %v7787, 1
  %v7845 = vsel %vm4911, %v7844, %v7843
  %v7846 = vsel %vm4914, %v7788, %v7845
  %v7847 = vrot.slane %v7789, 7
  %v7848 = vsel %vm4917, %v7847, %v7846
  %v7849 = vrot.slane %v7790, 6
  %v7850 = vsel %vm4920, %v7849, %v7848
  %v7851 = vrot.slane %v7791, 5
  %v7852 = vsel %vm4923, %v7851, %v7850
  %v7853 = vrot.slane %v7792, 4
  %v7854 = vsel %vm4926, %v7853, %v7852
  %v7855 = vpack.c.b16 %v7854, %v7854
  %v7857 = vunpack.c.h.b16 %v4604
  %v7858 = vunpack.c.h.b16 %v4608
  %v7859 = vunpack.c.h.b16 %v4612
  %v7860 = vunpack.c.h.b16 %v4616
  %v7861 = vunpack.c.h.b16 %v4620
  %v7862 = vunpack.c.h.b16 %v4624
  %v7863 = vunpack.c.h.b16 %v4628
  %v7864 = vunpack.c.h.b16 %v4632
  %v7865 = vrot.slane %v7858, 7
  %v7866 = vsel %vm4908, %v7865, %v7857
  %v7867 = vrot.slane %v7859, 6
  %v7868 = vsel %vm4911, %v7867, %v7866
  %v7869 = vrot.slane %v7860, 5
  %v7870 = vsel %vm4914, %v7869, %v7868
  %v7871 = vrot.slane %v7861, 4
  %v7872 = vsel %vm4917, %v7871, %v7870
  %v7873 = vrot.slane %v7862, 3
  %v7874 = vsel %vm4920, %v7873, %v7872
  %v7875 = vrot.slane %v7863, 2
  %v7876 = vsel %vm4923, %v7875, %v7874
  %v7877 = vrot.slane %v7864, 1
  %v7878 = vsel %vm4926, %v7877, %v7876
  %v7879 = vpack.c.b16 %v7878, %v7878
  %v7881 = vrot.slane %v7857, 1
  %v7882 = vsel %vm4908, %v7858, %v7881
  %v7883 = vrot.slane %v7859, 7
  %v7884 = vsel %vm4911, %v7883, %v7882
  %v7885 = vrot.slane %v7860, 6
  %v7886 = vsel %vm4914, %v7885, %v7884
  %v7887 = vrot.slane %v7861, 5
  %v7888 = vsel %vm4917, %v7887, %v7886
  %v7889 = vrot.slane %v7862, 4
  %v7890 = vsel %vm4920, %v7889, %v7888
  %v7891 = vrot.slane %v7863, 3
  %v7892 = vsel %vm4923, %v7891, %v7890
  %v7893 = vrot.slane %v7864, 2
  %v7894 = vsel %vm4926, %v7893, %v7892
  %v7895 = vpack.c.b16 %v7894, %v7894
  %v7897 = vrot.slane %v7857, 2
  %v7898 = vrot.slane %v7858, 1
  %v7899 = vsel %vm4908, %v7898, %v7897
  %v7900 = vsel %vm4911, %v7859, %v7899
  %v7901 = vrot.slane %v7860, 7
  %v7902 = vsel %vm4914, %v7901, %v7900
  %v7903 = vrot.slane %v7861, 6
  %v7904 = vsel %vm4917, %v7903, %v7902
  %v7905 = vrot.slane %v7862, 5
  %v7906 = vsel %vm4920, %v7905, %v7904
  %v7907 = vrot.slane %v7863, 4
  %v7908 = vsel %vm4923, %v7907, %v7906
  %v7909 = vrot.slane %v7864, 3
  %v7910 = vsel %vm4926, %v7909, %v7908
  %v7911 = vpack.c.b16 %v7910, %v7910
  %v7913 = vrot.slane %v7857, 3
  %v7914 = vrot.slane %v7858, 2
  %v7915 = vsel %vm4908, %v7914, %v7913
  %v7916 = vrot.slane %v7859, 1
  %v7917 = vsel %vm4911, %v7916, %v7915
  %v7918 = vsel %vm4914, %v7860, %v7917
  %v7919 = vrot.slane %v7861, 7
  %v7920 = vsel %vm4917, %v7919, %v7918
  %v7921 = vrot.slane %v7862, 6
  %v7922 = vsel %vm4920, %v7921, %v7920
  %v7923 = vrot.slane %v7863, 5
  %v7924 = vsel %vm4923, %v7923, %v7922
  %v7925 = vrot.slane %v7864, 4
  %v7926 = vsel %vm4926, %v7925, %v7924
  %v7927 = vpack.c.b16 %v7926, %v7926
  %7929 = vmatprep.subr.bf16.mxu0 %v5982
  %7930 = vmatpush1.bf16.msra.mxu0 %v5981
  %7931 = vmatprep.subr.bf16.mxu0 %v5984
  %7932 = vmatpush1.bf16.msra.mxu0 %v5983
  %7933 = vmatprep.subr.bf16.mxu0 %v5986
  %7934 = vmatpush1.bf16.msra.mxu0 %v5985
  %7935 = vmatprep.subr.bf16.mxu0 %v5988
  %7936 = vmatpush1.bf16.msra.mxu0 %v5987
  %7937 = vmatprep.subr.bf16.mxu0 %v5990
  %7938 = vmatpush1.bf16.msra.mxu0 %v5989
  %7939 = vmatprep.subr.bf16.mxu0 %v5992
  %7940 = vmatpush1.bf16.msra.mxu0 %v5991
  %7941 = vmatprep.subr.bf16.mxu0 %v5994
  %7942 = vmatpush1.bf16.msra.mxu0 %v5993
  %7943 = vmatprep.subr.bf16.mxu0 %v5996
  %7944 = vmatpush1.bf16.msra.mxu0 %v5995
  %7945 = vmatprep.subr.bf16.mxu0 %v5998
  %7946 = vmatpush1.bf16.msra.mxu0 %v5997
  %7947 = vmatprep.subr.bf16.mxu0 %v6000
  %7948 = vmatpush1.bf16.msra.mxu0 %v5999
  %7949 = vmatprep.subr.bf16.mxu0 %v6002
  %7950 = vmatpush1.bf16.msra.mxu0 %v6001
  %7951 = vmatprep.subr.bf16.mxu0 %v6004
  %7952 = vmatpush1.bf16.msra.mxu0 %v6003
  %7953 = vmatprep.subr.bf16.mxu0 %v6006
  %7954 = vmatpush1.bf16.msra.mxu0 %v6005
  %7955 = vmatprep.subr.bf16.mxu0 %v6008
  %7956 = vmatpush1.bf16.msra.mxu0 %v6007
  %7957 = vmatprep.subr.bf16.mxu0 %v6010
  %7958 = vmatpush1.bf16.msra.mxu0 %v6009
  %7959 = vmatprep.subr.bf16.mxu0 %v6012
  %7960 = vmatpush1.bf16.msra.mxu0 %v6011
  %7961 = vmatprep.mubr.bf16.mxu0 %v5096
  %7962 = vmatmul.mubr.bf16.gmra.mrb[0].mxu0 %v5080
  %v7963 = vpop.f32.mrb[0].mxu0
  %v7964 = vadd.f32 %v5206, %v7963
  %v7965 = vpop.f32.mrb[0].mxu0
  %v7966 = vadd.f32 %v5210, %v7965
  %v7967 = vpop.f32.mrb[0].mxu0
  %v7968 = vpop.f32.mrb[0].mxu0
  %7969 = vdwg.mxu0
  %7970 = vmatprep.subr.bf16.mxu0 %v6014
  %7971 = vmatpush1.bf16.msra.mxu0 %v6013
  %7972 = vmatprep.subr.bf16.mxu0 %v6016
  %7973 = vmatpush1.bf16.msra.mxu0 %v6015
  %7974 = vmatprep.subr.bf16.mxu0 %v6018
  %7975 = vmatpush1.bf16.msra.mxu0 %v6017
  %7976 = vmatprep.subr.bf16.mxu0 %v6020
  %7977 = vmatpush1.bf16.msra.mxu0 %v6019
  %7978 = vmatprep.subr.bf16.mxu0 %v6022
  %7979 = vmatpush1.bf16.msra.mxu0 %v6021
  %7980 = vmatprep.subr.bf16.mxu0 %v6024
  %7981 = vmatpush1.bf16.msra.mxu0 %v6023
  %7982 = vmatprep.subr.bf16.mxu0 %v6026
  %7983 = vmatpush1.bf16.msra.mxu0 %v6025
  %7984 = vmatprep.subr.bf16.mxu0 %v6028
  %7985 = vmatpush1.bf16.msra.mxu0 %v6027
  %7986 = vmatprep.subr.bf16.mxu0 %v6030
  %7987 = vmatpush1.bf16.msra.mxu0 %v6029
  %7988 = vmatprep.subr.bf16.mxu0 %v6032
  %7989 = vmatpush1.bf16.msra.mxu0 %v6031
  %7990 = vmatprep.subr.bf16.mxu0 %v6034
  %7991 = vmatpush1.bf16.msra.mxu0 %v6033
  %7992 = vmatprep.subr.bf16.mxu0 %v6036
  %7993 = vmatpush1.bf16.msra.mxu0 %v6035
  %7994 = vmatprep.subr.bf16.mxu0 %v6038
  %7995 = vmatpush1.bf16.msra.mxu0 %v6037
  %7996 = vmatprep.subr.bf16.mxu0 %v6040
  %7997 = vmatpush1.bf16.msra.mxu0 %v6039
  %7998 = vmatprep.subr.bf16.mxu0 %v6042
  %7999 = vmatpush1.bf16.msra.mxu0 %v6041
  %8000 = vmatprep.subr.bf16.mxu0 %v6044
  %8001 = vmatpush1.bf16.msra.mxu0 %v6043
  %8002 = vmatprep.mubr.bf16.mxu0 %v5128
  %8003 = vmatmul.mubr.bf16.gmra.mrb[0].mxu0 %v5112
  %v8004 = vpop.f32.mrb[0].mxu0
  %v8005 = vadd.f32 %v7964, %v8004
  %v8006 = vpop.f32.mrb[0].mxu0
  %v8007 = vadd.f32 %v7966, %v8006
  %v8008 = vpop.f32.mrb[0].mxu0
  %v8009 = vpop.f32.mrb[0].mxu0
  %8010 = vdwg.mxu0
  %8011 = vmatprep.subr.bf16.mxu0 %v6046
  %8012 = vmatpush1.bf16.msra.mxu0 %v6045
  %8013 = vmatprep.subr.bf16.mxu0 %v6048
  %8014 = vmatpush1.bf16.msra.mxu0 %v6047
  %8015 = vmatprep.subr.bf16.mxu0 %v6050
  %8016 = vmatpush1.bf16.msra.mxu0 %v6049
  %8017 = vmatprep.subr.bf16.mxu0 %v6052
  %8018 = vmatpush1.bf16.msra.mxu0 %v6051
  %8019 = vmatprep.subr.bf16.mxu0 %v6054
  %8020 = vmatpush1.bf16.msra.mxu0 %v6053
  %8021 = vmatprep.subr.bf16.mxu0 %v6056
  %8022 = vmatpush1.bf16.msra.mxu0 %v6055
  %8023 = vmatprep.subr.bf16.mxu0 %v6058
  %8024 = vmatpush1.bf16.msra.mxu0 %v6057
  %8025 = vmatprep.subr.bf16.mxu0 %v6060
  %8026 = vmatpush1.bf16.msra.mxu0 %v6059
  %8027 = vmatprep.subr.bf16.mxu0 %v6062
  %8028 = vmatpush1.bf16.msra.mxu0 %v6061
  %8029 = vmatprep.subr.bf16.mxu0 %v6064
  %8030 = vmatpush1.bf16.msra.mxu0 %v6063
  %8031 = vmatprep.subr.bf16.mxu0 %v6066
  %8032 = vmatpush1.bf16.msra.mxu0 %v6065
  %8033 = vmatprep.subr.bf16.mxu0 %v6068
  %8034 = vmatpush1.bf16.msra.mxu0 %v6067
  %8035 = vmatprep.subr.bf16.mxu0 %v6070
  %8036 = vmatpush1.bf16.msra.mxu0 %v6069
  %8037 = vmatprep.subr.bf16.mxu0 %v6072
  %8038 = vmatpush1.bf16.msra.mxu0 %v6071
  %8039 = vmatprep.subr.bf16.mxu0 %v6074
  %8040 = vmatpush1.bf16.msra.mxu0 %v6073
  %8041 = vmatprep.subr.bf16.mxu0 %v6076
  %8042 = vmatpush1.bf16.msra.mxu0 %v6075
  %8043 = vmatprep.mubr.bf16.mxu0 %v5168
  %8044 = vmatmul.mubr.bf16.gmra.mrb[0].mxu0 %v5152
  %v8045 = vpop.f32.mrb[0].mxu0
  %v8046 = vadd.f32 %v8005, %v8045
  %v8047 = vpop.f32.mrb[0].mxu0
  %v8048 = vadd.f32 %v8007, %v8047
  %v8049 = vpop.f32.mrb[0].mxu0
  %v8050 = vpop.f32.mrb[0].mxu0
  %8051 = vdwg.mxu0
  %8052 = vmatprep.subr.bf16.mxu0 %v6078
  %8053 = vmatpush1.bf16.msra.mxu0 %v6077
  %8054 = vmatprep.subr.bf16.mxu0 %v6080
  %8055 = vmatpush1.bf16.msra.mxu0 %v6079
  %8056 = vmatprep.subr.bf16.mxu0 %v6082
  %8057 = vmatpush1.bf16.msra.mxu0 %v6081
  %8058 = vmatprep.subr.bf16.mxu0 %v6084
  %8059 = vmatpush1.bf16.msra.mxu0 %v6083
  %8060 = vmatprep.subr.bf16.mxu0 %v6086
  %8061 = vmatpush1.bf16.msra.mxu0 %v6085
  %8062 = vmatprep.subr.bf16.mxu0 %v6088
  %8063 = vmatpush1.bf16.msra.mxu0 %v6087
  %8064 = vmatprep.subr.bf16.mxu0 %v6090
  %8065 = vmatpush1.bf16.msra.mxu0 %v6089
  %8066 = vmatprep.subr.bf16.mxu0 %v6092
  %8067 = vmatpush1.bf16.msra.mxu0 %v6091
  %8068 = vmatprep.subr.bf16.mxu0 %v6094
  %8069 = vmatpush1.bf16.msra.mxu0 %v6093
  %8070 = vmatprep.subr.bf16.mxu0 %v6096
  %8071 = vmatpush1.bf16.msra.mxu0 %v6095
  %8072 = vmatprep.subr.bf16.mxu0 %v6098
  %8073 = vmatpush1.bf16.msra.mxu0 %v6097
  %8074 = vmatprep.subr.bf16.mxu0 %v6100
  %8075 = vmatpush1.bf16.msra.mxu0 %v6099
  %8076 = vmatprep.subr.bf16.mxu0 %v6102
  %8077 = vmatpush1.bf16.msra.mxu0 %v6101
  %8078 = vmatprep.subr.bf16.mxu0 %v6104
  %8079 = vmatpush1.bf16.msra.mxu0 %v6103
  %8080 = vmatprep.subr.bf16.mxu0 %v6106
  %8081 = vmatpush1.bf16.msra.mxu0 %v6105
  %8082 = vmatprep.subr.bf16.mxu0 %v6108
  %8083 = vmatpush1.bf16.msra.mxu0 %v6107
  %8084 = vmatprep.mubr.bf16.mxu0 %v5200
  %8085 = vmatmul.mubr.bf16.gmra.mrb[0].mxu0 %v5184
  %v8086 = vpop.f32.mrb[0].mxu0
  %v8087 = vadd.f32 %v8046, %v8086
  %v8088 = vpop.f32.mrb[0].mxu0
  %v8089 = vadd.f32 %v8048, %v8088
  %v8090 = vpop.f32.mrb[0].mxu0
  %v8091 = vpop.f32.mrb[0].mxu0
  %8092 = vdwg.mxu0
  %8093 = vmatprep.subr.bf16.mxu0 %v6110
  %8094 = vmatpush1.bf16.msra.mxu0 %v6109
  %8095 = vmatprep.subr.bf16.mxu0 %v6112
  %8096 = vmatpush1.bf16.msra.mxu0 %v6111
  %8097 = vmatprep.subr.bf16.mxu0 %v6114
  %8098 = vmatpush1.bf16.msra.mxu0 %v6113
  %8099 = vmatprep.subr.bf16.mxu0 %v6116
  %8100 = vmatpush1.bf16.msra.mxu0 %v6115
  %8101 = vmatprep.subr.bf16.mxu0 %v6118
  %8102 = vmatpush1.bf16.msra.mxu0 %v6117
  %8103 = vmatprep.subr.bf16.mxu0 %v6120
  %8104 = vmatpush1.bf16.msra.mxu0 %v6119
  %8105 = vmatprep.subr.bf16.mxu0 %v6122
  %8106 = vmatpush1.bf16.msra.mxu0 %v6121
  %8107 = vmatprep.subr.bf16.mxu0 %v6124
  %8108 = vmatpush1.bf16.msra.mxu0 %v6123
  %8109 = vmatprep.subr.bf16.mxu0 %v6126
  %8110 = vmatpush1.bf16.msra.mxu0 %v6125
  %8111 = vmatprep.subr.bf16.mxu0 %v6128
  %8112 = vmatpush1.bf16.msra.mxu0 %v6127
  %8113 = vmatprep.subr.bf16.mxu0 %v6130
  %8114 = vmatpush1.bf16.msra.mxu0 %v6129
  %8115 = vmatprep.subr.bf16.mxu0 %v6132
  %8116 = vmatpush1.bf16.msra.mxu0 %v6131
  %8117 = vmatprep.subr.bf16.mxu0 %v6134
  %8118 = vmatpush1.bf16.msra.mxu0 %v6133
  %8119 = vmatprep.subr.bf16.mxu0 %v6136
  %8120 = vmatpush1.bf16.msra.mxu0 %v6135
  %8121 = vmatprep.subr.bf16.mxu0 %v6138
  %8122 = vmatpush1.bf16.msra.mxu0 %v6137
  %8123 = vmatprep.subr.bf16.mxu0 %v6140
  %8124 = vmatpush1.bf16.msra.mxu0 %v6139
  %8125 = vmatprep.mubr.bf16.mxu0 %v7823
  %8126 = vmatmul.mubr.bf16.gmra.mrb[0].mxu0 %v7807
  %v8127 = vpop.f32.mrb[0].mxu0
  %v8128 = vadd.f32 %v8087, %v8127
  %v8129 = vpop.f32.mrb[0].mxu0
  %v8130 = vadd.f32 %v8089, %v8129
  %v8131 = vpop.f32.mrb[0].mxu0
  %v8132 = vpop.f32.mrb[0].mxu0
  %8133 = vdwg.mxu0
  %8134 = vmatprep.subr.bf16.mxu0 %v6142
  %8135 = vmatpush1.bf16.msra.mxu0 %v6141
  %8136 = vmatprep.subr.bf16.mxu0 %v6144
  %8137 = vmatpush1.bf16.msra.mxu0 %v6143
  %8138 = vmatprep.subr.bf16.mxu0 %v6146
  %8139 = vmatpush1.bf16.msra.mxu0 %v6145
  %8140 = vmatprep.subr.bf16.mxu0 %v6148
  %8141 = vmatpush1.bf16.msra.mxu0 %v6147
  %8142 = vmatprep.subr.bf16.mxu0 %v6150
  %8143 = vmatpush1.bf16.msra.mxu0 %v6149
  %8144 = vmatprep.subr.bf16.mxu0 %v6152
  %8145 = vmatpush1.bf16.msra.mxu0 %v6151
  %8146 = vmatprep.subr.bf16.mxu0 %v6154
  %8147 = vmatpush1.bf16.msra.mxu0 %v6153
  %8148 = vmatprep.subr.bf16.mxu0 %v6156
  %8149 = vmatpush1.bf16.msra.mxu0 %v6155
  %8150 = vmatprep.subr.bf16.mxu0 %v6158
  %8151 = vmatpush1.bf16.msra.mxu0 %v6157
  %8152 = vmatprep.subr.bf16.mxu0 %v6160
  %8153 = vmatpush1.bf16.msra.mxu0 %v6159
  %8154 = vmatprep.subr.bf16.mxu0 %v6162
  %8155 = vmatpush1.bf16.msra.mxu0 %v6161
  %8156 = vmatprep.subr.bf16.mxu0 %v6164
  %8157 = vmatpush1.bf16.msra.mxu0 %v6163
  %8158 = vmatprep.subr.bf16.mxu0 %v6166
  %8159 = vmatpush1.bf16.msra.mxu0 %v6165
  %8160 = vmatprep.subr.bf16.mxu0 %v6168
  %8161 = vmatpush1.bf16.msra.mxu0 %v6167
  %8162 = vmatprep.subr.bf16.mxu0 %v6170
  %8163 = vmatpush1.bf16.msra.mxu0 %v6169
  %8164 = vmatprep.subr.bf16.mxu0 %v6172
  %8165 = vmatpush1.bf16.msra.mxu0 %v6171
  %8166 = vmatprep.mubr.bf16.mxu0 %v7855
  %8167 = vmatmul.mubr.bf16.gmra.mrb[0].mxu0 %v7839
  %v8168 = vpop.f32.mrb[0].mxu0
  %v8169 = vadd.f32 %v8128, %v8168
  %v8170 = vpop.f32.mrb[0].mxu0
  %v8171 = vadd.f32 %v8130, %v8170
  %v8172 = vpop.f32.mrb[0].mxu0
  %v8173 = vpop.f32.mrb[0].mxu0
  %8174 = vdwg.mxu0
  %8175 = vmatprep.subr.bf16.mxu0 %v6174
  %8176 = vmatpush1.bf16.msra.mxu0 %v6173
  %8177 = vmatprep.subr.bf16.mxu0 %v6176
  %8178 = vmatpush1.bf16.msra.mxu0 %v6175
  %8179 = vmatprep.subr.bf16.mxu0 %v6178
  %8180 = vmatpush1.bf16.msra.mxu0 %v6177
  %8181 = vmatprep.subr.bf16.mxu0 %v6180
  %8182 = vmatpush1.bf16.msra.mxu0 %v6179
  %8183 = vmatprep.subr.bf16.mxu0 %v6182
  %8184 = vmatpush1.bf16.msra.mxu0 %v6181
  %8185 = vmatprep.subr.bf16.mxu0 %v6184
  %8186 = vmatpush1.bf16.msra.mxu0 %v6183
  %8187 = vmatprep.subr.bf16.mxu0 %v6186
  %8188 = vmatpush1.bf16.msra.mxu0 %v6185
  %8189 = vmatprep.subr.bf16.mxu0 %v6188
  %8190 = vmatpush1.bf16.msra.mxu0 %v6187
  %8191 = vmatprep.subr.bf16.mxu0 %v6190
  %8192 = vmatpush1.bf16.msra.mxu0 %v6189
  %8193 = vmatprep.subr.bf16.mxu0 %v6192
  %8194 = vmatpush1.bf16.msra.mxu0 %v6191
  %8195 = vmatprep.subr.bf16.mxu0 %v6194
  %8196 = vmatpush1.bf16.msra.mxu0 %v6193
  %8197 = vmatprep.subr.bf16.mxu0 %v6196
  %8198 = vmatpush1.bf16.msra.mxu0 %v6195
  %8199 = vmatprep.subr.bf16.mxu0 %v6198
  %8200 = vmatpush1.bf16.msra.mxu0 %v6197
  %8201 = vmatprep.subr.bf16.mxu0 %v6200
  %8202 = vmatpush1.bf16.msra.mxu0 %v6199
  %8203 = vmatprep.subr.bf16.mxu0 %v6202
  %8204 = vmatpush1.bf16.msra.mxu0 %v6201
  %8205 = vmatprep.subr.bf16.mxu0 %v6204
  %8206 = vmatpush1.bf16.msra.mxu0 %v6203
  %8207 = vmatprep.mubr.bf16.mxu0 %v7895
  %8208 = vmatmul.mubr.bf16.gmra.mrb[0].mxu0 %v7879
  %v8209 = vpop.f32.mrb[0].mxu0
  %v8210 = vadd.f32 %v8169, %v8209
  %v8211 = vpop.f32.mrb[0].mxu0
  %v8212 = vadd.f32 %v8171, %v8211
  %v8213 = vpop.f32.mrb[0].mxu0
  %v8214 = vpop.f32.mrb[0].mxu0
  %8215 = vdwg.mxu0
  %8216 = vmatprep.subr.bf16.mxu0 %v6206
  %8217 = vmatpush1.bf16.msra.mxu0 %v6205
  %8218 = vmatprep.subr.bf16.mxu0 %v6208
  %8219 = vmatpush1.bf16.msra.mxu0 %v6207
  %8220 = vmatprep.subr.bf16.mxu0 %v6210
  %8221 = vmatpush1.bf16.msra.mxu0 %v6209
  %8222 = vmatprep.subr.bf16.mxu0 %v6212
  %8223 = vmatpush1.bf16.msra.mxu0 %v6211
  %8224 = vmatprep.subr.bf16.mxu0 %v6214
  %8225 = vmatpush1.bf16.msra.mxu0 %v6213
  %8226 = vmatprep.subr.bf16.mxu0 %v6216
  %8227 = vmatpush1.bf16.msra.mxu0 %v6215
  %8228 = vmatprep.subr.bf16.mxu0 %v6218
  %8229 = vmatpush1.bf16.msra.mxu0 %v6217
  %8230 = vmatprep.subr.bf16.mxu0 %v6220
  %8231 = vmatpush1.bf16.msra.mxu0 %v6219
  %8232 = vmatprep.subr.bf16.mxu0 %v6222
  %8233 = vmatpush1.bf16.msra.mxu0 %v6221
  %8234 = vmatprep.subr.bf16.mxu0 %v6224
  %8235 = vmatpush1.bf16.msra.mxu0 %v6223
  %8236 = vmatprep.subr.bf16.mxu0 %v6226
  %8237 = vmatpush1.bf16.msra.mxu0 %v6225
  %8238 = vmatprep.subr.bf16.mxu0 %v6228
  %8239 = vmatpush1.bf16.msra.mxu0 %v6227
  %8240 = vmatprep.subr.bf16.mxu0 %v6230
  %8241 = vmatpush1.bf16.msra.mxu0 %v6229
  %8242 = vmatprep.subr.bf16.mxu0 %v6232
  %8243 = vmatpush1.bf16.msra.mxu0 %v6231
  %8244 = vmatprep.subr.bf16.mxu0 %v6234
  %8245 = vmatpush1.bf16.msra.mxu0 %v6233
  %8246 = vmatprep.subr.bf16.mxu0 %v6236
  %8247 = vmatpush1.bf16.msra.mxu0 %v6235
  %8248 = vmatprep.mubr.bf16.mxu0 %v7927
  %8249 = vmatmul.mubr.bf16.gmra.mrb[0].mxu0 %v7911
  %v8250 = vpop.f32.mrb[0].mxu0
  %v8251 = vadd.f32 %v8210, %v8250
  %v8252 = vpop.f32.mrb[0].mxu0
  %v8253 = vadd.f32 %v8212, %v8252
  %v8254 = vpop.f32.mrb[0].mxu0
  %v8255 = vpop.f32.mrb[0].mxu0
  %8256 = vdwg.mxu0
  %v8257 = vmax.f32 %v8251, 0.0
  %v8258 = vmax.f32 %v8253, 0.0
  %v8259 = vpack.c.bf16 %v8257, %v8257
  %v8260 = vpack.c.bf16 %v8258, %v8258
  %v8261 = vsel %vm4914, %v7793, %v7785
  %v8262 = vsel %vm4917, %v7795, %v8261
  %v8263 = vsel %vm4920, %v7797, %v8262
  %v8264 = vsel %vm4923, %v7799, %v8263
  %v8265 = vsel %vm4926, %v7801, %v8264
  %v8266 = vsel %vm4908, %v7805, %v7803
  %v8267 = vpack.c.b16 %v8266, %v8265
  %v8268 = vsel %vm4914, %v7786, %v7809
  %v8269 = vsel %vm4917, %v7811, %v8268
  %v8270 = vsel %vm4920, %v7813, %v8269
  %v8271 = vsel %vm4923, %v7815, %v8270
  %v8272 = vsel %vm4926, %v7817, %v8271
  %v8273 = vsel %vm4908, %v7821, %v7819
  %v8274 = vpack.c.b16 %v8273, %v8272
  %v8275 = vsel %vm4914, %v7826, %v7825
  %v8276 = vsel %vm4917, %v7787, %v8275
  %v8277 = vsel %vm4920, %v7829, %v8276
  %v8278 = vsel %vm4923, %v7831, %v8277
  %v8279 = vsel %vm4926, %v7833, %v8278
  %v8280 = vsel %vm4908, %v7837, %v7835
  %v8281 = vpack.c.b16 %v8280, %v8279
  %v8282 = vsel %vm4914, %v7842, %v7841
  %v8283 = vsel %vm4917, %v7844, %v8282
  %v8284 = vsel %vm4920, %v7788, %v8283
  %v8285 = vsel %vm4923, %v7847, %v8284
  %v8286 = vsel %vm4926, %v7849, %v8285
  %v8287 = vsel %vm4908, %v7853, %v7851
  %v8288 = vpack.c.b16 %v8287, %v8286
  %v8289 = vsel %vm4914, %v7865, %v7857
  %v8290 = vsel %vm4917, %v7867, %v8289
  %v8291 = vsel %vm4920, %v7869, %v8290
  %v8292 = vsel %vm4923, %v7871, %v8291
  %v8293 = vsel %vm4926, %v7873, %v8292
  %v8294 = vsel %vm4908, %v7877, %v7875
  %v8295 = vpack.c.b16 %v8294, %v8293
  %v8296 = vsel %vm4914, %v7858, %v7881
  %v8297 = vsel %vm4917, %v7883, %v8296
  %v8298 = vsel %vm4920, %v7885, %v8297
  %v8299 = vsel %vm4923, %v7887, %v8298
  %v8300 = vsel %vm4926, %v7889, %v8299
  %v8301 = vsel %vm4908, %v7893, %v7891
  %v8302 = vpack.c.b16 %v8301, %v8300
  %v8303 = vsel %vm4914, %v7898, %v7897
  %v8304 = vsel %vm4917, %v7859, %v8303
  %v8305 = vsel %vm4920, %v7901, %v8304
  %v8306 = vsel %vm4923, %v7903, %v8305
  %v8307 = vsel %vm4926, %v7905, %v8306
  %v8308 = vsel %vm4908, %v7909, %v7907
  %v8309 = vpack.c.b16 %v8308, %v8307
  %v8310 = vsel %vm4914, %v7914, %v7913
  %v8311 = vsel %vm4917, %v7916, %v8310
  %v8312 = vsel %vm4920, %v7860, %v8311
  %v8313 = vsel %vm4923, %v7919, %v8312
  %v8314 = vsel %vm4926, %v7921, %v8313
  %v8315 = vsel %vm4908, %v7925, %v7923
  %v8316 = vpack.c.b16 %v8315, %v8314
  %v8317 = vrot.slane %v8267, 1
  %v8318 = vrot.slane %v8274, 1
  %v8319 = vrot.slane %v8281, 1
  %v8320 = vrot.slane %v8288, 1
  %v8321 = vrot.slane %v8295, 1
  %v8322 = vrot.slane %v8302, 1
  %v8323 = vrot.slane %v8309, 1
  %v8324 = vrot.slane %v8316, 1
  %8333 = vmatprep.subr.bf16.mxu0 %v5982
  %8334 = vmatpush1.bf16.msra.mxu0 %v5981
  %8335 = vmatprep.subr.bf16.mxu0 %v5984
  %8336 = vmatpush1.bf16.msra.mxu0 %v5983
  %8337 = vmatprep.subr.bf16.mxu0 %v5986
  %8338 = vmatpush1.bf16.msra.mxu0 %v5985
  %8339 = vmatprep.subr.bf16.mxu0 %v5988
  %8340 = vmatpush1.bf16.msra.mxu0 %v5987
  %8341 = vmatprep.subr.bf16.mxu0 %v5990
  %8342 = vmatpush1.bf16.msra.mxu0 %v5989
  %8343 = vmatprep.subr.bf16.mxu0 %v5992
  %8344 = vmatpush1.bf16.msra.mxu0 %v5991
  %8345 = vmatprep.subr.bf16.mxu0 %v5994
  %8346 = vmatpush1.bf16.msra.mxu0 %v5993
  %8347 = vmatprep.subr.bf16.mxu0 %v5996
  %8348 = vmatpush1.bf16.msra.mxu0 %v5995
  %8349 = vmatprep.subr.bf16.mxu0 %v5998
  %8350 = vmatpush1.bf16.msra.mxu0 %v5997
  %8351 = vmatprep.subr.bf16.mxu0 %v6000
  %8352 = vmatpush1.bf16.msra.mxu0 %v5999
  %8353 = vmatprep.subr.bf16.mxu0 %v6002
  %8354 = vmatpush1.bf16.msra.mxu0 %v6001
  %8355 = vmatprep.subr.bf16.mxu0 %v6004
  %8356 = vmatpush1.bf16.msra.mxu0 %v6003
  %8357 = vmatprep.subr.bf16.mxu0 %v6006
  %8358 = vmatpush1.bf16.msra.mxu0 %v6005
  %8359 = vmatprep.subr.bf16.mxu0 %v6008
  %8360 = vmatpush1.bf16.msra.mxu0 %v6007
  %8361 = vmatprep.subr.bf16.mxu0 %v6010
  %8362 = vmatpush1.bf16.msra.mxu0 %v6009
  %8363 = vmatprep.subr.bf16.mxu0 %v6012
  %8364 = vmatpush1.bf16.msra.mxu0 %v6011
  %8365 = vmatprep.mubr.bf16.mxu0 %v6946
  %8366 = vmatmul.mubr.bf16.gmra.mrb[0].mxu0 %v6945
  %v8367 = vpop.f32.mrb[0].mxu0
  %v8368 = vadd.f32 %v5206, %v8367
  %v8369 = vpop.f32.mrb[0].mxu0
  %v8370 = vadd.f32 %v5210, %v8369
  %v8371 = vpop.f32.mrb[0].mxu0
  %v8372 = vpop.f32.mrb[0].mxu0
  %8373 = vdwg.mxu0
  %8374 = vmatprep.subr.bf16.mxu0 %v6014
  %8375 = vmatpush1.bf16.msra.mxu0 %v6013
  %8376 = vmatprep.subr.bf16.mxu0 %v6016
  %8377 = vmatpush1.bf16.msra.mxu0 %v6015
  %8378 = vmatprep.subr.bf16.mxu0 %v6018
  %8379 = vmatpush1.bf16.msra.mxu0 %v6017
  %8380 = vmatprep.subr.bf16.mxu0 %v6020
  %8381 = vmatpush1.bf16.msra.mxu0 %v6019
  %8382 = vmatprep.subr.bf16.mxu0 %v6022
  %8383 = vmatpush1.bf16.msra.mxu0 %v6021
  %8384 = vmatprep.subr.bf16.mxu0 %v6024
  %8385 = vmatpush1.bf16.msra.mxu0 %v6023
  %8386 = vmatprep.subr.bf16.mxu0 %v6026
  %8387 = vmatpush1.bf16.msra.mxu0 %v6025
  %8388 = vmatprep.subr.bf16.mxu0 %v6028
  %8389 = vmatpush1.bf16.msra.mxu0 %v6027
  %8390 = vmatprep.subr.bf16.mxu0 %v6030
  %8391 = vmatpush1.bf16.msra.mxu0 %v6029
  %8392 = vmatprep.subr.bf16.mxu0 %v6032
  %8393 = vmatpush1.bf16.msra.mxu0 %v6031
  %8394 = vmatprep.subr.bf16.mxu0 %v6034
  %8395 = vmatpush1.bf16.msra.mxu0 %v6033
  %8396 = vmatprep.subr.bf16.mxu0 %v6036
  %8397 = vmatpush1.bf16.msra.mxu0 %v6035
  %8398 = vmatprep.subr.bf16.mxu0 %v6038
  %8399 = vmatpush1.bf16.msra.mxu0 %v6037
  %8400 = vmatprep.subr.bf16.mxu0 %v6040
  %8401 = vmatpush1.bf16.msra.mxu0 %v6039
  %8402 = vmatprep.subr.bf16.mxu0 %v6042
  %8403 = vmatpush1.bf16.msra.mxu0 %v6041
  %8404 = vmatprep.subr.bf16.mxu0 %v6044
  %8405 = vmatpush1.bf16.msra.mxu0 %v6043
  %8406 = vmatprep.mubr.bf16.mxu0 %v6948
  %8407 = vmatmul.mubr.bf16.gmra.mrb[0].mxu0 %v6947
  %v8408 = vpop.f32.mrb[0].mxu0
  %v8409 = vadd.f32 %v8368, %v8408
  %v8410 = vpop.f32.mrb[0].mxu0
  %v8411 = vadd.f32 %v8370, %v8410
  %v8412 = vpop.f32.mrb[0].mxu0
  %v8413 = vpop.f32.mrb[0].mxu0
  %8414 = vdwg.mxu0
  %8415 = vmatprep.subr.bf16.mxu0 %v6046
  %8416 = vmatpush1.bf16.msra.mxu0 %v6045
  %8417 = vmatprep.subr.bf16.mxu0 %v6048
  %8418 = vmatpush1.bf16.msra.mxu0 %v6047
  %8419 = vmatprep.subr.bf16.mxu0 %v6050
  %8420 = vmatpush1.bf16.msra.mxu0 %v6049
  %8421 = vmatprep.subr.bf16.mxu0 %v6052
  %8422 = vmatpush1.bf16.msra.mxu0 %v6051
  %8423 = vmatprep.subr.bf16.mxu0 %v6054
  %8424 = vmatpush1.bf16.msra.mxu0 %v6053
  %8425 = vmatprep.subr.bf16.mxu0 %v6056
  %8426 = vmatpush1.bf16.msra.mxu0 %v6055
  %8427 = vmatprep.subr.bf16.mxu0 %v6058
  %8428 = vmatpush1.bf16.msra.mxu0 %v6057
  %8429 = vmatprep.subr.bf16.mxu0 %v6060
  %8430 = vmatpush1.bf16.msra.mxu0 %v6059
  %8431 = vmatprep.subr.bf16.mxu0 %v6062
  %8432 = vmatpush1.bf16.msra.mxu0 %v6061
  %8433 = vmatprep.subr.bf16.mxu0 %v6064
  %8434 = vmatpush1.bf16.msra.mxu0 %v6063
  %8435 = vmatprep.subr.bf16.mxu0 %v6066
  %8436 = vmatpush1.bf16.msra.mxu0 %v6065
  %8437 = vmatprep.subr.bf16.mxu0 %v6068
  %8438 = vmatpush1.bf16.msra.mxu0 %v6067
  %8439 = vmatprep.subr.bf16.mxu0 %v6070
  %8440 = vmatpush1.bf16.msra.mxu0 %v6069
  %8441 = vmatprep.subr.bf16.mxu0 %v6072
  %8442 = vmatpush1.bf16.msra.mxu0 %v6071
  %8443 = vmatprep.subr.bf16.mxu0 %v6074
  %8444 = vmatpush1.bf16.msra.mxu0 %v6073
  %8445 = vmatprep.subr.bf16.mxu0 %v6076
  %8446 = vmatpush1.bf16.msra.mxu0 %v6075
  %8447 = vmatprep.mubr.bf16.mxu0 %v6950
  %8448 = vmatmul.mubr.bf16.gmra.mrb[0].mxu0 %v6949
  %v8449 = vpop.f32.mrb[0].mxu0
  %v8450 = vadd.f32 %v8409, %v8449
  %v8451 = vpop.f32.mrb[0].mxu0
  %v8452 = vadd.f32 %v8411, %v8451
  %v8453 = vpop.f32.mrb[0].mxu0
  %v8454 = vpop.f32.mrb[0].mxu0
  %8455 = vdwg.mxu0
  %8456 = vmatprep.subr.bf16.mxu0 %v6078
  %8457 = vmatpush1.bf16.msra.mxu0 %v6077
  %8458 = vmatprep.subr.bf16.mxu0 %v6080
  %8459 = vmatpush1.bf16.msra.mxu0 %v6079
  %8460 = vmatprep.subr.bf16.mxu0 %v6082
  %8461 = vmatpush1.bf16.msra.mxu0 %v6081
  %8462 = vmatprep.subr.bf16.mxu0 %v6084
  %8463 = vmatpush1.bf16.msra.mxu0 %v6083
  %8464 = vmatprep.subr.bf16.mxu0 %v6086
  %8465 = vmatpush1.bf16.msra.mxu0 %v6085
  %8466 = vmatprep.subr.bf16.mxu0 %v6088
  %8467 = vmatpush1.bf16.msra.mxu0 %v6087
  %8468 = vmatprep.subr.bf16.mxu0 %v6090
  %8469 = vmatpush1.bf16.msra.mxu0 %v6089
  %8470 = vmatprep.subr.bf16.mxu0 %v6092
  %8471 = vmatpush1.bf16.msra.mxu0 %v6091
  %8472 = vmatprep.subr.bf16.mxu0 %v6094
  %8473 = vmatpush1.bf16.msra.mxu0 %v6093
  %8474 = vmatprep.subr.bf16.mxu0 %v6096
  %8475 = vmatpush1.bf16.msra.mxu0 %v6095
  %8476 = vmatprep.subr.bf16.mxu0 %v6098
  %8477 = vmatpush1.bf16.msra.mxu0 %v6097
  %8478 = vmatprep.subr.bf16.mxu0 %v6100
  %8479 = vmatpush1.bf16.msra.mxu0 %v6099
  %8480 = vmatprep.subr.bf16.mxu0 %v6102
  %8481 = vmatpush1.bf16.msra.mxu0 %v6101
  %8482 = vmatprep.subr.bf16.mxu0 %v6104
  %8483 = vmatpush1.bf16.msra.mxu0 %v6103
  %8484 = vmatprep.subr.bf16.mxu0 %v6106
  %8485 = vmatpush1.bf16.msra.mxu0 %v6105
  %8486 = vmatprep.subr.bf16.mxu0 %v6108
  %8487 = vmatpush1.bf16.msra.mxu0 %v6107
  %8488 = vmatprep.mubr.bf16.mxu0 %v6952
  %8489 = vmatmul.mubr.bf16.gmra.mrb[0].mxu0 %v6951
  %v8490 = vpop.f32.mrb[0].mxu0
  %v8491 = vadd.f32 %v8450, %v8490
  %v8492 = vpop.f32.mrb[0].mxu0
  %v8493 = vadd.f32 %v8452, %v8492
  %v8494 = vpop.f32.mrb[0].mxu0
  %v8495 = vpop.f32.mrb[0].mxu0
  %8496 = vdwg.mxu0
  %8497 = vmatprep.subr.bf16.mxu0 %v6110
  %8498 = vmatpush1.bf16.msra.mxu0 %v6109
  %8499 = vmatprep.subr.bf16.mxu0 %v6112
  %8500 = vmatpush1.bf16.msra.mxu0 %v6111
  %8501 = vmatprep.subr.bf16.mxu0 %v6114
  %8502 = vmatpush1.bf16.msra.mxu0 %v6113
  %8503 = vmatprep.subr.bf16.mxu0 %v6116
  %8504 = vmatpush1.bf16.msra.mxu0 %v6115
  %8505 = vmatprep.subr.bf16.mxu0 %v6118
  %8506 = vmatpush1.bf16.msra.mxu0 %v6117
  %8507 = vmatprep.subr.bf16.mxu0 %v6120
  %8508 = vmatpush1.bf16.msra.mxu0 %v6119
  %8509 = vmatprep.subr.bf16.mxu0 %v6122
  %8510 = vmatpush1.bf16.msra.mxu0 %v6121
  %8511 = vmatprep.subr.bf16.mxu0 %v6124
  %8512 = vmatpush1.bf16.msra.mxu0 %v6123
  %8513 = vmatprep.subr.bf16.mxu0 %v6126
  %8514 = vmatpush1.bf16.msra.mxu0 %v6125
  %8515 = vmatprep.subr.bf16.mxu0 %v6128
  %8516 = vmatpush1.bf16.msra.mxu0 %v6127
  %8517 = vmatprep.subr.bf16.mxu0 %v6130
  %8518 = vmatpush1.bf16.msra.mxu0 %v6129
  %8519 = vmatprep.subr.bf16.mxu0 %v6132
  %8520 = vmatpush1.bf16.msra.mxu0 %v6131
  %8521 = vmatprep.subr.bf16.mxu0 %v6134
  %8522 = vmatpush1.bf16.msra.mxu0 %v6133
  %8523 = vmatprep.subr.bf16.mxu0 %v6136
  %8524 = vmatpush1.bf16.msra.mxu0 %v6135
  %8525 = vmatprep.subr.bf16.mxu0 %v6138
  %8526 = vmatpush1.bf16.msra.mxu0 %v6137
  %8527 = vmatprep.subr.bf16.mxu0 %v6140
  %8528 = vmatpush1.bf16.msra.mxu0 %v6139
  %8529 = vmatprep.mubr.bf16.mxu0 %v8318
  %8530 = vmatmul.mubr.bf16.gmra.mrb[0].mxu0 %v8317
  %v8531 = vpop.f32.mrb[0].mxu0
  %v8532 = vadd.f32 %v8491, %v8531
  %v8533 = vpop.f32.mrb[0].mxu0
  %v8534 = vadd.f32 %v8493, %v8533
  %v8535 = vpop.f32.mrb[0].mxu0
  %v8536 = vpop.f32.mrb[0].mxu0
  %8537 = vdwg.mxu0
  %8538 = vmatprep.subr.bf16.mxu0 %v6142
  %8539 = vmatpush1.bf16.msra.mxu0 %v6141
  %8540 = vmatprep.subr.bf16.mxu0 %v6144
  %8541 = vmatpush1.bf16.msra.mxu0 %v6143
  %8542 = vmatprep.subr.bf16.mxu0 %v6146
  %8543 = vmatpush1.bf16.msra.mxu0 %v6145
  %8544 = vmatprep.subr.bf16.mxu0 %v6148
  %8545 = vmatpush1.bf16.msra.mxu0 %v6147
  %8546 = vmatprep.subr.bf16.mxu0 %v6150
  %8547 = vmatpush1.bf16.msra.mxu0 %v6149
  %8548 = vmatprep.subr.bf16.mxu0 %v6152
  %8549 = vmatpush1.bf16.msra.mxu0 %v6151
  %8550 = vmatprep.subr.bf16.mxu0 %v6154
  %8551 = vmatpush1.bf16.msra.mxu0 %v6153
  %8552 = vmatprep.subr.bf16.mxu0 %v6156
  %8553 = vmatpush1.bf16.msra.mxu0 %v6155
  %8554 = vmatprep.subr.bf16.mxu0 %v6158
  %8555 = vmatpush1.bf16.msra.mxu0 %v6157
  %8556 = vmatprep.subr.bf16.mxu0 %v6160
  %8557 = vmatpush1.bf16.msra.mxu0 %v6159
  %8558 = vmatprep.subr.bf16.mxu0 %v6162
  %8559 = vmatpush1.bf16.msra.mxu0 %v6161
  %8560 = vmatprep.subr.bf16.mxu0 %v6164
  %8561 = vmatpush1.bf16.msra.mxu0 %v6163
  %8562 = vmatprep.subr.bf16.mxu0 %v6166
  %8563 = vmatpush1.bf16.msra.mxu0 %v6165
  %8564 = vmatprep.subr.bf16.mxu0 %v6168
  %8565 = vmatpush1.bf16.msra.mxu0 %v6167
  %8566 = vmatprep.subr.bf16.mxu0 %v6170
  %8567 = vmatpush1.bf16.msra.mxu0 %v6169
  %8568 = vmatprep.subr.bf16.mxu0 %v6172
  %8569 = vmatpush1.bf16.msra.mxu0 %v6171
  %8570 = vmatprep.mubr.bf16.mxu0 %v8320
  %8571 = vmatmul.mubr.bf16.gmra.mrb[0].mxu0 %v8319
  %v8572 = vpop.f32.mrb[0].mxu0
  %v8573 = vadd.f32 %v8532, %v8572
  %v8574 = vpop.f32.mrb[0].mxu0
  %v8575 = vadd.f32 %v8534, %v8574
  %v8576 = vpop.f32.mrb[0].mxu0
  %v8577 = vpop.f32.mrb[0].mxu0
  %8578 = vdwg.mxu0
  %8579 = vmatprep.subr.bf16.mxu0 %v6174
  %8580 = vmatpush1.bf16.msra.mxu0 %v6173
  %8581 = vmatprep.subr.bf16.mxu0 %v6176
  %8582 = vmatpush1.bf16.msra.mxu0 %v6175
  %8583 = vmatprep.subr.bf16.mxu0 %v6178
  %8584 = vmatpush1.bf16.msra.mxu0 %v6177
  %8585 = vmatprep.subr.bf16.mxu0 %v6180
  %8586 = vmatpush1.bf16.msra.mxu0 %v6179
  %8587 = vmatprep.subr.bf16.mxu0 %v6182
  %8588 = vmatpush1.bf16.msra.mxu0 %v6181
  %8589 = vmatprep.subr.bf16.mxu0 %v6184
  %8590 = vmatpush1.bf16.msra.mxu0 %v6183
  %8591 = vmatprep.subr.bf16.mxu0 %v6186
  %8592 = vmatpush1.bf16.msra.mxu0 %v6185
  %8593 = vmatprep.subr.bf16.mxu0 %v6188
  %8594 = vmatpush1.bf16.msra.mxu0 %v6187
  %8595 = vmatprep.subr.bf16.mxu0 %v6190
  %8596 = vmatpush1.bf16.msra.mxu0 %v6189
  %8597 = vmatprep.subr.bf16.mxu0 %v6192
  %8598 = vmatpush1.bf16.msra.mxu0 %v6191
  %8599 = vmatprep.subr.bf16.mxu0 %v6194
  %8600 = vmatpush1.bf16.msra.mxu0 %v6193
  %8601 = vmatprep.subr.bf16.mxu0 %v6196
  %8602 = vmatpush1.bf16.msra.mxu0 %v6195
  %8603 = vmatprep.subr.bf16.mxu0 %v6198
  %8604 = vmatpush1.bf16.msra.mxu0 %v6197
  %8605 = vmatprep.subr.bf16.mxu0 %v6200
  %8606 = vmatpush1.bf16.msra.mxu0 %v6199
  %8607 = vmatprep.subr.bf16.mxu0 %v6202
  %8608 = vmatpush1.bf16.msra.mxu0 %v6201
  %8609 = vmatprep.subr.bf16.mxu0 %v6204
  %8610 = vmatpush1.bf16.msra.mxu0 %v6203
  %8611 = vmatprep.mubr.bf16.mxu0 %v8322
  %8612 = vmatmul.mubr.bf16.gmra.mrb[0].mxu0 %v8321
  %v8613 = vpop.f32.mrb[0].mxu0
  %v8614 = vadd.f32 %v8573, %v8613
  %v8615 = vpop.f32.mrb[0].mxu0
  %v8616 = vadd.f32 %v8575, %v8615
  %v8617 = vpop.f32.mrb[0].mxu0
  %v8618 = vpop.f32.mrb[0].mxu0
  %8619 = vdwg.mxu0
  %8620 = vmatprep.subr.bf16.mxu0 %v6206
  %8621 = vmatpush1.bf16.msra.mxu0 %v6205
  %8622 = vmatprep.subr.bf16.mxu0 %v6208
  %8623 = vmatpush1.bf16.msra.mxu0 %v6207
  %8624 = vmatprep.subr.bf16.mxu0 %v6210
  %8625 = vmatpush1.bf16.msra.mxu0 %v6209
  %8626 = vmatprep.subr.bf16.mxu0 %v6212
  %8627 = vmatpush1.bf16.msra.mxu0 %v6211
  %8628 = vmatprep.subr.bf16.mxu0 %v6214
  %8629 = vmatpush1.bf16.msra.mxu0 %v6213
  %8630 = vmatprep.subr.bf16.mxu0 %v6216
  %8631 = vmatpush1.bf16.msra.mxu0 %v6215
  %8632 = vmatprep.subr.bf16.mxu0 %v6218
  %8633 = vmatpush1.bf16.msra.mxu0 %v6217
  %8634 = vmatprep.subr.bf16.mxu0 %v6220
  %8635 = vmatpush1.bf16.msra.mxu0 %v6219
  %8636 = vmatprep.subr.bf16.mxu0 %v6222
  %8637 = vmatpush1.bf16.msra.mxu0 %v6221
  %8638 = vmatprep.subr.bf16.mxu0 %v6224
  %8639 = vmatpush1.bf16.msra.mxu0 %v6223
  %8640 = vmatprep.subr.bf16.mxu0 %v6226
  %8641 = vmatpush1.bf16.msra.mxu0 %v6225
  %8642 = vmatprep.subr.bf16.mxu0 %v6228
  %8643 = vmatpush1.bf16.msra.mxu0 %v6227
  %8644 = vmatprep.subr.bf16.mxu0 %v6230
  %8645 = vmatpush1.bf16.msra.mxu0 %v6229
  %8646 = vmatprep.subr.bf16.mxu0 %v6232
  %8647 = vmatpush1.bf16.msra.mxu0 %v6231
  %8648 = vmatprep.subr.bf16.mxu0 %v6234
  %8649 = vmatpush1.bf16.msra.mxu0 %v6233
  %8650 = vmatprep.subr.bf16.mxu0 %v6236
  %8651 = vmatpush1.bf16.msra.mxu0 %v6235
  %8652 = vmatprep.mubr.bf16.mxu0 %v8324
  %8653 = vmatmul.mubr.bf16.gmra.mrb[0].mxu0 %v8323
  %v8654 = vpop.f32.mrb[0].mxu0
  %v8655 = vadd.f32 %v8614, %v8654
  %v8656 = vpop.f32.mrb[0].mxu0
  %v8657 = vadd.f32 %v8616, %v8656
  %v8658 = vpop.f32.mrb[0].mxu0
  %v8659 = vpop.f32.mrb[0].mxu0
  %8660 = vdwg.mxu0
  %v8661 = vmax.f32 %v8655, 0.0
  %v8662 = vmax.f32 %v8657, 0.0
  %v8663 = vpack.c.bf16 %v8661, %v8661
  %v8664 = vpack.c.bf16 %v8662, %v8662
  %v8665 = vsel %vm4920, %v7793, %v7785
  %v8666 = vsel %vm4923, %v7795, %v8665
  %v8667 = vsel %vm4926, %v7797, %v8666
  %v8668 = vsel %vm4908, %v7801, %v7799
  %v8669 = vsel %vm4911, %v7803, %v8668
  %v8670 = vsel %vm4914, %v7805, %v8669
  %v8671 = vpack.c.b16 %v8670, %v8667
  %v8672 = vsel %vm4920, %v7786, %v7809
  %v8673 = vsel %vm4923, %v7811, %v8672
  %v8674 = vsel %vm4926, %v7813, %v8673
  %v8675 = vsel %vm4908, %v7817, %v7815
  %v8676 = vsel %vm4911, %v7819, %v8675
  %v8677 = vsel %vm4914, %v7821, %v8676
  %v8678 = vpack.c.b16 %v8677, %v8674
  %v8679 = vsel %vm4920, %v7826, %v7825
  %v8680 = vsel %vm4923, %v7787, %v8679
  %v8681 = vsel %vm4926, %v7829, %v8680
  %v8682 = vsel %vm4908, %v7833, %v7831
  %v8683 = vsel %vm4911, %v7835, %v8682
  %v8684 = vsel %vm4914, %v7837, %v8683
  %v8685 = vpack.c.b16 %v8684, %v8681
  %v8686 = vsel %vm4920, %v7842, %v7841
  %v8687 = vsel %vm4923, %v7844, %v8686
  %v8688 = vsel %vm4926, %v7788, %v8687
  %v8689 = vsel %vm4908, %v7849, %v7847
  %v8690 = vsel %vm4911, %v7851, %v8689
  %v8691 = vsel %vm4914, %v7853, %v8690
  %v8692 = vpack.c.b16 %v8691, %v8688
  %v8693 = vsel %vm4920, %v7865, %v7857
  %v8694 = vsel %vm4923, %v7867, %v8693
  %v8695 = vsel %vm4926, %v7869, %v8694
  %v8696 = vsel %vm4908, %v7873, %v7871
  %v8697 = vsel %vm4911, %v7875, %v8696
  %v8698 = vsel %vm4914, %v7877, %v8697
  %v8699 = vpack.c.b16 %v8698, %v8695
  %v8700 = vsel %vm4920, %v7858, %v7881
  %v8701 = vsel %vm4923, %v7883, %v8700
  %v8702 = vsel %vm4926, %v7885, %v8701
  %v8703 = vsel %vm4908, %v7889, %v7887
  %v8704 = vsel %vm4911, %v7891, %v8703
  %v8705 = vsel %vm4914, %v7893, %v8704
  %v8706 = vpack.c.b16 %v8705, %v8702
  %v8707 = vsel %vm4920, %v7898, %v7897
  %v8708 = vsel %vm4923, %v7859, %v8707
  %v8709 = vsel %vm4926, %v7901, %v8708
  %v8710 = vsel %vm4908, %v7905, %v7903
  %v8711 = vsel %vm4911, %v7907, %v8710
  %v8712 = vsel %vm4914, %v7909, %v8711
  %v8713 = vpack.c.b16 %v8712, %v8709
  %v8714 = vsel %vm4920, %v7914, %v7913
  %v8715 = vsel %vm4923, %v7916, %v8714
  %v8716 = vsel %vm4926, %v7860, %v8715
  %v8717 = vsel %vm4908, %v7921, %v7919
  %v8718 = vsel %vm4911, %v7923, %v8717
  %v8719 = vsel %vm4914, %v7925, %v8718
  %v8720 = vpack.c.b16 %v8719, %v8716
  %v8721 = vrot.slane %v8671, 2
  %v8722 = vrot.slane %v8678, 2
  %v8723 = vrot.slane %v8685, 2
  %v8724 = vrot.slane %v8692, 2
  %v8725 = vrot.slane %v8699, 2
  %v8726 = vrot.slane %v8706, 2
  %v8727 = vrot.slane %v8713, 2
  %v8728 = vrot.slane %v8720, 2
  %8737 = vmatprep.subr.bf16.mxu0 %v5982
  %8738 = vmatpush1.bf16.msra.mxu0 %v5981
  %8739 = vmatprep.subr.bf16.mxu0 %v5984
  %8740 = vmatpush1.bf16.msra.mxu0 %v5983
  %8741 = vmatprep.subr.bf16.mxu0 %v5986
  %8742 = vmatpush1.bf16.msra.mxu0 %v5985
  %8743 = vmatprep.subr.bf16.mxu0 %v5988
  %8744 = vmatpush1.bf16.msra.mxu0 %v5987
  %8745 = vmatprep.subr.bf16.mxu0 %v5990
  %8746 = vmatpush1.bf16.msra.mxu0 %v5989
  %8747 = vmatprep.subr.bf16.mxu0 %v5992
  %8748 = vmatpush1.bf16.msra.mxu0 %v5991
  %8749 = vmatprep.subr.bf16.mxu0 %v5994
  %8750 = vmatpush1.bf16.msra.mxu0 %v5993
  %8751 = vmatprep.subr.bf16.mxu0 %v5996
  %8752 = vmatpush1.bf16.msra.mxu0 %v5995
  %8753 = vmatprep.subr.bf16.mxu0 %v5998
  %8754 = vmatpush1.bf16.msra.mxu0 %v5997
  %8755 = vmatprep.subr.bf16.mxu0 %v6000
  %8756 = vmatpush1.bf16.msra.mxu0 %v5999
  %8757 = vmatprep.subr.bf16.mxu0 %v6002
  %8758 = vmatpush1.bf16.msra.mxu0 %v6001
  %8759 = vmatprep.subr.bf16.mxu0 %v6004
  %8760 = vmatpush1.bf16.msra.mxu0 %v6003
  %8761 = vmatprep.subr.bf16.mxu0 %v6006
  %8762 = vmatpush1.bf16.msra.mxu0 %v6005
  %8763 = vmatprep.subr.bf16.mxu0 %v6008
  %8764 = vmatpush1.bf16.msra.mxu0 %v6007
  %8765 = vmatprep.subr.bf16.mxu0 %v6010
  %8766 = vmatpush1.bf16.msra.mxu0 %v6009
  %8767 = vmatprep.subr.bf16.mxu0 %v6012
  %8768 = vmatpush1.bf16.msra.mxu0 %v6011
  %8769 = vmatprep.mubr.bf16.mxu0 %v7422
  %8770 = vmatmul.mubr.bf16.gmra.mrb[0].mxu0 %v7421
  %v8771 = vpop.f32.mrb[0].mxu0
  %v8772 = vadd.f32 %v5206, %v8771
  %v8773 = vpop.f32.mrb[0].mxu0
  %v8774 = vadd.f32 %v5210, %v8773
  %v8775 = vpop.f32.mrb[0].mxu0
  %v8776 = vpop.f32.mrb[0].mxu0
  %8777 = vdwg.mxu0
  %8778 = vmatprep.subr.bf16.mxu0 %v6014
  %8779 = vmatpush1.bf16.msra.mxu0 %v6013
  %8780 = vmatprep.subr.bf16.mxu0 %v6016
  %8781 = vmatpush1.bf16.msra.mxu0 %v6015
  %8782 = vmatprep.subr.bf16.mxu0 %v6018
  %8783 = vmatpush1.bf16.msra.mxu0 %v6017
  %8784 = vmatprep.subr.bf16.mxu0 %v6020
  %8785 = vmatpush1.bf16.msra.mxu0 %v6019
  %8786 = vmatprep.subr.bf16.mxu0 %v6022
  %8787 = vmatpush1.bf16.msra.mxu0 %v6021
  %8788 = vmatprep.subr.bf16.mxu0 %v6024
  %8789 = vmatpush1.bf16.msra.mxu0 %v6023
  %8790 = vmatprep.subr.bf16.mxu0 %v6026
  %8791 = vmatpush1.bf16.msra.mxu0 %v6025
  %8792 = vmatprep.subr.bf16.mxu0 %v6028
  %8793 = vmatpush1.bf16.msra.mxu0 %v6027
  %8794 = vmatprep.subr.bf16.mxu0 %v6030
  %8795 = vmatpush1.bf16.msra.mxu0 %v6029
  %8796 = vmatprep.subr.bf16.mxu0 %v6032
  %8797 = vmatpush1.bf16.msra.mxu0 %v6031
  %8798 = vmatprep.subr.bf16.mxu0 %v6034
  %8799 = vmatpush1.bf16.msra.mxu0 %v6033
  %8800 = vmatprep.subr.bf16.mxu0 %v6036
  %8801 = vmatpush1.bf16.msra.mxu0 %v6035
  %8802 = vmatprep.subr.bf16.mxu0 %v6038
  %8803 = vmatpush1.bf16.msra.mxu0 %v6037
  %8804 = vmatprep.subr.bf16.mxu0 %v6040
  %8805 = vmatpush1.bf16.msra.mxu0 %v6039
  %8806 = vmatprep.subr.bf16.mxu0 %v6042
  %8807 = vmatpush1.bf16.msra.mxu0 %v6041
  %8808 = vmatprep.subr.bf16.mxu0 %v6044
  %8809 = vmatpush1.bf16.msra.mxu0 %v6043
  %8810 = vmatprep.mubr.bf16.mxu0 %v7424
  %8811 = vmatmul.mubr.bf16.gmra.mrb[0].mxu0 %v7423
  %v8812 = vpop.f32.mrb[0].mxu0
  %v8813 = vadd.f32 %v8772, %v8812
  %v8814 = vpop.f32.mrb[0].mxu0
  %v8815 = vadd.f32 %v8774, %v8814
  %v8816 = vpop.f32.mrb[0].mxu0
  %v8817 = vpop.f32.mrb[0].mxu0
  %8818 = vdwg.mxu0
  %8819 = vmatprep.subr.bf16.mxu0 %v6046
  %8820 = vmatpush1.bf16.msra.mxu0 %v6045
  %8821 = vmatprep.subr.bf16.mxu0 %v6048
  %8822 = vmatpush1.bf16.msra.mxu0 %v6047
  %8823 = vmatprep.subr.bf16.mxu0 %v6050
  %8824 = vmatpush1.bf16.msra.mxu0 %v6049
  %8825 = vmatprep.subr.bf16.mxu0 %v6052
  %8826 = vmatpush1.bf16.msra.mxu0 %v6051
  %8827 = vmatprep.subr.bf16.mxu0 %v6054
  %8828 = vmatpush1.bf16.msra.mxu0 %v6053
  %8829 = vmatprep.subr.bf16.mxu0 %v6056
  %8830 = vmatpush1.bf16.msra.mxu0 %v6055
  %8831 = vmatprep.subr.bf16.mxu0 %v6058
  %8832 = vmatpush1.bf16.msra.mxu0 %v6057
  %8833 = vmatprep.subr.bf16.mxu0 %v6060
  %8834 = vmatpush1.bf16.msra.mxu0 %v6059
  %8835 = vmatprep.subr.bf16.mxu0 %v6062
  %8836 = vmatpush1.bf16.msra.mxu0 %v6061
  %8837 = vmatprep.subr.bf16.mxu0 %v6064
  %8838 = vmatpush1.bf16.msra.mxu0 %v6063
  %8839 = vmatprep.subr.bf16.mxu0 %v6066
  %8840 = vmatpush1.bf16.msra.mxu0 %v6065
  %8841 = vmatprep.subr.bf16.mxu0 %v6068
  %8842 = vmatpush1.bf16.msra.mxu0 %v6067
  %8843 = vmatprep.subr.bf16.mxu0 %v6070
  %8844 = vmatpush1.bf16.msra.mxu0 %v6069
  %8845 = vmatprep.subr.bf16.mxu0 %v6072
  %8846 = vmatpush1.bf16.msra.mxu0 %v6071
  %8847 = vmatprep.subr.bf16.mxu0 %v6074
  %8848 = vmatpush1.bf16.msra.mxu0 %v6073
  %8849 = vmatprep.subr.bf16.mxu0 %v6076
  %8850 = vmatpush1.bf16.msra.mxu0 %v6075
  %8851 = vmatprep.mubr.bf16.mxu0 %v7426
  %8852 = vmatmul.mubr.bf16.gmra.mrb[0].mxu0 %v7425
  %v8853 = vpop.f32.mrb[0].mxu0
  %v8854 = vadd.f32 %v8813, %v8853
  %v8855 = vpop.f32.mrb[0].mxu0
  %v8856 = vadd.f32 %v8815, %v8855
  %v8857 = vpop.f32.mrb[0].mxu0
  %v8858 = vpop.f32.mrb[0].mxu0
  %8859 = vdwg.mxu0
  %8860 = vmatprep.subr.bf16.mxu0 %v6078
  %8861 = vmatpush1.bf16.msra.mxu0 %v6077
  %8862 = vmatprep.subr.bf16.mxu0 %v6080
  %8863 = vmatpush1.bf16.msra.mxu0 %v6079
  %8864 = vmatprep.subr.bf16.mxu0 %v6082
  %8865 = vmatpush1.bf16.msra.mxu0 %v6081
  %8866 = vmatprep.subr.bf16.mxu0 %v6084
  %8867 = vmatpush1.bf16.msra.mxu0 %v6083
  %8868 = vmatprep.subr.bf16.mxu0 %v6086
  %8869 = vmatpush1.bf16.msra.mxu0 %v6085
  %8870 = vmatprep.subr.bf16.mxu0 %v6088
  %8871 = vmatpush1.bf16.msra.mxu0 %v6087
  %8872 = vmatprep.subr.bf16.mxu0 %v6090
  %8873 = vmatpush1.bf16.msra.mxu0 %v6089
  %8874 = vmatprep.subr.bf16.mxu0 %v6092
  %8875 = vmatpush1.bf16.msra.mxu0 %v6091
  %8876 = vmatprep.subr.bf16.mxu0 %v6094
  %8877 = vmatpush1.bf16.msra.mxu0 %v6093
  %8878 = vmatprep.subr.bf16.mxu0 %v6096
  %8879 = vmatpush1.bf16.msra.mxu0 %v6095
  %8880 = vmatprep.subr.bf16.mxu0 %v6098
  %8881 = vmatpush1.bf16.msra.mxu0 %v6097
  %8882 = vmatprep.subr.bf16.mxu0 %v6100
  %8883 = vmatpush1.bf16.msra.mxu0 %v6099
  %8884 = vmatprep.subr.bf16.mxu0 %v6102
  %8885 = vmatpush1.bf16.msra.mxu0 %v6101
  %8886 = vmatprep.subr.bf16.mxu0 %v6104
  %8887 = vmatpush1.bf16.msra.mxu0 %v6103
  %8888 = vmatprep.subr.bf16.mxu0 %v6106
  %8889 = vmatpush1.bf16.msra.mxu0 %v6105
  %8890 = vmatprep.subr.bf16.mxu0 %v6108
  %8891 = vmatpush1.bf16.msra.mxu0 %v6107
  %8892 = vmatprep.mubr.bf16.mxu0 %v7428
  %8893 = vmatmul.mubr.bf16.gmra.mrb[0].mxu0 %v7427
  %v8894 = vpop.f32.mrb[0].mxu0
  %v8895 = vadd.f32 %v8854, %v8894
  %v8896 = vpop.f32.mrb[0].mxu0
  %v8897 = vadd.f32 %v8856, %v8896
  %v8898 = vpop.f32.mrb[0].mxu0
  %v8899 = vpop.f32.mrb[0].mxu0
  %8900 = vdwg.mxu0
  %8901 = vmatprep.subr.bf16.mxu0 %v6110
  %8902 = vmatpush1.bf16.msra.mxu0 %v6109
  %8903 = vmatprep.subr.bf16.mxu0 %v6112
  %8904 = vmatpush1.bf16.msra.mxu0 %v6111
  %8905 = vmatprep.subr.bf16.mxu0 %v6114
  %8906 = vmatpush1.bf16.msra.mxu0 %v6113
  %8907 = vmatprep.subr.bf16.mxu0 %v6116
  %8908 = vmatpush1.bf16.msra.mxu0 %v6115
  %8909 = vmatprep.subr.bf16.mxu0 %v6118
  %8910 = vmatpush1.bf16.msra.mxu0 %v6117
  %8911 = vmatprep.subr.bf16.mxu0 %v6120
  %8912 = vmatpush1.bf16.msra.mxu0 %v6119
  %8913 = vmatprep.subr.bf16.mxu0 %v6122
  %8914 = vmatpush1.bf16.msra.mxu0 %v6121
  %8915 = vmatprep.subr.bf16.mxu0 %v6124
  %8916 = vmatpush1.bf16.msra.mxu0 %v6123
  %8917 = vmatprep.subr.bf16.mxu0 %v6126
  %8918 = vmatpush1.bf16.msra.mxu0 %v6125
  %8919 = vmatprep.subr.bf16.mxu0 %v6128
  %8920 = vmatpush1.bf16.msra.mxu0 %v6127
  %8921 = vmatprep.subr.bf16.mxu0 %v6130
  %8922 = vmatpush1.bf16.msra.mxu0 %v6129
  %8923 = vmatprep.subr.bf16.mxu0 %v6132
  %8924 = vmatpush1.bf16.msra.mxu0 %v6131
  %8925 = vmatprep.subr.bf16.mxu0 %v6134
  %8926 = vmatpush1.bf16.msra.mxu0 %v6133
  %8927 = vmatprep.subr.bf16.mxu0 %v6136
  %8928 = vmatpush1.bf16.msra.mxu0 %v6135
  %8929 = vmatprep.subr.bf16.mxu0 %v6138
  %8930 = vmatpush1.bf16.msra.mxu0 %v6137
  %8931 = vmatprep.subr.bf16.mxu0 %v6140
  %8932 = vmatpush1.bf16.msra.mxu0 %v6139
  %8933 = vmatprep.mubr.bf16.mxu0 %v8722
  %8934 = vmatmul.mubr.bf16.gmra.mrb[0].mxu0 %v8721
  %v8935 = vpop.f32.mrb[0].mxu0
  %v8936 = vadd.f32 %v8895, %v8935
  %v8937 = vpop.f32.mrb[0].mxu0
  %v8938 = vadd.f32 %v8897, %v8937
  %v8939 = vpop.f32.mrb[0].mxu0
  %v8940 = vpop.f32.mrb[0].mxu0
  %8941 = vdwg.mxu0
  %8942 = vmatprep.subr.bf16.mxu0 %v6142
  %8943 = vmatpush1.bf16.msra.mxu0 %v6141
  %8944 = vmatprep.subr.bf16.mxu0 %v6144
  %8945 = vmatpush1.bf16.msra.mxu0 %v6143
  %8946 = vmatprep.subr.bf16.mxu0 %v6146
  %8947 = vmatpush1.bf16.msra.mxu0 %v6145
  %8948 = vmatprep.subr.bf16.mxu0 %v6148
  %8949 = vmatpush1.bf16.msra.mxu0 %v6147
  %8950 = vmatprep.subr.bf16.mxu0 %v6150
  %8951 = vmatpush1.bf16.msra.mxu0 %v6149
  %8952 = vmatprep.subr.bf16.mxu0 %v6152
  %8953 = vmatpush1.bf16.msra.mxu0 %v6151
  %8954 = vmatprep.subr.bf16.mxu0 %v6154
  %8955 = vmatpush1.bf16.msra.mxu0 %v6153
  %8956 = vmatprep.subr.bf16.mxu0 %v6156
  %8957 = vmatpush1.bf16.msra.mxu0 %v6155
  %8958 = vmatprep.subr.bf16.mxu0 %v6158
  %8959 = vmatpush1.bf16.msra.mxu0 %v6157
  %8960 = vmatprep.subr.bf16.mxu0 %v6160
  %8961 = vmatpush1.bf16.msra.mxu0 %v6159
  %8962 = vmatprep.subr.bf16.mxu0 %v6162
  %8963 = vmatpush1.bf16.msra.mxu0 %v6161
  %8964 = vmatprep.subr.bf16.mxu0 %v6164
  %8965 = vmatpush1.bf16.msra.mxu0 %v6163
  %8966 = vmatprep.subr.bf16.mxu0 %v6166
  %8967 = vmatpush1.bf16.msra.mxu0 %v6165
  %8968 = vmatprep.subr.bf16.mxu0 %v6168
  %8969 = vmatpush1.bf16.msra.mxu0 %v6167
  %8970 = vmatprep.subr.bf16.mxu0 %v6170
  %8971 = vmatpush1.bf16.msra.mxu0 %v6169
  %8972 = vmatprep.subr.bf16.mxu0 %v6172
  %8973 = vmatpush1.bf16.msra.mxu0 %v6171
  %8974 = vmatprep.mubr.bf16.mxu0 %v8724
  %8975 = vmatmul.mubr.bf16.gmra.mrb[0].mxu0 %v8723
  %v8976 = vpop.f32.mrb[0].mxu0
  %v8977 = vadd.f32 %v8936, %v8976
  %v8978 = vpop.f32.mrb[0].mxu0
  %v8979 = vadd.f32 %v8938, %v8978
  %v8980 = vpop.f32.mrb[0].mxu0
  %v8981 = vpop.f32.mrb[0].mxu0
  %8982 = vdwg.mxu0
  %8983 = vmatprep.subr.bf16.mxu0 %v6174
  %8984 = vmatpush1.bf16.msra.mxu0 %v6173
  %8985 = vmatprep.subr.bf16.mxu0 %v6176
  %8986 = vmatpush1.bf16.msra.mxu0 %v6175
  %8987 = vmatprep.subr.bf16.mxu0 %v6178
  %8988 = vmatpush1.bf16.msra.mxu0 %v6177
  %8989 = vmatprep.subr.bf16.mxu0 %v6180
  %8990 = vmatpush1.bf16.msra.mxu0 %v6179
  %8991 = vmatprep.subr.bf16.mxu0 %v6182
  %8992 = vmatpush1.bf16.msra.mxu0 %v6181
  %8993 = vmatprep.subr.bf16.mxu0 %v6184
  %8994 = vmatpush1.bf16.msra.mxu0 %v6183
  %8995 = vmatprep.subr.bf16.mxu0 %v6186
  %8996 = vmatpush1.bf16.msra.mxu0 %v6185
  %8997 = vmatprep.subr.bf16.mxu0 %v6188
  %8998 = vmatpush1.bf16.msra.mxu0 %v6187
  %8999 = vmatprep.subr.bf16.mxu0 %v6190
  %9000 = vmatpush1.bf16.msra.mxu0 %v6189
  %9001 = vmatprep.subr.bf16.mxu0 %v6192
  %9002 = vmatpush1.bf16.msra.mxu0 %v6191
  %9003 = vmatprep.subr.bf16.mxu0 %v6194
  %9004 = vmatpush1.bf16.msra.mxu0 %v6193
  %9005 = vmatprep.subr.bf16.mxu0 %v6196
  %9006 = vmatpush1.bf16.msra.mxu0 %v6195
  %9007 = vmatprep.subr.bf16.mxu0 %v6198
  %9008 = vmatpush1.bf16.msra.mxu0 %v6197
  %9009 = vmatprep.subr.bf16.mxu0 %v6200
  %9010 = vmatpush1.bf16.msra.mxu0 %v6199
  %9011 = vmatprep.subr.bf16.mxu0 %v6202
  %9012 = vmatpush1.bf16.msra.mxu0 %v6201
  %9013 = vmatprep.subr.bf16.mxu0 %v6204
  %9014 = vmatpush1.bf16.msra.mxu0 %v6203
  %9015 = vmatprep.mubr.bf16.mxu0 %v8726
  %9016 = vmatmul.mubr.bf16.gmra.mrb[0].mxu0 %v8725
  %v9017 = vpop.f32.mrb[0].mxu0
  %v9018 = vadd.f32 %v8977, %v9017
  %v9019 = vpop.f32.mrb[0].mxu0
  %v9020 = vadd.f32 %v8979, %v9019
  %v9021 = vpop.f32.mrb[0].mxu0
  %v9022 = vpop.f32.mrb[0].mxu0
  %9023 = vdwg.mxu0
  %9024 = vmatprep.subr.bf16.mxu0 %v6206
  %9025 = vmatpush1.bf16.msra.mxu0 %v6205
  %9026 = vmatprep.subr.bf16.mxu0 %v6208
  %9027 = vmatpush1.bf16.msra.mxu0 %v6207
  %9028 = vmatprep.subr.bf16.mxu0 %v6210
  %9029 = vmatpush1.bf16.msra.mxu0 %v6209
  %9030 = vmatprep.subr.bf16.mxu0 %v6212
  %9031 = vmatpush1.bf16.msra.mxu0 %v6211
  %9032 = vmatprep.subr.bf16.mxu0 %v6214
  %9033 = vmatpush1.bf16.msra.mxu0 %v6213
  %9034 = vmatprep.subr.bf16.mxu0 %v6216
  %9035 = vmatpush1.bf16.msra.mxu0 %v6215
  %9036 = vmatprep.subr.bf16.mxu0 %v6218
  %9037 = vmatpush1.bf16.msra.mxu0 %v6217
  %9038 = vmatprep.subr.bf16.mxu0 %v6220
  %9039 = vmatpush1.bf16.msra.mxu0 %v6219
  %9040 = vmatprep.subr.bf16.mxu0 %v6222
  %9041 = vmatpush1.bf16.msra.mxu0 %v6221
  %9042 = vmatprep.subr.bf16.mxu0 %v6224
  %9043 = vmatpush1.bf16.msra.mxu0 %v6223
  %9044 = vmatprep.subr.bf16.mxu0 %v6226
  %9045 = vmatpush1.bf16.msra.mxu0 %v6225
  %9046 = vmatprep.subr.bf16.mxu0 %v6228
  %9047 = vmatpush1.bf16.msra.mxu0 %v6227
  %9048 = vmatprep.subr.bf16.mxu0 %v6230
  %9049 = vmatpush1.bf16.msra.mxu0 %v6229
  %9050 = vmatprep.subr.bf16.mxu0 %v6232
  %9051 = vmatpush1.bf16.msra.mxu0 %v6231
  %9052 = vmatprep.subr.bf16.mxu0 %v6234
  %9053 = vmatpush1.bf16.msra.mxu0 %v6233
  %9054 = vmatprep.subr.bf16.mxu0 %v6236
  %9055 = vmatpush1.bf16.msra.mxu0 %v6235
  %9056 = vmatprep.mubr.bf16.mxu0 %v8728
  %9057 = vmatmul.mubr.bf16.gmra.mrb[0].mxu0 %v8727
  %v9058 = vpop.f32.mrb[0].mxu0
  %v9059 = vadd.f32 %v9018, %v9058
  %v9060 = vpop.f32.mrb[0].mxu0
  %v9061 = vadd.f32 %v9020, %v9060
  %v9062 = vpop.f32.mrb[0].mxu0
  %v9063 = vpop.f32.mrb[0].mxu0
  %9064 = vdwg.mxu0
  %v9065 = vmax.f32 %v9059, 0.0
  %v9066 = vmax.f32 %v9061, 0.0
  %v9067 = vpack.c.bf16 %v9065, %v9065
  %v9068 = vpack.c.bf16 %v9066, %v9066
  %v9077 = vunpack.c.l.b16 %v4605
  %v9078 = vunpack.c.l.b16 %v4609
  %v9079 = vunpack.c.l.b16 %v4613
  %v9080 = vunpack.c.l.b16 %v4617
  %v9081 = vunpack.c.l.b16 %v4621
  %v9082 = vunpack.c.l.b16 %v4625
  %v9083 = vunpack.c.l.b16 %v4629
  %v9084 = vunpack.c.l.b16 %v4633
  %v9085 = vrot.slane %v9078, 7
  %v9086 = vsel %vm4908, %v9085, %v9077
  %v9087 = vrot.slane %v9079, 6
  %v9088 = vsel %vm4911, %v9087, %v9086
  %v9089 = vrot.slane %v9080, 5
  %v9090 = vsel %vm4914, %v9089, %v9088
  %v9091 = vrot.slane %v9081, 4
  %v9092 = vsel %vm4917, %v9091, %v9090
  %v9093 = vrot.slane %v9082, 3
  %v9094 = vsel %vm4920, %v9093, %v9092
  %v9095 = vrot.slane %v9083, 2
  %v9096 = vsel %vm4923, %v9095, %v9094
  %v9097 = vrot.slane %v9084, 1
  %v9098 = vsel %vm4926, %v9097, %v9096
  %v9099 = vpack.c.b16 %v9098, %v9098
  %v9101 = vrot.slane %v9077, 1
  %v9102 = vsel %vm4908, %v9078, %v9101
  %v9103 = vrot.slane %v9079, 7
  %v9104 = vsel %vm4911, %v9103, %v9102
  %v9105 = vrot.slane %v9080, 6
  %v9106 = vsel %vm4914, %v9105, %v9104
  %v9107 = vrot.slane %v9081, 5
  %v9108 = vsel %vm4917, %v9107, %v9106
  %v9109 = vrot.slane %v9082, 4
  %v9110 = vsel %vm4920, %v9109, %v9108
  %v9111 = vrot.slane %v9083, 3
  %v9112 = vsel %vm4923, %v9111, %v9110
  %v9113 = vrot.slane %v9084, 2
  %v9114 = vsel %vm4926, %v9113, %v9112
  %v9115 = vpack.c.b16 %v9114, %v9114
  %v9117 = vrot.slane %v9077, 2
  %v9118 = vrot.slane %v9078, 1
  %v9119 = vsel %vm4908, %v9118, %v9117
  %v9120 = vsel %vm4911, %v9079, %v9119
  %v9121 = vrot.slane %v9080, 7
  %v9122 = vsel %vm4914, %v9121, %v9120
  %v9123 = vrot.slane %v9081, 6
  %v9124 = vsel %vm4917, %v9123, %v9122
  %v9125 = vrot.slane %v9082, 5
  %v9126 = vsel %vm4920, %v9125, %v9124
  %v9127 = vrot.slane %v9083, 4
  %v9128 = vsel %vm4923, %v9127, %v9126
  %v9129 = vrot.slane %v9084, 3
  %v9130 = vsel %vm4926, %v9129, %v9128
  %v9131 = vpack.c.b16 %v9130, %v9130
  %v9133 = vrot.slane %v9077, 3
  %v9134 = vrot.slane %v9078, 2
  %v9135 = vsel %vm4908, %v9134, %v9133
  %v9136 = vrot.slane %v9079, 1
  %v9137 = vsel %vm4911, %v9136, %v9135
  %v9138 = vsel %vm4914, %v9080, %v9137
  %v9139 = vrot.slane %v9081, 7
  %v9140 = vsel %vm4917, %v9139, %v9138
  %v9141 = vrot.slane %v9082, 6
  %v9142 = vsel %vm4920, %v9141, %v9140
  %v9143 = vrot.slane %v9083, 5
  %v9144 = vsel %vm4923, %v9143, %v9142
  %v9145 = vrot.slane %v9084, 4
  %v9146 = vsel %vm4926, %v9145, %v9144
  %v9147 = vpack.c.b16 %v9146, %v9146
  %v9149 = vunpack.c.h.b16 %v4605
  %v9150 = vunpack.c.h.b16 %v4609
  %v9151 = vunpack.c.h.b16 %v4613
  %v9152 = vunpack.c.h.b16 %v4617
  %v9153 = vunpack.c.h.b16 %v4621
  %v9154 = vunpack.c.h.b16 %v4625
  %v9155 = vunpack.c.h.b16 %v4629
  %v9156 = vunpack.c.h.b16 %v4633
  %v9157 = vrot.slane %v9150, 7
  %v9158 = vsel %vm4908, %v9157, %v9149
  %v9159 = vrot.slane %v9151, 6
  %v9160 = vsel %vm4911, %v9159, %v9158
  %v9161 = vrot.slane %v9152, 5
  %v9162 = vsel %vm4914, %v9161, %v9160
  %v9163 = vrot.slane %v9153, 4
  %v9164 = vsel %vm4917, %v9163, %v9162
  %v9165 = vrot.slane %v9154, 3
  %v9166 = vsel %vm4920, %v9165, %v9164
  %v9167 = vrot.slane %v9155, 2
  %v9168 = vsel %vm4923, %v9167, %v9166
  %v9169 = vrot.slane %v9156, 1
  %v9170 = vsel %vm4926, %v9169, %v9168
  %v9171 = vpack.c.b16 %v9170, %v9170
  %v9173 = vrot.slane %v9149, 1
  %v9174 = vsel %vm4908, %v9150, %v9173
  %v9175 = vrot.slane %v9151, 7
  %v9176 = vsel %vm4911, %v9175, %v9174
  %v9177 = vrot.slane %v9152, 6
  %v9178 = vsel %vm4914, %v9177, %v9176
  %v9179 = vrot.slane %v9153, 5
  %v9180 = vsel %vm4917, %v9179, %v9178
  %v9181 = vrot.slane %v9154, 4
  %v9182 = vsel %vm4920, %v9181, %v9180
  %v9183 = vrot.slane %v9155, 3
  %v9184 = vsel %vm4923, %v9183, %v9182
  %v9185 = vrot.slane %v9156, 2
  %v9186 = vsel %vm4926, %v9185, %v9184
  %v9187 = vpack.c.b16 %v9186, %v9186
  %v9189 = vrot.slane %v9149, 2
  %v9190 = vrot.slane %v9150, 1
  %v9191 = vsel %vm4908, %v9190, %v9189
  %v9192 = vsel %vm4911, %v9151, %v9191
  %v9193 = vrot.slane %v9152, 7
  %v9194 = vsel %vm4914, %v9193, %v9192
  %v9195 = vrot.slane %v9153, 6
  %v9196 = vsel %vm4917, %v9195, %v9194
  %v9197 = vrot.slane %v9154, 5
  %v9198 = vsel %vm4920, %v9197, %v9196
  %v9199 = vrot.slane %v9155, 4
  %v9200 = vsel %vm4923, %v9199, %v9198
  %v9201 = vrot.slane %v9156, 3
  %v9202 = vsel %vm4926, %v9201, %v9200
  %v9203 = vpack.c.b16 %v9202, %v9202
  %v9205 = vrot.slane %v9149, 3
  %v9206 = vrot.slane %v9150, 2
  %v9207 = vsel %vm4908, %v9206, %v9205
  %v9208 = vrot.slane %v9151, 1
  %v9209 = vsel %vm4911, %v9208, %v9207
  %v9210 = vsel %vm4914, %v9152, %v9209
  %v9211 = vrot.slane %v9153, 7
  %v9212 = vsel %vm4917, %v9211, %v9210
  %v9213 = vrot.slane %v9154, 6
  %v9214 = vsel %vm4920, %v9213, %v9212
  %v9215 = vrot.slane %v9155, 5
  %v9216 = vsel %vm4923, %v9215, %v9214
  %v9217 = vrot.slane %v9156, 4
  %v9218 = vsel %vm4926, %v9217, %v9216
  %v9219 = vpack.c.b16 %v9218, %v9218
  %9221 = vmatprep.subr.bf16.mxu0 %v5982
  %9222 = vmatpush1.bf16.msra.mxu0 %v5981
  %9223 = vmatprep.subr.bf16.mxu0 %v5984
  %9224 = vmatpush1.bf16.msra.mxu0 %v5983
  %9225 = vmatprep.subr.bf16.mxu0 %v5986
  %9226 = vmatpush1.bf16.msra.mxu0 %v5985
  %9227 = vmatprep.subr.bf16.mxu0 %v5988
  %9228 = vmatpush1.bf16.msra.mxu0 %v5987
  %9229 = vmatprep.subr.bf16.mxu0 %v5990
  %9230 = vmatpush1.bf16.msra.mxu0 %v5989
  %9231 = vmatprep.subr.bf16.mxu0 %v5992
  %9232 = vmatpush1.bf16.msra.mxu0 %v5991
  %9233 = vmatprep.subr.bf16.mxu0 %v5994
  %9234 = vmatpush1.bf16.msra.mxu0 %v5993
  %9235 = vmatprep.subr.bf16.mxu0 %v5996
  %9236 = vmatpush1.bf16.msra.mxu0 %v5995
  %9237 = vmatprep.subr.bf16.mxu0 %v5998
  %9238 = vmatpush1.bf16.msra.mxu0 %v5997
  %9239 = vmatprep.subr.bf16.mxu0 %v6000
  %9240 = vmatpush1.bf16.msra.mxu0 %v5999
  %9241 = vmatprep.subr.bf16.mxu0 %v6002
  %9242 = vmatpush1.bf16.msra.mxu0 %v6001
  %9243 = vmatprep.subr.bf16.mxu0 %v6004
  %9244 = vmatpush1.bf16.msra.mxu0 %v6003
  %9245 = vmatprep.subr.bf16.mxu0 %v6006
  %9246 = vmatpush1.bf16.msra.mxu0 %v6005
  %9247 = vmatprep.subr.bf16.mxu0 %v6008
  %9248 = vmatpush1.bf16.msra.mxu0 %v6007
  %9249 = vmatprep.subr.bf16.mxu0 %v6010
  %9250 = vmatpush1.bf16.msra.mxu0 %v6009
  %9251 = vmatprep.subr.bf16.mxu0 %v6012
  %9252 = vmatpush1.bf16.msra.mxu0 %v6011
  %9253 = vmatprep.mubr.bf16.mxu0 %v7823
  %9254 = vmatmul.mubr.bf16.gmra.mrb[0].mxu0 %v7807
  %v9255 = vpop.f32.mrb[0].mxu0
  %v9256 = vadd.f32 %v5206, %v9255
  %v9257 = vpop.f32.mrb[0].mxu0
  %v9258 = vadd.f32 %v5210, %v9257
  %v9259 = vpop.f32.mrb[0].mxu0
  %v9260 = vpop.f32.mrb[0].mxu0
  %9261 = vdwg.mxu0
  %9262 = vmatprep.subr.bf16.mxu0 %v6014
  %9263 = vmatpush1.bf16.msra.mxu0 %v6013
  %9264 = vmatprep.subr.bf16.mxu0 %v6016
  %9265 = vmatpush1.bf16.msra.mxu0 %v6015
  %9266 = vmatprep.subr.bf16.mxu0 %v6018
  %9267 = vmatpush1.bf16.msra.mxu0 %v6017
  %9268 = vmatprep.subr.bf16.mxu0 %v6020
  %9269 = vmatpush1.bf16.msra.mxu0 %v6019
  %9270 = vmatprep.subr.bf16.mxu0 %v6022
  %9271 = vmatpush1.bf16.msra.mxu0 %v6021
  %9272 = vmatprep.subr.bf16.mxu0 %v6024
  %9273 = vmatpush1.bf16.msra.mxu0 %v6023
  %9274 = vmatprep.subr.bf16.mxu0 %v6026
  %9275 = vmatpush1.bf16.msra.mxu0 %v6025
  %9276 = vmatprep.subr.bf16.mxu0 %v6028
  %9277 = vmatpush1.bf16.msra.mxu0 %v6027
  %9278 = vmatprep.subr.bf16.mxu0 %v6030
  %9279 = vmatpush1.bf16.msra.mxu0 %v6029
  %9280 = vmatprep.subr.bf16.mxu0 %v6032
  %9281 = vmatpush1.bf16.msra.mxu0 %v6031
  %9282 = vmatprep.subr.bf16.mxu0 %v6034
  %9283 = vmatpush1.bf16.msra.mxu0 %v6033
  %9284 = vmatprep.subr.bf16.mxu0 %v6036
  %9285 = vmatpush1.bf16.msra.mxu0 %v6035
  %9286 = vmatprep.subr.bf16.mxu0 %v6038
  %9287 = vmatpush1.bf16.msra.mxu0 %v6037
  %9288 = vmatprep.subr.bf16.mxu0 %v6040
  %9289 = vmatpush1.bf16.msra.mxu0 %v6039
  %9290 = vmatprep.subr.bf16.mxu0 %v6042
  %9291 = vmatpush1.bf16.msra.mxu0 %v6041
  %9292 = vmatprep.subr.bf16.mxu0 %v6044
  %9293 = vmatpush1.bf16.msra.mxu0 %v6043
  %9294 = vmatprep.mubr.bf16.mxu0 %v7855
  %9295 = vmatmul.mubr.bf16.gmra.mrb[0].mxu0 %v7839
  %v9296 = vpop.f32.mrb[0].mxu0
  %v9297 = vadd.f32 %v9256, %v9296
  %v9298 = vpop.f32.mrb[0].mxu0
  %v9299 = vadd.f32 %v9258, %v9298
  %v9300 = vpop.f32.mrb[0].mxu0
  %v9301 = vpop.f32.mrb[0].mxu0
  %9302 = vdwg.mxu0
  %9303 = vmatprep.subr.bf16.mxu0 %v6046
  %9304 = vmatpush1.bf16.msra.mxu0 %v6045
  %9305 = vmatprep.subr.bf16.mxu0 %v6048
  %9306 = vmatpush1.bf16.msra.mxu0 %v6047
  %9307 = vmatprep.subr.bf16.mxu0 %v6050
  %9308 = vmatpush1.bf16.msra.mxu0 %v6049
  %9309 = vmatprep.subr.bf16.mxu0 %v6052
  %9310 = vmatpush1.bf16.msra.mxu0 %v6051
  %9311 = vmatprep.subr.bf16.mxu0 %v6054
  %9312 = vmatpush1.bf16.msra.mxu0 %v6053
  %9313 = vmatprep.subr.bf16.mxu0 %v6056
  %9314 = vmatpush1.bf16.msra.mxu0 %v6055
  %9315 = vmatprep.subr.bf16.mxu0 %v6058
  %9316 = vmatpush1.bf16.msra.mxu0 %v6057
  %9317 = vmatprep.subr.bf16.mxu0 %v6060
  %9318 = vmatpush1.bf16.msra.mxu0 %v6059
  %9319 = vmatprep.subr.bf16.mxu0 %v6062
  %9320 = vmatpush1.bf16.msra.mxu0 %v6061
  %9321 = vmatprep.subr.bf16.mxu0 %v6064
  %9322 = vmatpush1.bf16.msra.mxu0 %v6063
  %9323 = vmatprep.subr.bf16.mxu0 %v6066
  %9324 = vmatpush1.bf16.msra.mxu0 %v6065
  %9325 = vmatprep.subr.bf16.mxu0 %v6068
  %9326 = vmatpush1.bf16.msra.mxu0 %v6067
  %9327 = vmatprep.subr.bf16.mxu0 %v6070
  %9328 = vmatpush1.bf16.msra.mxu0 %v6069
  %9329 = vmatprep.subr.bf16.mxu0 %v6072
  %9330 = vmatpush1.bf16.msra.mxu0 %v6071
  %9331 = vmatprep.subr.bf16.mxu0 %v6074
  %9332 = vmatpush1.bf16.msra.mxu0 %v6073
  %9333 = vmatprep.subr.bf16.mxu0 %v6076
  %9334 = vmatpush1.bf16.msra.mxu0 %v6075
  %9335 = vmatprep.mubr.bf16.mxu0 %v7895
  %9336 = vmatmul.mubr.bf16.gmra.mrb[0].mxu0 %v7879
  %v9337 = vpop.f32.mrb[0].mxu0
  %v9338 = vadd.f32 %v9297, %v9337
  %v9339 = vpop.f32.mrb[0].mxu0
  %v9340 = vadd.f32 %v9299, %v9339
  %v9341 = vpop.f32.mrb[0].mxu0
  %v9342 = vpop.f32.mrb[0].mxu0
  %9343 = vdwg.mxu0
  %9344 = vmatprep.subr.bf16.mxu0 %v6078
  %9345 = vmatpush1.bf16.msra.mxu0 %v6077
  %9346 = vmatprep.subr.bf16.mxu0 %v6080
  %9347 = vmatpush1.bf16.msra.mxu0 %v6079
  %9348 = vmatprep.subr.bf16.mxu0 %v6082
  %9349 = vmatpush1.bf16.msra.mxu0 %v6081
  %9350 = vmatprep.subr.bf16.mxu0 %v6084
  %9351 = vmatpush1.bf16.msra.mxu0 %v6083
  %9352 = vmatprep.subr.bf16.mxu0 %v6086
  %9353 = vmatpush1.bf16.msra.mxu0 %v6085
  %9354 = vmatprep.subr.bf16.mxu0 %v6088
  %9355 = vmatpush1.bf16.msra.mxu0 %v6087
  %9356 = vmatprep.subr.bf16.mxu0 %v6090
  %9357 = vmatpush1.bf16.msra.mxu0 %v6089
  %9358 = vmatprep.subr.bf16.mxu0 %v6092
  %9359 = vmatpush1.bf16.msra.mxu0 %v6091
  %9360 = vmatprep.subr.bf16.mxu0 %v6094
  %9361 = vmatpush1.bf16.msra.mxu0 %v6093
  %9362 = vmatprep.subr.bf16.mxu0 %v6096
  %9363 = vmatpush1.bf16.msra.mxu0 %v6095
  %9364 = vmatprep.subr.bf16.mxu0 %v6098
  %9365 = vmatpush1.bf16.msra.mxu0 %v6097
  %9366 = vmatprep.subr.bf16.mxu0 %v6100
  %9367 = vmatpush1.bf16.msra.mxu0 %v6099
  %9368 = vmatprep.subr.bf16.mxu0 %v6102
  %9369 = vmatpush1.bf16.msra.mxu0 %v6101
  %9370 = vmatprep.subr.bf16.mxu0 %v6104
  %9371 = vmatpush1.bf16.msra.mxu0 %v6103
  %9372 = vmatprep.subr.bf16.mxu0 %v6106
  %9373 = vmatpush1.bf16.msra.mxu0 %v6105
  %9374 = vmatprep.subr.bf16.mxu0 %v6108
  %9375 = vmatpush1.bf16.msra.mxu0 %v6107
  %9376 = vmatprep.mubr.bf16.mxu0 %v7927
  %9377 = vmatmul.mubr.bf16.gmra.mrb[0].mxu0 %v7911
  %v9378 = vpop.f32.mrb[0].mxu0
  %v9379 = vadd.f32 %v9338, %v9378
  %v9380 = vpop.f32.mrb[0].mxu0
  %v9381 = vadd.f32 %v9340, %v9380
  %v9382 = vpop.f32.mrb[0].mxu0
  %v9383 = vpop.f32.mrb[0].mxu0
  %9384 = vdwg.mxu0
  %9385 = vmatprep.subr.bf16.mxu0 %v6110
  %9386 = vmatpush1.bf16.msra.mxu0 %v6109
  %9387 = vmatprep.subr.bf16.mxu0 %v6112
  %9388 = vmatpush1.bf16.msra.mxu0 %v6111
  %9389 = vmatprep.subr.bf16.mxu0 %v6114
  %9390 = vmatpush1.bf16.msra.mxu0 %v6113
  %9391 = vmatprep.subr.bf16.mxu0 %v6116
  %9392 = vmatpush1.bf16.msra.mxu0 %v6115
  %9393 = vmatprep.subr.bf16.mxu0 %v6118
  %9394 = vmatpush1.bf16.msra.mxu0 %v6117
  %9395 = vmatprep.subr.bf16.mxu0 %v6120
  %9396 = vmatpush1.bf16.msra.mxu0 %v6119
  %9397 = vmatprep.subr.bf16.mxu0 %v6122
  %9398 = vmatpush1.bf16.msra.mxu0 %v6121
  %9399 = vmatprep.subr.bf16.mxu0 %v6124
  %9400 = vmatpush1.bf16.msra.mxu0 %v6123
  %9401 = vmatprep.subr.bf16.mxu0 %v6126
  %9402 = vmatpush1.bf16.msra.mxu0 %v6125
  %9403 = vmatprep.subr.bf16.mxu0 %v6128
  %9404 = vmatpush1.bf16.msra.mxu0 %v6127
  %9405 = vmatprep.subr.bf16.mxu0 %v6130
  %9406 = vmatpush1.bf16.msra.mxu0 %v6129
  %9407 = vmatprep.subr.bf16.mxu0 %v6132
  %9408 = vmatpush1.bf16.msra.mxu0 %v6131
  %9409 = vmatprep.subr.bf16.mxu0 %v6134
  %9410 = vmatpush1.bf16.msra.mxu0 %v6133
  %9411 = vmatprep.subr.bf16.mxu0 %v6136
  %9412 = vmatpush1.bf16.msra.mxu0 %v6135
  %9413 = vmatprep.subr.bf16.mxu0 %v6138
  %9414 = vmatpush1.bf16.msra.mxu0 %v6137
  %9415 = vmatprep.subr.bf16.mxu0 %v6140
  %9416 = vmatpush1.bf16.msra.mxu0 %v6139
  %9417 = vmatprep.mubr.bf16.mxu0 %v9115
  %9418 = vmatmul.mubr.bf16.gmra.mrb[0].mxu0 %v9099
  %v9419 = vpop.f32.mrb[0].mxu0
  %v9420 = vadd.f32 %v9379, %v9419
  %v9421 = vpop.f32.mrb[0].mxu0
  %v9422 = vadd.f32 %v9381, %v9421
  %v9423 = vpop.f32.mrb[0].mxu0
  %v9424 = vpop.f32.mrb[0].mxu0
  %9425 = vdwg.mxu0
  %9426 = vmatprep.subr.bf16.mxu0 %v6142
  %9427 = vmatpush1.bf16.msra.mxu0 %v6141
  %9428 = vmatprep.subr.bf16.mxu0 %v6144
  %9429 = vmatpush1.bf16.msra.mxu0 %v6143
  %9430 = vmatprep.subr.bf16.mxu0 %v6146
  %9431 = vmatpush1.bf16.msra.mxu0 %v6145
  %9432 = vmatprep.subr.bf16.mxu0 %v6148
  %9433 = vmatpush1.bf16.msra.mxu0 %v6147
  %9434 = vmatprep.subr.bf16.mxu0 %v6150
  %9435 = vmatpush1.bf16.msra.mxu0 %v6149
  %9436 = vmatprep.subr.bf16.mxu0 %v6152
  %9437 = vmatpush1.bf16.msra.mxu0 %v6151
  %9438 = vmatprep.subr.bf16.mxu0 %v6154
  %9439 = vmatpush1.bf16.msra.mxu0 %v6153
  %9440 = vmatprep.subr.bf16.mxu0 %v6156
  %9441 = vmatpush1.bf16.msra.mxu0 %v6155
  %9442 = vmatprep.subr.bf16.mxu0 %v6158
  %9443 = vmatpush1.bf16.msra.mxu0 %v6157
  %9444 = vmatprep.subr.bf16.mxu0 %v6160
  %9445 = vmatpush1.bf16.msra.mxu0 %v6159
  %9446 = vmatprep.subr.bf16.mxu0 %v6162
  %9447 = vmatpush1.bf16.msra.mxu0 %v6161
  %9448 = vmatprep.subr.bf16.mxu0 %v6164
  %9449 = vmatpush1.bf16.msra.mxu0 %v6163
  %9450 = vmatprep.subr.bf16.mxu0 %v6166
  %9451 = vmatpush1.bf16.msra.mxu0 %v6165
  %9452 = vmatprep.subr.bf16.mxu0 %v6168
  %9453 = vmatpush1.bf16.msra.mxu0 %v6167
  %9454 = vmatprep.subr.bf16.mxu0 %v6170
  %9455 = vmatpush1.bf16.msra.mxu0 %v6169
  %9456 = vmatprep.subr.bf16.mxu0 %v6172
  %9457 = vmatpush1.bf16.msra.mxu0 %v6171
  %9458 = vmatprep.mubr.bf16.mxu0 %v9147
  %9459 = vmatmul.mubr.bf16.gmra.mrb[0].mxu0 %v9131
  %v9460 = vpop.f32.mrb[0].mxu0
  %v9461 = vadd.f32 %v9420, %v9460
  %v9462 = vpop.f32.mrb[0].mxu0
  %v9463 = vadd.f32 %v9422, %v9462
  %v9464 = vpop.f32.mrb[0].mxu0
  %v9465 = vpop.f32.mrb[0].mxu0
  %9466 = vdwg.mxu0
  %9467 = vmatprep.subr.bf16.mxu0 %v6174
  %9468 = vmatpush1.bf16.msra.mxu0 %v6173
  %9469 = vmatprep.subr.bf16.mxu0 %v6176
  %9470 = vmatpush1.bf16.msra.mxu0 %v6175
  %9471 = vmatprep.subr.bf16.mxu0 %v6178
  %9472 = vmatpush1.bf16.msra.mxu0 %v6177
  %9473 = vmatprep.subr.bf16.mxu0 %v6180
  %9474 = vmatpush1.bf16.msra.mxu0 %v6179
  %9475 = vmatprep.subr.bf16.mxu0 %v6182
  %9476 = vmatpush1.bf16.msra.mxu0 %v6181
  %9477 = vmatprep.subr.bf16.mxu0 %v6184
  %9478 = vmatpush1.bf16.msra.mxu0 %v6183
  %9479 = vmatprep.subr.bf16.mxu0 %v6186
  %9480 = vmatpush1.bf16.msra.mxu0 %v6185
  %9481 = vmatprep.subr.bf16.mxu0 %v6188
  %9482 = vmatpush1.bf16.msra.mxu0 %v6187
  %9483 = vmatprep.subr.bf16.mxu0 %v6190
  %9484 = vmatpush1.bf16.msra.mxu0 %v6189
  %9485 = vmatprep.subr.bf16.mxu0 %v6192
  %9486 = vmatpush1.bf16.msra.mxu0 %v6191
  %9487 = vmatprep.subr.bf16.mxu0 %v6194
  %9488 = vmatpush1.bf16.msra.mxu0 %v6193
  %9489 = vmatprep.subr.bf16.mxu0 %v6196
  %9490 = vmatpush1.bf16.msra.mxu0 %v6195
  %9491 = vmatprep.subr.bf16.mxu0 %v6198
  %9492 = vmatpush1.bf16.msra.mxu0 %v6197
  %9493 = vmatprep.subr.bf16.mxu0 %v6200
  %9494 = vmatpush1.bf16.msra.mxu0 %v6199
  %9495 = vmatprep.subr.bf16.mxu0 %v6202
  %9496 = vmatpush1.bf16.msra.mxu0 %v6201
  %9497 = vmatprep.subr.bf16.mxu0 %v6204
  %9498 = vmatpush1.bf16.msra.mxu0 %v6203
  %9499 = vmatprep.mubr.bf16.mxu0 %v9187
  %9500 = vmatmul.mubr.bf16.gmra.mrb[0].mxu0 %v9171
  %v9501 = vpop.f32.mrb[0].mxu0
  %v9502 = vadd.f32 %v9461, %v9501
  %v9503 = vpop.f32.mrb[0].mxu0
  %v9504 = vadd.f32 %v9463, %v9503
  %v9505 = vpop.f32.mrb[0].mxu0
  %v9506 = vpop.f32.mrb[0].mxu0
  %9507 = vdwg.mxu0
  %9508 = vmatprep.subr.bf16.mxu0 %v6206
  %9509 = vmatpush1.bf16.msra.mxu0 %v6205
  %9510 = vmatprep.subr.bf16.mxu0 %v6208
  %9511 = vmatpush1.bf16.msra.mxu0 %v6207
  %9512 = vmatprep.subr.bf16.mxu0 %v6210
  %9513 = vmatpush1.bf16.msra.mxu0 %v6209
  %9514 = vmatprep.subr.bf16.mxu0 %v6212
  %9515 = vmatpush1.bf16.msra.mxu0 %v6211
  %9516 = vmatprep.subr.bf16.mxu0 %v6214
  %9517 = vmatpush1.bf16.msra.mxu0 %v6213
  %9518 = vmatprep.subr.bf16.mxu0 %v6216
  %9519 = vmatpush1.bf16.msra.mxu0 %v6215
  %9520 = vmatprep.subr.bf16.mxu0 %v6218
  %9521 = vmatpush1.bf16.msra.mxu0 %v6217
  %9522 = vmatprep.subr.bf16.mxu0 %v6220
  %9523 = vmatpush1.bf16.msra.mxu0 %v6219
  %9524 = vmatprep.subr.bf16.mxu0 %v6222
  %9525 = vmatpush1.bf16.msra.mxu0 %v6221
  %9526 = vmatprep.subr.bf16.mxu0 %v6224
  %9527 = vmatpush1.bf16.msra.mxu0 %v6223
  %9528 = vmatprep.subr.bf16.mxu0 %v6226
  %9529 = vmatpush1.bf16.msra.mxu0 %v6225
  %9530 = vmatprep.subr.bf16.mxu0 %v6228
  %9531 = vmatpush1.bf16.msra.mxu0 %v6227
  %9532 = vmatprep.subr.bf16.mxu0 %v6230
  %9533 = vmatpush1.bf16.msra.mxu0 %v6229
  %9534 = vmatprep.subr.bf16.mxu0 %v6232
  %9535 = vmatpush1.bf16.msra.mxu0 %v6231
  %9536 = vmatprep.subr.bf16.mxu0 %v6234
  %9537 = vmatpush1.bf16.msra.mxu0 %v6233
  %9538 = vmatprep.subr.bf16.mxu0 %v6236
  %9539 = vmatpush1.bf16.msra.mxu0 %v6235
  %9540 = vmatprep.mubr.bf16.mxu0 %v9219
  %9541 = vmatmul.mubr.bf16.gmra.mrb[0].mxu0 %v9203
  %v9542 = vpop.f32.mrb[0].mxu0
  %v9543 = vadd.f32 %v9502, %v9542
  %v9544 = vpop.f32.mrb[0].mxu0
  %v9545 = vadd.f32 %v9504, %v9544
  %v9546 = vpop.f32.mrb[0].mxu0
  %v9547 = vpop.f32.mrb[0].mxu0
  %9548 = vdwg.mxu0
  %v9549 = vmax.f32 %v9543, 0.0
  %v9550 = vmax.f32 %v9545, 0.0
  %v9551 = vpack.c.bf16 %v9549, %v9549
  %v9552 = vpack.c.bf16 %v9550, %v9550
  %v9553 = vsel %vm4914, %v9085, %v9077
  %v9554 = vsel %vm4917, %v9087, %v9553
  %v9555 = vsel %vm4920, %v9089, %v9554
  %v9556 = vsel %vm4923, %v9091, %v9555
  %v9557 = vsel %vm4926, %v9093, %v9556
  %v9558 = vsel %vm4908, %v9097, %v9095
  %v9559 = vpack.c.b16 %v9558, %v9557
  %v9560 = vsel %vm4914, %v9078, %v9101
  %v9561 = vsel %vm4917, %v9103, %v9560
  %v9562 = vsel %vm4920, %v9105, %v9561
  %v9563 = vsel %vm4923, %v9107, %v9562
  %v9564 = vsel %vm4926, %v9109, %v9563
  %v9565 = vsel %vm4908, %v9113, %v9111
  %v9566 = vpack.c.b16 %v9565, %v9564
  %v9567 = vsel %vm4914, %v9118, %v9117
  %v9568 = vsel %vm4917, %v9079, %v9567
  %v9569 = vsel %vm4920, %v9121, %v9568
  %v9570 = vsel %vm4923, %v9123, %v9569
  %v9571 = vsel %vm4926, %v9125, %v9570
  %v9572 = vsel %vm4908, %v9129, %v9127
  %v9573 = vpack.c.b16 %v9572, %v9571
  %v9574 = vsel %vm4914, %v9134, %v9133
  %v9575 = vsel %vm4917, %v9136, %v9574
  %v9576 = vsel %vm4920, %v9080, %v9575
  %v9577 = vsel %vm4923, %v9139, %v9576
  %v9578 = vsel %vm4926, %v9141, %v9577
  %v9579 = vsel %vm4908, %v9145, %v9143
  %v9580 = vpack.c.b16 %v9579, %v9578
  %v9581 = vsel %vm4914, %v9157, %v9149
  %v9582 = vsel %vm4917, %v9159, %v9581
  %v9583 = vsel %vm4920, %v9161, %v9582
  %v9584 = vsel %vm4923, %v9163, %v9583
  %v9585 = vsel %vm4926, %v9165, %v9584
  %v9586 = vsel %vm4908, %v9169, %v9167
  %v9587 = vpack.c.b16 %v9586, %v9585
  %v9588 = vsel %vm4914, %v9150, %v9173
  %v9589 = vsel %vm4917, %v9175, %v9588
  %v9590 = vsel %vm4920, %v9177, %v9589
  %v9591 = vsel %vm4923, %v9179, %v9590
  %v9592 = vsel %vm4926, %v9181, %v9591
  %v9593 = vsel %vm4908, %v9185, %v9183
  %v9594 = vpack.c.b16 %v9593, %v9592
  %v9595 = vsel %vm4914, %v9190, %v9189
  %v9596 = vsel %vm4917, %v9151, %v9595
  %v9597 = vsel %vm4920, %v9193, %v9596
  %v9598 = vsel %vm4923, %v9195, %v9597
  %v9599 = vsel %vm4926, %v9197, %v9598
  %v9600 = vsel %vm4908, %v9201, %v9199
  %v9601 = vpack.c.b16 %v9600, %v9599
  %v9602 = vsel %vm4914, %v9206, %v9205
  %v9603 = vsel %vm4917, %v9208, %v9602
  %v9604 = vsel %vm4920, %v9152, %v9603
  %v9605 = vsel %vm4923, %v9211, %v9604
  %v9606 = vsel %vm4926, %v9213, %v9605
  %v9607 = vsel %vm4908, %v9217, %v9215
  %v9608 = vpack.c.b16 %v9607, %v9606
  %v9609 = vrot.slane %v9559, 1
  %v9610 = vrot.slane %v9566, 1
  %v9611 = vrot.slane %v9573, 1
  %v9612 = vrot.slane %v9580, 1
  %v9613 = vrot.slane %v9587, 1
  %v9614 = vrot.slane %v9594, 1
  %v9615 = vrot.slane %v9601, 1
  %v9616 = vrot.slane %v9608, 1
  %9625 = vmatprep.subr.bf16.mxu0 %v5982
  %9626 = vmatpush1.bf16.msra.mxu0 %v5981
  %9627 = vmatprep.subr.bf16.mxu0 %v5984
  %9628 = vmatpush1.bf16.msra.mxu0 %v5983
  %9629 = vmatprep.subr.bf16.mxu0 %v5986
  %9630 = vmatpush1.bf16.msra.mxu0 %v5985
  %9631 = vmatprep.subr.bf16.mxu0 %v5988
  %9632 = vmatpush1.bf16.msra.mxu0 %v5987
  %9633 = vmatprep.subr.bf16.mxu0 %v5990
  %9634 = vmatpush1.bf16.msra.mxu0 %v5989
  %9635 = vmatprep.subr.bf16.mxu0 %v5992
  %9636 = vmatpush1.bf16.msra.mxu0 %v5991
  %9637 = vmatprep.subr.bf16.mxu0 %v5994
  %9638 = vmatpush1.bf16.msra.mxu0 %v5993
  %9639 = vmatprep.subr.bf16.mxu0 %v5996
  %9640 = vmatpush1.bf16.msra.mxu0 %v5995
  %9641 = vmatprep.subr.bf16.mxu0 %v5998
  %9642 = vmatpush1.bf16.msra.mxu0 %v5997
  %9643 = vmatprep.subr.bf16.mxu0 %v6000
  %9644 = vmatpush1.bf16.msra.mxu0 %v5999
  %9645 = vmatprep.subr.bf16.mxu0 %v6002
  %9646 = vmatpush1.bf16.msra.mxu0 %v6001
  %9647 = vmatprep.subr.bf16.mxu0 %v6004
  %9648 = vmatpush1.bf16.msra.mxu0 %v6003
  %9649 = vmatprep.subr.bf16.mxu0 %v6006
  %9650 = vmatpush1.bf16.msra.mxu0 %v6005
  %9651 = vmatprep.subr.bf16.mxu0 %v6008
  %9652 = vmatpush1.bf16.msra.mxu0 %v6007
  %9653 = vmatprep.subr.bf16.mxu0 %v6010
  %9654 = vmatpush1.bf16.msra.mxu0 %v6009
  %9655 = vmatprep.subr.bf16.mxu0 %v6012
  %9656 = vmatpush1.bf16.msra.mxu0 %v6011
  %9657 = vmatprep.mubr.bf16.mxu0 %v8318
  %9658 = vmatmul.mubr.bf16.gmra.mrb[0].mxu0 %v8317
  %v9659 = vpop.f32.mrb[0].mxu0
  %v9660 = vadd.f32 %v5206, %v9659
  %v9661 = vpop.f32.mrb[0].mxu0
  %v9662 = vadd.f32 %v5210, %v9661
  %v9663 = vpop.f32.mrb[0].mxu0
  %v9664 = vpop.f32.mrb[0].mxu0
  %9665 = vdwg.mxu0
  %9666 = vmatprep.subr.bf16.mxu0 %v6014
  %9667 = vmatpush1.bf16.msra.mxu0 %v6013
  %9668 = vmatprep.subr.bf16.mxu0 %v6016
  %9669 = vmatpush1.bf16.msra.mxu0 %v6015
  %9670 = vmatprep.subr.bf16.mxu0 %v6018
  %9671 = vmatpush1.bf16.msra.mxu0 %v6017
  %9672 = vmatprep.subr.bf16.mxu0 %v6020
  %9673 = vmatpush1.bf16.msra.mxu0 %v6019
  %9674 = vmatprep.subr.bf16.mxu0 %v6022
  %9675 = vmatpush1.bf16.msra.mxu0 %v6021
  %9676 = vmatprep.subr.bf16.mxu0 %v6024
  %9677 = vmatpush1.bf16.msra.mxu0 %v6023
  %9678 = vmatprep.subr.bf16.mxu0 %v6026
  %9679 = vmatpush1.bf16.msra.mxu0 %v6025
  %9680 = vmatprep.subr.bf16.mxu0 %v6028
  %9681 = vmatpush1.bf16.msra.mxu0 %v6027
  %9682 = vmatprep.subr.bf16.mxu0 %v6030
  %9683 = vmatpush1.bf16.msra.mxu0 %v6029
  %9684 = vmatprep.subr.bf16.mxu0 %v6032
  %9685 = vmatpush1.bf16.msra.mxu0 %v6031
  %9686 = vmatprep.subr.bf16.mxu0 %v6034
  %9687 = vmatpush1.bf16.msra.mxu0 %v6033
  %9688 = vmatprep.subr.bf16.mxu0 %v6036
  %9689 = vmatpush1.bf16.msra.mxu0 %v6035
  %9690 = vmatprep.subr.bf16.mxu0 %v6038
  %9691 = vmatpush1.bf16.msra.mxu0 %v6037
  %9692 = vmatprep.subr.bf16.mxu0 %v6040
  %9693 = vmatpush1.bf16.msra.mxu0 %v6039
  %9694 = vmatprep.subr.bf16.mxu0 %v6042
  %9695 = vmatpush1.bf16.msra.mxu0 %v6041
  %9696 = vmatprep.subr.bf16.mxu0 %v6044
  %9697 = vmatpush1.bf16.msra.mxu0 %v6043
  %9698 = vmatprep.mubr.bf16.mxu0 %v8320
  %9699 = vmatmul.mubr.bf16.gmra.mrb[0].mxu0 %v8319
  %v9700 = vpop.f32.mrb[0].mxu0
  %v9701 = vadd.f32 %v9660, %v9700
  %v9702 = vpop.f32.mrb[0].mxu0
  %v9703 = vadd.f32 %v9662, %v9702
  %v9704 = vpop.f32.mrb[0].mxu0
  %v9705 = vpop.f32.mrb[0].mxu0
  %9706 = vdwg.mxu0
  %9707 = vmatprep.subr.bf16.mxu0 %v6046
  %9708 = vmatpush1.bf16.msra.mxu0 %v6045
  %9709 = vmatprep.subr.bf16.mxu0 %v6048
  %9710 = vmatpush1.bf16.msra.mxu0 %v6047
  %9711 = vmatprep.subr.bf16.mxu0 %v6050
  %9712 = vmatpush1.bf16.msra.mxu0 %v6049
  %9713 = vmatprep.subr.bf16.mxu0 %v6052
  %9714 = vmatpush1.bf16.msra.mxu0 %v6051
  %9715 = vmatprep.subr.bf16.mxu0 %v6054
  %9716 = vmatpush1.bf16.msra.mxu0 %v6053
  %9717 = vmatprep.subr.bf16.mxu0 %v6056
  %9718 = vmatpush1.bf16.msra.mxu0 %v6055
  %9719 = vmatprep.subr.bf16.mxu0 %v6058
  %9720 = vmatpush1.bf16.msra.mxu0 %v6057
  %9721 = vmatprep.subr.bf16.mxu0 %v6060
  %9722 = vmatpush1.bf16.msra.mxu0 %v6059
  %9723 = vmatprep.subr.bf16.mxu0 %v6062
  %9724 = vmatpush1.bf16.msra.mxu0 %v6061
  %9725 = vmatprep.subr.bf16.mxu0 %v6064
  %9726 = vmatpush1.bf16.msra.mxu0 %v6063
  %9727 = vmatprep.subr.bf16.mxu0 %v6066
  %9728 = vmatpush1.bf16.msra.mxu0 %v6065
  %9729 = vmatprep.subr.bf16.mxu0 %v6068
  %9730 = vmatpush1.bf16.msra.mxu0 %v6067
  %9731 = vmatprep.subr.bf16.mxu0 %v6070
  %9732 = vmatpush1.bf16.msra.mxu0 %v6069
  %9733 = vmatprep.subr.bf16.mxu0 %v6072
  %9734 = vmatpush1.bf16.msra.mxu0 %v6071
  %9735 = vmatprep.subr.bf16.mxu0 %v6074
  %9736 = vmatpush1.bf16.msra.mxu0 %v6073
  %9737 = vmatprep.subr.bf16.mxu0 %v6076
  %9738 = vmatpush1.bf16.msra.mxu0 %v6075
  %9739 = vmatprep.mubr.bf16.mxu0 %v8322
  %9740 = vmatmul.mubr.bf16.gmra.mrb[0].mxu0 %v8321
  %v9741 = vpop.f32.mrb[0].mxu0
  %v9742 = vadd.f32 %v9701, %v9741
  %v9743 = vpop.f32.mrb[0].mxu0
  %v9744 = vadd.f32 %v9703, %v9743
  %v9745 = vpop.f32.mrb[0].mxu0
  %v9746 = vpop.f32.mrb[0].mxu0
  %9747 = vdwg.mxu0
  %9748 = vmatprep.subr.bf16.mxu0 %v6078
  %9749 = vmatpush1.bf16.msra.mxu0 %v6077
  %9750 = vmatprep.subr.bf16.mxu0 %v6080
  %9751 = vmatpush1.bf16.msra.mxu0 %v6079
  %9752 = vmatprep.subr.bf16.mxu0 %v6082
  %9753 = vmatpush1.bf16.msra.mxu0 %v6081
  %9754 = vmatprep.subr.bf16.mxu0 %v6084
  %9755 = vmatpush1.bf16.msra.mxu0 %v6083
  %9756 = vmatprep.subr.bf16.mxu0 %v6086
  %9757 = vmatpush1.bf16.msra.mxu0 %v6085
  %9758 = vmatprep.subr.bf16.mxu0 %v6088
  %9759 = vmatpush1.bf16.msra.mxu0 %v6087
  %9760 = vmatprep.subr.bf16.mxu0 %v6090
  %9761 = vmatpush1.bf16.msra.mxu0 %v6089
  %9762 = vmatprep.subr.bf16.mxu0 %v6092
  %9763 = vmatpush1.bf16.msra.mxu0 %v6091
  %9764 = vmatprep.subr.bf16.mxu0 %v6094
  %9765 = vmatpush1.bf16.msra.mxu0 %v6093
  %9766 = vmatprep.subr.bf16.mxu0 %v6096
  %9767 = vmatpush1.bf16.msra.mxu0 %v6095
  %9768 = vmatprep.subr.bf16.mxu0 %v6098
  %9769 = vmatpush1.bf16.msra.mxu0 %v6097
  %9770 = vmatprep.subr.bf16.mxu0 %v6100
  %9771 = vmatpush1.bf16.msra.mxu0 %v6099
  %9772 = vmatprep.subr.bf16.mxu0 %v6102
  %9773 = vmatpush1.bf16.msra.mxu0 %v6101
  %9774 = vmatprep.subr.bf16.mxu0 %v6104
  %9775 = vmatpush1.bf16.msra.mxu0 %v6103
  %9776 = vmatprep.subr.bf16.mxu0 %v6106
  %9777 = vmatpush1.bf16.msra.mxu0 %v6105
  %9778 = vmatprep.subr.bf16.mxu0 %v6108
  %9779 = vmatpush1.bf16.msra.mxu0 %v6107
  %9780 = vmatprep.mubr.bf16.mxu0 %v8324
  %9781 = vmatmul.mubr.bf16.gmra.mrb[0].mxu0 %v8323
  %v9782 = vpop.f32.mrb[0].mxu0
  %v9783 = vadd.f32 %v9742, %v9782
  %v9784 = vpop.f32.mrb[0].mxu0
  %v9785 = vadd.f32 %v9744, %v9784
  %v9786 = vpop.f32.mrb[0].mxu0
  %v9787 = vpop.f32.mrb[0].mxu0
  %9788 = vdwg.mxu0
  %9789 = vmatprep.subr.bf16.mxu0 %v6110
  %9790 = vmatpush1.bf16.msra.mxu0 %v6109
  %9791 = vmatprep.subr.bf16.mxu0 %v6112
  %9792 = vmatpush1.bf16.msra.mxu0 %v6111
  %9793 = vmatprep.subr.bf16.mxu0 %v6114
  %9794 = vmatpush1.bf16.msra.mxu0 %v6113
  %9795 = vmatprep.subr.bf16.mxu0 %v6116
  %9796 = vmatpush1.bf16.msra.mxu0 %v6115
  %9797 = vmatprep.subr.bf16.mxu0 %v6118
  %9798 = vmatpush1.bf16.msra.mxu0 %v6117
  %9799 = vmatprep.subr.bf16.mxu0 %v6120
  %9800 = vmatpush1.bf16.msra.mxu0 %v6119
  %9801 = vmatprep.subr.bf16.mxu0 %v6122
  %9802 = vmatpush1.bf16.msra.mxu0 %v6121
  %9803 = vmatprep.subr.bf16.mxu0 %v6124
  %9804 = vmatpush1.bf16.msra.mxu0 %v6123
  %9805 = vmatprep.subr.bf16.mxu0 %v6126
  %9806 = vmatpush1.bf16.msra.mxu0 %v6125
  %9807 = vmatprep.subr.bf16.mxu0 %v6128
  %9808 = vmatpush1.bf16.msra.mxu0 %v6127
  %9809 = vmatprep.subr.bf16.mxu0 %v6130
  %9810 = vmatpush1.bf16.msra.mxu0 %v6129
  %9811 = vmatprep.subr.bf16.mxu0 %v6132
  %9812 = vmatpush1.bf16.msra.mxu0 %v6131
  %9813 = vmatprep.subr.bf16.mxu0 %v6134
  %9814 = vmatpush1.bf16.msra.mxu0 %v6133
  %9815 = vmatprep.subr.bf16.mxu0 %v6136
  %9816 = vmatpush1.bf16.msra.mxu0 %v6135
  %9817 = vmatprep.subr.bf16.mxu0 %v6138
  %9818 = vmatpush1.bf16.msra.mxu0 %v6137
  %9819 = vmatprep.subr.bf16.mxu0 %v6140
  %9820 = vmatpush1.bf16.msra.mxu0 %v6139
  %9821 = vmatprep.mubr.bf16.mxu0 %v9610
  %9822 = vmatmul.mubr.bf16.gmra.mrb[0].mxu0 %v9609
  %v9823 = vpop.f32.mrb[0].mxu0
  %v9824 = vadd.f32 %v9783, %v9823
  %v9825 = vpop.f32.mrb[0].mxu0
  %v9826 = vadd.f32 %v9785, %v9825
  %v9827 = vpop.f32.mrb[0].mxu0
  %v9828 = vpop.f32.mrb[0].mxu0
  %9829 = vdwg.mxu0
  %9830 = vmatprep.subr.bf16.mxu0 %v6142
  %9831 = vmatpush1.bf16.msra.mxu0 %v6141
  %9832 = vmatprep.subr.bf16.mxu0 %v6144
  %9833 = vmatpush1.bf16.msra.mxu0 %v6143
  %9834 = vmatprep.subr.bf16.mxu0 %v6146
  %9835 = vmatpush1.bf16.msra.mxu0 %v6145
  %9836 = vmatprep.subr.bf16.mxu0 %v6148
  %9837 = vmatpush1.bf16.msra.mxu0 %v6147
  %9838 = vmatprep.subr.bf16.mxu0 %v6150
  %9839 = vmatpush1.bf16.msra.mxu0 %v6149
  %9840 = vmatprep.subr.bf16.mxu0 %v6152
  %9841 = vmatpush1.bf16.msra.mxu0 %v6151
  %9842 = vmatprep.subr.bf16.mxu0 %v6154
  %9843 = vmatpush1.bf16.msra.mxu0 %v6153
  %9844 = vmatprep.subr.bf16.mxu0 %v6156
  %9845 = vmatpush1.bf16.msra.mxu0 %v6155
  %9846 = vmatprep.subr.bf16.mxu0 %v6158
  %9847 = vmatpush1.bf16.msra.mxu0 %v6157
  %9848 = vmatprep.subr.bf16.mxu0 %v6160
  %9849 = vmatpush1.bf16.msra.mxu0 %v6159
  %9850 = vmatprep.subr.bf16.mxu0 %v6162
  %9851 = vmatpush1.bf16.msra.mxu0 %v6161
  %9852 = vmatprep.subr.bf16.mxu0 %v6164
  %9853 = vmatpush1.bf16.msra.mxu0 %v6163
  %9854 = vmatprep.subr.bf16.mxu0 %v6166
  %9855 = vmatpush1.bf16.msra.mxu0 %v6165
  %9856 = vmatprep.subr.bf16.mxu0 %v6168
  %9857 = vmatpush1.bf16.msra.mxu0 %v6167
  %9858 = vmatprep.subr.bf16.mxu0 %v6170
  %9859 = vmatpush1.bf16.msra.mxu0 %v6169
  %9860 = vmatprep.subr.bf16.mxu0 %v6172
  %9861 = vmatpush1.bf16.msra.mxu0 %v6171
  %9862 = vmatprep.mubr.bf16.mxu0 %v9612
  %9863 = vmatmul.mubr.bf16.gmra.mrb[0].mxu0 %v9611
  %v9864 = vpop.f32.mrb[0].mxu0
  %v9865 = vadd.f32 %v9824, %v9864
  %v9866 = vpop.f32.mrb[0].mxu0
  %v9867 = vadd.f32 %v9826, %v9866
  %v9868 = vpop.f32.mrb[0].mxu0
  %v9869 = vpop.f32.mrb[0].mxu0
  %9870 = vdwg.mxu0
  %9871 = vmatprep.subr.bf16.mxu0 %v6174
  %9872 = vmatpush1.bf16.msra.mxu0 %v6173
  %9873 = vmatprep.subr.bf16.mxu0 %v6176
  %9874 = vmatpush1.bf16.msra.mxu0 %v6175
  %9875 = vmatprep.subr.bf16.mxu0 %v6178
  %9876 = vmatpush1.bf16.msra.mxu0 %v6177
  %9877 = vmatprep.subr.bf16.mxu0 %v6180
  %9878 = vmatpush1.bf16.msra.mxu0 %v6179
  %9879 = vmatprep.subr.bf16.mxu0 %v6182
  %9880 = vmatpush1.bf16.msra.mxu0 %v6181
  %9881 = vmatprep.subr.bf16.mxu0 %v6184
  %9882 = vmatpush1.bf16.msra.mxu0 %v6183
  %9883 = vmatprep.subr.bf16.mxu0 %v6186
  %9884 = vmatpush1.bf16.msra.mxu0 %v6185
  %9885 = vmatprep.subr.bf16.mxu0 %v6188
  %9886 = vmatpush1.bf16.msra.mxu0 %v6187
  %9887 = vmatprep.subr.bf16.mxu0 %v6190
  %9888 = vmatpush1.bf16.msra.mxu0 %v6189
  %9889 = vmatprep.subr.bf16.mxu0 %v6192
  %9890 = vmatpush1.bf16.msra.mxu0 %v6191
  %9891 = vmatprep.subr.bf16.mxu0 %v6194
  %9892 = vmatpush1.bf16.msra.mxu0 %v6193
  %9893 = vmatprep.subr.bf16.mxu0 %v6196
  %9894 = vmatpush1.bf16.msra.mxu0 %v6195
  %9895 = vmatprep.subr.bf16.mxu0 %v6198
  %9896 = vmatpush1.bf16.msra.mxu0 %v6197
  %9897 = vmatprep.subr.bf16.mxu0 %v6200
  %9898 = vmatpush1.bf16.msra.mxu0 %v6199
  %9899 = vmatprep.subr.bf16.mxu0 %v6202
  %9900 = vmatpush1.bf16.msra.mxu0 %v6201
  %9901 = vmatprep.subr.bf16.mxu0 %v6204
  %9902 = vmatpush1.bf16.msra.mxu0 %v6203
  %9903 = vmatprep.mubr.bf16.mxu0 %v9614
  %9904 = vmatmul.mubr.bf16.gmra.mrb[0].mxu0 %v9613
  %v9905 = vpop.f32.mrb[0].mxu0
  %v9906 = vadd.f32 %v9865, %v9905
  %v9907 = vpop.f32.mrb[0].mxu0
  %v9908 = vadd.f32 %v9867, %v9907
  %v9909 = vpop.f32.mrb[0].mxu0
  %v9910 = vpop.f32.mrb[0].mxu0
  %9911 = vdwg.mxu0
  %9912 = vmatprep.subr.bf16.mxu0 %v6206
  %9913 = vmatpush1.bf16.msra.mxu0 %v6205
  %9914 = vmatprep.subr.bf16.mxu0 %v6208
  %9915 = vmatpush1.bf16.msra.mxu0 %v6207
  %9916 = vmatprep.subr.bf16.mxu0 %v6210
  %9917 = vmatpush1.bf16.msra.mxu0 %v6209
  %9918 = vmatprep.subr.bf16.mxu0 %v6212
  %9919 = vmatpush1.bf16.msra.mxu0 %v6211
  %9920 = vmatprep.subr.bf16.mxu0 %v6214
  %9921 = vmatpush1.bf16.msra.mxu0 %v6213
  %9922 = vmatprep.subr.bf16.mxu0 %v6216
  %9923 = vmatpush1.bf16.msra.mxu0 %v6215
  %9924 = vmatprep.subr.bf16.mxu0 %v6218
  %9925 = vmatpush1.bf16.msra.mxu0 %v6217
  %9926 = vmatprep.subr.bf16.mxu0 %v6220
  %9927 = vmatpush1.bf16.msra.mxu0 %v6219
  %9928 = vmatprep.subr.bf16.mxu0 %v6222
  %9929 = vmatpush1.bf16.msra.mxu0 %v6221
  %9930 = vmatprep.subr.bf16.mxu0 %v6224
  %9931 = vmatpush1.bf16.msra.mxu0 %v6223
  %9932 = vmatprep.subr.bf16.mxu0 %v6226
  %9933 = vmatpush1.bf16.msra.mxu0 %v6225
  %9934 = vmatprep.subr.bf16.mxu0 %v6228
  %9935 = vmatpush1.bf16.msra.mxu0 %v6227
  %9936 = vmatprep.subr.bf16.mxu0 %v6230
  %9937 = vmatpush1.bf16.msra.mxu0 %v6229
  %9938 = vmatprep.subr.bf16.mxu0 %v6232
  %9939 = vmatpush1.bf16.msra.mxu0 %v6231
  %9940 = vmatprep.subr.bf16.mxu0 %v6234
  %9941 = vmatpush1.bf16.msra.mxu0 %v6233
  %9942 = vmatprep.subr.bf16.mxu0 %v6236
  %9943 = vmatpush1.bf16.msra.mxu0 %v6235
  %9944 = vmatprep.mubr.bf16.mxu0 %v9616
  %9945 = vmatmul.mubr.bf16.gmra.mrb[0].mxu0 %v9615
  %v9946 = vpop.f32.mrb[0].mxu0
  %v9947 = vadd.f32 %v9906, %v9946
  %v9948 = vpop.f32.mrb[0].mxu0
  %v9949 = vadd.f32 %v9908, %v9948
  %v9950 = vpop.f32.mrb[0].mxu0
  %v9951 = vpop.f32.mrb[0].mxu0
  %9952 = vdwg.mxu0
  %v9953 = vmax.f32 %v9947, 0.0
  %v9954 = vmax.f32 %v9949, 0.0
  %v9955 = vpack.c.bf16 %v9953, %v9953
  %v9956 = vpack.c.bf16 %v9954, %v9954
  %v9957 = vsel %vm4920, %v9085, %v9077
  %v9958 = vsel %vm4923, %v9087, %v9957
  %v9959 = vsel %vm4926, %v9089, %v9958
  %v9960 = vsel %vm4908, %v9093, %v9091
  %v9961 = vsel %vm4911, %v9095, %v9960
  %v9962 = vsel %vm4914, %v9097, %v9961
  %v9963 = vpack.c.b16 %v9962, %v9959
  %v9964 = vsel %vm4920, %v9078, %v9101
  %v9965 = vsel %vm4923, %v9103, %v9964
  %v9966 = vsel %vm4926, %v9105, %v9965
  %v9967 = vsel %vm4908, %v9109, %v9107
  %v9968 = vsel %vm4911, %v9111, %v9967
  %v9969 = vsel %vm4914, %v9113, %v9968
  %v9970 = vpack.c.b16 %v9969, %v9966
  %v9971 = vsel %vm4920, %v9118, %v9117
  %v9972 = vsel %vm4923, %v9079, %v9971
  %v9973 = vsel %vm4926, %v9121, %v9972
  %v9974 = vsel %vm4908, %v9125, %v9123
  %v9975 = vsel %vm4911, %v9127, %v9974
  %v9976 = vsel %vm4914, %v9129, %v9975
  %v9977 = vpack.c.b16 %v9976, %v9973
  %v9978 = vsel %vm4920, %v9134, %v9133
  %v9979 = vsel %vm4923, %v9136, %v9978
  %v9980 = vsel %vm4926, %v9080, %v9979
  %v9981 = vsel %vm4908, %v9141, %v9139
  %v9982 = vsel %vm4911, %v9143, %v9981
  %v9983 = vsel %vm4914, %v9145, %v9982
  %v9984 = vpack.c.b16 %v9983, %v9980
  %v9985 = vsel %vm4920, %v9157, %v9149
  %v9986 = vsel %vm4923, %v9159, %v9985
  %v9987 = vsel %vm4926, %v9161, %v9986
  %v9988 = vsel %vm4908, %v9165, %v9163
  %v9989 = vsel %vm4911, %v9167, %v9988
  %v9990 = vsel %vm4914, %v9169, %v9989
  %v9991 = vpack.c.b16 %v9990, %v9987
  %v9992 = vsel %vm4920, %v9150, %v9173
  %v9993 = vsel %vm4923, %v9175, %v9992
  %v9994 = vsel %vm4926, %v9177, %v9993
  %v9995 = vsel %vm4908, %v9181, %v9179
  %v9996 = vsel %vm4911, %v9183, %v9995
  %v9997 = vsel %vm4914, %v9185, %v9996
  %v9998 = vpack.c.b16 %v9997, %v9994
  %v9999 = vsel %vm4920, %v9190, %v9189
  %v10000 = vsel %vm4923, %v9151, %v9999
  %v10001 = vsel %vm4926, %v9193, %v10000
  %v10002 = vsel %vm4908, %v9197, %v9195
  %v10003 = vsel %vm4911, %v9199, %v10002
  %v10004 = vsel %vm4914, %v9201, %v10003
  %v10005 = vpack.c.b16 %v10004, %v10001
  %v10006 = vsel %vm4920, %v9206, %v9205
  %v10007 = vsel %vm4923, %v9208, %v10006
  %v10008 = vsel %vm4926, %v9152, %v10007
  %v10009 = vsel %vm4908, %v9213, %v9211
  %v10010 = vsel %vm4911, %v9215, %v10009
  %v10011 = vsel %vm4914, %v9217, %v10010
  %v10012 = vpack.c.b16 %v10011, %v10008
  %v10013 = vrot.slane %v9963, 2
  %v10014 = vrot.slane %v9970, 2
  %v10015 = vrot.slane %v9977, 2
  %v10016 = vrot.slane %v9984, 2
  %v10017 = vrot.slane %v9991, 2
  %v10018 = vrot.slane %v9998, 2
  %v10019 = vrot.slane %v10005, 2
  %v10020 = vrot.slane %v10012, 2
  %10029 = vmatprep.subr.bf16.mxu0 %v5982
  %10030 = vmatpush1.bf16.msra.mxu0 %v5981
  %10031 = vmatprep.subr.bf16.mxu0 %v5984
  %10032 = vmatpush1.bf16.msra.mxu0 %v5983
  %10033 = vmatprep.subr.bf16.mxu0 %v5986
  %10034 = vmatpush1.bf16.msra.mxu0 %v5985
  %10035 = vmatprep.subr.bf16.mxu0 %v5988
  %10036 = vmatpush1.bf16.msra.mxu0 %v5987
  %10037 = vmatprep.subr.bf16.mxu0 %v5990
  %10038 = vmatpush1.bf16.msra.mxu0 %v5989
  %10039 = vmatprep.subr.bf16.mxu0 %v5992
  %10040 = vmatpush1.bf16.msra.mxu0 %v5991
  %10041 = vmatprep.subr.bf16.mxu0 %v5994
  %10042 = vmatpush1.bf16.msra.mxu0 %v5993
  %10043 = vmatprep.subr.bf16.mxu0 %v5996
  %10044 = vmatpush1.bf16.msra.mxu0 %v5995
  %10045 = vmatprep.subr.bf16.mxu0 %v5998
  %10046 = vmatpush1.bf16.msra.mxu0 %v5997
  %10047 = vmatprep.subr.bf16.mxu0 %v6000
  %10048 = vmatpush1.bf16.msra.mxu0 %v5999
  %10049 = vmatprep.subr.bf16.mxu0 %v6002
  %10050 = vmatpush1.bf16.msra.mxu0 %v6001
  %10051 = vmatprep.subr.bf16.mxu0 %v6004
  %10052 = vmatpush1.bf16.msra.mxu0 %v6003
  %10053 = vmatprep.subr.bf16.mxu0 %v6006
  %10054 = vmatpush1.bf16.msra.mxu0 %v6005
  %10055 = vmatprep.subr.bf16.mxu0 %v6008
  %10056 = vmatpush1.bf16.msra.mxu0 %v6007
  %10057 = vmatprep.subr.bf16.mxu0 %v6010
  %10058 = vmatpush1.bf16.msra.mxu0 %v6009
  %10059 = vmatprep.subr.bf16.mxu0 %v6012
  %10060 = vmatpush1.bf16.msra.mxu0 %v6011
  %10061 = vmatprep.mubr.bf16.mxu0 %v8722
  %10062 = vmatmul.mubr.bf16.gmra.mrb[0].mxu0 %v8721
  %v10063 = vpop.f32.mrb[0].mxu0
  %v10064 = vadd.f32 %v5206, %v10063
  %v10065 = vpop.f32.mrb[0].mxu0
  %v10066 = vadd.f32 %v5210, %v10065
  %v10067 = vpop.f32.mrb[0].mxu0
  %v10068 = vpop.f32.mrb[0].mxu0
  %10069 = vdwg.mxu0
  %10070 = vmatprep.subr.bf16.mxu0 %v6014
  %10071 = vmatpush1.bf16.msra.mxu0 %v6013
  %10072 = vmatprep.subr.bf16.mxu0 %v6016
  %10073 = vmatpush1.bf16.msra.mxu0 %v6015
  %10074 = vmatprep.subr.bf16.mxu0 %v6018
  %10075 = vmatpush1.bf16.msra.mxu0 %v6017
  %10076 = vmatprep.subr.bf16.mxu0 %v6020
  %10077 = vmatpush1.bf16.msra.mxu0 %v6019
  %10078 = vmatprep.subr.bf16.mxu0 %v6022
  %10079 = vmatpush1.bf16.msra.mxu0 %v6021
  %10080 = vmatprep.subr.bf16.mxu0 %v6024
  %10081 = vmatpush1.bf16.msra.mxu0 %v6023
  %10082 = vmatprep.subr.bf16.mxu0 %v6026
  %10083 = vmatpush1.bf16.msra.mxu0 %v6025
  %10084 = vmatprep.subr.bf16.mxu0 %v6028
  %10085 = vmatpush1.bf16.msra.mxu0 %v6027
  %10086 = vmatprep.subr.bf16.mxu0 %v6030
  %10087 = vmatpush1.bf16.msra.mxu0 %v6029
  %10088 = vmatprep.subr.bf16.mxu0 %v6032
  %10089 = vmatpush1.bf16.msra.mxu0 %v6031
  %10090 = vmatprep.subr.bf16.mxu0 %v6034
  %10091 = vmatpush1.bf16.msra.mxu0 %v6033
  %10092 = vmatprep.subr.bf16.mxu0 %v6036
  %10093 = vmatpush1.bf16.msra.mxu0 %v6035
  %10094 = vmatprep.subr.bf16.mxu0 %v6038
  %10095 = vmatpush1.bf16.msra.mxu0 %v6037
  %10096 = vmatprep.subr.bf16.mxu0 %v6040
  %10097 = vmatpush1.bf16.msra.mxu0 %v6039
  %10098 = vmatprep.subr.bf16.mxu0 %v6042
  %10099 = vmatpush1.bf16.msra.mxu0 %v6041
  %10100 = vmatprep.subr.bf16.mxu0 %v6044
  %10101 = vmatpush1.bf16.msra.mxu0 %v6043
  %10102 = vmatprep.mubr.bf16.mxu0 %v8724
  %10103 = vmatmul.mubr.bf16.gmra.mrb[0].mxu0 %v8723
  %v10104 = vpop.f32.mrb[0].mxu0
  %v10105 = vadd.f32 %v10064, %v10104
  %v10106 = vpop.f32.mrb[0].mxu0
  %v10107 = vadd.f32 %v10066, %v10106
  %v10108 = vpop.f32.mrb[0].mxu0
  %v10109 = vpop.f32.mrb[0].mxu0
  %10110 = vdwg.mxu0
  %10111 = vmatprep.subr.bf16.mxu0 %v6046
  %10112 = vmatpush1.bf16.msra.mxu0 %v6045
  %10113 = vmatprep.subr.bf16.mxu0 %v6048
  %10114 = vmatpush1.bf16.msra.mxu0 %v6047
  %10115 = vmatprep.subr.bf16.mxu0 %v6050
  %10116 = vmatpush1.bf16.msra.mxu0 %v6049
  %10117 = vmatprep.subr.bf16.mxu0 %v6052
  %10118 = vmatpush1.bf16.msra.mxu0 %v6051
  %10119 = vmatprep.subr.bf16.mxu0 %v6054
  %10120 = vmatpush1.bf16.msra.mxu0 %v6053
  %10121 = vmatprep.subr.bf16.mxu0 %v6056
  %10122 = vmatpush1.bf16.msra.mxu0 %v6055
  %10123 = vmatprep.subr.bf16.mxu0 %v6058
  %10124 = vmatpush1.bf16.msra.mxu0 %v6057
  %10125 = vmatprep.subr.bf16.mxu0 %v6060
  %10126 = vmatpush1.bf16.msra.mxu0 %v6059
  %10127 = vmatprep.subr.bf16.mxu0 %v6062
  %10128 = vmatpush1.bf16.msra.mxu0 %v6061
  %10129 = vmatprep.subr.bf16.mxu0 %v6064
  %10130 = vmatpush1.bf16.msra.mxu0 %v6063
  %10131 = vmatprep.subr.bf16.mxu0 %v6066
  %10132 = vmatpush1.bf16.msra.mxu0 %v6065
  %10133 = vmatprep.subr.bf16.mxu0 %v6068
  %10134 = vmatpush1.bf16.msra.mxu0 %v6067
  %10135 = vmatprep.subr.bf16.mxu0 %v6070
  %10136 = vmatpush1.bf16.msra.mxu0 %v6069
  %10137 = vmatprep.subr.bf16.mxu0 %v6072
  %10138 = vmatpush1.bf16.msra.mxu0 %v6071
  %10139 = vmatprep.subr.bf16.mxu0 %v6074
  %10140 = vmatpush1.bf16.msra.mxu0 %v6073
  %10141 = vmatprep.subr.bf16.mxu0 %v6076
  %10142 = vmatpush1.bf16.msra.mxu0 %v6075
  %10143 = vmatprep.mubr.bf16.mxu0 %v8726
  %10144 = vmatmul.mubr.bf16.gmra.mrb[0].mxu0 %v8725
  %v10145 = vpop.f32.mrb[0].mxu0
  %v10146 = vadd.f32 %v10105, %v10145
  %v10147 = vpop.f32.mrb[0].mxu0
  %v10148 = vadd.f32 %v10107, %v10147
  %v10149 = vpop.f32.mrb[0].mxu0
  %v10150 = vpop.f32.mrb[0].mxu0
  %10151 = vdwg.mxu0
  %10152 = vmatprep.subr.bf16.mxu0 %v6078
  %10153 = vmatpush1.bf16.msra.mxu0 %v6077
  %10154 = vmatprep.subr.bf16.mxu0 %v6080
  %10155 = vmatpush1.bf16.msra.mxu0 %v6079
  %10156 = vmatprep.subr.bf16.mxu0 %v6082
  %10157 = vmatpush1.bf16.msra.mxu0 %v6081
  %10158 = vmatprep.subr.bf16.mxu0 %v6084
  %10159 = vmatpush1.bf16.msra.mxu0 %v6083
  %10160 = vmatprep.subr.bf16.mxu0 %v6086
  %10161 = vmatpush1.bf16.msra.mxu0 %v6085
  %10162 = vmatprep.subr.bf16.mxu0 %v6088
  %10163 = vmatpush1.bf16.msra.mxu0 %v6087
  %10164 = vmatprep.subr.bf16.mxu0 %v6090
  %10165 = vmatpush1.bf16.msra.mxu0 %v6089
  %10166 = vmatprep.subr.bf16.mxu0 %v6092
  %10167 = vmatpush1.bf16.msra.mxu0 %v6091
  %10168 = vmatprep.subr.bf16.mxu0 %v6094
  %10169 = vmatpush1.bf16.msra.mxu0 %v6093
  %10170 = vmatprep.subr.bf16.mxu0 %v6096
  %10171 = vmatpush1.bf16.msra.mxu0 %v6095
  %10172 = vmatprep.subr.bf16.mxu0 %v6098
  %10173 = vmatpush1.bf16.msra.mxu0 %v6097
  %10174 = vmatprep.subr.bf16.mxu0 %v6100
  %10175 = vmatpush1.bf16.msra.mxu0 %v6099
  %10176 = vmatprep.subr.bf16.mxu0 %v6102
  %10177 = vmatpush1.bf16.msra.mxu0 %v6101
  %10178 = vmatprep.subr.bf16.mxu0 %v6104
  %10179 = vmatpush1.bf16.msra.mxu0 %v6103
  %10180 = vmatprep.subr.bf16.mxu0 %v6106
  %10181 = vmatpush1.bf16.msra.mxu0 %v6105
  %10182 = vmatprep.subr.bf16.mxu0 %v6108
  %10183 = vmatpush1.bf16.msra.mxu0 %v6107
  %10184 = vmatprep.mubr.bf16.mxu0 %v8728
  %10185 = vmatmul.mubr.bf16.gmra.mrb[0].mxu0 %v8727
  %v10186 = vpop.f32.mrb[0].mxu0
  %v10187 = vadd.f32 %v10146, %v10186
  %v10188 = vpop.f32.mrb[0].mxu0
  %v10189 = vadd.f32 %v10148, %v10188
  %v10190 = vpop.f32.mrb[0].mxu0
  %v10191 = vpop.f32.mrb[0].mxu0
  %10192 = vdwg.mxu0
  %10193 = vmatprep.subr.bf16.mxu0 %v6110
  %10194 = vmatpush1.bf16.msra.mxu0 %v6109
  %10195 = vmatprep.subr.bf16.mxu0 %v6112
  %10196 = vmatpush1.bf16.msra.mxu0 %v6111
  %10197 = vmatprep.subr.bf16.mxu0 %v6114
  %10198 = vmatpush1.bf16.msra.mxu0 %v6113
  %10199 = vmatprep.subr.bf16.mxu0 %v6116
  %10200 = vmatpush1.bf16.msra.mxu0 %v6115
  %10201 = vmatprep.subr.bf16.mxu0 %v6118
  %10202 = vmatpush1.bf16.msra.mxu0 %v6117
  %10203 = vmatprep.subr.bf16.mxu0 %v6120
  %10204 = vmatpush1.bf16.msra.mxu0 %v6119
  %10205 = vmatprep.subr.bf16.mxu0 %v6122
  %10206 = vmatpush1.bf16.msra.mxu0 %v6121
  %10207 = vmatprep.subr.bf16.mxu0 %v6124
  %10208 = vmatpush1.bf16.msra.mxu0 %v6123
  %10209 = vmatprep.subr.bf16.mxu0 %v6126
  %10210 = vmatpush1.bf16.msra.mxu0 %v6125
  %10211 = vmatprep.subr.bf16.mxu0 %v6128
  %10212 = vmatpush1.bf16.msra.mxu0 %v6127
  %10213 = vmatprep.subr.bf16.mxu0 %v6130
  %10214 = vmatpush1.bf16.msra.mxu0 %v6129
  %10215 = vmatprep.subr.bf16.mxu0 %v6132
  %10216 = vmatpush1.bf16.msra.mxu0 %v6131
  %10217 = vmatprep.subr.bf16.mxu0 %v6134
  %10218 = vmatpush1.bf16.msra.mxu0 %v6133
  %10219 = vmatprep.subr.bf16.mxu0 %v6136
  %10220 = vmatpush1.bf16.msra.mxu0 %v6135
  %10221 = vmatprep.subr.bf16.mxu0 %v6138
  %10222 = vmatpush1.bf16.msra.mxu0 %v6137
  %10223 = vmatprep.subr.bf16.mxu0 %v6140
  %10224 = vmatpush1.bf16.msra.mxu0 %v6139
  %10225 = vmatprep.mubr.bf16.mxu0 %v10014
  %10226 = vmatmul.mubr.bf16.gmra.mrb[0].mxu0 %v10013
  %v10227 = vpop.f32.mrb[0].mxu0
  %v10228 = vadd.f32 %v10187, %v10227
  %v10229 = vpop.f32.mrb[0].mxu0
  %v10230 = vadd.f32 %v10189, %v10229
  %v10231 = vpop.f32.mrb[0].mxu0
  %v10232 = vpop.f32.mrb[0].mxu0
  %10233 = vdwg.mxu0
  %10234 = vmatprep.subr.bf16.mxu0 %v6142
  %10235 = vmatpush1.bf16.msra.mxu0 %v6141
  %10236 = vmatprep.subr.bf16.mxu0 %v6144
  %10237 = vmatpush1.bf16.msra.mxu0 %v6143
  %10238 = vmatprep.subr.bf16.mxu0 %v6146
  %10239 = vmatpush1.bf16.msra.mxu0 %v6145
  %10240 = vmatprep.subr.bf16.mxu0 %v6148
  %10241 = vmatpush1.bf16.msra.mxu0 %v6147
  %10242 = vmatprep.subr.bf16.mxu0 %v6150
  %10243 = vmatpush1.bf16.msra.mxu0 %v6149
  %10244 = vmatprep.subr.bf16.mxu0 %v6152
  %10245 = vmatpush1.bf16.msra.mxu0 %v6151
  %10246 = vmatprep.subr.bf16.mxu0 %v6154
  %10247 = vmatpush1.bf16.msra.mxu0 %v6153
  %10248 = vmatprep.subr.bf16.mxu0 %v6156
  %10249 = vmatpush1.bf16.msra.mxu0 %v6155
  %10250 = vmatprep.subr.bf16.mxu0 %v6158
  %10251 = vmatpush1.bf16.msra.mxu0 %v6157
  %10252 = vmatprep.subr.bf16.mxu0 %v6160
  %10253 = vmatpush1.bf16.msra.mxu0 %v6159
  %10254 = vmatprep.subr.bf16.mxu0 %v6162
  %10255 = vmatpush1.bf16.msra.mxu0 %v6161
  %10256 = vmatprep.subr.bf16.mxu0 %v6164
  %10257 = vmatpush1.bf16.msra.mxu0 %v6163
  %10258 = vmatprep.subr.bf16.mxu0 %v6166
  %10259 = vmatpush1.bf16.msra.mxu0 %v6165
  %10260 = vmatprep.subr.bf16.mxu0 %v6168
  %10261 = vmatpush1.bf16.msra.mxu0 %v6167
  %10262 = vmatprep.subr.bf16.mxu0 %v6170
  %10263 = vmatpush1.bf16.msra.mxu0 %v6169
  %10264 = vmatprep.subr.bf16.mxu0 %v6172
  %10265 = vmatpush1.bf16.msra.mxu0 %v6171
  %10266 = vmatprep.mubr.bf16.mxu0 %v10016
  %10267 = vmatmul.mubr.bf16.gmra.mrb[0].mxu0 %v10015
  %v10268 = vpop.f32.mrb[0].mxu0
  %v10269 = vadd.f32 %v10228, %v10268
  %v10270 = vpop.f32.mrb[0].mxu0
  %v10271 = vadd.f32 %v10230, %v10270
  %v10272 = vpop.f32.mrb[0].mxu0
  %v10273 = vpop.f32.mrb[0].mxu0
  %10274 = vdwg.mxu0
  %10275 = vmatprep.subr.bf16.mxu0 %v6174
  %10276 = vmatpush1.bf16.msra.mxu0 %v6173
  %10277 = vmatprep.subr.bf16.mxu0 %v6176
  %10278 = vmatpush1.bf16.msra.mxu0 %v6175
  %10279 = vmatprep.subr.bf16.mxu0 %v6178
  %10280 = vmatpush1.bf16.msra.mxu0 %v6177
  %10281 = vmatprep.subr.bf16.mxu0 %v6180
  %10282 = vmatpush1.bf16.msra.mxu0 %v6179
  %10283 = vmatprep.subr.bf16.mxu0 %v6182
  %10284 = vmatpush1.bf16.msra.mxu0 %v6181
  %10285 = vmatprep.subr.bf16.mxu0 %v6184
  %10286 = vmatpush1.bf16.msra.mxu0 %v6183
  %10287 = vmatprep.subr.bf16.mxu0 %v6186
  %10288 = vmatpush1.bf16.msra.mxu0 %v6185
  %10289 = vmatprep.subr.bf16.mxu0 %v6188
  %10290 = vmatpush1.bf16.msra.mxu0 %v6187
  %10291 = vmatprep.subr.bf16.mxu0 %v6190
  %10292 = vmatpush1.bf16.msra.mxu0 %v6189
  %10293 = vmatprep.subr.bf16.mxu0 %v6192
  %10294 = vmatpush1.bf16.msra.mxu0 %v6191
  %10295 = vmatprep.subr.bf16.mxu0 %v6194
  %10296 = vmatpush1.bf16.msra.mxu0 %v6193
  %10297 = vmatprep.subr.bf16.mxu0 %v6196
  %10298 = vmatpush1.bf16.msra.mxu0 %v6195
  %10299 = vmatprep.subr.bf16.mxu0 %v6198
  %10300 = vmatpush1.bf16.msra.mxu0 %v6197
  %10301 = vmatprep.subr.bf16.mxu0 %v6200
  %10302 = vmatpush1.bf16.msra.mxu0 %v6199
  %10303 = vmatprep.subr.bf16.mxu0 %v6202
  %10304 = vmatpush1.bf16.msra.mxu0 %v6201
  %10305 = vmatprep.subr.bf16.mxu0 %v6204
  %10306 = vmatpush1.bf16.msra.mxu0 %v6203
  %10307 = vmatprep.mubr.bf16.mxu0 %v10018
  %10308 = vmatmul.mubr.bf16.gmra.mrb[0].mxu0 %v10017
  %v10309 = vpop.f32.mrb[0].mxu0
  %v10310 = vadd.f32 %v10269, %v10309
  %v10311 = vpop.f32.mrb[0].mxu0
  %v10312 = vadd.f32 %v10271, %v10311
  %v10313 = vpop.f32.mrb[0].mxu0
  %v10314 = vpop.f32.mrb[0].mxu0
  %10315 = vdwg.mxu0
  %10316 = vmatprep.subr.bf16.mxu0 %v6206
  %10317 = vmatpush1.bf16.msra.mxu0 %v6205
  %10318 = vmatprep.subr.bf16.mxu0 %v6208
  %10319 = vmatpush1.bf16.msra.mxu0 %v6207
  %10320 = vmatprep.subr.bf16.mxu0 %v6210
  %10321 = vmatpush1.bf16.msra.mxu0 %v6209
  %10322 = vmatprep.subr.bf16.mxu0 %v6212
  %10323 = vmatpush1.bf16.msra.mxu0 %v6211
  %10324 = vmatprep.subr.bf16.mxu0 %v6214
  %10325 = vmatpush1.bf16.msra.mxu0 %v6213
  %10326 = vmatprep.subr.bf16.mxu0 %v6216
  %10327 = vmatpush1.bf16.msra.mxu0 %v6215
  %10328 = vmatprep.subr.bf16.mxu0 %v6218
  %10329 = vmatpush1.bf16.msra.mxu0 %v6217
  %10330 = vmatprep.subr.bf16.mxu0 %v6220
  %10331 = vmatpush1.bf16.msra.mxu0 %v6219
  %10332 = vmatprep.subr.bf16.mxu0 %v6222
  %10333 = vmatpush1.bf16.msra.mxu0 %v6221
  %10334 = vmatprep.subr.bf16.mxu0 %v6224
  %10335 = vmatpush1.bf16.msra.mxu0 %v6223
  %10336 = vmatprep.subr.bf16.mxu0 %v6226
  %10337 = vmatpush1.bf16.msra.mxu0 %v6225
  %10338 = vmatprep.subr.bf16.mxu0 %v6228
  %10339 = vmatpush1.bf16.msra.mxu0 %v6227
  %10340 = vmatprep.subr.bf16.mxu0 %v6230
  %10341 = vmatpush1.bf16.msra.mxu0 %v6229
  %10342 = vmatprep.subr.bf16.mxu0 %v6232
  %10343 = vmatpush1.bf16.msra.mxu0 %v6231
  %10344 = vmatprep.subr.bf16.mxu0 %v6234
  %10345 = vmatpush1.bf16.msra.mxu0 %v6233
  %10346 = vmatprep.subr.bf16.mxu0 %v6236
  %10347 = vmatpush1.bf16.msra.mxu0 %v6235
  %10348 = vmatprep.mubr.bf16.mxu0 %v10020
  %10349 = vmatmul.mubr.bf16.gmra.mrb[0].mxu0 %v10019
  %v10350 = vpop.f32.mrb[0].mxu0
  %v10351 = vadd.f32 %v10310, %v10350
  %v10352 = vpop.f32.mrb[0].mxu0
  %v10353 = vadd.f32 %v10312, %v10352
  %v10354 = vpop.f32.mrb[0].mxu0
  %v10355 = vpop.f32.mrb[0].mxu0
  %10356 = vdwg.mxu0
  %v10357 = vmax.f32 %v10351, 0.0
  %v10358 = vmax.f32 %v10353, 0.0
  %v10359 = vpack.c.bf16 %v10357, %v10357
  %v10360 = vpack.c.bf16 %v10358, %v10358
  %v10361 = vld [vmem:[%s5] sm:$0xf]
  %v10362 = vld [vmem:[%s5 + $0x4] sm:$0xf]
  %v10363 = vld [vmem:[%s5 + $0x8] sm:$0xf]
  %v10364 = vld [vmem:[%s5 + $0xc] sm:$0xf]
  %v10365 = vld [vmem:[%s5 + $0x10] sm:$0xf]
  %v10366 = vld [vmem:[%s5 + $0x14] sm:$0xf]
  %v10367 = vld [vmem:[%s5 + $0x18] sm:$0xf]
  %v10368 = vld [vmem:[%s5 + $0x1c] sm:$0xf]
  %v10369 = vld [vmem:[%s5 + $0x20] sm:$0xf]
  %v10370 = vld [vmem:[%s5 + $0x24] sm:$0xf]
  %v10371 = vld [vmem:[%s5 + $0x28] sm:$0xf]
  %v10372 = vld [vmem:[%s5 + $0x2c] sm:$0xf]
  %v10373 = vld [vmem:[%s5 + $0x30] sm:$0xf]
  %v10374 = vld [vmem:[%s5 + $0x34] sm:$0xf]
  %v10375 = vld [vmem:[%s5 + $0x38] sm:$0xf]
  %v10376 = vld [vmem:[%s5 + $0x3c] sm:$0xf]
  %v10377 = vld [vmem:[%s5 + $0x40] sm:$0xf]
  %v10378 = vld [vmem:[%s5 + $0x44] sm:$0xf]
  %v10379 = vld [vmem:[%s5 + $0x48] sm:$0xf]
  %v10380 = vld [vmem:[%s5 + $0x4c] sm:$0xf]
  %v10381 = vld [vmem:[%s5 + $0x50] sm:$0xf]
  %v10382 = vld [vmem:[%s5 + $0x54] sm:$0xf]
  %v10383 = vld [vmem:[%s5 + $0x58] sm:$0xf]
  %v10384 = vld [vmem:[%s5 + $0x5c] sm:$0xf]
  %v10385 = vld [vmem:[%s5 + $0x60] sm:$0xf]
  %v10386 = vld [vmem:[%s5 + $0x64] sm:$0xf]
  %v10387 = vld [vmem:[%s5 + $0x68] sm:$0xf]
  %v10388 = vld [vmem:[%s5 + $0x6c] sm:$0xf]
  %v10389 = vld [vmem:[%s5 + $0x70] sm:$0xf]
  %v10390 = vld [vmem:[%s5 + $0x74] sm:$0xf]
  %v10391 = vld [vmem:[%s5 + $0x78] sm:$0xf]
  %v10392 = vld [vmem:[%s5 + $0x7c] sm:$0xf]
  %v10393 = vld [vmem:[%s5 + $0x80] sm:$0xf]
  %v10394 = vld [vmem:[%s5 + $0x84] sm:$0xf]
  %v10395 = vld [vmem:[%s5 + $0x88] sm:$0xf]
  %v10396 = vld [vmem:[%s5 + $0x8c] sm:$0xf]
  %v10397 = vld [vmem:[%s5 + $0x90] sm:$0xf]
  %v10398 = vld [vmem:[%s5 + $0x94] sm:$0xf]
  %v10399 = vld [vmem:[%s5 + $0x98] sm:$0xf]
  %v10400 = vld [vmem:[%s5 + $0x9c] sm:$0xf]
  %v10401 = vld [vmem:[%s5 + $0xa0] sm:$0xf]
  %v10402 = vld [vmem:[%s5 + $0xa4] sm:$0xf]
  %v10403 = vld [vmem:[%s5 + $0xa8] sm:$0xf]
  %v10404 = vld [vmem:[%s5 + $0xac] sm:$0xf]
  %v10405 = vld [vmem:[%s5 + $0xb0] sm:$0xf]
  %v10406 = vld [vmem:[%s5 + $0xb4] sm:$0xf]
  %v10407 = vld [vmem:[%s5 + $0xb8] sm:$0xf]
  %v10408 = vld [vmem:[%s5 + $0xbc] sm:$0xf]
  %v10409 = vld [vmem:[%s5 + $0xc0] sm:$0xf]
  %v10410 = vld [vmem:[%s5 + $0xc4] sm:$0xf]
  %v10411 = vld [vmem:[%s5 + $0xc8] sm:$0xf]
  %v10412 = vld [vmem:[%s5 + $0xcc] sm:$0xf]
  %v10413 = vld [vmem:[%s5 + $0xd0] sm:$0xf]
  %v10414 = vld [vmem:[%s5 + $0xd4] sm:$0xf]
  %v10415 = vld [vmem:[%s5 + $0xd8] sm:$0xf]
  %v10416 = vld [vmem:[%s5 + $0xdc] sm:$0xf]
  %v10417 = vld [vmem:[%s5 + $0xe0] sm:$0xf]
  %v10418 = vld [vmem:[%s5 + $0xe4] sm:$0xf]
  %v10419 = vld [vmem:[%s5 + $0xe8] sm:$0xf]
  %v10420 = vld [vmem:[%s5 + $0xec] sm:$0xf]
  %v10421 = vld [vmem:[%s5 + $0xf0] sm:$0xf]
  %v10422 = vld [vmem:[%s5 + $0xf4] sm:$0xf]
  %v10423 = vld [vmem:[%s5 + $0xf8] sm:$0xf]
  %v10424 = vld [vmem:[%s5 + $0xfc] sm:$0xf]
  %v10425 = vld [vmem:[%s5 + $0x100] sm:$0xf]
  %v10426 = vld [vmem:[%s5 + $0x104] sm:$0xf]
  %v10427 = vld [vmem:[%s5 + $0x108] sm:$0xf]
  %v10428 = vld [vmem:[%s5 + $0x10c] sm:$0xf]
  %v10429 = vld [vmem:[%s5 + $0x110] sm:$0xf]
  %v10430 = vld [vmem:[%s5 + $0x114] sm:$0xf]
  %v10431 = vld [vmem:[%s5 + $0x118] sm:$0xf]
  %v10432 = vld [vmem:[%s5 + $0x11c] sm:$0xf]
  %v10433 = vld [vmem:[%s5 + $0x120] sm:$0xf]
  %v10434 = vld [vmem:[%s5 + $0x124] sm:$0xf]
  %v10435 = vld [vmem:[%s5 + $0x128] sm:$0xf]
  %v10436 = vld [vmem:[%s5 + $0x12c] sm:$0xf]
  %v10437 = vld [vmem:[%s5 + $0x130] sm:$0xf]
  %v10438 = vld [vmem:[%s5 + $0x134] sm:$0xf]
  %v10439 = vld [vmem:[%s5 + $0x138] sm:$0xf]
  %v10440 = vld [vmem:[%s5 + $0x13c] sm:$0xf]
  %v10441 = vld [vmem:[%s5 + $0x140] sm:$0xf]
  %v10442 = vld [vmem:[%s5 + $0x144] sm:$0xf]
  %v10443 = vld [vmem:[%s5 + $0x148] sm:$0xf]
  %v10444 = vld [vmem:[%s5 + $0x14c] sm:$0xf]
  %v10445 = vld [vmem:[%s5 + $0x150] sm:$0xf]
  %v10446 = vld [vmem:[%s5 + $0x154] sm:$0xf]
  %v10447 = vld [vmem:[%s5 + $0x158] sm:$0xf]
  %v10448 = vld [vmem:[%s5 + $0x15c] sm:$0xf]
  %v10449 = vld [vmem:[%s5 + $0x160] sm:$0xf]
  %v10450 = vld [vmem:[%s5 + $0x164] sm:$0xf]
  %v10451 = vld [vmem:[%s5 + $0x168] sm:$0xf]
  %v10452 = vld [vmem:[%s5 + $0x16c] sm:$0xf]
  %v10453 = vld [vmem:[%s5 + $0x170] sm:$0xf]
  %v10454 = vld [vmem:[%s5 + $0x174] sm:$0xf]
  %v10455 = vld [vmem:[%s5 + $0x178] sm:$0xf]
  %v10456 = vld [vmem:[%s5 + $0x17c] sm:$0xf]
  %v10457 = vld [vmem:[%s5 + $0x180] sm:$0xf]
  %v10458 = vld [vmem:[%s5 + $0x184] sm:$0xf]
  %v10459 = vld [vmem:[%s5 + $0x188] sm:$0xf]
  %v10460 = vld [vmem:[%s5 + $0x18c] sm:$0xf]
  %v10461 = vld [vmem:[%s5 + $0x190] sm:$0xf]
  %v10462 = vld [vmem:[%s5 + $0x194] sm:$0xf]
  %v10463 = vld [vmem:[%s5 + $0x198] sm:$0xf]
  %v10464 = vld [vmem:[%s5 + $0x19c] sm:$0xf]
  %v10465 = vld [vmem:[%s5 + $0x1a0] sm:$0xf]
  %v10466 = vld [vmem:[%s5 + $0x1a4] sm:$0xf]
  %v10467 = vld [vmem:[%s5 + $0x1a8] sm:$0xf]
  %v10468 = vld [vmem:[%s5 + $0x1ac] sm:$0xf]
  %v10469 = vld [vmem:[%s5 + $0x1b0] sm:$0xf]
  %v10470 = vld [vmem:[%s5 + $0x1b4] sm:$0xf]
  %v10471 = vld [vmem:[%s5 + $0x1b8] sm:$0xf]
  %v10472 = vld [vmem:[%s5 + $0x1bc] sm:$0xf]
  %v10473 = vld [vmem:[%s5 + $0x1c0] sm:$0xf]
  %v10474 = vld [vmem:[%s5 + $0x1c4] sm:$0xf]
  %v10475 = vld [vmem:[%s5 + $0x1c8] sm:$0xf]
  %v10476 = vld [vmem:[%s5 + $0x1cc] sm:$0xf]
  %v10477 = vld [vmem:[%s5 + $0x1d0] sm:$0xf]
  %v10478 = vld [vmem:[%s5 + $0x1d4] sm:$0xf]
  %v10479 = vld [vmem:[%s5 + $0x1d8] sm:$0xf]
  %v10480 = vld [vmem:[%s5 + $0x1dc] sm:$0xf]
  %v10481 = vld [vmem:[%s5 + $0x1e0] sm:$0xf]
  %v10482 = vld [vmem:[%s5 + $0x1e4] sm:$0xf]
  %v10483 = vld [vmem:[%s5 + $0x1e8] sm:$0xf]
  %v10484 = vld [vmem:[%s5 + $0x1ec] sm:$0xf]
  %v10485 = vld [vmem:[%s5 + $0x1f0] sm:$0xf]
  %v10486 = vld [vmem:[%s5 + $0x1f4] sm:$0xf]
  %v10487 = vld [vmem:[%s5 + $0x1f8] sm:$0xf]
  %v10488 = vld [vmem:[%s5 + $0x1fc] sm:$0xf]
  %v10489 = vld [vmem:[%s5 + $0x200] sm:$0xf]
  %v10490 = vld [vmem:[%s5 + $0x204] sm:$0xf]
  %v10491 = vld [vmem:[%s5 + $0x208] sm:$0xf]
  %v10492 = vld [vmem:[%s5 + $0x20c] sm:$0xf]
  %v10493 = vld [vmem:[%s5 + $0x210] sm:$0xf]
  %v10494 = vld [vmem:[%s5 + $0x214] sm:$0xf]
  %v10495 = vld [vmem:[%s5 + $0x218] sm:$0xf]
  %v10496 = vld [vmem:[%s5 + $0x21c] sm:$0xf]
  %v10497 = vld [vmem:[%s5 + $0x220] sm:$0xf]
  %v10498 = vld [vmem:[%s5 + $0x224] sm:$0xf]
  %v10499 = vld [vmem:[%s5 + $0x228] sm:$0xf]
  %v10500 = vld [vmem:[%s5 + $0x22c] sm:$0xf]
  %v10501 = vld [vmem:[%s5 + $0x230] sm:$0xf]
  %v10502 = vld [vmem:[%s5 + $0x234] sm:$0xf]
  %v10503 = vld [vmem:[%s5 + $0x238] sm:$0xf]
  %v10504 = vld [vmem:[%s5 + $0x23c] sm:$0xf]
  %v10505 = vld [vmem:[%s5 + $0x240] sm:$0xf]
  %v10506 = vld [vmem:[%s5 + $0x244] sm:$0xf]
  %v10507 = vld [vmem:[%s5 + $0x248] sm:$0xf]
  %v10508 = vld [vmem:[%s5 + $0x24c] sm:$0xf]
  %v10509 = vld [vmem:[%s5 + $0x250] sm:$0xf]
  %v10510 = vld [vmem:[%s5 + $0x254] sm:$0xf]
  %v10511 = vld [vmem:[%s5 + $0x258] sm:$0xf]
  %v10512 = vld [vmem:[%s5 + $0x25c] sm:$0xf]
  %v10513 = vld [vmem:[%s5 + $0x260] sm:$0xf]
  %v10514 = vld [vmem:[%s5 + $0x264] sm:$0xf]
  %v10515 = vld [vmem:[%s5 + $0x268] sm:$0xf]
  %v10516 = vld [vmem:[%s5 + $0x26c] sm:$0xf]
  %v10517 = vld [vmem:[%s5 + $0x270] sm:$0xf]
  %v10518 = vld [vmem:[%s5 + $0x274] sm:$0xf]
  %v10519 = vld [vmem:[%s5 + $0x278] sm:$0xf]
  %v10520 = vld [vmem:[%s5 + $0x27c] sm:$0xf]
  %v10521 = vld [vmem:[%s5 + $0x280] sm:$0xf]
  %v10522 = vld [vmem:[%s5 + $0x284] sm:$0xf]
  %v10523 = vld [vmem:[%s5 + $0x288] sm:$0xf]
  %v10524 = vld [vmem:[%s5 + $0x28c] sm:$0xf]
  %v10525 = vld [vmem:[%s5 + $0x290] sm:$0xf]
  %v10526 = vld [vmem:[%s5 + $0x294] sm:$0xf]
  %v10527 = vld [vmem:[%s5 + $0x298] sm:$0xf]
  %v10528 = vld [vmem:[%s5 + $0x29c] sm:$0xf]
  %v10529 = vld [vmem:[%s5 + $0x2a0] sm:$0xf]
  %v10530 = vld [vmem:[%s5 + $0x2a4] sm:$0xf]
  %v10531 = vld [vmem:[%s5 + $0x2a8] sm:$0xf]
  %v10532 = vld [vmem:[%s5 + $0x2ac] sm:$0xf]
  %v10533 = vld [vmem:[%s5 + $0x2b0] sm:$0xf]
  %v10534 = vld [vmem:[%s5 + $0x2b4] sm:$0xf]
  %v10535 = vld [vmem:[%s5 + $0x2b8] sm:$0xf]
  %v10536 = vld [vmem:[%s5 + $0x2bc] sm:$0xf]
  %v10537 = vld [vmem:[%s5 + $0x2c0] sm:$0xf]
  %v10538 = vld [vmem:[%s5 + $0x2c4] sm:$0xf]
  %v10539 = vld [vmem:[%s5 + $0x2c8] sm:$0xf]
  %v10540 = vld [vmem:[%s5 + $0x2cc] sm:$0xf]
  %v10541 = vld [vmem:[%s5 + $0x2d0] sm:$0xf]
  %v10542 = vld [vmem:[%s5 + $0x2d4] sm:$0xf]
  %v10543 = vld [vmem:[%s5 + $0x2d8] sm:$0xf]
  %v10544 = vld [vmem:[%s5 + $0x2dc] sm:$0xf]
  %v10545 = vld [vmem:[%s5 + $0x2e0] sm:$0xf]
  %v10546 = vld [vmem:[%s5 + $0x2e4] sm:$0xf]
  %v10547 = vld [vmem:[%s5 + $0x2e8] sm:$0xf]
  %v10548 = vld [vmem:[%s5 + $0x2ec] sm:$0xf]
  %v10549 = vld [vmem:[%s5 + $0x2f0] sm:$0xf]
  %v10550 = vld [vmem:[%s5 + $0x2f4] sm:$0xf]
  %v10551 = vld [vmem:[%s5 + $0x2f8] sm:$0xf]
  %v10552 = vld [vmem:[%s5 + $0x2fc] sm:$0xf]
  %v10553 = vld [vmem:[%s5 + $0x300] sm:$0xf]
  %v10554 = vld [vmem:[%s5 + $0x304] sm:$0xf]
  %v10555 = vld [vmem:[%s5 + $0x308] sm:$0xf]
  %v10556 = vld [vmem:[%s5 + $0x30c] sm:$0xf]
  %v10557 = vld [vmem:[%s5 + $0x310] sm:$0xf]
  %v10558 = vld [vmem:[%s5 + $0x314] sm:$0xf]
  %v10559 = vld [vmem:[%s5 + $0x318] sm:$0xf]
  %v10560 = vld [vmem:[%s5 + $0x31c] sm:$0xf]
  %v10561 = vld [vmem:[%s5 + $0x320] sm:$0xf]
  %v10562 = vld [vmem:[%s5 + $0x324] sm:$0xf]
  %v10563 = vld [vmem:[%s5 + $0x328] sm:$0xf]
  %v10564 = vld [vmem:[%s5 + $0x32c] sm:$0xf]
  %v10565 = vld [vmem:[%s5 + $0x330] sm:$0xf]
  %v10566 = vld [vmem:[%s5 + $0x334] sm:$0xf]
  %v10567 = vld [vmem:[%s5 + $0x338] sm:$0xf]
  %v10568 = vld [vmem:[%s5 + $0x33c] sm:$0xf]
  %v10569 = vld [vmem:[%s5 + $0x340] sm:$0xf]
  %v10570 = vld [vmem:[%s5 + $0x344] sm:$0xf]
  %v10571 = vld [vmem:[%s5 + $0x348] sm:$0xf]
  %v10572 = vld [vmem:[%s5 + $0x34c] sm:$0xf]
  %v10573 = vld [vmem:[%s5 + $0x350] sm:$0xf]
  %v10574 = vld [vmem:[%s5 + $0x354] sm:$0xf]
  %v10575 = vld [vmem:[%s5 + $0x358] sm:$0xf]
  %v10576 = vld [vmem:[%s5 + $0x35c] sm:$0xf]
  %v10577 = vld [vmem:[%s5 + $0x360] sm:$0xf]
  %v10578 = vld [vmem:[%s5 + $0x364] sm:$0xf]
  %v10579 = vld [vmem:[%s5 + $0x368] sm:$0xf]
  %v10580 = vld [vmem:[%s5 + $0x36c] sm:$0xf]
  %v10581 = vld [vmem:[%s5 + $0x370] sm:$0xf]
  %v10582 = vld [vmem:[%s5 + $0x374] sm:$0xf]
  %v10583 = vld [vmem:[%s5 + $0x378] sm:$0xf]
  %v10584 = vld [vmem:[%s5 + $0x37c] sm:$0xf]
  %v10585 = vld [vmem:[%s5 + $0x380] sm:$0xf]
  %v10586 = vld [vmem:[%s5 + $0x384] sm:$0xf]
  %v10587 = vld [vmem:[%s5 + $0x388] sm:$0xf]
  %v10588 = vld [vmem:[%s5 + $0x38c] sm:$0xf]
  %v10589 = vld [vmem:[%s5 + $0x390] sm:$0xf]
  %v10590 = vld [vmem:[%s5 + $0x394] sm:$0xf]
  %v10591 = vld [vmem:[%s5 + $0x398] sm:$0xf]
  %v10592 = vld [vmem:[%s5 + $0x39c] sm:$0xf]
  %v10593 = vld [vmem:[%s5 + $0x3a0] sm:$0xf]
  %v10594 = vld [vmem:[%s5 + $0x3a4] sm:$0xf]
  %v10595 = vld [vmem:[%s5 + $0x3a8] sm:$0xf]
  %v10596 = vld [vmem:[%s5 + $0x3ac] sm:$0xf]
  %v10597 = vld [vmem:[%s5 + $0x3b0] sm:$0xf]
  %v10598 = vld [vmem:[%s5 + $0x3b4] sm:$0xf]
  %v10599 = vld [vmem:[%s5 + $0x3b8] sm:$0xf]
  %v10600 = vld [vmem:[%s5 + $0x3bc] sm:$0xf]
  %v10601 = vld [vmem:[%s5 + $0x3c0] sm:$0xf]
  %v10602 = vld [vmem:[%s5 + $0x3c4] sm:$0xf]
  %v10603 = vld [vmem:[%s5 + $0x3c8] sm:$0xf]
  %v10604 = vld [vmem:[%s5 + $0x3cc] sm:$0xf]
  %v10605 = vld [vmem:[%s5 + $0x3d0] sm:$0xf]
  %v10606 = vld [vmem:[%s5 + $0x3d4] sm:$0xf]
  %v10607 = vld [vmem:[%s5 + $0x3d8] sm:$0xf]
  %v10608 = vld [vmem:[%s5 + $0x3dc] sm:$0xf]
  %v10609 = vld [vmem:[%s5 + $0x3e0] sm:$0xf]
  %v10610 = vld [vmem:[%s5 + $0x3e4] sm:$0xf]
  %v10611 = vld [vmem:[%s5 + $0x3e8] sm:$0xf]
  %v10612 = vld [vmem:[%s5 + $0x3ec] sm:$0xf]
  %v10613 = vld [vmem:[%s5 + $0x3f0] sm:$0xf]
  %v10614 = vld [vmem:[%s5 + $0x3f4] sm:$0xf]
  %v10615 = vld [vmem:[%s5 + $0x3f8] sm:$0xf]
  %v10616 = vld [vmem:[%s5 + $0x3fc] sm:$0xf]
  %v10617 = vld [vmem:[%s5 + $0x400] sm:$0xf]
  %v10618 = vld [vmem:[%s5 + $0x404] sm:$0xf]
  %v10619 = vld [vmem:[%s5 + $0x408] sm:$0xf]
  %v10620 = vld [vmem:[%s5 + $0x40c] sm:$0xf]
  %v10621 = vld [vmem:[%s5 + $0x410] sm:$0xf]
  %v10622 = vld [vmem:[%s5 + $0x414] sm:$0xf]
  %v10623 = vld [vmem:[%s5 + $0x418] sm:$0xf]
  %v10624 = vld [vmem:[%s5 + $0x41c] sm:$0xf]
  %v10625 = vld [vmem:[%s5 + $0x420] sm:$0xf]
  %v10626 = vld [vmem:[%s5 + $0x424] sm:$0xf]
  %v10627 = vld [vmem:[%s5 + $0x428] sm:$0xf]
  %v10628 = vld [vmem:[%s5 + $0x42c] sm:$0xf]
  %v10629 = vld [vmem:[%s5 + $0x430] sm:$0xf]
  %v10630 = vld [vmem:[%s5 + $0x434] sm:$0xf]
  %v10631 = vld [vmem:[%s5 + $0x438] sm:$0xf]
  %v10632 = vld [vmem:[%s5 + $0x43c] sm:$0xf]
  %v10633 = vld [vmem:[%s5 + $0x440] sm:$0xf]
  %v10634 = vld [vmem:[%s5 + $0x444] sm:$0xf]
  %v10635 = vld [vmem:[%s5 + $0x448] sm:$0xf]
  %v10636 = vld [vmem:[%s5 + $0x44c] sm:$0xf]
  %v10637 = vld [vmem:[%s5 + $0x450] sm:$0xf]
  %v10638 = vld [vmem:[%s5 + $0x454] sm:$0xf]
  %v10639 = vld [vmem:[%s5 + $0x458] sm:$0xf]
  %v10640 = vld [vmem:[%s5 + $0x45c] sm:$0xf]
  %v10641 = vld [vmem:[%s5 + $0x460] sm:$0xf]
  %v10642 = vld [vmem:[%s5 + $0x464] sm:$0xf]
  %v10643 = vld [vmem:[%s5 + $0x468] sm:$0xf]
  %v10644 = vld [vmem:[%s5 + $0x46c] sm:$0xf]
  %v10645 = vld [vmem:[%s5 + $0x470] sm:$0xf]
  %v10646 = vld [vmem:[%s5 + $0x474] sm:$0xf]
  %v10647 = vld [vmem:[%s5 + $0x478] sm:$0xf]
  %v10648 = vld [vmem:[%s5 + $0x47c] sm:$0xf]
  %v10649 = vld [vmem:[%s6] sm:$0x1]
  %v10651 = vlaneseq
  %v10652 = vshrl.u32 %v10651, 7
  %v10653 = vsub.s32 0, %v10652
  %v10654 = vrot.slane %v10649, %v10653
  %v10944 = vunpack.c.l.b16 %v10361
  %v10945 = vunpack.c.l.b16 %v10362
  %v10946 = vunpack.c.l.b16 %v10363
  %v10947 = vunpack.c.l.b16 %v10364
  %v10948 = vunpack.c.l.b16 %v10365
  %v10949 = vunpack.c.l.b16 %v10366
  %v10950 = vunpack.c.l.b16 %v10367
  %v10951 = vunpack.c.l.b16 %v10368
  %v10952 = vunpack.c.l.b16 %v10369
  %v10953 = vunpack.c.l.b16 %v10370
  %v10954 = vunpack.c.l.b16 %v10371
  %v10955 = vunpack.c.l.b16 %v10372
  %v10956 = vunpack.c.l.b16 %v10373
  %v10957 = vunpack.c.l.b16 %v10374
  %v10958 = vunpack.c.l.b16 %v10375
  %v10959 = vunpack.c.l.b16 %v10376
  %v10960 = vunpack.c.l.b16 %v10377
  %v10961 = vunpack.c.l.b16 %v10378
  %v10962 = vunpack.c.l.b16 %v10379
  %v10963 = vunpack.c.l.b16 %v10380
  %v10964 = vunpack.c.l.b16 %v10381
  %v10965 = vunpack.c.l.b16 %v10382
  %v10966 = vunpack.c.l.b16 %v10383
  %v10967 = vunpack.c.l.b16 %v10384
  %v10968 = vunpack.c.l.b16 %v10385
  %v10969 = vunpack.c.l.b16 %v10386
  %v10970 = vunpack.c.l.b16 %v10387
  %v10971 = vunpack.c.l.b16 %v10388
  %v10972 = vunpack.c.l.b16 %v10389
  %v10973 = vunpack.c.l.b16 %v10390
  %v10974 = vunpack.c.l.b16 %v10391
  %v10975 = vunpack.c.l.b16 %v10392
  %v10976 = vunpack.c.l.b16 %v10393
  %v10977 = vunpack.c.l.b16 %v10394
  %v10978 = vunpack.c.l.b16 %v10395
  %v10979 = vunpack.c.l.b16 %v10396
  %v10980 = vunpack.c.l.b16 %v10397
  %v10981 = vunpack.c.l.b16 %v10398
  %v10982 = vunpack.c.l.b16 %v10399
  %v10983 = vunpack.c.l.b16 %v10400
  %v10984 = vunpack.c.l.b16 %v10401
  %v10985 = vunpack.c.l.b16 %v10402
  %v10986 = vunpack.c.l.b16 %v10403
  %v10987 = vunpack.c.l.b16 %v10404
  %v10988 = vunpack.c.l.b16 %v10405
  %v10989 = vunpack.c.l.b16 %v10406
  %v10990 = vunpack.c.l.b16 %v10407
  %v10991 = vunpack.c.l.b16 %v10408
  %v10992 = vunpack.c.l.b16 %v10409
  %v10993 = vunpack.c.l.b16 %v10410
  %v10994 = vunpack.c.l.b16 %v10411
  %v10995 = vunpack.c.l.b16 %v10412
  %v10996 = vunpack.c.l.b16 %v10413
  %v10997 = vunpack.c.l.b16 %v10414
  %v10998 = vunpack.c.l.b16 %v10415
  %v10999 = vunpack.c.l.b16 %v10416
  %v11000 = vunpack.c.l.b16 %v10417
  %v11001 = vunpack.c.l.b16 %v10418
  %v11002 = vunpack.c.l.b16 %v10419
  %v11003 = vunpack.c.l.b16 %v10420
  %v11004 = vunpack.c.l.b16 %v10421
  %v11005 = vunpack.c.l.b16 %v10422
  %v11006 = vunpack.c.l.b16 %v10423
  %v11007 = vunpack.c.l.b16 %v10424
  %v11008 = vunpack.c.l.b16 %v10425
  %v11009 = vunpack.c.l.b16 %v10426
  %v11010 = vunpack.c.l.b16 %v10427
  %v11011 = vunpack.c.l.b16 %v10428
  %v11012 = vunpack.c.l.b16 %v10429
  %v11013 = vunpack.c.l.b16 %v10430
  %v11014 = vunpack.c.l.b16 %v10431
  %v11015 = vunpack.c.l.b16 %v10432
  %v11016 = vunpack.c.l.b16 %v10433
  %v11017 = vunpack.c.l.b16 %v10434
  %v11018 = vunpack.c.l.b16 %v10435
  %v11019 = vunpack.c.l.b16 %v10436
  %v11020 = vunpack.c.l.b16 %v10437
  %v11021 = vunpack.c.l.b16 %v10438
  %v11022 = vunpack.c.l.b16 %v10439
  %v11023 = vunpack.c.l.b16 %v10440
  %v11024 = vunpack.c.l.b16 %v10441
  %v11025 = vunpack.c.l.b16 %v10442
  %v11026 = vunpack.c.l.b16 %v10443
  %v11027 = vunpack.c.l.b16 %v10444
  %v11028 = vunpack.c.l.b16 %v10445
  %v11029 = vunpack.c.l.b16 %v10446
  %v11030 = vunpack.c.l.b16 %v10447
  %v11031 = vunpack.c.l.b16 %v10448
  %v11032 = vunpack.c.l.b16 %v10449
  %v11033 = vunpack.c.l.b16 %v10450
  %v11034 = vunpack.c.l.b16 %v10451
  %v11035 = vunpack.c.l.b16 %v10452
  %v11036 = vunpack.c.l.b16 %v10453
  %v11037 = vunpack.c.l.b16 %v10454
  %v11038 = vunpack.c.l.b16 %v10455
  %v11039 = vunpack.c.l.b16 %v10456
  %v11040 = vunpack.c.l.b16 %v10457
  %v11041 = vunpack.c.l.b16 %v10458
  %v11042 = vunpack.c.l.b16 %v10459
  %v11043 = vunpack.c.l.b16 %v10460
  %v11044 = vunpack.c.l.b16 %v10461
  %v11045 = vunpack.c.l.b16 %v10462
  %v11046 = vunpack.c.l.b16 %v10463
  %v11047 = vunpack.c.l.b16 %v10464
  %v11048 = vunpack.c.l.b16 %v10465
  %v11049 = vunpack.c.l.b16 %v10466
  %v11050 = vunpack.c.l.b16 %v10467
  %v11051 = vunpack.c.l.b16 %v10468
  %v11052 = vunpack.c.l.b16 %v10469
  %v11053 = vunpack.c.l.b16 %v10470
  %v11054 = vunpack.c.l.b16 %v10471
  %v11055 = vunpack.c.l.b16 %v10472
  %v11056 = vunpack.c.l.b16 %v10473
  %v11057 = vunpack.c.l.b16 %v10474
  %v11058 = vunpack.c.l.b16 %v10475
  %v11059 = vunpack.c.l.b16 %v10476
  %v11060 = vunpack.c.l.b16 %v10477
  %v11061 = vunpack.c.l.b16 %v10478
  %v11062 = vunpack.c.l.b16 %v10479
  %v11063 = vunpack.c.l.b16 %v10480
  %v11064 = vunpack.c.l.b16 %v10481
  %v11065 = vunpack.c.l.b16 %v10482
  %v11066 = vunpack.c.l.b16 %v10483
  %v11067 = vunpack.c.l.b16 %v10484
  %v11068 = vunpack.c.l.b16 %v10485
  %v11069 = vunpack.c.l.b16 %v10486
  %v11070 = vunpack.c.l.b16 %v10487
  %v11071 = vunpack.c.l.b16 %v10488
  %v11072 = vunpack.c.l.b16 %v10489
  %v11073 = vunpack.c.l.b16 %v10490
  %v11074 = vunpack.c.l.b16 %v10491
  %v11075 = vunpack.c.l.b16 %v10492
  %v11076 = vunpack.c.l.b16 %v10493
  %v11077 = vunpack.c.l.b16 %v10494
  %v11078 = vunpack.c.l.b16 %v10495
  %v11079 = vunpack.c.l.b16 %v10496
  %v11080 = vunpack.c.l.b16 %v10497
  %v11081 = vunpack.c.l.b16 %v10498
  %v11082 = vunpack.c.l.b16 %v10499
  %v11083 = vunpack.c.l.b16 %v10500
  %v11084 = vunpack.c.l.b16 %v10501
  %v11085 = vunpack.c.l.b16 %v10502
  %v11086 = vunpack.c.l.b16 %v10503
  %v11087 = vunpack.c.l.b16 %v10504
  %v11088 = vunpack.c.l.b16 %v10505
  %v11089 = vunpack.c.l.b16 %v10506
  %v11090 = vunpack.c.l.b16 %v10507
  %v11091 = vunpack.c.l.b16 %v10508
  %v11092 = vunpack.c.l.b16 %v10509
  %v11093 = vunpack.c.l.b16 %v10510
  %v11094 = vunpack.c.l.b16 %v10511
  %v11095 = vunpack.c.l.b16 %v10512
  %v11096 = vunpack.c.l.b16 %v10513
  %v11097 = vunpack.c.l.b16 %v10514
  %v11098 = vunpack.c.l.b16 %v10515
  %v11099 = vunpack.c.l.b16 %v10516
  %v11100 = vunpack.c.l.b16 %v10517
  %v11101 = vunpack.c.l.b16 %v10518
  %v11102 = vunpack.c.l.b16 %v10519
  %v11103 = vunpack.c.l.b16 %v10520
  %v11104 = vunpack.c.l.b16 %v10521
  %v11105 = vunpack.c.l.b16 %v10522
  %v11106 = vunpack.c.l.b16 %v10523
  %v11107 = vunpack.c.l.b16 %v10524
  %v11108 = vunpack.c.l.b16 %v10525
  %v11109 = vunpack.c.l.b16 %v10526
  %v11110 = vunpack.c.l.b16 %v10527
  %v11111 = vunpack.c.l.b16 %v10528
  %v11112 = vunpack.c.l.b16 %v10529
  %v11113 = vunpack.c.l.b16 %v10530
  %v11114 = vunpack.c.l.b16 %v10531
  %v11115 = vunpack.c.l.b16 %v10532
  %v11116 = vunpack.c.l.b16 %v10533
  %v11117 = vunpack.c.l.b16 %v10534
  %v11118 = vunpack.c.l.b16 %v10535
  %v11119 = vunpack.c.l.b16 %v10536
  %v11120 = vunpack.c.l.b16 %v10537
  %v11121 = vunpack.c.l.b16 %v10538
  %v11122 = vunpack.c.l.b16 %v10539
  %v11123 = vunpack.c.l.b16 %v10540
  %v11124 = vunpack.c.l.b16 %v10541
  %v11125 = vunpack.c.l.b16 %v10542
  %v11126 = vunpack.c.l.b16 %v10543
  %v11127 = vunpack.c.l.b16 %v10544
  %v11128 = vunpack.c.l.b16 %v10545
  %v11129 = vunpack.c.l.b16 %v10546
  %v11130 = vunpack.c.l.b16 %v10547
  %v11131 = vunpack.c.l.b16 %v10548
  %v11132 = vunpack.c.l.b16 %v10549
  %v11133 = vunpack.c.l.b16 %v10550
  %v11134 = vunpack.c.l.b16 %v10551
  %v11135 = vunpack.c.l.b16 %v10552
  %v11136 = vunpack.c.l.b16 %v10553
  %v11137 = vunpack.c.l.b16 %v10554
  %v11138 = vunpack.c.l.b16 %v10555
  %v11139 = vunpack.c.l.b16 %v10556
  %v11140 = vunpack.c.l.b16 %v10557
  %v11141 = vunpack.c.l.b16 %v10558
  %v11142 = vunpack.c.l.b16 %v10559
  %v11143 = vunpack.c.l.b16 %v10560
  %v11144 = vunpack.c.l.b16 %v10561
  %v11145 = vunpack.c.l.b16 %v10562
  %v11146 = vunpack.c.l.b16 %v10563
  %v11147 = vunpack.c.l.b16 %v10564
  %v11148 = vunpack.c.l.b16 %v10565
  %v11149 = vunpack.c.l.b16 %v10566
  %v11150 = vunpack.c.l.b16 %v10567
  %v11151 = vunpack.c.l.b16 %v10568
  %v11152 = vunpack.c.l.b16 %v10569
  %v11153 = vunpack.c.l.b16 %v10570
  %v11154 = vunpack.c.l.b16 %v10571
  %v11155 = vunpack.c.l.b16 %v10572
  %v11156 = vunpack.c.l.b16 %v10573
  %v11157 = vunpack.c.l.b16 %v10574
  %v11158 = vunpack.c.l.b16 %v10575
  %v11159 = vunpack.c.l.b16 %v10576
  %v11160 = vunpack.c.l.b16 %v10577
  %v11161 = vunpack.c.l.b16 %v10578
  %v11162 = vunpack.c.l.b16 %v10579
  %v11163 = vunpack.c.l.b16 %v10580
  %v11164 = vunpack.c.l.b16 %v10581
  %v11165 = vunpack.c.l.b16 %v10582
  %v11166 = vunpack.c.l.b16 %v10583
  %v11167 = vunpack.c.l.b16 %v10584
  %v11168 = vunpack.c.l.b16 %v10585
  %v11169 = vunpack.c.l.b16 %v10586
  %v11170 = vunpack.c.l.b16 %v10587
  %v11171 = vunpack.c.l.b16 %v10588
  %v11172 = vunpack.c.l.b16 %v10589
  %v11173 = vunpack.c.l.b16 %v10590
  %v11174 = vunpack.c.l.b16 %v10591
  %v11175 = vunpack.c.l.b16 %v10592
  %v11176 = vunpack.c.l.b16 %v10593
  %v11177 = vunpack.c.l.b16 %v10594
  %v11178 = vunpack.c.l.b16 %v10595
  %v11179 = vunpack.c.l.b16 %v10596
  %v11180 = vunpack.c.l.b16 %v10597
  %v11181 = vunpack.c.l.b16 %v10598
  %v11182 = vunpack.c.l.b16 %v10599
  %v11183 = vunpack.c.l.b16 %v10600
  %v11184 = vunpack.c.l.b16 %v10601
  %v11185 = vunpack.c.l.b16 %v10602
  %v11186 = vunpack.c.l.b16 %v10603
  %v11187 = vunpack.c.l.b16 %v10604
  %v11188 = vunpack.c.l.b16 %v10605
  %v11189 = vunpack.c.l.b16 %v10606
  %v11190 = vunpack.c.l.b16 %v10607
  %v11191 = vunpack.c.l.b16 %v10608
  %v11192 = vunpack.c.l.b16 %v10609
  %v11193 = vunpack.c.l.b16 %v10610
  %v11194 = vunpack.c.l.b16 %v10611
  %v11195 = vunpack.c.l.b16 %v10612
  %v11196 = vunpack.c.l.b16 %v10613
  %v11197 = vunpack.c.l.b16 %v10614
  %v11198 = vunpack.c.l.b16 %v10615
  %v11199 = vunpack.c.l.b16 %v10616
  %v11200 = vunpack.c.l.b16 %v10617
  %v11201 = vunpack.c.l.b16 %v10618
  %v11202 = vunpack.c.l.b16 %v10619
  %v11203 = vunpack.c.l.b16 %v10620
  %v11204 = vunpack.c.l.b16 %v10621
  %v11205 = vunpack.c.l.b16 %v10622
  %v11206 = vunpack.c.l.b16 %v10623
  %v11207 = vunpack.c.l.b16 %v10624
  %v11208 = vunpack.c.l.b16 %v10625
  %v11209 = vunpack.c.l.b16 %v10626
  %v11210 = vunpack.c.l.b16 %v10627
  %v11211 = vunpack.c.l.b16 %v10628
  %v11212 = vunpack.c.l.b16 %v10629
  %v11213 = vunpack.c.l.b16 %v10630
  %v11214 = vunpack.c.l.b16 %v10631
  %v11215 = vunpack.c.l.b16 %v10632
  %v11216 = vunpack.c.l.b16 %v10633
  %v11217 = vunpack.c.l.b16 %v10634
  %v11218 = vunpack.c.l.b16 %v10635
  %v11219 = vunpack.c.l.b16 %v10636
  %v11220 = vunpack.c.l.b16 %v10637
  %v11221 = vunpack.c.l.b16 %v10638
  %v11222 = vunpack.c.l.b16 %v10639
  %v11223 = vunpack.c.l.b16 %v10640
  %v11224 = vunpack.c.l.b16 %v10641
  %v11225 = vunpack.c.l.b16 %v10642
  %v11226 = vunpack.c.l.b16 %v10643
  %v11227 = vunpack.c.l.b16 %v10644
  %v11228 = vunpack.c.l.b16 %v10645
  %v11229 = vunpack.c.l.b16 %v10646
  %v11230 = vunpack.c.l.b16 %v10647
  %v11231 = vunpack.c.l.b16 %v10648
  %v11232 = vpack.c.b16 %v10945, %v10944
  %v11233 = vpack.c.b16 %v10947, %v10946
  %v11234 = vpack.c.b16 %v10949, %v10948
  %v11235 = vpack.c.b16 %v10951, %v10950
  %v11236 = vpack.c.b16 %v10953, %v10952
  %v11237 = vpack.c.b16 %v10955, %v10954
  %v11238 = vpack.c.b16 %v10957, %v10956
  %v11239 = vpack.c.b16 %v10959, %v10958
  %v11240 = vpack.c.b16 %v10961, %v10960
  %v11241 = vpack.c.b16 %v10963, %v10962
  %v11242 = vpack.c.b16 %v10965, %v10964
  %v11243 = vpack.c.b16 %v10967, %v10966
  %v11244 = vpack.c.b16 %v10969, %v10968
  %v11245 = vpack.c.b16 %v10971, %v10970
  %v11246 = vpack.c.b16 %v10973, %v10972
  %v11247 = vpack.c.b16 %v10975, %v10974
  %v11248 = vpack.c.b16 %v10977, %v10976
  %v11249 = vpack.c.b16 %v10979, %v10978
  %v11250 = vpack.c.b16 %v10981, %v10980
  %v11251 = vpack.c.b16 %v10983, %v10982
  %v11252 = vpack.c.b16 %v10985, %v10984
  %v11253 = vpack.c.b16 %v10987, %v10986
  %v11254 = vpack.c.b16 %v10989, %v10988
  %v11255 = vpack.c.b16 %v10991, %v10990
  %v11256 = vpack.c.b16 %v10993, %v10992
  %v11257 = vpack.c.b16 %v10995, %v10994
  %v11258 = vpack.c.b16 %v10997, %v10996
  %v11259 = vpack.c.b16 %v10999, %v10998
  %v11260 = vpack.c.b16 %v11001, %v11000
  %v11261 = vpack.c.b16 %v11003, %v11002
  %v11262 = vpack.c.b16 %v11005, %v11004
  %v11263 = vpack.c.b16 %v11007, %v11006
  %v11264 = vpack.c.b16 %v11009, %v11008
  %v11265 = vpack.c.b16 %v11011, %v11010
  %v11266 = vpack.c.b16 %v11013, %v11012
  %v11267 = vpack.c.b16 %v11015, %v11014
  %v11268 = vpack.c.b16 %v11017, %v11016
  %v11269 = vpack.c.b16 %v11019, %v11018
  %v11270 = vpack.c.b16 %v11021, %v11020
  %v11271 = vpack.c.b16 %v11023, %v11022
  %v11272 = vpack.c.b16 %v11025, %v11024
  %v11273 = vpack.c.b16 %v11027, %v11026
  %v11274 = vpack.c.b16 %v11029, %v11028
  %v11275 = vpack.c.b16 %v11031, %v11030
  %v11276 = vpack.c.b16 %v11033, %v11032
  %v11277 = vpack.c.b16 %v11035, %v11034
  %v11278 = vpack.c.b16 %v11037, %v11036
  %v11279 = vpack.c.b16 %v11039, %v11038
  %v11280 = vpack.c.b16 %v11041, %v11040
  %v11281 = vpack.c.b16 %v11043, %v11042
  %v11282 = vpack.c.b16 %v11045, %v11044
  %v11283 = vpack.c.b16 %v11047, %v11046
  %v11284 = vpack.c.b16 %v11049, %v11048
  %v11285 = vpack.c.b16 %v11051, %v11050
  %v11286 = vpack.c.b16 %v11053, %v11052
  %v11287 = vpack.c.b16 %v11055, %v11054
  %v11288 = vpack.c.b16 %v11057, %v11056
  %v11289 = vpack.c.b16 %v11059, %v11058
  %v11290 = vpack.c.b16 %v11061, %v11060
  %v11291 = vpack.c.b16 %v11063, %v11062
  %v11292 = vpack.c.b16 %v11065, %v11064
  %v11293 = vpack.c.b16 %v11067, %v11066
  %v11294 = vpack.c.b16 %v11069, %v11068
  %v11295 = vpack.c.b16 %v11071, %v11070
  %v11296 = vpack.c.b16 %v11073, %v11072
  %v11297 = vpack.c.b16 %v11075, %v11074
  %v11298 = vpack.c.b16 %v11077, %v11076
  %v11299 = vpack.c.b16 %v11079, %v11078
  %v11300 = vpack.c.b16 %v11081, %v11080
  %v11301 = vpack.c.b16 %v11083, %v11082
  %v11302 = vpack.c.b16 %v11085, %v11084
  %v11303 = vpack.c.b16 %v11087, %v11086
  %v11304 = vpack.c.b16 %v11089, %v11088
  %v11305 = vpack.c.b16 %v11091, %v11090
  %v11306 = vpack.c.b16 %v11093, %v11092
  %v11307 = vpack.c.b16 %v11095, %v11094
  %v11308 = vpack.c.b16 %v11097, %v11096
  %v11309 = vpack.c.b16 %v11099, %v11098
  %v11310 = vpack.c.b16 %v11101, %v11100
  %v11311 = vpack.c.b16 %v11103, %v11102
  %v11312 = vpack.c.b16 %v11105, %v11104
  %v11313 = vpack.c.b16 %v11107, %v11106
  %v11314 = vpack.c.b16 %v11109, %v11108
  %v11315 = vpack.c.b16 %v11111, %v11110
  %v11316 = vpack.c.b16 %v11113, %v11112
  %v11317 = vpack.c.b16 %v11115, %v11114
  %v11318 = vpack.c.b16 %v11117, %v11116
  %v11319 = vpack.c.b16 %v11119, %v11118
  %v11320 = vpack.c.b16 %v11121, %v11120
  %v11321 = vpack.c.b16 %v11123, %v11122
  %v11322 = vpack.c.b16 %v11125, %v11124
  %v11323 = vpack.c.b16 %v11127, %v11126
  %v11324 = vpack.c.b16 %v11129, %v11128
  %v11325 = vpack.c.b16 %v11131, %v11130
  %v11326 = vpack.c.b16 %v11133, %v11132
  %v11327 = vpack.c.b16 %v11135, %v11134
  %v11328 = vpack.c.b16 %v11137, %v11136
  %v11329 = vpack.c.b16 %v11139, %v11138
  %v11330 = vpack.c.b16 %v11141, %v11140
  %v11331 = vpack.c.b16 %v11143, %v11142
  %v11332 = vpack.c.b16 %v11145, %v11144
  %v11333 = vpack.c.b16 %v11147, %v11146
  %v11334 = vpack.c.b16 %v11149, %v11148
  %v11335 = vpack.c.b16 %v11151, %v11150
  %v11336 = vpack.c.b16 %v11153, %v11152
  %v11337 = vpack.c.b16 %v11155, %v11154
  %v11338 = vpack.c.b16 %v11157, %v11156
  %v11339 = vpack.c.b16 %v11159, %v11158
  %v11340 = vpack.c.b16 %v11161, %v11160
  %v11341 = vpack.c.b16 %v11163, %v11162
  %v11342 = vpack.c.b16 %v11165, %v11164
  %v11343 = vpack.c.b16 %v11167, %v11166
  %v11344 = vpack.c.b16 %v11169, %v11168
  %v11345 = vpack.c.b16 %v11171, %v11170
  %v11346 = vpack.c.b16 %v11173, %v11172
  %v11347 = vpack.c.b16 %v11175, %v11174
  %v11348 = vpack.c.b16 %v11177, %v11176
  %v11349 = vpack.c.b16 %v11179, %v11178
  %v11350 = vpack.c.b16 %v11181, %v11180
  %v11351 = vpack.c.b16 %v11183, %v11182
  %v11352 = vpack.c.b16 %v11185, %v11184
  %v11353 = vpack.c.b16 %v11187, %v11186
  %v11354 = vpack.c.b16 %v11189, %v11188
  %v11355 = vpack.c.b16 %v11191, %v11190
  %v11356 = vpack.c.b16 %v11193, %v11192
  %v11357 = vpack.c.b16 %v11195, %v11194
  %v11358 = vpack.c.b16 %v11197, %v11196
  %v11359 = vpack.c.b16 %v11199, %v11198
  %v11360 = vpack.c.b16 %v11201, %v11200
  %v11361 = vpack.c.b16 %v11203, %v11202
  %v11362 = vpack.c.b16 %v11205, %v11204
  %v11363 = vpack.c.b16 %v11207, %v11206
  %v11364 = vpack.c.b16 %v11209, %v11208
  %v11365 = vpack.c.b16 %v11211, %v11210
  %v11366 = vpack.c.b16 %v11213, %v11212
  %v11367 = vpack.c.b16 %v11215, %v11214
  %v11368 = vpack.c.b16 %v11217, %v11216
  %v11369 = vpack.c.b16 %v11219, %v11218
  %v11370 = vpack.c.b16 %v11221, %v11220
  %v11371 = vpack.c.b16 %v11223, %v11222
  %v11372 = vpack.c.b16 %v11225, %v11224
  %v11373 = vpack.c.b16 %v11227, %v11226
  %v11374 = vpack.c.b16 %v11229, %v11228
  %v11375 = vpack.c.b16 %v11231, %v11230
  %11520 = vmatprep.subr.bf16.mxu0 0
  %11521 = vmatpush1.bf16.msra.mxu0 %v11232
  %11522 = vmatprep.subr.bf16.mxu0 0
  %11523 = vmatpush1.bf16.msra.mxu0 %v11233
  %11524 = vmatprep.subr.bf16.mxu0 0
  %11525 = vmatpush1.bf16.msra.mxu0 %v11234
  %11526 = vmatprep.subr.bf16.mxu0 0
  %11527 = vmatpush1.bf16.msra.mxu0 %v11235
  %11528 = vmatprep.subr.bf16.mxu0 0
  %11529 = vmatpush1.bf16.msra.mxu0 %v11236
  %11530 = vmatprep.subr.bf16.mxu0 0
  %11531 = vmatpush1.bf16.msra.mxu0 %v11237
  %11532 = vmatprep.subr.bf16.mxu0 0
  %11533 = vmatpush1.bf16.msra.mxu0 %v11238
  %11534 = vmatprep.subr.bf16.mxu0 0
  %11535 = vmatpush1.bf16.msra.mxu0 %v11239
  %11536 = vmatprep.subr.bf16.mxu0 0
  %11537 = vmatpush1.bf16.msra.mxu0 %v11240
  %11538 = vmatprep.subr.bf16.mxu0 0
  %11539 = vmatpush1.bf16.msra.mxu0 %v11241
  %11540 = vmatprep.subr.bf16.mxu0 0
  %11541 = vmatpush1.bf16.msra.mxu0 %v11242
  %11542 = vmatprep.subr.bf16.mxu0 0
  %11543 = vmatpush1.bf16.msra.mxu0 %v11243
  %11544 = vmatprep.subr.bf16.mxu0 0
  %11545 = vmatpush1.bf16.msra.mxu0 %v11244
  %11546 = vmatprep.subr.bf16.mxu0 0
  %11547 = vmatpush1.bf16.msra.mxu0 %v11245
  %11548 = vmatprep.subr.bf16.mxu0 0
  %11549 = vmatpush1.bf16.msra.mxu0 %v11246
  %11550 = vmatprep.subr.bf16.mxu0 0
  %11551 = vmatpush1.bf16.msra.mxu0 %v11247
  %11552 = vmatprep.mubr.bf16.mxu0 %v6824
  %11553 = vmatmul.mubr.bf16.gmra.mrb[0].mxu0 %v6823
  %v11554 = vpop.f32.mrb[0].mxu0
  %v11555 = vadd.f32 %v10654, %v11554
  %v11556 = vpop.f32.mrb[0].mxu0
  %v11557 = vpop.f32.mrb[0].mxu0
  %v11558 = vpop.f32.mrb[0].mxu0
  %11559 = vdwg.mxu0
  %11560 = vmatprep.subr.bf16.mxu0 0
  %11561 = vmatpush1.bf16.msra.mxu0 %v11248
  %11562 = vmatprep.subr.bf16.mxu0 0
  %11563 = vmatpush1.bf16.msra.mxu0 %v11249
  %11564 = vmatprep.subr.bf16.mxu0 0
  %11565 = vmatpush1.bf16.msra.mxu0 %v11250
  %11566 = vmatprep.subr.bf16.mxu0 0
  %11567 = vmatpush1.bf16.msra.mxu0 %v11251
  %11568 = vmatprep.subr.bf16.mxu0 0
  %11569 = vmatpush1.bf16.msra.mxu0 %v11252
  %11570 = vmatprep.subr.bf16.mxu0 0
  %11571 = vmatpush1.bf16.msra.mxu0 %v11253
  %11572 = vmatprep.subr.bf16.mxu0 0
  %11573 = vmatpush1.bf16.msra.mxu0 %v11254
  %11574 = vmatprep.subr.bf16.mxu0 0
  %11575 = vmatpush1.bf16.msra.mxu0 %v11255
  %11576 = vmatprep.subr.bf16.mxu0 0
  %11577 = vmatpush1.bf16.msra.mxu0 %v11256
  %11578 = vmatprep.subr.bf16.mxu0 0
  %11579 = vmatpush1.bf16.msra.mxu0 %v11257
  %11580 = vmatprep.subr.bf16.mxu0 0
  %11581 = vmatpush1.bf16.msra.mxu0 %v11258
  %11582 = vmatprep.subr.bf16.mxu0 0
  %11583 = vmatpush1.bf16.msra.mxu0 %v11259
  %11584 = vmatprep.subr.bf16.mxu0 0
  %11585 = vmatpush1.bf16.msra.mxu0 %v11260
  %11586 = vmatprep.subr.bf16.mxu0 0
  %11587 = vmatpush1.bf16.msra.mxu0 %v11261
  %11588 = vmatprep.subr.bf16.mxu0 0
  %11589 = vmatpush1.bf16.msra.mxu0 %v11262
  %11590 = vmatprep.subr.bf16.mxu0 0
  %11591 = vmatpush1.bf16.msra.mxu0 %v11263
  %11592 = vmatprep.mubr.bf16.mxu0 %v7300
  %11593 = vmatmul.mubr.bf16.gmra.mrb[0].mxu0 %v7299
  %v11594 = vpop.f32.mrb[0].mxu0
  %v11595 = vadd.f32 %v11555, %v11594
  %v11596 = vpop.f32.mrb[0].mxu0
  %v11597 = vpop.f32.mrb[0].mxu0
  %v11598 = vpop.f32.mrb[0].mxu0
  %11599 = vdwg.mxu0
  %11600 = vmatprep.subr.bf16.mxu0 0
  %11601 = vmatpush1.bf16.msra.mxu0 %v11264
  %11602 = vmatprep.subr.bf16.mxu0 0
  %11603 = vmatpush1.bf16.msra.mxu0 %v11265
  %11604 = vmatprep.subr.bf16.mxu0 0
  %11605 = vmatpush1.bf16.msra.mxu0 %v11266
  %11606 = vmatprep.subr.bf16.mxu0 0
  %11607 = vmatpush1.bf16.msra.mxu0 %v11267
  %11608 = vmatprep.subr.bf16.mxu0 0
  %11609 = vmatpush1.bf16.msra.mxu0 %v11268
  %11610 = vmatprep.subr.bf16.mxu0 0
  %11611 = vmatpush1.bf16.msra.mxu0 %v11269
  %11612 = vmatprep.subr.bf16.mxu0 0
  %11613 = vmatpush1.bf16.msra.mxu0 %v11270
  %11614 = vmatprep.subr.bf16.mxu0 0
  %11615 = vmatpush1.bf16.msra.mxu0 %v11271
  %11616 = vmatprep.subr.bf16.mxu0 0
  %11617 = vmatpush1.bf16.msra.mxu0 %v11272
  %11618 = vmatprep.subr.bf16.mxu0 0
  %11619 = vmatpush1.bf16.msra.mxu0 %v11273
  %11620 = vmatprep.subr.bf16.mxu0 0
  %11621 = vmatpush1.bf16.msra.mxu0 %v11274
  %11622 = vmatprep.subr.bf16.mxu0 0
  %11623 = vmatpush1.bf16.msra.mxu0 %v11275
  %11624 = vmatprep.subr.bf16.mxu0 0
  %11625 = vmatpush1.bf16.msra.mxu0 %v11276
  %11626 = vmatprep.subr.bf16.mxu0 0
  %11627 = vmatpush1.bf16.msra.mxu0 %v11277
  %11628 = vmatprep.subr.bf16.mxu0 0
  %11629 = vmatpush1.bf16.msra.mxu0 %v11278
  %11630 = vmatprep.subr.bf16.mxu0 0
  %11631 = vmatpush1.bf16.msra.mxu0 %v11279
  %11632 = vmatprep.mubr.bf16.mxu0 %v7776
  %11633 = vmatmul.mubr.bf16.gmra.mrb[0].mxu0 %v7775
  %v11634 = vpop.f32.mrb[0].mxu0
  %v11635 = vadd.f32 %v11595, %v11634
  %v11636 = vpop.f32.mrb[0].mxu0
  %v11637 = vpop.f32.mrb[0].mxu0
  %v11638 = vpop.f32.mrb[0].mxu0
  %11639 = vdwg.mxu0
  %11640 = vmatprep.subr.bf16.mxu0 0
  %11641 = vmatpush1.bf16.msra.mxu0 %v11280
  %11642 = vmatprep.subr.bf16.mxu0 0
  %11643 = vmatpush1.bf16.msra.mxu0 %v11281
  %11644 = vmatprep.subr.bf16.mxu0 0
  %11645 = vmatpush1.bf16.msra.mxu0 %v11282
  %11646 = vmatprep.subr.bf16.mxu0 0
  %11647 = vmatpush1.bf16.msra.mxu0 %v11283
  %11648 = vmatprep.subr.bf16.mxu0 0
  %11649 = vmatpush1.bf16.msra.mxu0 %v11284
  %11650 = vmatprep.subr.bf16.mxu0 0
  %11651 = vmatpush1.bf16.msra.mxu0 %v11285
  %11652 = vmatprep.subr.bf16.mxu0 0
  %11653 = vmatpush1.bf16.msra.mxu0 %v11286
  %11654 = vmatprep.subr.bf16.mxu0 0
  %11655 = vmatpush1.bf16.msra.mxu0 %v11287
  %11656 = vmatprep.subr.bf16.mxu0 0
  %11657 = vmatpush1.bf16.msra.mxu0 %v11288
  %11658 = vmatprep.subr.bf16.mxu0 0
  %11659 = vmatpush1.bf16.msra.mxu0 %v11289
  %11660 = vmatprep.subr.bf16.mxu0 0
  %11661 = vmatpush1.bf16.msra.mxu0 %v11290
  %11662 = vmatprep.subr.bf16.mxu0 0
  %11663 = vmatpush1.bf16.msra.mxu0 %v11291
  %11664 = vmatprep.subr.bf16.mxu0 0
  %11665 = vmatpush1.bf16.msra.mxu0 %v11292
  %11666 = vmatprep.subr.bf16.mxu0 0
  %11667 = vmatpush1.bf16.msra.mxu0 %v11293
  %11668 = vmatprep.subr.bf16.mxu0 0
  %11669 = vmatpush1.bf16.msra.mxu0 %v11294
  %11670 = vmatprep.subr.bf16.mxu0 0
  %11671 = vmatpush1.bf16.msra.mxu0 %v11295
  %11672 = vmatprep.mubr.bf16.mxu0 %v8260
  %11673 = vmatmul.mubr.bf16.gmra.mrb[0].mxu0 %v8259
  %v11674 = vpop.f32.mrb[0].mxu0
  %v11675 = vadd.f32 %v11635, %v11674
  %v11676 = vpop.f32.mrb[0].mxu0
  %v11677 = vpop.f32.mrb[0].mxu0
  %v11678 = vpop.f32.mrb[0].mxu0
  %11679 = vdwg.mxu0
  %11680 = vmatprep.subr.bf16.mxu0 0
  %11681 = vmatpush1.bf16.msra.mxu0 %v11296
  %11682 = vmatprep.subr.bf16.mxu0 0
  %11683 = vmatpush1.bf16.msra.mxu0 %v11297
  %11684 = vmatprep.subr.bf16.mxu0 0
  %11685 = vmatpush1.bf16.msra.mxu0 %v11298
  %11686 = vmatprep.subr.bf16.mxu0 0
  %11687 = vmatpush1.bf16.msra.mxu0 %v11299
  %11688 = vmatprep.subr.bf16.mxu0 0
  %11689 = vmatpush1.bf16.msra.mxu0 %v11300
  %11690 = vmatprep.subr.bf16.mxu0 0
  %11691 = vmatpush1.bf16.msra.mxu0 %v11301
  %11692 = vmatprep.subr.bf16.mxu0 0
  %11693 = vmatpush1.bf16.msra.mxu0 %v11302
  %11694 = vmatprep.subr.bf16.mxu0 0
  %11695 = vmatpush1.bf16.msra.mxu0 %v11303
  %11696 = vmatprep.subr.bf16.mxu0 0
  %11697 = vmatpush1.bf16.msra.mxu0 %v11304
  %11698 = vmatprep.subr.bf16.mxu0 0
  %11699 = vmatpush1.bf16.msra.mxu0 %v11305
  %11700 = vmatprep.subr.bf16.mxu0 0
  %11701 = vmatpush1.bf16.msra.mxu0 %v11306
  %11702 = vmatprep.subr.bf16.mxu0 0
  %11703 = vmatpush1.bf16.msra.mxu0 %v11307
  %11704 = vmatprep.subr.bf16.mxu0 0
  %11705 = vmatpush1.bf16.msra.mxu0 %v11308
  %11706 = vmatprep.subr.bf16.mxu0 0
  %11707 = vmatpush1.bf16.msra.mxu0 %v11309
  %11708 = vmatprep.subr.bf16.mxu0 0
  %11709 = vmatpush1.bf16.msra.mxu0 %v11310
  %11710 = vmatprep.subr.bf16.mxu0 0
  %11711 = vmatpush1.bf16.msra.mxu0 %v11311
  %11712 = vmatprep.mubr.bf16.mxu0 %v8664
  %11713 = vmatmul.mubr.bf16.gmra.mrb[0].mxu0 %v8663
  %v11714 = vpop.f32.mrb[0].mxu0
  %v11715 = vadd.f32 %v11675, %v11714
  %v11716 = vpop.f32.mrb[0].mxu0
  %v11717 = vpop.f32.mrb[0].mxu0
  %v11718 = vpop.f32.mrb[0].mxu0
  %11719 = vdwg.mxu0
  %11720 = vmatprep.subr.bf16.mxu0 0
  %11721 = vmatpush1.bf16.msra.mxu0 %v11312
  %11722 = vmatprep.subr.bf16.mxu0 0
  %11723 = vmatpush1.bf16.msra.mxu0 %v11313
  %11724 = vmatprep.subr.bf16.mxu0 0
  %11725 = vmatpush1.bf16.msra.mxu0 %v11314
  %11726 = vmatprep.subr.bf16.mxu0 0
  %11727 = vmatpush1.bf16.msra.mxu0 %v11315
  %11728 = vmatprep.subr.bf16.mxu0 0
  %11729 = vmatpush1.bf16.msra.mxu0 %v11316
  %11730 = vmatprep.subr.bf16.mxu0 0
  %11731 = vmatpush1.bf16.msra.mxu0 %v11317
  %11732 = vmatprep.subr.bf16.mxu0 0
  %11733 = vmatpush1.bf16.msra.mxu0 %v11318
  %11734 = vmatprep.subr.bf16.mxu0 0
  %11735 = vmatpush1.bf16.msra.mxu0 %v11319
  %11736 = vmatprep.subr.bf16.mxu0 0
  %11737 = vmatpush1.bf16.msra.mxu0 %v11320
  %11738 = vmatprep.subr.bf16.mxu0 0
  %11739 = vmatpush1.bf16.msra.mxu0 %v11321
  %11740 = vmatprep.subr.bf16.mxu0 0
  %11741 = vmatpush1.bf16.msra.mxu0 %v11322
  %11742 = vmatprep.subr.bf16.mxu0 0
  %11743 = vmatpush1.bf16.msra.mxu0 %v11323
  %11744 = vmatprep.subr.bf16.mxu0 0
  %11745 = vmatpush1.bf16.msra.mxu0 %v11324
  %11746 = vmatprep.subr.bf16.mxu0 0
  %11747 = vmatpush1.bf16.msra.mxu0 %v11325
  %11748 = vmatprep.subr.bf16.mxu0 0
  %11749 = vmatpush1.bf16.msra.mxu0 %v11326
  %11750 = vmatprep.subr.bf16.mxu0 0
  %11751 = vmatpush1.bf16.msra.mxu0 %v11327
  %11752 = vmatprep.mubr.bf16.mxu0 %v9068
  %11753 = vmatmul.mubr.bf16.gmra.mrb[0].mxu0 %v9067
  %v11754 = vpop.f32.mrb[0].mxu0
  %v11755 = vadd.f32 %v11715, %v11754
  %v11756 = vpop.f32.mrb[0].mxu0
  %v11757 = vpop.f32.mrb[0].mxu0
  %v11758 = vpop.f32.mrb[0].mxu0
  %11759 = vdwg.mxu0
  %11760 = vmatprep.subr.bf16.mxu0 0
  %11761 = vmatpush1.bf16.msra.mxu0 %v11328
  %11762 = vmatprep.subr.bf16.mxu0 0
  %11763 = vmatpush1.bf16.msra.mxu0 %v11329
  %11764 = vmatprep.subr.bf16.mxu0 0
  %11765 = vmatpush1.bf16.msra.mxu0 %v11330
  %11766 = vmatprep.subr.bf16.mxu0 0
  %11767 = vmatpush1.bf16.msra.mxu0 %v11331
  %11768 = vmatprep.subr.bf16.mxu0 0
  %11769 = vmatpush1.bf16.msra.mxu0 %v11332
  %11770 = vmatprep.subr.bf16.mxu0 0
  %11771 = vmatpush1.bf16.msra.mxu0 %v11333
  %11772 = vmatprep.subr.bf16.mxu0 0
  %11773 = vmatpush1.bf16.msra.mxu0 %v11334
  %11774 = vmatprep.subr.bf16.mxu0 0
  %11775 = vmatpush1.bf16.msra.mxu0 %v11335
  %11776 = vmatprep.subr.bf16.mxu0 0
  %11777 = vmatpush1.bf16.msra.mxu0 %v11336
  %11778 = vmatprep.subr.bf16.mxu0 0
  %11779 = vmatpush1.bf16.msra.mxu0 %v11337
  %11780 = vmatprep.subr.bf16.mxu0 0
  %11781 = vmatpush1.bf16.msra.mxu0 %v11338
  %11782 = vmatprep.subr.bf16.mxu0 0
  %11783 = vmatpush1.bf16.msra.mxu0 %v11339
  %11784 = vmatprep.subr.bf16.mxu0 0
  %11785 = vmatpush1.bf16.msra.mxu0 %v11340
  %11786 = vmatprep.subr.bf16.mxu0 0
  %11787 = vmatpush1.bf16.msra.mxu0 %v11341
  %11788 = vmatprep.subr.bf16.mxu0 0
  %11789 = vmatpush1.bf16.msra.mxu0 %v11342
  %11790 = vmatprep.subr.bf16.mxu0 0
  %11791 = vmatpush1.bf16.msra.mxu0 %v11343
  %11792 = vmatprep.mubr.bf16.mxu0 %v9552
  %11793 = vmatmul.mubr.bf16.gmra.mrb[0].mxu0 %v9551
  %v11794 = vpop.f32.mrb[0].mxu0
  %v11795 = vadd.f32 %v11755, %v11794
  %v11796 = vpop.f32.mrb[0].mxu0
  %v11797 = vpop.f32.mrb[0].mxu0
  %v11798 = vpop.f32.mrb[0].mxu0
  %11799 = vdwg.mxu0
  %11800 = vmatprep.subr.bf16.mxu0 0
  %11801 = vmatpush1.bf16.msra.mxu0 %v11344
  %11802 = vmatprep.subr.bf16.mxu0 0
  %11803 = vmatpush1.bf16.msra.mxu0 %v11345
  %11804 = vmatprep.subr.bf16.mxu0 0
  %11805 = vmatpush1.bf16.msra.mxu0 %v11346
  %11806 = vmatprep.subr.bf16.mxu0 0
  %11807 = vmatpush1.bf16.msra.mxu0 %v11347
  %11808 = vmatprep.subr.bf16.mxu0 0
  %11809 = vmatpush1.bf16.msra.mxu0 %v11348
  %11810 = vmatprep.subr.bf16.mxu0 0
  %11811 = vmatpush1.bf16.msra.mxu0 %v11349
  %11812 = vmatprep.subr.bf16.mxu0 0
  %11813 = vmatpush1.bf16.msra.mxu0 %v11350
  %11814 = vmatprep.subr.bf16.mxu0 0
  %11815 = vmatpush1.bf16.msra.mxu0 %v11351
  %11816 = vmatprep.subr.bf16.mxu0 0
  %11817 = vmatpush1.bf16.msra.mxu0 %v11352
  %11818 = vmatprep.subr.bf16.mxu0 0
  %11819 = vmatpush1.bf16.msra.mxu0 %v11353
  %11820 = vmatprep.subr.bf16.mxu0 0
  %11821 = vmatpush1.bf16.msra.mxu0 %v11354
  %11822 = vmatprep.subr.bf16.mxu0 0
  %11823 = vmatpush1.bf16.msra.mxu0 %v11355
  %11824 = vmatprep.subr.bf16.mxu0 0
  %11825 = vmatpush1.bf16.msra.mxu0 %v11356
  %11826 = vmatprep.subr.bf16.mxu0 0
  %11827 = vmatpush1.bf16.msra.mxu0 %v11357
  %11828 = vmatprep.subr.bf16.mxu0 0
  %11829 = vmatpush1.bf16.msra.mxu0 %v11358
  %11830 = vmatprep.subr.bf16.mxu0 0
  %11831 = vmatpush1.bf16.msra.mxu0 %v11359
  %11832 = vmatprep.mubr.bf16.mxu0 %v9956
  %11833 = vmatmul.mubr.bf16.gmra.mrb[0].mxu0 %v9955
  %v11834 = vpop.f32.mrb[0].mxu0
  %v11835 = vadd.f32 %v11795, %v11834
  %v11836 = vpop.f32.mrb[0].mxu0
  %v11837 = vpop.f32.mrb[0].mxu0
  %v11838 = vpop.f32.mrb[0].mxu0
  %11839 = vdwg.mxu0
  %11840 = vmatprep.subr.bf16.mxu0 0
  %11841 = vmatpush1.bf16.msra.mxu0 %v11360
  %11842 = vmatprep.subr.bf16.mxu0 0
  %11843 = vmatpush1.bf16.msra.mxu0 %v11361
  %11844 = vmatprep.subr.bf16.mxu0 0
  %11845 = vmatpush1.bf16.msra.mxu0 %v11362
  %11846 = vmatprep.subr.bf16.mxu0 0
  %11847 = vmatpush1.bf16.msra.mxu0 %v11363
  %11848 = vmatprep.subr.bf16.mxu0 0
  %11849 = vmatpush1.bf16.msra.mxu0 %v11364
  %11850 = vmatprep.subr.bf16.mxu0 0
  %11851 = vmatpush1.bf16.msra.mxu0 %v11365
  %11852 = vmatprep.subr.bf16.mxu0 0
  %11853 = vmatpush1.bf16.msra.mxu0 %v11366
  %11854 = vmatprep.subr.bf16.mxu0 0
  %11855 = vmatpush1.bf16.msra.mxu0 %v11367
  %11856 = vmatprep.subr.bf16.mxu0 0
  %11857 = vmatpush1.bf16.msra.mxu0 %v11368
  %11858 = vmatprep.subr.bf16.mxu0 0
  %11859 = vmatpush1.bf16.msra.mxu0 %v11369
  %11860 = vmatprep.subr.bf16.mxu0 0
  %11861 = vmatpush1.bf16.msra.mxu0 %v11370
  %11862 = vmatprep.subr.bf16.mxu0 0
  %11863 = vmatpush1.bf16.msra.mxu0 %v11371
  %11864 = vmatprep.subr.bf16.mxu0 0
  %11865 = vmatpush1.bf16.msra.mxu0 %v11372
  %11866 = vmatprep.subr.bf16.mxu0 0
  %11867 = vmatpush1.bf16.msra.mxu0 %v11373
  %11868 = vmatprep.subr.bf16.mxu0 0
  %11869 = vmatpush1.bf16.msra.mxu0 %v11374
  %11870 = vmatprep.subr.bf16.mxu0 0
  %11871 = vmatpush1.bf16.msra.mxu0 %v11375
  %11872 = vmatprep.mubr.bf16.mxu0 %v10360
  %11873 = vmatmul.mubr.bf16.gmra.mrb[0].mxu0 %v10359
  %v11874 = vpop.f32.mrb[0].mxu0
  %v11875 = vadd.f32 %v11835, %v11874
  %v11876 = vpop.f32.mrb[0].mxu0
  %v11877 = vpop.f32.mrb[0].mxu0
  %v11878 = vpop.f32.mrb[0].mxu0
  %11879 = vdwg.mxu0
  %v11880 = vmax.f32 %v11875, 0.0
  %v11881 = vpack.c.bf16 %v11880, %v11880
  %v11882 = vld [vmem:[%s7] sm:$0xff]
  %v11883 = vld [vmem:[%s7 + $0x8] sm:$0xff]
  %v11884 = vld [vmem:[%s7 + $0x10] sm:$0xff]
  %v11885 = vld [vmem:[%s7 + $0x18] sm:$0xff]
  %v11886 = vld [vmem:[%s7 + $0x20] sm:$0xff]
  %v11887 = vld [vmem:[%s7 + $0x28] sm:$0xff]
  %v11888 = vld [vmem:[%s7 + $0x30] sm:$0xff]
  %v11889 = vld [vmem:[%s7 + $0x38] sm:$0xff]
  %v11890 = vld [vmem:[%s7 + $0x40] sm:$0xff]
  %v11891 = vld [vmem:[%s7 + $0x48] sm:$0xff]
  %v11892 = vld [vmem:[%s7 + $0x50] sm:$0xff]
  %v11893 = vld [vmem:[%s7 + $0x58] sm:$0xff]
  %v11894 = vld [vmem:[%s7 + $0x60] sm:$0xff]
  %v11895 = vld [vmem:[%s7 + $0x68] sm:$0xff]
  %v11896 = vld [vmem:[%s7 + $0x70] sm:$0xff]
  %v11897 = vld [vmem:[%s7 + $0x78] sm:$0xff]
  %v11898 = vld [vmem:[%s7 + $0x80] sm:$0xff]
  %v11899 = vld [vmem:[%s7 + $0x88] sm:$0xff]
  %v11900 = vld [vmem:[%s7 + $0x90] sm:$0xff]
  %v11901 = vld [vmem:[%s7 + $0x98] sm:$0xff]
  %v11902 = vld [vmem:[%s7 + $0xa0] sm:$0xff]
  %v11903 = vld [vmem:[%s7 + $0xa8] sm:$0xff]
  %v11904 = vld [vmem:[%s7 + $0xb0] sm:$0xff]
  %v11905 = vld [vmem:[%s7 + $0xb8] sm:$0xff]
  %v11906 = vld [vmem:[%s7 + $0xc0] sm:$0xff]
  %v11907 = vld [vmem:[%s7 + $0xc8] sm:$0xff]
  %v11908 = vld [vmem:[%s7 + $0xd0] sm:$0xff]
  %v11909 = vld [vmem:[%s7 + $0xd8] sm:$0xff]
  %v11910 = vld [vmem:[%s7 + $0xe0] sm:$0xff]
  %v11911 = vld [vmem:[%s7 + $0xe8] sm:$0xff]
  %v11912 = vld [vmem:[%s7 + $0xf0] sm:$0xff]
  %v11913 = vld [vmem:[%s7 + $0xf8] sm:$0xff]
  %v11914 = vld [vmem:[%s8] sm:$0xf]
  %v11916 = vlaneseq
  %v11917 = vshrl.u32 %v11916, 7
  %v11918 = vsub.s32 0, %v11917
  %v11919 = vrot.slane %v11914, %v11918
  %v11920 = vlaneseq
  %v11921 = vshrl.u32 %v11920, 7
  %v11922 = vsub.s32 1, %v11921
  %v11923 = vrot.slane %v11914, %v11922
  %v11924 = vlaneseq
  %v11925 = vshrl.u32 %v11924, 7
  %v11926 = vsub.s32 2, %v11925
  %v11927 = vrot.slane %v11914, %v11926
  %v11928 = vlaneseq
  %v11929 = vshrl.u32 %v11928, 7
  %v11930 = vsub.s32 3, %v11929
  %v11931 = vrot.slane %v11914, %v11930
  %v11968 = vunpack.c.l.b16 %v11882
  %v11969 = vunpack.c.h.b16 %v11882
  %v11970 = vunpack.c.l.b16 %v11883
  %v11971 = vunpack.c.h.b16 %v11883
  %v11972 = vunpack.c.l.b16 %v11884
  %v11973 = vunpack.c.h.b16 %v11884
  %v11974 = vunpack.c.l.b16 %v11885
  %v11975 = vunpack.c.h.b16 %v11885
  %v11976 = vunpack.c.l.b16 %v11886
  %v11977 = vunpack.c.h.b16 %v11886
  %v11978 = vunpack.c.l.b16 %v11887
  %v11979 = vunpack.c.h.b16 %v11887
  %v11980 = vunpack.c.l.b16 %v11888
  %v11981 = vunpack.c.h.b16 %v11888
  %v11982 = vunpack.c.l.b16 %v11889
  %v11983 = vunpack.c.h.b16 %v11889
  %v11984 = vunpack.c.l.b16 %v11890
  %v11985 = vunpack.c.h.b16 %v11890
  %v11986 = vunpack.c.l.b16 %v11891
  %v11987 = vunpack.c.h.b16 %v11891
  %v11988 = vunpack.c.l.b16 %v11892
  %v11989 = vunpack.c.h.b16 %v11892
  %v11990 = vunpack.c.l.b16 %v11893
  %v11991 = vunpack.c.h.b16 %v11893
  %v11992 = vunpack.c.l.b16 %v11894
  %v11993 = vunpack.c.h.b16 %v11894
  %v11994 = vunpack.c.l.b16 %v11895
  %v11995 = vunpack.c.h.b16 %v11895
  %v11996 = vunpack.c.l.b16 %v11896
  %v11997 = vunpack.c.h.b16 %v11896
  %v11998 = vunpack.c.l.b16 %v11897
  %v11999 = vunpack.c.h.b16 %v11897
  %v12000 = vunpack.c.l.b16 %v11898
  %v12001 = vunpack.c.h.b16 %v11898
  %v12002 = vunpack.c.l.b16 %v11899
  %v12003 = vunpack.c.h.b16 %v11899
  %v12004 = vunpack.c.l.b16 %v11900
  %v12005 = vunpack.c.h.b16 %v11900
  %v12006 = vunpack.c.l.b16 %v11901
  %v12007 = vunpack.c.h.b16 %v11901
  %v12008 = vunpack.c.l.b16 %v11902
  %v12009 = vunpack.c.h.b16 %v11902
  %v12010 = vunpack.c.l.b16 %v11903
  %v12011 = vunpack.c.h.b16 %v11903
  %v12012 = vunpack.c.l.b16 %v11904
  %v12013 = vunpack.c.h.b16 %v11904
  %v12014 = vunpack.c.l.b16 %v11905
  %v12015 = vunpack.c.h.b16 %v11905
  %v12016 = vunpack.c.l.b16 %v11906
  %v12017 = vunpack.c.h.b16 %v11906
  %v12018 = vunpack.c.l.b16 %v11907
  %v12019 = vunpack.c.h.b16 %v11907
  %v12020 = vunpack.c.l.b16 %v11908
  %v12021 = vunpack.c.h.b16 %v11908
  %v12022 = vunpack.c.l.b16 %v11909
  %v12023 = vunpack.c.h.b16 %v11909
  %v12024 = vunpack.c.l.b16 %v11910
  %v12025 = vunpack.c.h.b16 %v11910
  %v12026 = vunpack.c.l.b16 %v11911
  %v12027 = vunpack.c.h.b16 %v11911
  %v12028 = vunpack.c.l.b16 %v11912
  %v12029 = vunpack.c.h.b16 %v11912
  %v12030 = vunpack.c.l.b16 %v11913
  %v12031 = vunpack.c.h.b16 %v11913
  %v12032 = vpack.c.b16 %v11972, %v11968
  %v12033 = vpack.c.b16 %v11973, %v11969
  %v12034 = vpack.c.b16 %v11974, %v11970
  %v12035 = vpack.c.b16 %v11975, %v11971
  %v12036 = vpack.c.b16 %v11980, %v11976
  %v12037 = vpack.c.b16 %v11981, %v11977
  %v12038 = vpack.c.b16 %v11982, %v11978
  %v12039 = vpack.c.b16 %v11983, %v11979
  %v12040 = vpack.c.b16 %v11988, %v11984
  %v12041 = vpack.c.b16 %v11989, %v11985
  %v12042 = vpack.c.b16 %v11990, %v11986
  %v12043 = vpack.c.b16 %v11991, %v11987
  %v12044 = vpack.c.b16 %v11996, %v11992
  %v12045 = vpack.c.b16 %v11997, %v11993
  %v12046 = vpack.c.b16 %v11998, %v11994
  %v12047 = vpack.c.b16 %v11999, %v11995
  %v12048 = vpack.c.b16 %v12004, %v12000
  %v12049 = vpack.c.b16 %v12005, %v12001
  %v12050 = vpack.c.b16 %v12006, %v12002
  %v12051 = vpack.c.b16 %v12007, %v12003
  %v12052 = vpack.c.b16 %v12012, %v12008
  %v12053 = vpack.c.b16 %v12013, %v12009
  %v12054 = vpack.c.b16 %v12014, %v12010
  %v12055 = vpack.c.b16 %v12015, %v12011
  %v12056 = vpack.c.b16 %v12020, %v12016
  %v12057 = vpack.c.b16 %v12021, %v12017
  %v12058 = vpack.c.b16 %v12022, %v12018
  %v12059 = vpack.c.b16 %v12023, %v12019
  %v12060 = vpack.c.b16 %v12028, %v12024
  %v12061 = vpack.c.b16 %v12029, %v12025
  %v12062 = vpack.c.b16 %v12030, %v12026
  %v12063 = vpack.c.b16 %v12031, %v12027
  %12096 = vmatprep.subr.bf16.mxu0 %v12033
  %12097 = vmatpush1.bf16.msra.mxu0 %v12032
  %12098 = vmatprep.subr.bf16.mxu0 %v12037
  %12099 = vmatpush1.bf16.msra.mxu0 %v12036
  %12100 = vmatprep.subr.bf16.mxu0 %v12041
  %12101 = vmatpush1.bf16.msra.mxu0 %v12040
  %12102 = vmatprep.subr.bf16.mxu0 %v12045
  %12103 = vmatpush1.bf16.msra.mxu0 %v12044
  %12104 = vmatprep.subr.bf16.mxu0 %v12049
  %12105 = vmatpush1.bf16.msra.mxu0 %v12048
  %12106 = vmatprep.subr.bf16.mxu0 %v12053
  %12107 = vmatpush1.bf16.msra.mxu0 %v12052
  %12108 = vmatprep.subr.bf16.mxu0 %v12057
  %12109 = vmatpush1.bf16.msra.mxu0 %v12056
  %12110 = vmatprep.subr.bf16.mxu0 %v12061
  %12111 = vmatpush1.bf16.msra.mxu0 %v12060
  %12112 = vmatprep.subr.bf16.mxu0 0
  %12113 = vmatpush1.bf16.msra.mxu0 0
  %12114 = vmatprep.subr.bf16.mxu0 0
  %12115 = vmatpush1.bf16.msra.mxu0 0
  %12116 = vmatprep.subr.bf16.mxu0 0
  %12117 = vmatpush1.bf16.msra.mxu0 0
  %12118 = vmatprep.subr.bf16.mxu0 0
  %12119 = vmatpush1.bf16.msra.mxu0 0
  %12120 = vmatprep.subr.bf16.mxu0 0
  %12121 = vmatpush1.bf16.msra.mxu0 0
  %12122 = vmatprep.subr.bf16.mxu0 0
  %12123 = vmatpush1.bf16.msra.mxu0 0
  %12124 = vmatprep.subr.bf16.mxu0 0
  %12125 = vmatpush1.bf16.msra.mxu0 0
  %12126 = vmatprep.subr.bf16.mxu0 0
  %12127 = vmatpush1.bf16.msra.mxu0 0
  %12128 = vmatprep.mubr.bf16.mxu0 0
  %12129 = vmatmul.mubr.bf16.gmra.mrb[0].mxu0 %v11881
  %v12130 = vpop.f32.mrb[0].mxu0
  %v12131 = vadd.f32 %v11919, %v12130
  %v12132 = vpop.f32.mrb[0].mxu0
  %v12133 = vadd.f32 %v11923, %v12132
  %v12134 = vpop.f32.mrb[0].mxu0
  %v12135 = vpop.f32.mrb[0].mxu0
  %12136 = vdwg.mxu0
  %12137 = vmatprep.subr.bf16.mxu0 %v12035
  %12138 = vmatpush1.bf16.msra.mxu0 %v12034
  %12139 = vmatprep.subr.bf16.mxu0 %v12039
  %12140 = vmatpush1.bf16.msra.mxu0 %v12038
  %12141 = vmatprep.subr.bf16.mxu0 %v12043
  %12142 = vmatpush1.bf16.msra.mxu0 %v12042
  %12143 = vmatprep.subr.bf16.mxu0 %v12047
  %12144 = vmatpush1.bf16.msra.mxu0 %v12046
  %12145 = vmatprep.subr.bf16.mxu0 %v12051
  %12146 = vmatpush1.bf16.msra.mxu0 %v12050
  %12147 = vmatprep.subr.bf16.mxu0 %v12055
  %12148 = vmatpush1.bf16.msra.mxu0 %v12054
  %12149 = vmatprep.subr.bf16.mxu0 %v12059
  %12150 = vmatpush1.bf16.msra.mxu0 %v12058
  %12151 = vmatprep.subr.bf16.mxu0 %v12063
  %12152 = vmatpush1.bf16.msra.mxu0 %v12062
  %12153 = vmatprep.subr.bf16.mxu0 0
  %12154 = vmatpush1.bf16.msra.mxu0 0
  %12155 = vmatprep.subr.bf16.mxu0 0
  %12156 = vmatpush1.bf16.msra.mxu0 0
  %12157 = vmatprep.subr.bf16.mxu0 0
  %12158 = vmatpush1.bf16.msra.mxu0 0
  %12159 = vmatprep.subr.bf16.mxu0 0
  %12160 = vmatpush1.bf16.msra.mxu0 0
  %12161 = vmatprep.subr.bf16.mxu0 0
  %12162 = vmatpush1.bf16.msra.mxu0 0
  %12163 = vmatprep.subr.bf16.mxu0 0
  %12164 = vmatpush1.bf16.msra.mxu0 0
  %12165 = vmatprep.subr.bf16.mxu0 0
  %12166 = vmatpush1.bf16.msra.mxu0 0
  %12167 = vmatprep.subr.bf16.mxu0 0
  %12168 = vmatpush1.bf16.msra.mxu0 0
  %12169 = vmatprep.mubr.bf16.mxu0 0
  %12170 = vmatmul.mubr.bf16.gmra.mrb[0].mxu0 %v11881
  %v12171 = vpop.f32.mrb[0].mxu0
  %v12172 = vadd.f32 %v11927, %v12171
  %v12173 = vpop.f32.mrb[0].mxu0
  %v12174 = vadd.f32 %v11931, %v12173
  %v12175 = vpop.f32.mrb[0].mxu0
  %v12176 = vpop.f32.mrb[0].mxu0
  %12177 = vdwg.mxu0
  %v12178 = vmax.f32 %v12131, 0.0
  %v12179 = vmax.f32 %v12133, 0.0
  %v12180 = vmax.f32 %v12172, 0.0
  %v12181 = vmax.f32 %v12174, 0.0
  %v12182 = vpack.c.bf16 %v12178, %v12178
  %v12183 = vpack.c.bf16 %v12179, %v12179
  %v12184 = vpack.c.bf16 %v12180, %v12180
  %v12185 = vpack.c.bf16 %v12181, %v12181
  %v12186 = vld [vmem:[%s9] sm:$0xf]
  %v12187 = vld [vmem:[%s9 + $0x4] sm:$0xf]
  %v12188 = vld [vmem:[%s9 + $0x8] sm:$0xf]
  %v12189 = vld [vmem:[%s9 + $0xc] sm:$0xf]
  %v12190 = vld [vmem:[%s9 + $0x10] sm:$0xf]
  %v12191 = vld [vmem:[%s9 + $0x14] sm:$0xf]
  %v12192 = vld [vmem:[%s9 + $0x18] sm:$0xf]
  %v12193 = vld [vmem:[%s9 + $0x1c] sm:$0xf]
  %v12194 = vld [vmem:[%s9 + $0x20] sm:$0xf]
  %v12195 = vld [vmem:[%s9 + $0x24] sm:$0xf]
  %v12196 = vld [vmem:[%s9 + $0x28] sm:$0xf]
  %v12197 = vld [vmem:[%s9 + $0x2c] sm:$0xf]
  %v12198 = vld [vmem:[%s9 + $0x30] sm:$0xf]
  %v12199 = vld [vmem:[%s9 + $0x34] sm:$0xf]
  %v12200 = vld [vmem:[%s9 + $0x38] sm:$0xf]
  %v12201 = vld [vmem:[%s9 + $0x3c] sm:$0xf]
  %v12202 = vld [vmem:[%s9 + $0x40] sm:$0xf]
  %v12203 = vld [vmem:[%s9 + $0x44] sm:$0xf]
  %v12204 = vld [vmem:[%s9 + $0x48] sm:$0xf]
  %v12205 = vld [vmem:[%s9 + $0x4c] sm:$0xf]
  %v12206 = vld [vmem:[%s9 + $0x50] sm:$0xf]
  %v12207 = vld [vmem:[%s9 + $0x54] sm:$0xf]
  %v12208 = vld [vmem:[%s9 + $0x58] sm:$0xf]
  %v12209 = vld [vmem:[%s9 + $0x5c] sm:$0xf]
  %v12210 = vld [vmem:[%s9 + $0x60] sm:$0xf]
  %v12211 = vld [vmem:[%s9 + $0x64] sm:$0xf]
  %v12212 = vld [vmem:[%s9 + $0x68] sm:$0xf]
  %v12213 = vld [vmem:[%s9 + $0x6c] sm:$0xf]
  %v12214 = vld [vmem:[%s9 + $0x70] sm:$0xf]
  %v12215 = vld [vmem:[%s9 + $0x74] sm:$0xf]
  %v12216 = vld [vmem:[%s9 + $0x78] sm:$0xf]
  %v12217 = vld [vmem:[%s9 + $0x7c] sm:$0xf]
  %v12218 = vld [vmem:[%s9 + $0x80] sm:$0xf]
  %v12219 = vld [vmem:[%s9 + $0x84] sm:$0xf]
  %v12220 = vld [vmem:[%s9 + $0x88] sm:$0xf]
  %v12221 = vld [vmem:[%s9 + $0x8c] sm:$0xf]
  %v12222 = vld [vmem:[%s9 + $0x90] sm:$0xf]
  %v12223 = vld [vmem:[%s9 + $0x94] sm:$0xf]
  %v12224 = vld [vmem:[%s9 + $0x98] sm:$0xf]
  %v12225 = vld [vmem:[%s9 + $0x9c] sm:$0xf]
  %v12226 = vld [vmem:[%s9 + $0xa0] sm:$0xf]
  %v12227 = vld [vmem:[%s9 + $0xa4] sm:$0xf]
  %v12228 = vld [vmem:[%s9 + $0xa8] sm:$0xf]
  %v12229 = vld [vmem:[%s9 + $0xac] sm:$0xf]
  %v12230 = vld [vmem:[%s9 + $0xb0] sm:$0xf]
  %v12231 = vld [vmem:[%s9 + $0xb4] sm:$0xf]
  %v12232 = vld [vmem:[%s9 + $0xb8] sm:$0xf]
  %v12233 = vld [vmem:[%s9 + $0xbc] sm:$0xf]
  %v12234 = vld [vmem:[%s9 + $0xc0] sm:$0xf]
  %v12235 = vld [vmem:[%s9 + $0xc4] sm:$0xf]
  %v12236 = vld [vmem:[%s9 + $0xc8] sm:$0xf]
  %v12237 = vld [vmem:[%s9 + $0xcc] sm:$0xf]
  %v12238 = vld [vmem:[%s9 + $0xd0] sm:$0xf]
  %v12239 = vld [vmem:[%s9 + $0xd4] sm:$0xf]
  %v12240 = vld [vmem:[%s9 + $0xd8] sm:$0xf]
  %v12241 = vld [vmem:[%s9 + $0xdc] sm:$0xf]
  %v12242 = vld [vmem:[%s9 + $0xe0] sm:$0xf]
  %v12243 = vld [vmem:[%s9 + $0xe4] sm:$0xf]
  %v12244 = vld [vmem:[%s9 + $0xe8] sm:$0xf]
  %v12245 = vld [vmem:[%s9 + $0xec] sm:$0xf]
  %v12246 = vld [vmem:[%s9 + $0xf0] sm:$0xf]
  %v12247 = vld [vmem:[%s9 + $0xf4] sm:$0xf]
  %v12248 = vld [vmem:[%s9 + $0xf8] sm:$0xf]
  %v12249 = vld [vmem:[%s9 + $0xfc] sm:$0xf]
  %v12250 = vld [vmem:[%s10] sm:$0x1]
  %v12252 = vlaneseq
  %v12253 = vshrl.u32 %v12252, 7
  %v12254 = vsub.s32 0, %v12253
  %v12255 = vrot.slane %v12250, %v12254
  %v12321 = vunpack.c.l.b16 %v12186
  %v12322 = vunpack.c.l.b16 %v12187
  %v12323 = vunpack.c.l.b16 %v12188
  %v12324 = vunpack.c.l.b16 %v12189
  %v12325 = vunpack.c.l.b16 %v12190
  %v12326 = vunpack.c.l.b16 %v12191
  %v12327 = vunpack.c.l.b16 %v12192
  %v12328 = vunpack.c.l.b16 %v12193
  %v12329 = vunpack.c.l.b16 %v12194
  %v12330 = vunpack.c.l.b16 %v12195
  %v12331 = vunpack.c.l.b16 %v12196
  %v12332 = vunpack.c.l.b16 %v12197
  %v12333 = vunpack.c.l.b16 %v12198
  %v12334 = vunpack.c.l.b16 %v12199
  %v12335 = vunpack.c.l.b16 %v12200
  %v12336 = vunpack.c.l.b16 %v12201
  %v12337 = vunpack.c.l.b16 %v12202
  %v12338 = vunpack.c.l.b16 %v12203
  %v12339 = vunpack.c.l.b16 %v12204
  %v12340 = vunpack.c.l.b16 %v12205
  %v12341 = vunpack.c.l.b16 %v12206
  %v12342 = vunpack.c.l.b16 %v12207
  %v12343 = vunpack.c.l.b16 %v12208
  %v12344 = vunpack.c.l.b16 %v12209
  %v12345 = vunpack.c.l.b16 %v12210
  %v12346 = vunpack.c.l.b16 %v12211
  %v12347 = vunpack.c.l.b16 %v12212
  %v12348 = vunpack.c.l.b16 %v12213
  %v12349 = vunpack.c.l.b16 %v12214
  %v12350 = vunpack.c.l.b16 %v12215
  %v12351 = vunpack.c.l.b16 %v12216
  %v12352 = vunpack.c.l.b16 %v12217
  %v12353 = vunpack.c.l.b16 %v12218
  %v12354 = vunpack.c.l.b16 %v12219
  %v12355 = vunpack.c.l.b16 %v12220
  %v12356 = vunpack.c.l.b16 %v12221
  %v12357 = vunpack.c.l.b16 %v12222
  %v12358 = vunpack.c.l.b16 %v12223
  %v12359 = vunpack.c.l.b16 %v12224
  %v12360 = vunpack.c.l.b16 %v12225
  %v12361 = vunpack.c.l.b16 %v12226
  %v12362 = vunpack.c.l.b16 %v12227
  %v12363 = vunpack.c.l.b16 %v12228
  %v12364 = vunpack.c.l.b16 %v12229
  %v12365 = vunpack.c.l.b16 %v12230
  %v12366 = vunpack.c.l.b16 %v12231
  %v12367 = vunpack.c.l.b16 %v12232
  %v12368 = vunpack.c.l.b16 %v12233
  %v12369 = vunpack.c.l.b16 %v12234
  %v12370 = vunpack.c.l.b16 %v12235
  %v12371 = vunpack.c.l.b16 %v12236
  %v12372 = vunpack.c.l.b16 %v12237
  %v12373 = vunpack.c.l.b16 %v12238
  %v12374 = vunpack.c.l.b16 %v12239
  %v12375 = vunpack.c.l.b16 %v12240
  %v12376 = vunpack.c.l.b16 %v12241
  %v12377 = vunpack.c.l.b16 %v12242
  %v12378 = vunpack.c.l.b16 %v12243
  %v12379 = vunpack.c.l.b16 %v12244
  %v12380 = vunpack.c.l.b16 %v12245
  %v12381 = vunpack.c.l.b16 %v12246
  %v12382 = vunpack.c.l.b16 %v12247
  %v12383 = vunpack.c.l.b16 %v12248
  %v12384 = vunpack.c.l.b16 %v12249
  %v12385 = vpack.c.b16 %v12322, %v12321
  %v12386 = vpack.c.b16 %v12324, %v12323
  %v12387 = vpack.c.b16 %v12326, %v12325
  %v12388 = vpack.c.b16 %v12328, %v12327
  %v12389 = vpack.c.b16 %v12330, %v12329
  %v12390 = vpack.c.b16 %v12332, %v12331
  %v12391 = vpack.c.b16 %v12334, %v12333
  %v12392 = vpack.c.b16 %v12336, %v12335
  %v12393 = vpack.c.b16 %v12338, %v12337
  %v12394 = vpack.c.b16 %v12340, %v12339
  %v12395 = vpack.c.b16 %v12342, %v12341
  %v12396 = vpack.c.b16 %v12344, %v12343
  %v12397 = vpack.c.b16 %v12346, %v12345
  %v12398 = vpack.c.b16 %v12348, %v12347
  %v12399 = vpack.c.b16 %v12350, %v12349
  %v12400 = vpack.c.b16 %v12352, %v12351
  %v12401 = vpack.c.b16 %v12354, %v12353
  %v12402 = vpack.c.b16 %v12356, %v12355
  %v12403 = vpack.c.b16 %v12358, %v12357
  %v12404 = vpack.c.b16 %v12360, %v12359
  %v12405 = vpack.c.b16 %v12362, %v12361
  %v12406 = vpack.c.b16 %v12364, %v12363
  %v12407 = vpack.c.b16 %v12366, %v12365
  %v12408 = vpack.c.b16 %v12368, %v12367
  %v12409 = vpack.c.b16 %v12370, %v12369
  %v12410 = vpack.c.b16 %v12372, %v12371
  %v12411 = vpack.c.b16 %v12374, %v12373
  %v12412 = vpack.c.b16 %v12376, %v12375
  %v12413 = vpack.c.b16 %v12378, %v12377
  %v12414 = vpack.c.b16 %v12380, %v12379
  %v12415 = vpack.c.b16 %v12382, %v12381
  %v12416 = vpack.c.b16 %v12384, %v12383
  %12449 = vmatprep.subr.bf16.mxu0 0
  %12450 = vmatpush1.bf16.msra.mxu0 %v12385
  %12451 = vmatprep.subr.bf16.mxu0 0
  %12452 = vmatpush1.bf16.msra.mxu0 %v12386
  %12453 = vmatprep.subr.bf16.mxu0 0
  %12454 = vmatpush1.bf16.msra.mxu0 %v12387
  %12455 = vmatprep.subr.bf16.mxu0 0
  %12456 = vmatpush1.bf16.msra.mxu0 %v12388
  %12457 = vmatprep.subr.bf16.mxu0 0
  %12458 = vmatpush1.bf16.msra.mxu0 %v12389
  %12459 = vmatprep.subr.bf16.mxu0 0
  %12460 = vmatpush1.bf16.msra.mxu0 %v12390
  %12461 = vmatprep.subr.bf16.mxu0 0
  %12462 = vmatpush1.bf16.msra.mxu0 %v12391
  %12463 = vmatprep.subr.bf16.mxu0 0
  %12464 = vmatpush1.bf16.msra.mxu0 %v12392
  %12465 = vmatprep.subr.bf16.mxu0 0
  %12466 = vmatpush1.bf16.msra.mxu0 %v12393
  %12467 = vmatprep.subr.bf16.mxu0 0
  %12468 = vmatpush1.bf16.msra.mxu0 %v12394
  %12469 = vmatprep.subr.bf16.mxu0 0
  %12470 = vmatpush1.bf16.msra.mxu0 %v12395
  %12471 = vmatprep.subr.bf16.mxu0 0
  %12472 = vmatpush1.bf16.msra.mxu0 %v12396
  %12473 = vmatprep.subr.bf16.mxu0 0
  %12474 = vmatpush1.bf16.msra.mxu0 %v12397
  %12475 = vmatprep.subr.bf16.mxu0 0
  %12476 = vmatpush1.bf16.msra.mxu0 %v12398
  %12477 = vmatprep.subr.bf16.mxu0 0
  %12478 = vmatpush1.bf16.msra.mxu0 %v12399
  %12479 = vmatprep.subr.bf16.mxu0 0
  %12480 = vmatpush1.bf16.msra.mxu0 %v12400
  %12481 = vmatprep.mubr.bf16.mxu0 %v12183
  %12482 = vmatmul.mubr.bf16.gmra.mrb[0].mxu0 %v12182
  %v12483 = vpop.f32.mrb[0].mxu0
  %v12484 = vadd.f32 %v12255, %v12483
  %v12485 = vpop.f32.mrb[0].mxu0
  %v12486 = vpop.f32.mrb[0].mxu0
  %v12487 = vpop.f32.mrb[0].mxu0
  %12488 = vdwg.mxu0
  %12489 = vmatprep.subr.bf16.mxu0 0
  %12490 = vmatpush1.bf16.msra.mxu0 %v12401
  %12491 = vmatprep.subr.bf16.mxu0 0
  %12492 = vmatpush1.bf16.msra.mxu0 %v12402
  %12493 = vmatprep.subr.bf16.mxu0 0
  %12494 = vmatpush1.bf16.msra.mxu0 %v12403
  %12495 = vmatprep.subr.bf16.mxu0 0
  %12496 = vmatpush1.bf16.msra.mxu0 %v12404
  %12497 = vmatprep.subr.bf16.mxu0 0
  %12498 = vmatpush1.bf16.msra.mxu0 %v12405
  %12499 = vmatprep.subr.bf16.mxu0 0
  %12500 = vmatpush1.bf16.msra.mxu0 %v12406
  %12501 = vmatprep.subr.bf16.mxu0 0
  %12502 = vmatpush1.bf16.msra.mxu0 %v12407
  %12503 = vmatprep.subr.bf16.mxu0 0
  %12504 = vmatpush1.bf16.msra.mxu0 %v12408
  %12505 = vmatprep.subr.bf16.mxu0 0
  %12506 = vmatpush1.bf16.msra.mxu0 %v12409
  %12507 = vmatprep.subr.bf16.mxu0 0
  %12508 = vmatpush1.bf16.msra.mxu0 %v12410
  %12509 = vmatprep.subr.bf16.mxu0 0
  %12510 = vmatpush1.bf16.msra.mxu0 %v12411
  %12511 = vmatprep.subr.bf16.mxu0 0
  %12512 = vmatpush1.bf16.msra.mxu0 %v12412
  %12513 = vmatprep.subr.bf16.mxu0 0
  %12514 = vmatpush1.bf16.msra.mxu0 %v12413
  %12515 = vmatprep.subr.bf16.mxu0 0
  %12516 = vmatpush1.bf16.msra.mxu0 %v12414
  %12517 = vmatprep.subr.bf16.mxu0 0
  %12518 = vmatpush1.bf16.msra.mxu0 %v12415
  %12519 = vmatprep.subr.bf16.mxu0 0
  %12520 = vmatpush1.bf16.msra.mxu0 %v12416
  %12521 = vmatprep.mubr.bf16.mxu0 %v12185
  %12522 = vmatmul.mubr.bf16.gmra.mrb[0].mxu0 %v12184
  %v12523 = vpop.f32.mrb[0].mxu0
  %v12524 = vadd.f32 %v12484, %v12523
  %v12525 = vpop.f32.mrb[0].mxu0
  %v12526 = vpop.f32.mrb[0].mxu0
  %v12527 = vpop.f32.mrb[0].mxu0
  %12528 = vdwg.mxu0
  %12529 = vst [vmem:[%s11] sm:$0xff] %v12524
  // Predicated region
  $region46: #{cnn_model_forward.1} parent=0 // pred_check
    _
  $region47: #{cnn_model_forward.1} parent=0 // pred_check_branch
    %12531 = sbr.rel (0) target = $region49
  $region48: #{cnn_model_forward.1} parent=0 // pred_region
    _
  $region49: #{cnn_model_forward.1} parent=0 // pred_fallthru
    _
  // Predicated region
  $region50: #{cnn_model_forward.1} parent=0 // pred_check
    _
  $region51: #{cnn_model_forward.1} parent=0 // pred_check_branch
    %12533 = sbr.rel (0) target = $region53
  $region52: #{cnn_model_forward.1} parent=0 // pred_region
    _
  $region53: #{cnn_model_forward.1} parent=0 // pred_fallthru
    _

</llo_original>
